<compile_context>
chip_gen: v6e
topology: v6e:2x2x1
jax: 0.10.0
libtpu: 0.0.40
codegen_flags: <defaults>
</compile_context>

<pallas_src>
import functools

import jax
import jax.numpy as jnp
from jax.experimental import pallas as pl
from jax.experimental.pallas import tpu as pltpu

_LANE = 128  # TPU lane width  (last-dim tiling)
_SUB = 8     # TPU sublane width


def _round_up(a, m):
    return (a + m - 1) // m * m


# ---------------------------------------------------------------------------
# pltpu.roll shift-convention probe (run once, cached).
#   True  -> jnp.roll semantics: roll(x, 1, 0)[i] == x[i-1]
#   False -> opposite convention: roll(x, 1, 0)[i] == x[i+1]
#   None  -> roll unavailable; kernel falls back to misaligned window loads.
# ---------------------------------------------------------------------------
_ROLL_CONVENTION = "UNSET"


def _probe_roll_convention():
    def probe(o_ref):
        x = jax.lax.broadcasted_iota(jnp.int32, (32, 256), 0).astype(jnp.float32)
        o_ref[0] = pltpu.roll(x, 1, axis=0)
        o_ref[1] = pltpu.roll(x, 31, axis=0)

    try:
        out = pl.pallas_call(
            probe, out_shape=jax.ShapeDtypeStruct((2, 32, 256), jnp.float32))()
        out = jax.block_until_ready(out)
        a = float(out[0, 1, 0])
        b = float(out[1, 1, 0])
        if a == 0.0 and b == 2.0:
            return True
        if a == 2.0 and b == 0.0:
            return False
        return None
    except Exception:
        return None


def _roll_convention():
    global _ROLL_CONVENTION
    if _ROLL_CONVENTION == "UNSET":
        _ROLL_CONVENTION = _probe_roll_convention()
    return _ROLL_CONVENTION


# ---------------------------------------------------------------------------
# Kernel factory (all dims are static Python ints at trace time).
# ---------------------------------------------------------------------------
def _make_resblock_kernel(H, W, Wp, Cp, WS, PADN, roll_shifts):
    BASE = _SUB                     # flat offset of padded-image (row 0, col 0)
    HWS = H * WS
    eps = 1e-5
    inv_n = 1.0 / float(H * W)      # true pixel count (W, not padded Wp)
    f32 = jnp.float32
    bf16 = jnp.bfloat16

    def kernel(x_ref, w1_ref, g1_ref, b1_ref, w2_ref, g2_ref, b2_ref,
               out_ref, padf_ref, acc_ref):
        # x_ref   : (1, H, Wp, Cp)   one batch element (W and C zero-padded)
        # w*_ref  : (3, 3, Cp, Cp)   bf16 conv weights, (ky, kx, Cin, Cout)
        # g*/b*   : (1, Cp)          f32 InstanceNorm affine params
        # out_ref : (1, H, Wp, Cp)
        # padf_ref: (PADN, Cp) f32   flat zero-padded image, row stride WS
        # acc_ref : (HWS, Cp)  f32   conv accumulator

        # ---- validity mask (flat column < true W), synthesized in-kernel ----
        rf = jax.lax.broadcasted_iota(jnp.int32, (HWS, 1), 0).astype(f32)
        colf = rf - jnp.floor(rf / float(WS)) * float(WS)   # exact for these ints
        maskf = (colf < float(W)).astype(f32)               # (HWS, 1)

        # ---- stage 0: build the zero-padded input in flat VMEM scratch ------
        # Flat index BASE + r*WS + c  <->  padded-image row r, column c.
        # Rows 1..H / cols 0..Wp-1 hold x; all halo/slack positions are zero.
        # Every store below is 8-sublane aligned and lane dense.
        zrow = jnp.zeros((WS - Wp, Cp), f32)
        padf_ref[0:BASE + WS, :] = jnp.zeros((BASE + WS, Cp), f32)    # top halo

        def fill_row(y, carry):
            off = pl.multiple_of(BASE + WS + y * WS, _SUB)
            padf_ref[pl.ds(off, Wp), :] = x_ref[0, y].astype(f32)     # interior
            off2 = pl.multiple_of(BASE + WS + y * WS + Wp, _SUB)
            padf_ref[pl.ds(off2, WS - Wp), :] = zrow                  # side halo
            return carry
        jax.lax.fori_loop(0, H, fill_row, 0)

        bot = BASE + (H + 1) * WS
        padf_ref[bot:PADN, :] = jnp.zeros((PADN - bot, Cp), f32)      # bottom

        # ---- 3x3 conv: 9 MXU matmuls, aligned bf16 LHS, single acc store ----
        def conv3x3(w_ref):
            total = None
            for ky in range(3):
                woff = BASE + ky * WS
                if roll_shifts is not None:
                    sd, su = roll_shifts   # result[p]=v[p-1] / result[p]=v[p+1]
                    # One aligned window per ky; kx=0/2 taps come from rolling
                    # the f32 results.  The wrapped row for the +1 roll reads
                    # padf[woff+HWS-1] (a zeroed slack/halo column), and the
                    # wrapped row for the -1 roll lands at a masked slack row.
                    win = padf_ref[woff:woff + HWS, :].astype(bf16)
                    p_m = jnp.dot(win, w_ref[ky, 1], preferred_element_type=f32)
                    p_l = jnp.dot(win, w_ref[ky, 0], preferred_element_type=f32)
                    p_r = jnp.dot(win, w_ref[ky, 2], preferred_element_type=f32)
                    contrib = (p_m + pltpu.roll(p_l, sd, axis=0)
                               + pltpu.roll(p_r, su, axis=0))
                else:
                    # Fallback: shifted (possibly misaligned) window loads.
                    contrib = None
                    for kx in range(3):
                        off = woff + kx - 1
                        win = padf_ref[off:off + HWS, :].astype(bf16)
                        part = jnp.dot(win, w_ref[ky, kx],
                                       preferred_element_type=f32)
                        contrib = part if contrib is None else contrib + part
                total = contrib if total is None else total + contrib
            acc_ref[...] = total

        # ---- fused InstanceNorm: one-pass stats folded into scale/shift -----
        def inorm_scale_shift(g_ref, b_ref):
            a = acc_ref[...] * maskf
            s = jnp.sum(a, axis=0, keepdims=True)
            ss = jnp.sum(a * a, axis=0, keepdims=True)
            mean = s * inv_n
            var = ss * inv_n - mean * mean                 # biased variance
            scale = jax.lax.rsqrt(var + eps) * g_ref[...]
            shift = b_ref[...] - mean * scale
            return scale, shift

        # ---- conv1 + IN1 + ReLU ---------------------------------------------
        conv3x3(w1_ref)
        sc1, sh1 = inorm_scale_shift(g1_ref, b1_ref)
        h1 = jnp.maximum(acc_ref[...] * sc1 + sh1, 0.0) * maskf
        # Masked h1 reuses padf as the zero-padded conv2 input: slack columns
        # become the side halo; top/bottom halos keep their stage-0 zeros.
        padf_ref[BASE + WS:BASE + WS + HWS, :] = h1

        # ---- conv2 + IN2 + residual add --------------------------------------
        conv3x3(w2_ref)
        sc2, sh2 = inorm_scale_shift(g2_ref, b2_ref)

        def write_row(y, carry):
            off = pl.multiple_of(y * WS, _SUB)
            h2 = acc_ref[pl.ds(off, Wp), :] * sc2 + sh2               # (Wp, Cp)
            out_ref[0, y] = (x_ref[0, y].astype(f32) + h2).astype(out_ref.dtype)
            return carry
        jax.lax.fori_loop(0, H, write_row, 0)

    return kernel


# ---------------------------------------------------------------------------
# Wrapper
# ---------------------------------------------------------------------------
def residual_block_nhwc(x, w1, g1, b1, w2, g2, b2):
    """x: (B,H,W,C); w1/w2: (3,3,Cin,Cout); g*/b*: (C,).  Returns (B,H,W,C)."""
    return _residual_block_nhwc_jit(x, w1, g1, b1, w2, g2, b2, _roll_convention())


@functools.partial(jax.jit, static_argnums=(7,))
def _residual_block_nhwc_jit(x, w1, g1, b1, w2, g2, b2, roll_np_like):
    B, H, W, C = x.shape
    Cp = _round_up(C, _LANE)            # lane-dense channel dimension
    Wp = _round_up(W, _SUB)             # sublane-dense row width
    pad_c = Cp - C
    pad_w = Wp - W
    if pad_c or pad_w:
        # Zero-padded channels/columns stay zero through conv/IN/ReLU/residual.
        x = jnp.pad(x, ((0, 0), (0, 0), (0, pad_w), (0, pad_c)))
    if pad_c:
        w1 = jnp.pad(w1, ((0, 0), (0, 0), (0, pad_c), (0, pad_c)))
        w2 = jnp.pad(w2, ((0, 0), (0, 0), (0, pad_c), (0, pad_c)))
        g1 = jnp.pad(g1, (0, pad_c))
        b1 = jnp.pad(b1, (0, pad_c))
        g2 = jnp.pad(g2, (0, pad_c))
        b2 = jnp.pad(b2, (0, pad_c))
    w1 = w1.astype(jnp.bfloat16)        # bf16 MXU operands; accumulate in f32
    w2 = w2.astype(jnp.bfloat16)
    g1 = g1.reshape(1, Cp).astype(jnp.float32)
    b1 = b1.reshape(1, Cp).astype(jnp.float32)
    g2 = g2.reshape(1, Cp).astype(jnp.float32)
    b2 = b2.reshape(1, Cp).astype(jnp.float32)

    WS = _round_up(Wp + 2, _SUB)        # padded row stride (== Wp + 8)
    HWS = H * WS
    PADN = (H + 2) * WS + 2 * _SUB      # flat padded-image scratch length

    if roll_np_like is None:
        roll_shifts = None
    elif roll_np_like:
        roll_shifts = (1, HWS - 1)      # (down: v[p-1], up: v[p+1])
    else:
        roll_shifts = (HWS - 1, 1)

    kernel = _make_resblock_kernel(H, W, Wp, Cp, WS, PADN, roll_shifts)

    # VMEM budget: in/out blocks (double-buffered) + bf16 weights + scratch +
    # roll/matmul temporaries, capped at 3/4 of physical VMEM (v7x = 64 MiB).
    blk = H * Wp * Cp * x.dtype.itemsize
    wgt = 2 * 9 * Cp * Cp * 2
    scr = (PADN + HWS) * Cp * 4
    tmp = 6 * HWS * Cp * 4
    est = 4 * blk + 2 * wgt + scr + tmp
    try:
        phys = int(pltpu.get_tpu_info().vmem_capacity_bytes)
    except Exception:
        phys = 64 * 1024 * 1024         # conservative: safe on every generation
    vmem_limit = int(min(max(2 * est, 32 * 1024 * 1024), (phys * 3) // 4))

    full = lambda a: pl.BlockSpec(a.shape, lambda b: (0,) * a.ndim)

    out = pl.pallas_call(
        kernel,
        out_shape=jax.ShapeDtypeStruct((B, H, Wp, Cp), x.dtype),
        grid_spec=pltpu.PrefetchScalarGridSpec(
            num_scalar_prefetch=0,
            grid=(B,),
            in_specs=[
                pl.BlockSpec((1, H, Wp, Cp), lambda b: (b, 0, 0, 0)),
                full(w1), full(g1), full(b1),
                full(w2), full(g2), full(b2),
            ],
            out_specs=pl.BlockSpec((1, H, Wp, Cp), lambda b: (b, 0, 0, 0)),
            scratch_shapes=[
                pltpu.VMEM((PADN, Cp), jnp.float32),
                pltpu.VMEM((HWS, Cp), jnp.float32),
            ],
        ),
        compiler_params=pltpu.CompilerParams(
            dimension_semantics=("parallel",),
            vmem_limit_bytes=vmem_limit,
        ),
    )(x, w1, g1, b1, w2, g2, b2)
    return out[:, :, :W, :C]


def residual_block_nchw(x_nchw, params):
    """PyTorch-convention entry point: x is NCHW, conv weights (Cout,Cin,3,3)."""
    w1_t, g1, b1, w2_t, g2, b2 = params
    x_nhwc = jnp.transpose(x_nchw, (0, 2, 3, 1))
    w1 = jnp.transpose(w1_t, (2, 3, 1, 0))   # -> (ky, kx, Cin, Cout)
    w2 = jnp.transpose(w2_t, (2, 3, 1, 0))
    out = residual_block_nhwc(x_nhwc, w1, g1, b1, w2, g2, b2)
    return jnp.transpose(out, (0, 3, 1, 2))


def _reference_nchw(x, params):
    """Pure-JAX f32 reference mirroring the PyTorch module."""
    w1, g1, b1, w2, g2, b2 = params
    eps = 1e-5

    def conv(h, w):
        return jax.lax.conv_general_dilated(
            h, w, window_strides=(1, 1), padding=((1, 1), (1, 1)),
            dimension_numbers=("NCHW", "OIHW", "NCHW"))

    def inorm(h, g, b):
        mean = jnp.mean(h, axis=(2, 3), keepdims=True)
        var = jnp.mean((h - mean) ** 2, axis=(2, 3), keepdims=True)
        hn = (h - mean) * jax.lax.rsqrt(var + eps)
        return hn * g[None, :, None, None] + b[None, :, None, None]

    h = jnp.maximum(inorm(conv(x, w1), g1, b1), 0.0)
    h = inorm(conv(h, w2), g2, b2)
    return x + h


if __name__ == "__main__":
    B, C, H, W = 2, 8, 16, 16  # dim_in == dim_out (required by the residual add)
    key = jax.random.PRNGKey(0)
    kx_, kw1, kw2, kg1, kb1, kg2, kb2 = jax.random.split(key, 7)

    x = jax.random.normal(kx_, (B, C, H, W), jnp.float32)
    # PyTorch shapes: Conv2d weight (Cout, Cin, 3, 3); IN affine params (C,).
    w1 = jax.random.normal(kw1, (C, C, 3, 3), jnp.float32) * 0.1
    w2 = jax.random.normal(kw2, (C, C, 3, 3), jnp.float32) * 0.1
    g1 = 1.0 + 0.1 * jax.random.normal(kg1, (C,), jnp.float32)
    b1 = 0.1 * jax.random.normal(kb1, (C,), jnp.float32)
    g2 = 1.0 + 0.1 * jax.random.normal(kg2, (C,), jnp.float32)
    b2 = 0.1 * jax.random.normal(kb2, (C,), jnp.float32)
    params = (w1, g1, b1, w2, g2, b2)

    out = residual_block_nchw(x, params)
    out = jax.block_until_ready(out)

    ref = _reference_nchw(x, params)
    assert out.shape == (B, C, H, W)
    err = jnp.abs(out - ref)
    max_err = float(jnp.max(err))
    mean_err = float(jnp.mean(err))
    # bf16 MXU operands (f32 accumulation / f32 InstanceNorm) vs f32 reference.
    assert max_err < 8e-2, (max_err, mean_err)
    assert mean_err < 2e-2, (max_err, mean_err)
    print("KERNEL_OK")
</pallas_src>

<mosaic_0001>
module attributes {stable_mosaic.version = 11 : i64} {
  func.func @kernel(%arg0: i32, %arg1: memref<1x16x16x128xf32, #tpu.memory_space<vmem>>, %arg2: memref<3x3x128x128xbf16, #tpu.memory_space<vmem>>, %arg3: memref<1x128xf32, #tpu.memory_space<vmem>>, %arg4: memref<1x128xf32, #tpu.memory_space<vmem>>, %arg5: memref<3x3x128x128xbf16, #tpu.memory_space<vmem>>, %arg6: memref<1x128xf32, #tpu.memory_space<vmem>>, %arg7: memref<1x128xf32, #tpu.memory_space<vmem>>, %arg8: memref<1x16x16x128xf32, #tpu.memory_space<vmem>>, %arg9: memref<448x128xf32, #tpu.memory_space<vmem>>, %arg10: memref<384x128xf32, #tpu.memory_space<vmem>>) attributes {dimension_semantics = [#tpu.dimension_semantics<parallel>], iteration_bounds = array<i64: 2>, scalar_prefetch = 0 : i64, scratch_operands = 2 : i64, tpu.core_type = #tpu.core_type<tc>, window_params = [{transform_indices = @transform_0, window_bounds = array<i64: 1, 16, 16, 128>}, {pipeline_mode = #tpu.pipeline_mode<synchronous>, transform_indices = @transform_1, window_bounds = array<i64: 3, 3, 128, 128>}, {pipeline_mode = #tpu.pipeline_mode<synchronous>, transform_indices = @transform_2, window_bounds = array<i64: 1, 128>}, {pipeline_mode = #tpu.pipeline_mode<synchronous>, transform_indices = @transform_3, window_bounds = array<i64: 1, 128>}, {pipeline_mode = #tpu.pipeline_mode<synchronous>, transform_indices = @transform_4, window_bounds = array<i64: 3, 3, 128, 128>}, {pipeline_mode = #tpu.pipeline_mode<synchronous>, transform_indices = @transform_5, window_bounds = array<i64: 1, 128>}, {pipeline_mode = #tpu.pipeline_mode<synchronous>, transform_indices = @transform_6, window_bounds = array<i64: 1, 128>}, {transform_indices = @transform_7, window_bounds = array<i64: 1, 16, 16, 128>}]} {
    %0 = tpu.iota {dimensions = array<i32: 0>} : vector<384x1xi32>
    %1 = arith.sitofp %0 : vector<384x1xi32> to vector<384x1xf32>
    %cst = arith.constant 2.400000e+01 : f32
    %2 = vector.broadcast %cst : f32 to vector<384x1xf32>
    %3 = arith.divf %1, %2 : vector<384x1xf32>
    %4 = math.floor %3 : vector<384x1xf32>
    %cst_0 = arith.constant 2.400000e+01 : f32
    %5 = vector.broadcast %cst_0 : f32 to vector<384x1xf32>
    %6 = arith.mulf %4, %5 : vector<384x1xf32>
    %7 = arith.subf %1, %6 : vector<384x1xf32>
    %cst_1 = arith.constant 1.600000e+01 : f32
    %8 = vector.broadcast %cst_1 : f32 to vector<384x1xf32>
    %9 = arith.cmpf olt, %7, %8 : vector<384x1xf32>
    %10 = arith.extui %9 : vector<384x1xi1> to vector<384x1xi32>
    %11 = arith.sitofp %10 : vector<384x1xi32> to vector<384x1xf32>
    %cst_2 = arith.constant 0.000000e+00 : f32
    %12 = vector.broadcast %cst_2 : f32 to vector<8x128xf32>
    %cst_3 = arith.constant 0.000000e+00 : f32
    %13 = vector.broadcast %cst_3 : f32 to vector<32x128xf32>
    %c0 = arith.constant 0 : index
    %c0_4 = arith.constant 0 : index
    %14 = vector.load %arg9[%c0, %c0_4] : memref<448x128xf32, #tpu.memory_space<vmem>>, vector<32x128xf32>
    tpu.vector_store %arg9[%c0, %c0_4], %13 {strides = array<i32>} : memref<448x128xf32, #tpu.memory_space<vmem>>, vector<32x128xf32>,
    %c0_i32 = arith.constant 0 : i32
    %c16_i32 = arith.constant 16 : i32
    %15 = arith.addi %c0_i32, %c16_i32 : i32
    %c1_i32 = arith.constant 1 : i32
    scf.for %arg11 = %c0_i32 to %15 step %c1_i32  : i32 {
      %c24_i32 = arith.constant 24 : i32
      %181 = arith.muli %arg11, %c24_i32 : i32
      %c32_i32 = arith.constant 32 : i32
      %182 = arith.addi %c32_i32, %181 : i32
      %183 = tpu.assume_multiple %182, 8 : i32
      %c0_158 = arith.constant 0 : index
      %184 = arith.index_cast %arg11 : i32 to index
      %c0_159 = arith.constant 0 : index
      %c0_160 = arith.constant 0 : index
      %185 = vector.load %arg1[%c0_158, %184, %c0_159, %c0_160] : memref<1x16x16x128xf32, #tpu.memory_space<vmem>>, vector<1x1x16x128xf32>
      %186 = vector.shape_cast %185 : vector<1x1x16x128xf32> to vector<16x128xf32>
      %187 = arith.index_cast %183 : i32 to index
      %c0_161 = arith.constant 0 : index
      %188 = vector.load %arg9[%187, %c0_161] : memref<448x128xf32, #tpu.memory_space<vmem>>, vector<16x128xf32>
      tpu.vector_store %arg9[%187, %c0_161], %186 {strides = array<i32>} : memref<448x128xf32, #tpu.memory_space<vmem>>, vector<16x128xf32>,
      %c24_i32_162 = arith.constant 24 : i32
      %189 = arith.muli %arg11, %c24_i32_162 : i32
      %c32_i32_163 = arith.constant 32 : i32
      %190 = arith.addi %c32_i32_163, %189 : i32
      %c16_i32_164 = arith.constant 16 : i32
      %191 = arith.addi %190, %c16_i32_164 : i32
      %192 = tpu.assume_multiple %191, 8 : i32
      %193 = arith.index_cast %192 : i32 to index
      %c0_165 = arith.constant 0 : index
      %194 = vector.load %arg9[%193, %c0_165] : memref<448x128xf32, #tpu.memory_space<vmem>>, vector<8x128xf32>
      tpu.vector_store %arg9[%193, %c0_165], %12 {strides = array<i32>} : memref<448x128xf32, #tpu.memory_space<vmem>>, vector<8x128xf32>,
    }
    %c16_i32_5 = arith.constant 16 : i32
    %cst_6 = arith.constant 0.000000e+00 : f32
    %16 = vector.broadcast %cst_6 : f32 to vector<32x128xf32>
    %c416 = arith.constant 416 : index
    %c0_7 = arith.constant 0 : index
    %17 = vector.load %arg9[%c416, %c0_7] : memref<448x128xf32, #tpu.memory_space<vmem>>, vector<32x128xf32>
    tpu.vector_store %arg9[%c416, %c0_7], %16 {strides = array<i32>} : memref<448x128xf32, #tpu.memory_space<vmem>>, vector<32x128xf32>,
    %c7 = arith.constant 7 : index
    %c0_8 = arith.constant 0 : index
    %18 = vector.load %arg9[%c7, %c0_8] : memref<448x128xf32, #tpu.memory_space<vmem>>, vector<384x128xf32>
    %19 = arith.truncf %18 : vector<384x128xf32> to vector<384x128xbf16>
    %c0_9 = arith.constant 0 : index
    %c0_10 = arith.constant 0 : index
    %c0_11 = arith.constant 0 : index
    %c0_12 = arith.constant 0 : index
    %20 = vector.load %arg2[%c0_9, %c0_10, %c0_11, %c0_12] : memref<3x3x128x128xbf16, #tpu.memory_space<vmem>>, vector<1x1x128x128xbf16>
    %21 = vector.shape_cast %20 : vector<1x1x128x128xbf16> to vector<128x128xbf16>
    %cst_13 = arith.constant dense<0.000000e+00> : vector<384x128xf32>
    %22 = tpu.matmul %19, %21, %cst_13 {dimension_numbers = #tpu.dot_dimension_numbers<[1], [0], [0], [1], [0, 0, 1, 1], [], []>} : vector<384x128xbf16>, vector<128x128xbf16>, vector<384x128xf32> -> vector<384x128xf32>
    %c8 = arith.constant 8 : index
    %c0_14 = arith.constant 0 : index
    %23 = vector.load %arg9[%c8, %c0_14] : memref<448x128xf32, #tpu.memory_space<vmem>>, vector<384x128xf32>
    %24 = arith.truncf %23 : vector<384x128xf32> to vector<384x128xbf16>
    %c0_15 = arith.constant 0 : index
    %c1 = arith.constant 1 : index
    %c0_16 = arith.constant 0 : index
    %c0_17 = arith.constant 0 : index
    %25 = vector.load %arg2[%c0_15, %c1, %c0_16, %c0_17] : memref<3x3x128x128xbf16, #tpu.memory_space<vmem>>, vector<1x1x128x128xbf16>
    %26 = vector.shape_cast %25 : vector<1x1x128x128xbf16> to vector<128x128xbf16>
    %cst_18 = arith.constant dense<0.000000e+00> : vector<384x128xf32>
    %27 = tpu.matmul %24, %26, %cst_18 {dimension_numbers = #tpu.dot_dimension_numbers<[1], [0], [0], [1], [0, 0, 1, 1], [], []>} : vector<384x128xbf16>, vector<128x128xbf16>, vector<384x128xf32> -> vector<384x128xf32>
    %28 = arith.addf %22, %27 : vector<384x128xf32>
    %c9 = arith.constant 9 : index
    %c0_19 = arith.constant 0 : index
    %29 = vector.load %arg9[%c9, %c0_19] : memref<448x128xf32, #tpu.memory_space<vmem>>, vector<384x128xf32>
    %30 = arith.truncf %29 : vector<384x128xf32> to vector<384x128xbf16>
    %c0_20 = arith.constant 0 : index
    %c2 = arith.constant 2 : index
    %c0_21 = arith.constant 0 : index
    %c0_22 = arith.constant 0 : index
    %31 = vector.load %arg2[%c0_20, %c2, %c0_21, %c0_22] : memref<3x3x128x128xbf16, #tpu.memory_space<vmem>>, vector<1x1x128x128xbf16>
    %32 = vector.shape_cast %31 : vector<1x1x128x128xbf16> to vector<128x128xbf16>
    %cst_23 = arith.constant dense<0.000000e+00> : vector<384x128xf32>
    %33 = tpu.matmul %30, %32, %cst_23 {dimension_numbers = #tpu.dot_dimension_numbers<[1], [0], [0], [1], [0, 0, 1, 1], [], []>} : vector<384x128xbf16>, vector<128x128xbf16>, vector<384x128xf32> -> vector<384x128xf32>
    %34 = arith.addf %28, %33 : vector<384x128xf32>
    %c31 = arith.constant 31 : index
    %c0_24 = arith.constant 0 : index
    %35 = vector.load %arg9[%c31, %c0_24] : memref<448x128xf32, #tpu.memory_space<vmem>>, vector<384x128xf32>
    %36 = arith.truncf %35 : vector<384x128xf32> to vector<384x128xbf16>
    %c1_25 = arith.constant 1 : index
    %c0_26 = arith.constant 0 : index
    %c0_27 = arith.constant 0 : index
    %c0_28 = arith.constant 0 : index
    %37 = vector.load %arg2[%c1_25, %c0_26, %c0_27, %c0_28] : memref<3x3x128x128xbf16, #tpu.memory_space<vmem>>, vector<1x1x128x128xbf16>
    %38 = vector.shape_cast %37 : vector<1x1x128x128xbf16> to vector<128x128xbf16>
    %cst_29 = arith.constant dense<0.000000e+00> : vector<384x128xf32>
    %39 = tpu.matmul %36, %38, %cst_29 {dimension_numbers = #tpu.dot_dimension_numbers<[1], [0], [0], [1], [0, 0, 1, 1], [], []>} : vector<384x128xbf16>, vector<128x128xbf16>, vector<384x128xf32> -> vector<384x128xf32>
    %c32 = arith.constant 32 : index
    %c0_30 = arith.constant 0 : index
    %40 = vector.load %arg9[%c32, %c0_30] : memref<448x128xf32, #tpu.memory_space<vmem>>, vector<384x128xf32>
    %41 = arith.truncf %40 : vector<384x128xf32> to vector<384x128xbf16>
    %c1_31 = arith.constant 1 : index
    %c1_32 = arith.constant 1 : index
    %c0_33 = arith.constant 0 : index
    %c0_34 = arith.constant 0 : index
    %42 = vector.load %arg2[%c1_31, %c1_32, %c0_33, %c0_34] : memref<3x3x128x128xbf16, #tpu.memory_space<vmem>>, vector<1x1x128x128xbf16>
    %43 = vector.shape_cast %42 : vector<1x1x128x128xbf16> to vector<128x128xbf16>
    %cst_35 = arith.constant dense<0.000000e+00> : vector<384x128xf32>
    %44 = tpu.matmul %41, %43, %cst_35 {dimension_numbers = #tpu.dot_dimension_numbers<[1], [0], [0], [1], [0, 0, 1, 1], [], []>} : vector<384x128xbf16>, vector<128x128xbf16>, vector<384x128xf32> -> vector<384x128xf32>
    %45 = arith.addf %39, %44 : vector<384x128xf32>
    %c33 = arith.constant 33 : index
    %c0_36 = arith.constant 0 : index
    %46 = vector.load %arg9[%c33, %c0_36] : memref<448x128xf32, #tpu.memory_space<vmem>>, vector<384x128xf32>
    %47 = arith.truncf %46 : vector<384x128xf32> to vector<384x128xbf16>
    %c1_37 = arith.constant 1 : index
    %c2_38 = arith.constant 2 : index
    %c0_39 = arith.constant 0 : index
    %c0_40 = arith.constant 0 : index
    %48 = vector.load %arg2[%c1_37, %c2_38, %c0_39, %c0_40] : memref<3x3x128x128xbf16, #tpu.memory_space<vmem>>, vector<1x1x128x128xbf16>
    %49 = vector.shape_cast %48 : vector<1x1x128x128xbf16> to vector<128x128xbf16>
    %cst_41 = arith.constant dense<0.000000e+00> : vector<384x128xf32>
    %50 = tpu.matmul %47, %49, %cst_41 {dimension_numbers = #tpu.dot_dimension_numbers<[1], [0], [0], [1], [0, 0, 1, 1], [], []>} : vector<384x128xbf16>, vector<128x128xbf16>, vector<384x128xf32> -> vector<384x128xf32>
    %51 = arith.addf %45, %50 : vector<384x128xf32>
    %52 = arith.addf %34, %51 : vector<384x128xf32>
    %c55 = arith.constant 55 : index
    %c0_42 = arith.constant 0 : index
    %53 = vector.load %arg9[%c55, %c0_42] : memref<448x128xf32, #tpu.memory_space<vmem>>, vector<384x128xf32>
    %54 = arith.truncf %53 : vector<384x128xf32> to vector<384x128xbf16>
    %c2_43 = arith.constant 2 : index
    %c0_44 = arith.constant 0 : index
    %c0_45 = arith.constant 0 : index
    %c0_46 = arith.constant 0 : index
    %55 = vector.load %arg2[%c2_43, %c0_44, %c0_45, %c0_46] : memref<3x3x128x128xbf16, #tpu.memory_space<vmem>>, vector<1x1x128x128xbf16>
    %56 = vector.shape_cast %55 : vector<1x1x128x128xbf16> to vector<128x128xbf16>
    %cst_47 = arith.constant dense<0.000000e+00> : vector<384x128xf32>
    %57 = tpu.matmul %54, %56, %cst_47 {dimension_numbers = #tpu.dot_dimension_numbers<[1], [0], [0], [1], [0, 0, 1, 1], [], []>} : vector<384x128xbf16>, vector<128x128xbf16>, vector<384x128xf32> -> vector<384x128xf32>
    %c56 = arith.constant 56 : index
    %c0_48 = arith.constant 0 : index
    %58 = vector.load %arg9[%c56, %c0_48] : memref<448x128xf32, #tpu.memory_space<vmem>>, vector<384x128xf32>
    %59 = arith.truncf %58 : vector<384x128xf32> to vector<384x128xbf16>
    %c2_49 = arith.constant 2 : index
    %c1_50 = arith.constant 1 : index
    %c0_51 = arith.constant 0 : index
    %c0_52 = arith.constant 0 : index
    %60 = vector.load %arg2[%c2_49, %c1_50, %c0_51, %c0_52] : memref<3x3x128x128xbf16, #tpu.memory_space<vmem>>, vector<1x1x128x128xbf16>
    %61 = vector.shape_cast %60 : vector<1x1x128x128xbf16> to vector<128x128xbf16>
    %cst_53 = arith.constant dense<0.000000e+00> : vector<384x128xf32>
    %62 = tpu.matmul %59, %61, %cst_53 {dimension_numbers = #tpu.dot_dimension_numbers<[1], [0], [0], [1], [0, 0, 1, 1], [], []>} : vector<384x128xbf16>, vector<128x128xbf16>, vector<384x128xf32> -> vector<384x128xf32>
    %63 = arith.addf %57, %62 : vector<384x128xf32>
    %c57 = arith.constant 57 : index
    %c0_54 = arith.constant 0 : index
    %64 = vector.load %arg9[%c57, %c0_54] : memref<448x128xf32, #tpu.memory_space<vmem>>, vector<384x128xf32>
    %65 = arith.truncf %64 : vector<384x128xf32> to vector<384x128xbf16>
    %c2_55 = arith.constant 2 : index
    %c2_56 = arith.constant 2 : index
    %c0_57 = arith.constant 0 : index
    %c0_58 = arith.constant 0 : index
    %66 = vector.load %arg2[%c2_55, %c2_56, %c0_57, %c0_58] : memref<3x3x128x128xbf16, #tpu.memory_space<vmem>>, vector<1x1x128x128xbf16>
    %67 = vector.shape_cast %66 : vector<1x1x128x128xbf16> to vector<128x128xbf16>
    %cst_59 = arith.constant dense<0.000000e+00> : vector<384x128xf32>
    %68 = tpu.matmul %65, %67, %cst_59 {dimension_numbers = #tpu.dot_dimension_numbers<[1], [0], [0], [1], [0, 0, 1, 1], [], []>} : vector<384x128xbf16>, vector<128x128xbf16>, vector<384x128xf32> -> vector<384x128xf32>
    %69 = arith.addf %63, %68 : vector<384x128xf32>
    %70 = arith.addf %52, %69 : vector<384x128xf32>
    %c0_60 = arith.constant 0 : index
    %c0_61 = arith.constant 0 : index
    %71 = vector.load %arg10[%c0_60, %c0_61] : memref<384x128xf32, #tpu.memory_space<vmem>>, vector<384x128xf32>
    tpu.vector_store %arg10[%c0_60, %c0_61], %70 {strides = array<i32>} : memref<384x128xf32, #tpu.memory_space<vmem>>, vector<384x128xf32>,
    %c0_62 = arith.constant 0 : index
    %c0_63 = arith.constant 0 : index
    %72 = vector.load %arg10[%c0_62, %c0_63] : memref<384x128xf32, #tpu.memory_space<vmem>>, vector<384x128xf32>
    %73 = vector.broadcast %11 : vector<384x1xf32> to vector<384x128xf32>
    %74 = arith.mulf %72, %73 : vector<384x128xf32>
    %cst_64 = arith.constant dense<0.000000e+00> : vector<128xf32>
    %75 = vector.multi_reduction <add>, %74, %cst_64 [0] : vector<384x128xf32> to vector<128xf32>
    %76 = vector.shape_cast %75 : vector<128xf32> to vector<1x128xf32>
    %77 = arith.mulf %74, %74 : vector<384x128xf32>
    %cst_65 = arith.constant dense<0.000000e+00> : vector<128xf32>
    %78 = vector.multi_reduction <add>, %77, %cst_65 [0] : vector<384x128xf32> to vector<128xf32>
    %79 = vector.shape_cast %78 : vector<128xf32> to vector<1x128xf32>
    %cst_66 = arith.constant 3.906250e-03 : f32
    %80 = vector.broadcast %cst_66 : f32 to vector<1x128xf32>
    %81 = arith.mulf %76, %80 : vector<1x128xf32>
    %cst_67 = arith.constant 3.906250e-03 : f32
    %82 = vector.broadcast %cst_67 : f32 to vector<1x128xf32>
    %83 = arith.mulf %79, %82 : vector<1x128xf32>
    %84 = arith.mulf %81, %81 : vector<1x128xf32>
    %85 = arith.subf %83, %84 : vector<1x128xf32>
    %cst_68 = arith.constant 9.99999974E-6 : f32
    %86 = vector.broadcast %cst_68 : f32 to vector<1x128xf32>
    %87 = arith.addf %85, %86 : vector<1x128xf32>
    %88 = math.rsqrt %87 : vector<1x128xf32>
    %c0_69 = arith.constant 0 : index
    %c0_70 = arith.constant 0 : index
    %89 = vector.load %arg3[%c0_69, %c0_70] : memref<1x128xf32, #tpu.memory_space<vmem>>, vector<1x128xf32>
    %90 = arith.mulf %88, %89 : vector<1x128xf32>
    %c0_71 = arith.constant 0 : index
    %c0_72 = arith.constant 0 : index
    %91 = vector.load %arg4[%c0_71, %c0_72] : memref<1x128xf32, #tpu.memory_space<vmem>>, vector<1x128xf32>
    %92 = arith.mulf %81, %90 : vector<1x128xf32>
    %93 = arith.subf %91, %92 : vector<1x128xf32>
    %c0_73 = arith.constant 0 : index
    %c0_74 = arith.constant 0 : index
    %94 = vector.load %arg10[%c0_73, %c0_74] : memref<384x128xf32, #tpu.memory_space<vmem>>, vector<384x128xf32>
    %95 = vector.broadcast %90 : vector<1x128xf32> to vector<384x128xf32>
    %96 = arith.mulf %94, %95 : vector<384x128xf32>
    %97 = vector.broadcast %93 : vector<1x128xf32> to vector<384x128xf32>
    %98 = arith.addf %96, %97 : vector<384x128xf32>
    %cst_75 = arith.constant 0.000000e+00 : f32
    %99 = vector.broadcast %cst_75 : f32 to vector<384x128xf32>
    %100 = arith.maximumf %98, %99 : vector<384x128xf32>
    %101 = vector.broadcast %11 : vector<384x1xf32> to vector<384x128xf32>
    %102 = arith.mulf %100, %101 : vector<384x128xf32>
    %c32_76 = arith.constant 32 : index
    %c0_77 = arith.constant 0 : index
    %103 = vector.load %arg9[%c32_76, %c0_77] : memref<448x128xf32, #tpu.memory_space<vmem>>, vector<384x128xf32>
    tpu.vector_store %arg9[%c32_76, %c0_77], %102 {strides = array<i32>} : memref<448x128xf32, #tpu.memory_space<vmem>>, vector<384x128xf32>,
    %c7_78 = arith.constant 7 : index
    %c0_79 = arith.constant 0 : index
    %104 = vector.load %arg9[%c7_78, %c0_79] : memref<448x128xf32, #tpu.memory_space<vmem>>, vector<384x128xf32>
    %105 = arith.truncf %104 : vector<384x128xf32> to vector<384x128xbf16>
    %c0_80 = arith.constant 0 : index
    %c0_81 = arith.constant 0 : index
    %c0_82 = arith.constant 0 : index
    %c0_83 = arith.constant 0 : index
    %106 = vector.load %arg5[%c0_80, %c0_81, %c0_82, %c0_83] : memref<3x3x128x128xbf16, #tpu.memory_space<vmem>>, vector<1x1x128x128xbf16>
    %107 = vector.shape_cast %106 : vector<1x1x128x128xbf16> to vector<128x128xbf16>
    %cst_84 = arith.constant dense<0.000000e+00> : vector<384x128xf32>
    %108 = tpu.matmul %105, %107, %cst_84 {dimension_numbers = #tpu.dot_dimension_numbers<[1], [0], [0], [1], [0, 0, 1, 1], [], []>} : vector<384x128xbf16>, vector<128x128xbf16>, vector<384x128xf32> -> vector<384x128xf32>
    %c8_85 = arith.constant 8 : index
    %c0_86 = arith.constant 0 : index
    %109 = vector.load %arg9[%c8_85, %c0_86] : memref<448x128xf32, #tpu.memory_space<vmem>>, vector<384x128xf32>
    %110 = arith.truncf %109 : vector<384x128xf32> to vector<384x128xbf16>
    %c0_87 = arith.constant 0 : index
    %c1_88 = arith.constant 1 : index
    %c0_89 = arith.constant 0 : index
    %c0_90 = arith.constant 0 : index
    %111 = vector.load %arg5[%c0_87, %c1_88, %c0_89, %c0_90] : memref<3x3x128x128xbf16, #tpu.memory_space<vmem>>, vector<1x1x128x128xbf16>
    %112 = vector.shape_cast %111 : vector<1x1x128x128xbf16> to vector<128x128xbf16>
    %cst_91 = arith.constant dense<0.000000e+00> : vector<384x128xf32>
    %113 = tpu.matmul %110, %112, %cst_91 {dimension_numbers = #tpu.dot_dimension_numbers<[1], [0], [0], [1], [0, 0, 1, 1], [], []>} : vector<384x128xbf16>, vector<128x128xbf16>, vector<384x128xf32> -> vector<384x128xf32>
    %114 = arith.addf %108, %113 : vector<384x128xf32>
    %c9_92 = arith.constant 9 : index
    %c0_93 = arith.constant 0 : index
    %115 = vector.load %arg9[%c9_92, %c0_93] : memref<448x128xf32, #tpu.memory_space<vmem>>, vector<384x128xf32>
    %116 = arith.truncf %115 : vector<384x128xf32> to vector<384x128xbf16>
    %c0_94 = arith.constant 0 : index
    %c2_95 = arith.constant 2 : index
    %c0_96 = arith.constant 0 : index
    %c0_97 = arith.constant 0 : index
    %117 = vector.load %arg5[%c0_94, %c2_95, %c0_96, %c0_97] : memref<3x3x128x128xbf16, #tpu.memory_space<vmem>>, vector<1x1x128x128xbf16>
    %118 = vector.shape_cast %117 : vector<1x1x128x128xbf16> to vector<128x128xbf16>
    %cst_98 = arith.constant dense<0.000000e+00> : vector<384x128xf32>
    %119 = tpu.matmul %116, %118, %cst_98 {dimension_numbers = #tpu.dot_dimension_numbers<[1], [0], [0], [1], [0, 0, 1, 1], [], []>} : vector<384x128xbf16>, vector<128x128xbf16>, vector<384x128xf32> -> vector<384x128xf32>
    %120 = arith.addf %114, %119 : vector<384x128xf32>
    %c31_99 = arith.constant 31 : index
    %c0_100 = arith.constant 0 : index
    %121 = vector.load %arg9[%c31_99, %c0_100] : memref<448x128xf32, #tpu.memory_space<vmem>>, vector<384x128xf32>
    %122 = arith.truncf %121 : vector<384x128xf32> to vector<384x128xbf16>
    %c1_101 = arith.constant 1 : index
    %c0_102 = arith.constant 0 : index
    %c0_103 = arith.constant 0 : index
    %c0_104 = arith.constant 0 : index
    %123 = vector.load %arg5[%c1_101, %c0_102, %c0_103, %c0_104] : memref<3x3x128x128xbf16, #tpu.memory_space<vmem>>, vector<1x1x128x128xbf16>
    %124 = vector.shape_cast %123 : vector<1x1x128x128xbf16> to vector<128x128xbf16>
    %cst_105 = arith.constant dense<0.000000e+00> : vector<384x128xf32>
    %125 = tpu.matmul %122, %124, %cst_105 {dimension_numbers = #tpu.dot_dimension_numbers<[1], [0], [0], [1], [0, 0, 1, 1], [], []>} : vector<384x128xbf16>, vector<128x128xbf16>, vector<384x128xf32> -> vector<384x128xf32>
    %c32_106 = arith.constant 32 : index
    %c0_107 = arith.constant 0 : index
    %126 = vector.load %arg9[%c32_106, %c0_107] : memref<448x128xf32, #tpu.memory_space<vmem>>, vector<384x128xf32>
    %127 = arith.truncf %126 : vector<384x128xf32> to vector<384x128xbf16>
    %c1_108 = arith.constant 1 : index
    %c1_109 = arith.constant 1 : index
    %c0_110 = arith.constant 0 : index
    %c0_111 = arith.constant 0 : index
    %128 = vector.load %arg5[%c1_108, %c1_109, %c0_110, %c0_111] : memref<3x3x128x128xbf16, #tpu.memory_space<vmem>>, vector<1x1x128x128xbf16>
    %129 = vector.shape_cast %128 : vector<1x1x128x128xbf16> to vector<128x128xbf16>
    %cst_112 = arith.constant dense<0.000000e+00> : vector<384x128xf32>
    %130 = tpu.matmul %127, %129, %cst_112 {dimension_numbers = #tpu.dot_dimension_numbers<[1], [0], [0], [1], [0, 0, 1, 1], [], []>} : vector<384x128xbf16>, vector<128x128xbf16>, vector<384x128xf32> -> vector<384x128xf32>
    %131 = arith.addf %125, %130 : vector<384x128xf32>
    %c33_113 = arith.constant 33 : index
    %c0_114 = arith.constant 0 : index
    %132 = vector.load %arg9[%c33_113, %c0_114] : memref<448x128xf32, #tpu.memory_space<vmem>>, vector<384x128xf32>
    %133 = arith.truncf %132 : vector<384x128xf32> to vector<384x128xbf16>
    %c1_115 = arith.constant 1 : index
    %c2_116 = arith.constant 2 : index
    %c0_117 = arith.constant 0 : index
    %c0_118 = arith.constant 0 : index
    %134 = vector.load %arg5[%c1_115, %c2_116, %c0_117, %c0_118] : memref<3x3x128x128xbf16, #tpu.memory_space<vmem>>, vector<1x1x128x128xbf16>
    %135 = vector.shape_cast %134 : vector<1x1x128x128xbf16> to vector<128x128xbf16>
    %cst_119 = arith.constant dense<0.000000e+00> : vector<384x128xf32>
    %136 = tpu.matmul %133, %135, %cst_119 {dimension_numbers = #tpu.dot_dimension_numbers<[1], [0], [0], [1], [0, 0, 1, 1], [], []>} : vector<384x128xbf16>, vector<128x128xbf16>, vector<384x128xf32> -> vector<384x128xf32>
    %137 = arith.addf %131, %136 : vector<384x128xf32>
    %138 = arith.addf %120, %137 : vector<384x128xf32>
    %c55_120 = arith.constant 55 : index
    %c0_121 = arith.constant 0 : index
    %139 = vector.load %arg9[%c55_120, %c0_121] : memref<448x128xf32, #tpu.memory_space<vmem>>, vector<384x128xf32>
    %140 = arith.truncf %139 : vector<384x128xf32> to vector<384x128xbf16>
    %c2_122 = arith.constant 2 : index
    %c0_123 = arith.constant 0 : index
    %c0_124 = arith.constant 0 : index
    %c0_125 = arith.constant 0 : index
    %141 = vector.load %arg5[%c2_122, %c0_123, %c0_124, %c0_125] : memref<3x3x128x128xbf16, #tpu.memory_space<vmem>>, vector<1x1x128x128xbf16>
    %142 = vector.shape_cast %141 : vector<1x1x128x128xbf16> to vector<128x128xbf16>
    %cst_126 = arith.constant dense<0.000000e+00> : vector<384x128xf32>
    %143 = tpu.matmul %140, %142, %cst_126 {dimension_numbers = #tpu.dot_dimension_numbers<[1], [0], [0], [1], [0, 0, 1, 1], [], []>} : vector<384x128xbf16>, vector<128x128xbf16>, vector<384x128xf32> -> vector<384x128xf32>
    %c56_127 = arith.constant 56 : index
    %c0_128 = arith.constant 0 : index
    %144 = vector.load %arg9[%c56_127, %c0_128] : memref<448x128xf32, #tpu.memory_space<vmem>>, vector<384x128xf32>
    %145 = arith.truncf %144 : vector<384x128xf32> to vector<384x128xbf16>
    %c2_129 = arith.constant 2 : index
    %c1_130 = arith.constant 1 : index
    %c0_131 = arith.constant 0 : index
    %c0_132 = arith.constant 0 : index
    %146 = vector.load %arg5[%c2_129, %c1_130, %c0_131, %c0_132] : memref<3x3x128x128xbf16, #tpu.memory_space<vmem>>, vector<1x1x128x128xbf16>
    %147 = vector.shape_cast %146 : vector<1x1x128x128xbf16> to vector<128x128xbf16>
    %cst_133 = arith.constant dense<0.000000e+00> : vector<384x128xf32>
    %148 = tpu.matmul %145, %147, %cst_133 {dimension_numbers = #tpu.dot_dimension_numbers<[1], [0], [0], [1], [0, 0, 1, 1], [], []>} : vector<384x128xbf16>, vector<128x128xbf16>, vector<384x128xf32> -> vector<384x128xf32>
    %149 = arith.addf %143, %148 : vector<384x128xf32>
    %c57_134 = arith.constant 57 : index
    %c0_135 = arith.constant 0 : index
    %150 = vector.load %arg9[%c57_134, %c0_135] : memref<448x128xf32, #tpu.memory_space<vmem>>, vector<384x128xf32>
    %151 = arith.truncf %150 : vector<384x128xf32> to vector<384x128xbf16>
    %c2_136 = arith.constant 2 : index
    %c2_137 = arith.constant 2 : index
    %c0_138 = arith.constant 0 : index
    %c0_139 = arith.constant 0 : index
    %152 = vector.load %arg5[%c2_136, %c2_137, %c0_138, %c0_139] : memref<3x3x128x128xbf16, #tpu.memory_space<vmem>>, vector<1x1x128x128xbf16>
    %153 = vector.shape_cast %152 : vector<1x1x128x128xbf16> to vector<128x128xbf16>
    %cst_140 = arith.constant dense<0.000000e+00> : vector<384x128xf32>
    %154 = tpu.matmul %151, %153, %cst_140 {dimension_numbers = #tpu.dot_dimension_numbers<[1], [0], [0], [1], [0, 0, 1, 1], [], []>} : vector<384x128xbf16>, vector<128x128xbf16>, vector<384x128xf32> -> vector<384x128xf32>
    %155 = arith.addf %149, %154 : vector<384x128xf32>
    %156 = arith.addf %138, %155 : vector<384x128xf32>
    %c0_141 = arith.constant 0 : index
    %c0_142 = arith.constant 0 : index
    %157 = vector.load %arg10[%c0_141, %c0_142] : memref<384x128xf32, #tpu.memory_space<vmem>>, vector<384x128xf32>
    tpu.vector_store %arg10[%c0_141, %c0_142], %156 {strides = array<i32>} : memref<384x128xf32, #tpu.memory_space<vmem>>, vector<384x128xf32>,
    %c0_143 = arith.constant 0 : index
    %c0_144 = arith.constant 0 : index
    %158 = vector.load %arg10[%c0_143, %c0_144] : memref<384x128xf32, #tpu.memory_space<vmem>>, vector<384x128xf32>
    %159 = vector.broadcast %11 : vector<384x1xf32> to vector<384x128xf32>
    %160 = arith.mulf %158, %159 : vector<384x128xf32>
    %cst_145 = arith.constant dense<0.000000e+00> : vector<128xf32>
    %161 = vector.multi_reduction <add>, %160, %cst_145 [0] : vector<384x128xf32> to vector<128xf32>
    %162 = vector.shape_cast %161 : vector<128xf32> to vector<1x128xf32>
    %163 = arith.mulf %160, %160 : vector<384x128xf32>
    %cst_146 = arith.constant dense<0.000000e+00> : vector<128xf32>
    %164 = vector.multi_reduction <add>, %163, %cst_146 [0] : vector<384x128xf32> to vector<128xf32>
    %165 = vector.shape_cast %164 : vector<128xf32> to vector<1x128xf32>
    %cst_147 = arith.constant 3.906250e-03 : f32
    %166 = vector.broadcast %cst_147 : f32 to vector<1x128xf32>
    %167 = arith.mulf %162, %166 : vector<1x128xf32>
    %cst_148 = arith.constant 3.906250e-03 : f32
    %168 = vector.broadcast %cst_148 : f32 to vector<1x128xf32>
    %169 = arith.mulf %165, %168 : vector<1x128xf32>
    %170 = arith.mulf %167, %167 : vector<1x128xf32>
    %171 = arith.subf %169, %170 : vector<1x128xf32>
    %cst_149 = arith.constant 9.99999974E-6 : f32
    %172 = vector.broadcast %cst_149 : f32 to vector<1x128xf32>
    %173 = arith.addf %171, %172 : vector<1x128xf32>
    %174 = math.rsqrt %173 : vector<1x128xf32>
    %c0_150 = arith.constant 0 : index
    %c0_151 = arith.constant 0 : index
    %175 = vector.load %arg6[%c0_150, %c0_151] : memref<1x128xf32, #tpu.memory_space<vmem>>, vector<1x128xf32>
    %176 = arith.mulf %174, %175 : vector<1x128xf32>
    %c0_152 = arith.constant 0 : index
    %c0_153 = arith.constant 0 : index
    %177 = vector.load %arg7[%c0_152, %c0_153] : memref<1x128xf32, #tpu.memory_space<vmem>>, vector<1x128xf32>
    %178 = arith.mulf %167, %176 : vector<1x128xf32>
    %179 = arith.subf %177, %178 : vector<1x128xf32>
    %c0_i32_154 = arith.constant 0 : i32
    %c16_i32_155 = arith.constant 16 : i32
    %180 = arith.addi %c0_i32_154, %c16_i32_155 : i32
    %c1_i32_156 = arith.constant 1 : i32
    scf.for %arg11 = %c0_i32_154 to %180 step %c1_i32_156  : i32 {
      %c24_i32 = arith.constant 24 : i32
      %181 = arith.muli %arg11, %c24_i32 : i32
      %182 = tpu.assume_multiple %181, 8 : i32
      %183 = arith.index_cast %182 : i32 to index
      %c0_158 = arith.constant 0 : index
      %184 = vector.load %arg10[%183, %c0_158] : memref<384x128xf32, #tpu.memory_space<vmem>>, vector<16x128xf32>
      %185 = vector.broadcast %176 : vector<1x128xf32> to vector<16x128xf32>
      %186 = arith.mulf %184, %185 : vector<16x128xf32>
      %187 = vector.broadcast %179 : vector<1x128xf32> to vector<16x128xf32>
      %188 = arith.addf %186, %187 : vector<16x128xf32>
      %c0_159 = arith.constant 0 : index
      %189 = arith.index_cast %arg11 : i32 to index
      %c0_160 = arith.constant 0 : index
      %c0_161 = arith.constant 0 : index
      %190 = vector.load %arg1[%c0_159, %189, %c0_160, %c0_161] : memref<1x16x16x128xf32, #tpu.memory_space<vmem>>, vector<1x1x16x128xf32>
      %191 = vector.shape_cast %190 : vector<1x1x16x128xf32> to vector<16x128xf32>
      %192 = arith.addf %191, %188 : vector<16x128xf32>
      %c0_162 = arith.constant 0 : index
      %193 = arith.index_cast %arg11 : i32 to index
      %c0_163 = arith.constant 0 : index
      %c0_164 = arith.constant 0 : index
      %194 = vector.load %arg8[%c0_162, %193, %c0_163, %c0_164] : memref<1x16x16x128xf32, #tpu.memory_space<vmem>>, vector<1x1x16x128xf32>
      %195 = vector.shape_cast %194 : vector<1x1x16x128xf32> to vector<16x128xf32>
      %196 = vector.shape_cast %192 : vector<16x128xf32> to vector<1x1x16x128xf32>
      tpu.vector_store %arg8[%c0_162, %193, %c0_163, %c0_164], %196 {strides = array<i32>} : memref<1x16x16x128xf32, #tpu.memory_space<vmem>>, vector<1x1x16x128xf32>,
    }
    %c16_i32_157 = arith.constant 16 : i32
    return
  }
  func.func @transform_0(%arg0: i32) -> (i32, i32, i32, i32) {
    %c0_i32 = arith.constant 0 : i32
    %c0_i32_0 = arith.constant 0 : i32
    %c0_i32_1 = arith.constant 0 : i32
    %c0_i32_2 = arith.constant 0 : i32
    return %arg0, %c0_i32, %c0_i32_0, %c0_i32_1 : i32, i32, i32, i32
  }
  func.func @transform_1(%arg0: i32) -> (i32, i32, i32, i32) {
    %c0_i32 = arith.constant 0 : i32
    %c0_i32_0 = arith.constant 0 : i32
    %c0_i32_1 = arith.constant 0 : i32
    %c0_i32_2 = arith.constant 0 : i32
    %c0_i32_3 = arith.constant 0 : i32
    return %c0_i32, %c0_i32_0, %c0_i32_1, %c0_i32_2 : i32, i32, i32, i32
  }
  func.func @transform_2(%arg0: i32) -> (i32, i32) {
    %c0_i32 = arith.constant 0 : i32
    %c0_i32_0 = arith.constant 0 : i32
    %c0_i32_1 = arith.constant 0 : i32
    return %c0_i32, %c0_i32_0 : i32, i32
  }
  func.func @transform_3(%arg0: i32) -> (i32, i32) {
    %c0_i32 = arith.constant 0 : i32
    %c0_i32_0 = arith.constant 0 : i32
    %c0_i32_1 = arith.constant 0 : i32
    return %c0_i32, %c0_i32_0 : i32, i32
  }
  func.func @transform_4(%arg0: i32) -> (i32, i32, i32, i32) {
    %c0_i32 = arith.constant 0 : i32
    %c0_i32_0 = arith.constant 0 : i32
    %c0_i32_1 = arith.constant 0 : i32
    %c0_i32_2 = arith.constant 0 : i32
    %c0_i32_3 = arith.constant 0 : i32
    return %c0_i32, %c0_i32_0, %c0_i32_1, %c0_i32_2 : i32, i32, i32, i32
  }
  func.func @transform_5(%arg0: i32) -> (i32, i32) {
    %c0_i32 = arith.constant 0 : i32
    %c0_i32_0 = arith.constant 0 : i32
    %c0_i32_1 = arith.constant 0 : i32
    return %c0_i32, %c0_i32_0 : i32, i32
  }
  func.func @transform_6(%arg0: i32) -> (i32, i32) {
    %c0_i32 = arith.constant 0 : i32
    %c0_i32_0 = arith.constant 0 : i32
    %c0_i32_1 = arith.constant 0 : i32
    return %c0_i32, %c0_i32_0 : i32, i32
  }
  func.func @transform_7(%arg0: i32) -> (i32, i32, i32, i32) {
    %c0_i32 = arith.constant 0 : i32
    %c0_i32_0 = arith.constant 0 : i32
    %c0_i32_1 = arith.constant 0 : i32
    %c0_i32_2 = arith.constant 0 : i32
    return %arg0, %c0_i32, %c0_i32_0, %c0_i32_1 : i32, i32, i32, i32
  }
}

</mosaic_0001>

<llo_original>
// kernel: _residual_block_nhwc_jit.1
$region0: #{_residual_block_nhwc_jit.1}
  #allocation0 [shape = 'u32[]', space=smem, size = 0x4, offset = 0x4, fixed_abs, tag = 'smem constant byte address 0x4 - core index']
  #allocation1 [shape = 'u32[144,128]{1,0:T(1,128)}', space=vmem, size = 0x12000, scoped, tag = 'internal scratch']
  #allocation2 [shape = 'f32[448,128]{1,0:T(8,128)}', space=vmem, size = 0x38000, scoped, tag = 'scratch operand']
  #allocation3 [shape = 'f32[384,128]{1,0:T(8,128)}', space=vmem, size = 0x30000, scoped, tag = 'scratch operand']
  %s0 = inlined_call_operand.vmem [shape: f32[2,16,16,128], index: 0, kind: input, shape index: {}]
  %s1 = inlined_call_operand.vmem [shape: bf16[3,3,128,128], index: 1, kind: input, shape index: {}]
  %s2 = inlined_call_operand.vmem [shape: f32[1,128], index: 2, kind: input, shape index: {}]
  %s3 = inlined_call_operand.vmem [shape: f32[1,128], index: 3, kind: input, shape index: {}]
  %s4 = inlined_call_operand.vmem [shape: bf16[3,3,128,128], index: 4, kind: input, shape index: {}]
  %s5 = inlined_call_operand.vmem [shape: f32[1,128], index: 5, kind: input, shape index: {}]
  %s6 = inlined_call_operand.vmem [shape: f32[1,128], index: 6, kind: input, shape index: {}]
  %s7 = inlined_call_operand.vmem [shape: f32[2,16,16,128], index: 7, kind: output, shape index: {}]
  %s8 = sld [smem:[#allocation0]]
  $region75: #{_residual_block_nhwc_jit.1} parent=0
    _
  %s10 = ssub.s32 1, %s8
  %s11 = scalar_select 0, %s10, %s8
  loop: start=0, step=1, limit=4
  $region2: #{_residual_block_nhwc_jit.1} parent=0 // loop_pre_header
    _
  $region3: #{_residual_block_nhwc_jit.1} parent=0 // loop_header
    %s13 = sphi 0, %s17
    %p14 = scmp.ge.s32.totalorder %s13, 4
    %s23 = sphi 0, %s25
    %s26 = sphi 0, %s23
    %s27 = sphi 0, %s26
    %s43 = sphi 0, %s27
    %s47 = sphi 0, %s47
    %s49 = sphi 0, %s47
    %s50 = sphi 0, %s49
    %s64 = sphi 0, %s50
    %s68 = sphi 0, %s68
    %s70 = sphi 0, %s68
    %s71 = sphi 0, %s70
    %s85 = sphi 0, %s71
    %s89 = sphi 0, %s89
    %s91 = sphi 0, %s89
    %s92 = sphi 0, %s91
    %s106 = sphi 0, %s92
    %s110 = sphi 0, %s110
    %s112 = sphi 0, %s110
    %s113 = sphi 0, %s112
    %s127 = sphi 0, %s113
    %s131 = sphi 0, %s131
    %s133 = sphi 0, %s131
    %s134 = sphi 0, %s133
    %s148 = sphi 0, %s134
    %s152 = sphi 0, %s152
    %s154 = sphi 0, %s152
    %s155 = sphi 0, %s154
    %s169 = sphi 0, %s155
    %s175 = sphi 0, %s177
    %s178 = sphi 0, %s175
    %s179 = sphi 0, %s178
    %s195 = sphi 0, %s179
  $region4: #{_residual_block_nhwc_jit.1} parent=0 // loop_header_branch
    %16 = sbr.rel (%p14) target = $region8
  $region5: #{_residual_block_nhwc_jit.1} parent=0 // loop_body
    %s18 = ssub.s32 %s13, 1
    %s19 = ssub.s32 %s13, 2
    %s20 = sadd.s32 %s13, 1
    %s21 = ssub.s32 %s13, %s20
    %p22 = scmp.eq.s32.totalorder %s21, 0
    %s24 = sadd.s32 %s23, 1
    %s25 = scalar_select %p22, %s23, %s24
    %p28 = pneg %p22
    %p29 = scmp.eq.s32.totalorder %s13, 1
    %p30 = por %p28, %p29
    %p31 = scmp.ne.s32.totalorder %s23, %s26
    %p32 = scmp.eq.s32.totalorder %s13, 0
    %p33 = por %p31, %p32
    %p34 = scmp.ne.s32.totalorder %s23, %s26
    %p35 = scmp.eq.s32.totalorder %s18, 1
    %p36 = por %p34, %p35
    %p37 = scmp.ne.s32.totalorder %s26, %s27
    %p38 = scmp.eq.s32.totalorder %s18, 0
    %p39 = por %p37, %p38
    %p40 = scmp.ne.s32.totalorder %s26, %s27
    %p41 = scmp.eq.s32.totalorder %s19, 1
    %p42 = por %p40, %p41
    %p44 = scmp.ne.s32.totalorder %s27, %s43
    %p45 = scmp.eq.s32.totalorder %s19, 0
    %p46 = por %p44, %p45
    %s48 = sadd.s32 %s47, 1
    %p51 = scmp.eq.s32.totalorder %s13, 1
    %p52 = scmp.ne.s32.totalorder %s47, %s49
    %p53 = scmp.eq.s32.totalorder %s13, 0
    %p54 = por %p52, %p53
    %p55 = scmp.ne.s32.totalorder %s47, %s49
    %p56 = scmp.eq.s32.totalorder %s18, 1
    %p57 = por %p55, %p56
    %p58 = scmp.ne.s32.totalorder %s49, %s50
    %p59 = scmp.eq.s32.totalorder %s18, 0
    %p60 = por %p58, %p59
    %p61 = scmp.ne.s32.totalorder %s49, %s50
    %p62 = scmp.eq.s32.totalorder %s19, 1
    %p63 = por %p61, %p62
    %p65 = scmp.ne.s32.totalorder %s50, %s64
    %p66 = scmp.eq.s32.totalorder %s19, 0
    %p67 = por %p65, %p66
    %s69 = sadd.s32 %s68, 1
    %p72 = scmp.eq.s32.totalorder %s13, 1
    %p73 = scmp.ne.s32.totalorder %s68, %s70
    %p74 = scmp.eq.s32.totalorder %s13, 0
    %p75 = por %p73, %p74
    %p76 = scmp.ne.s32.totalorder %s68, %s70
    %p77 = scmp.eq.s32.totalorder %s18, 1
    %p78 = por %p76, %p77
    %p79 = scmp.ne.s32.totalorder %s70, %s71
    %p80 = scmp.eq.s32.totalorder %s18, 0
    %p81 = por %p79, %p80
    %p82 = scmp.ne.s32.totalorder %s70, %s71
    %p83 = scmp.eq.s32.totalorder %s19, 1
    %p84 = por %p82, %p83
    %p86 = scmp.ne.s32.totalorder %s71, %s85
    %p87 = scmp.eq.s32.totalorder %s19, 0
    %p88 = por %p86, %p87
    %s90 = sadd.s32 %s89, 1
    %p93 = scmp.eq.s32.totalorder %s13, 1
    %p94 = scmp.ne.s32.totalorder %s89, %s91
    %p95 = scmp.eq.s32.totalorder %s13, 0
    %p96 = por %p94, %p95
    %p97 = scmp.ne.s32.totalorder %s89, %s91
    %p98 = scmp.eq.s32.totalorder %s18, 1
    %p99 = por %p97, %p98
    %p100 = scmp.ne.s32.totalorder %s91, %s92
    %p101 = scmp.eq.s32.totalorder %s18, 0
    %p102 = por %p100, %p101
    %p103 = scmp.ne.s32.totalorder %s91, %s92
    %p104 = scmp.eq.s32.totalorder %s19, 1
    %p105 = por %p103, %p104
    %p107 = scmp.ne.s32.totalorder %s92, %s106
    %p108 = scmp.eq.s32.totalorder %s19, 0
    %p109 = por %p107, %p108
    %s111 = sadd.s32 %s110, 1
    %p114 = scmp.eq.s32.totalorder %s13, 1
    %p115 = scmp.ne.s32.totalorder %s110, %s112
    %p116 = scmp.eq.s32.totalorder %s13, 0
    %p117 = por %p115, %p116
    %p118 = scmp.ne.s32.totalorder %s110, %s112
    %p119 = scmp.eq.s32.totalorder %s18, 1
    %p120 = por %p118, %p119
    %p121 = scmp.ne.s32.totalorder %s112, %s113
    %p122 = scmp.eq.s32.totalorder %s18, 0
    %p123 = por %p121, %p122
    %p124 = scmp.ne.s32.totalorder %s112, %s113
    %p125 = scmp.eq.s32.totalorder %s19, 1
    %p126 = por %p124, %p125
    %p128 = scmp.ne.s32.totalorder %s113, %s127
    %p129 = scmp.eq.s32.totalorder %s19, 0
    %p130 = por %p128, %p129
    %s132 = sadd.s32 %s131, 1
    %p135 = scmp.eq.s32.totalorder %s13, 1
    %p136 = scmp.ne.s32.totalorder %s131, %s133
    %p137 = scmp.eq.s32.totalorder %s13, 0
    %p138 = por %p136, %p137
    %p139 = scmp.ne.s32.totalorder %s131, %s133
    %p140 = scmp.eq.s32.totalorder %s18, 1
    %p141 = por %p139, %p140
    %p142 = scmp.ne.s32.totalorder %s133, %s134
    %p143 = scmp.eq.s32.totalorder %s18, 0
    %p144 = por %p142, %p143
    %p145 = scmp.ne.s32.totalorder %s133, %s134
    %p146 = scmp.eq.s32.totalorder %s19, 1
    %p147 = por %p145, %p146
    %p149 = scmp.ne.s32.totalorder %s134, %s148
    %p150 = scmp.eq.s32.totalorder %s19, 0
    %p151 = por %p149, %p150
    %s153 = sadd.s32 %s152, 1
    %p156 = scmp.eq.s32.totalorder %s13, 1
    %p157 = scmp.ne.s32.totalorder %s152, %s154
    %p158 = scmp.eq.s32.totalorder %s13, 0
    %p159 = por %p157, %p158
    %p160 = scmp.ne.s32.totalorder %s152, %s154
    %p161 = scmp.eq.s32.totalorder %s18, 1
    %p162 = por %p160, %p161
    %p163 = scmp.ne.s32.totalorder %s154, %s155
    %p164 = scmp.eq.s32.totalorder %s18, 0
    %p165 = por %p163, %p164
    %p166 = scmp.ne.s32.totalorder %s154, %s155
    %p167 = scmp.eq.s32.totalorder %s19, 1
    %p168 = por %p166, %p167
    %p170 = scmp.ne.s32.totalorder %s155, %s169
    %p171 = scmp.eq.s32.totalorder %s19, 0
    %p172 = por %p170, %p171
    %s173 = ssub.s32 %s13, %s20
    %p174 = scmp.eq.s32.totalorder %s173, 0
    %s176 = sadd.s32 %s175, 1
    %s177 = scalar_select %p174, %s175, %s176
    %p180 = pneg %p174
    %p181 = scmp.eq.s32.totalorder %s13, 1
    %p182 = por %p180, %p181
    %p183 = scmp.ne.s32.totalorder %s175, %s178
    %p184 = scmp.eq.s32.totalorder %s13, 0
    %p185 = por %p183, %p184
    %p186 = scmp.ne.s32.totalorder %s175, %s178
    %p187 = scmp.eq.s32.totalorder %s18, 1
    %p188 = por %p186, %p187
    %p189 = scmp.ne.s32.totalorder %s178, %s179
    %p190 = scmp.eq.s32.totalorder %s18, 0
    %p191 = por %p189, %p190
    %p192 = scmp.ne.s32.totalorder %s178, %s179
    %p193 = scmp.eq.s32.totalorder %s19, 1
    %p194 = por %p192, %p193
    %p196 = scmp.ne.s32.totalorder %s179, %s195
    %p197 = scmp.eq.s32.totalorder %s19, 0
    %p198 = por %p196, %p197
    %p199 = scmp.le.s32.totalorder 1, %s13
    %p200 = scmp.lt.s32.totalorder %s13, 3
    %p201 = pnand %p199, %p200
    %p202 = pneg %p201
    // Predicated region
    $region9: #{_residual_block_nhwc_jit.1} parent=5 // pred_check
      _
    $region10: #{_residual_block_nhwc_jit.1} parent=5 // pred_check_branch
      %204 = sbr.rel (%p201) target = $region12
    $region11: #{_residual_block_nhwc_jit.1} parent=5 // pred_region
      %s205 = ssub.s32 %s13, 1
      // Predicated region
      $region13: #{_residual_block_nhwc_jit.1} parent=11 // pred_check
        %p206 = pneg %p60
      $region14: #{_residual_block_nhwc_jit.1} parent=11 // pred_check_branch
        %208 = sbr.rel (%p206) target = $region16
      $region15: #{_residual_block_nhwc_jit.1} parent=11 // pred_region
        _
      $region16: #{_residual_block_nhwc_jit.1} parent=11 // pred_fallthru
        _
      // Predicated region
      $region17: #{_residual_block_nhwc_jit.1} parent=11 // pred_check
        %p209 = pneg %p81
      $region18: #{_residual_block_nhwc_jit.1} parent=11 // pred_check_branch
        %211 = sbr.rel (%p209) target = $region20
      $region19: #{_residual_block_nhwc_jit.1} parent=11 // pred_region
        _
      $region20: #{_residual_block_nhwc_jit.1} parent=11 // pred_fallthru
        _
      // Predicated region
      $region21: #{_residual_block_nhwc_jit.1} parent=11 // pred_check
        %p212 = pneg %p102
      $region22: #{_residual_block_nhwc_jit.1} parent=11 // pred_check_branch
        %214 = sbr.rel (%p212) target = $region24
      $region23: #{_residual_block_nhwc_jit.1} parent=11 // pred_region
        _
      $region24: #{_residual_block_nhwc_jit.1} parent=11 // pred_fallthru
        _
      // Predicated region
      $region25: #{_residual_block_nhwc_jit.1} parent=11 // pred_check
        %p215 = pneg %p123
      $region26: #{_residual_block_nhwc_jit.1} parent=11 // pred_check_branch
        %217 = sbr.rel (%p215) target = $region28
      $region27: #{_residual_block_nhwc_jit.1} parent=11 // pred_region
        _
      $region28: #{_residual_block_nhwc_jit.1} parent=11 // pred_fallthru
        _
      // Predicated region
      $region29: #{_residual_block_nhwc_jit.1} parent=11 // pred_check
        %p218 = pneg %p144
      $region30: #{_residual_block_nhwc_jit.1} parent=11 // pred_check_branch
        %220 = sbr.rel (%p218) target = $region32
      $region31: #{_residual_block_nhwc_jit.1} parent=11 // pred_region
        _
      $region32: #{_residual_block_nhwc_jit.1} parent=11 // pred_fallthru
        _
      // Predicated region
      $region33: #{_residual_block_nhwc_jit.1} parent=11 // pred_check
        %p221 = pneg %p165
      $region34: #{_residual_block_nhwc_jit.1} parent=11 // pred_check_branch
        %223 = sbr.rel (%p221) target = $region36
      $region35: #{_residual_block_nhwc_jit.1} parent=11 // pred_region
        _
      $region36: #{_residual_block_nhwc_jit.1} parent=11 // pred_fallthru
        _
    $region12: #{_residual_block_nhwc_jit.1} parent=5 // pred_fallthru
      _
    %p224 = scmp.lt.s32.totalorder %s13, 2
    // Predicated region
    $region37: #{_residual_block_nhwc_jit.1} parent=5 // pred_check
      %p225 = pneg %p224
    $region38: #{_residual_block_nhwc_jit.1} parent=5 // pred_check_branch
      %227 = sbr.rel (%p225) target = $region40
    $region39: #{_residual_block_nhwc_jit.1} parent=5 // pred_region
      // Predicated region
      $region41: #{_residual_block_nhwc_jit.1} parent=39 // pred_check
        %p228 = pneg %p33
      $region42: #{_residual_block_nhwc_jit.1} parent=39 // pred_check_branch
        %230 = sbr.rel (%p228) target = $region44
      $region43: #{_residual_block_nhwc_jit.1} parent=39 // pred_region
        %p231 = scmp.lt.s32.totalorder %s13, 1
        %s232 = scalar_select %p231, %s13, 1
        %s233 = smul.addr %s232, 32
        %s234 = smul.addr %s233, 8
        %s235 = scalar_lea.vmem %s0, %s234
      $region44: #{_residual_block_nhwc_jit.1} parent=39 // pred_fallthru
        _
    $region40: #{_residual_block_nhwc_jit.1} parent=5 // pred_fallthru
      _
    %p236 = scmp.le.s32.totalorder 1, %s13
    %p237 = scmp.lt.s32.totalorder %s13, 3
    %p238 = pnand %p236, %p237
    %p239 = pneg %p238
    // Predicated region
    $region45: #{_residual_block_nhwc_jit.1} parent=5 // pred_check
      _
    $region46: #{_residual_block_nhwc_jit.1} parent=5 // pred_check_branch
      %241 = sbr.rel (%p238) target = $region48
    $region47: #{_residual_block_nhwc_jit.1} parent=5 // pred_region
      %s242 = ssub.s32 %s13, 1
      %p243 = scmp.lt.s32.totalorder %s18, 1
      %s244 = scalar_select %p243, %s18, 1
      %s245 = smul.addr %s244, 32
      %s246 = smul.addr %s245, 8
      %s247 = scalar_lea.vmem %s0, %s246
      %p248 = pneg %p39
      %p249 = pneg %p36
      %p250 = pneg %p60
      %p251 = pneg %p57
      %p252 = pneg %p81
      %p253 = pneg %p78
      %p254 = pneg %p102
      %p255 = pneg %p99
      %p256 = pneg %p123
      %p257 = pneg %p120
      %p258 = pneg %p144
      %p259 = pneg %p141
      %p260 = pneg %p165
      %p261 = pneg %p162
      %p262 = pneg %p191
      %p263 = pneg %p188
      %p264 = scmp.lt.s32.totalorder %s18, 1
      %s265 = scalar_select %p264, %s18, 1
      %s266 = smul.addr %s265, 32
      %s267 = smul.addr %s266, 8
      %s268 = scalar_lea.vmem %s7, %s267
      %p269 = scmp.lt.s32.totalorder %s18, 1
      %s270 = scalar_select %p269, %s18, 1
      %s271 = smul.addr %s270, 32
      %s272 = smul.addr %s271, 8
      %s273 = scalar_lea.vmem %s0, %s272
      %p274 = scmp.lt.s32.totalorder %s18, 1
      %s275 = scalar_select %p274, %s18, 1
      %s276 = smul.addr %s275, 32
      %s277 = smul.addr %s276, 8
      %s278 = scalar_lea.vmem %s7, %s277
      %v280 = vlaneseq
      %v281 = vshrl.u32 %v280, 7
      %v282 = vadd.s32 %v281, 8
      %v283 = vadd.s32 %v281, 16
      %v284 = vadd.s32 %v281, 24
      %v285 = vadd.s32 %v281, 32
      %v286 = vadd.s32 %v281, 40
      %v287 = vadd.s32 %v281, 48
      %v288 = vadd.s32 %v281, 56
      %v289 = vadd.s32 %v281, 64
      %v290 = vadd.s32 %v281, 72
      %v291 = vadd.s32 %v281, 80
      %v292 = vadd.s32 %v281, 88
      %v293 = vadd.s32 %v281, 96
      %v294 = vadd.s32 %v281, 104
      %v295 = vadd.s32 %v281, 112
      %v296 = vadd.s32 %v281, 120
      %v297 = vadd.s32 %v281, 128
      %v298 = vadd.s32 %v281, 136
      %v299 = vadd.s32 %v281, 144
      %v300 = vadd.s32 %v281, 152
      %v301 = vadd.s32 %v281, 160
      %v302 = vadd.s32 %v281, 168
      %v303 = vadd.s32 %v281, 176
      %v304 = vadd.s32 %v281, 184
      %v305 = vadd.s32 %v281, 192
      %v306 = vadd.s32 %v281, 200
      %v307 = vadd.s32 %v281, 208
      %v308 = vadd.s32 %v281, 216
      %v309 = vadd.s32 %v281, 224
      %v310 = vadd.s32 %v281, 232
      %v311 = vadd.s32 %v281, 240
      %v312 = vadd.s32 %v281, 248
      %v313 = vadd.s32 %v281, 256
      %v314 = vadd.s32 %v281, 264
      %v315 = vadd.s32 %v281, 272
      %v316 = vadd.s32 %v281, 280
      %v317 = vadd.s32 %v281, 288
      %v318 = vadd.s32 %v281, 296
      %v319 = vadd.s32 %v281, 304
      %v320 = vadd.s32 %v281, 312
      %v321 = vadd.s32 %v281, 320
      %v322 = vadd.s32 %v281, 328
      %v323 = vadd.s32 %v281, 336
      %v324 = vadd.s32 %v281, 344
      %v325 = vadd.s32 %v281, 352
      %v326 = vadd.s32 %v281, 360
      %v327 = vadd.s32 %v281, 368
      %v328 = vadd.s32 %v281, 376
      %v329 = vcvt.s32.f32 %v281
      %v330 = vcvt.s32.f32 %v282
      %v331 = vcvt.s32.f32 %v283
      %v332 = vcvt.s32.f32 %v284
      %v333 = vcvt.s32.f32 %v285
      %v334 = vcvt.s32.f32 %v286
      %v335 = vcvt.s32.f32 %v287
      %v336 = vcvt.s32.f32 %v288
      %v337 = vcvt.s32.f32 %v289
      %v338 = vcvt.s32.f32 %v290
      %v339 = vcvt.s32.f32 %v291
      %v340 = vcvt.s32.f32 %v292
      %v341 = vcvt.s32.f32 %v293
      %v342 = vcvt.s32.f32 %v294
      %v343 = vcvt.s32.f32 %v295
      %v344 = vcvt.s32.f32 %v296
      %v345 = vcvt.s32.f32 %v297
      %v346 = vcvt.s32.f32 %v298
      %v347 = vcvt.s32.f32 %v299
      %v348 = vcvt.s32.f32 %v300
      %v349 = vcvt.s32.f32 %v301
      %v350 = vcvt.s32.f32 %v302
      %v351 = vcvt.s32.f32 %v303
      %v352 = vcvt.s32.f32 %v304
      %v353 = vcvt.s32.f32 %v305
      %v354 = vcvt.s32.f32 %v306
      %v355 = vcvt.s32.f32 %v307
      %v356 = vcvt.s32.f32 %v308
      %v357 = vcvt.s32.f32 %v309
      %v358 = vcvt.s32.f32 %v310
      %v359 = vcvt.s32.f32 %v311
      %v360 = vcvt.s32.f32 %v312
      %v361 = vcvt.s32.f32 %v313
      %v362 = vcvt.s32.f32 %v314
      %v363 = vcvt.s32.f32 %v315
      %v364 = vcvt.s32.f32 %v316
      %v365 = vcvt.s32.f32 %v317
      %v366 = vcvt.s32.f32 %v318
      %v367 = vcvt.s32.f32 %v319
      %v368 = vcvt.s32.f32 %v320
      %v369 = vcvt.s32.f32 %v321
      %v370 = vcvt.s32.f32 %v322
      %v371 = vcvt.s32.f32 %v323
      %v372 = vcvt.s32.f32 %v324
      %v373 = vcvt.s32.f32 %v325
      %v374 = vcvt.s32.f32 %v326
      %v375 = vcvt.s32.f32 %v327
      %v376 = vcvt.s32.f32 %v328
      %v377 = vrcp.pop 24.0
      %v378 = vmul.f32 %v329, %v377
      %v379 = vmul.f32 %v330, %v377
      %v380 = vmul.f32 %v331, %v377
      %v381 = vmul.f32 %v332, %v377
      %v382 = vmul.f32 %v333, %v377
      %v383 = vmul.f32 %v334, %v377
      %v384 = vmul.f32 %v335, %v377
      %v385 = vmul.f32 %v336, %v377
      %v386 = vmul.f32 %v337, %v377
      %v387 = vmul.f32 %v338, %v377
      %v388 = vmul.f32 %v339, %v377
      %v389 = vmul.f32 %v340, %v377
      %v390 = vmul.f32 %v341, %v377
      %v391 = vmul.f32 %v342, %v377
      %v392 = vmul.f32 %v343, %v377
      %v393 = vmul.f32 %v344, %v377
      %v394 = vmul.f32 %v345, %v377
      %v395 = vmul.f32 %v346, %v377
      %v396 = vmul.f32 %v347, %v377
      %v397 = vmul.f32 %v348, %v377
      %v398 = vmul.f32 %v349, %v377
      %v399 = vmul.f32 %v350, %v377
      %v400 = vmul.f32 %v351, %v377
      %v401 = vmul.f32 %v352, %v377
      %v402 = vmul.f32 %v353, %v377
      %v403 = vmul.f32 %v354, %v377
      %v404 = vmul.f32 %v355, %v377
      %v405 = vmul.f32 %v356, %v377
      %v406 = vmul.f32 %v357, %v377
      %v407 = vmul.f32 %v358, %v377
      %v408 = vmul.f32 %v359, %v377
      %v409 = vmul.f32 %v360, %v377
      %v410 = vmul.f32 %v361, %v377
      %v411 = vmul.f32 %v362, %v377
      %v412 = vmul.f32 %v363, %v377
      %v413 = vmul.f32 %v364, %v377
      %v414 = vmul.f32 %v365, %v377
      %v415 = vmul.f32 %v366, %v377
      %v416 = vmul.f32 %v367, %v377
      %v417 = vmul.f32 %v368, %v377
      %v418 = vmul.f32 %v369, %v377
      %v419 = vmul.f32 %v370, %v377
      %v420 = vmul.f32 %v371, %v377
      %v421 = vmul.f32 %v372, %v377
      %v422 = vmul.f32 %v373, %v377
      %v423 = vmul.f32 %v374, %v377
      %v424 = vmul.f32 %v375, %v377
      %v425 = vmul.f32 %v376, %v377
      %v426 = vfloor.f32 %v378
      %v427 = vfloor.f32 %v379
      %v428 = vfloor.f32 %v380
      %v429 = vfloor.f32 %v381
      %v430 = vfloor.f32 %v382
      %v431 = vfloor.f32 %v383
      %v432 = vfloor.f32 %v384
      %v433 = vfloor.f32 %v385
      %v434 = vfloor.f32 %v386
      %v435 = vfloor.f32 %v387
      %v436 = vfloor.f32 %v388
      %v437 = vfloor.f32 %v389
      %v438 = vfloor.f32 %v390
      %v439 = vfloor.f32 %v391
      %v440 = vfloor.f32 %v392
      %v441 = vfloor.f32 %v393
      %v442 = vfloor.f32 %v394
      %v443 = vfloor.f32 %v395
      %v444 = vfloor.f32 %v396
      %v445 = vfloor.f32 %v397
      %v446 = vfloor.f32 %v398
      %v447 = vfloor.f32 %v399
      %v448 = vfloor.f32 %v400
      %v449 = vfloor.f32 %v401
      %v450 = vfloor.f32 %v402
      %v451 = vfloor.f32 %v403
      %v452 = vfloor.f32 %v404
      %v453 = vfloor.f32 %v405
      %v454 = vfloor.f32 %v406
      %v455 = vfloor.f32 %v407
      %v456 = vfloor.f32 %v408
      %v457 = vfloor.f32 %v409
      %v458 = vfloor.f32 %v410
      %v459 = vfloor.f32 %v411
      %v460 = vfloor.f32 %v412
      %v461 = vfloor.f32 %v413
      %v462 = vfloor.f32 %v414
      %v463 = vfloor.f32 %v415
      %v464 = vfloor.f32 %v416
      %v465 = vfloor.f32 %v417
      %v466 = vfloor.f32 %v418
      %v467 = vfloor.f32 %v419
      %v468 = vfloor.f32 %v420
      %v469 = vfloor.f32 %v421
      %v470 = vfloor.f32 %v422
      %v471 = vfloor.f32 %v423
      %v472 = vfloor.f32 %v424
      %v473 = vfloor.f32 %v425
      %v474 = vmul.f32 %v426, 24.0
      %v475 = vmul.f32 %v427, 24.0
      %v476 = vmul.f32 %v428, 24.0
      %v477 = vmul.f32 %v429, 24.0
      %v478 = vmul.f32 %v430, 24.0
      %v479 = vmul.f32 %v431, 24.0
      %v480 = vmul.f32 %v432, 24.0
      %v481 = vmul.f32 %v433, 24.0
      %v482 = vmul.f32 %v434, 24.0
      %v483 = vmul.f32 %v435, 24.0
      %v484 = vmul.f32 %v436, 24.0
      %v485 = vmul.f32 %v437, 24.0
      %v486 = vmul.f32 %v438, 24.0
      %v487 = vmul.f32 %v439, 24.0
      %v488 = vmul.f32 %v440, 24.0
      %v489 = vmul.f32 %v441, 24.0
      %v490 = vmul.f32 %v442, 24.0
      %v491 = vmul.f32 %v443, 24.0
      %v492 = vmul.f32 %v444, 24.0
      %v493 = vmul.f32 %v445, 24.0
      %v494 = vmul.f32 %v446, 24.0
      %v495 = vmul.f32 %v447, 24.0
      %v496 = vmul.f32 %v448, 24.0
      %v497 = vmul.f32 %v449, 24.0
      %v498 = vmul.f32 %v450, 24.0
      %v499 = vmul.f32 %v451, 24.0
      %v500 = vmul.f32 %v452, 24.0
      %v501 = vmul.f32 %v453, 24.0
      %v502 = vmul.f32 %v454, 24.0
      %v503 = vmul.f32 %v455, 24.0
      %v504 = vmul.f32 %v456, 24.0
      %v505 = vmul.f32 %v457, 24.0
      %v506 = vmul.f32 %v458, 24.0
      %v507 = vmul.f32 %v459, 24.0
      %v508 = vmul.f32 %v460, 24.0
      %v509 = vmul.f32 %v461, 24.0
      %v510 = vmul.f32 %v462, 24.0
      %v511 = vmul.f32 %v463, 24.0
      %v512 = vmul.f32 %v464, 24.0
      %v513 = vmul.f32 %v465, 24.0
      %v514 = vmul.f32 %v466, 24.0
      %v515 = vmul.f32 %v467, 24.0
      %v516 = vmul.f32 %v468, 24.0
      %v517 = vmul.f32 %v469, 24.0
      %v518 = vmul.f32 %v470, 24.0
      %v519 = vmul.f32 %v471, 24.0
      %v520 = vmul.f32 %v472, 24.0
      %v521 = vmul.f32 %v473, 24.0
      %v522 = vsub.f32 %v329, %v474
      %v523 = vsub.f32 %v330, %v475
      %v524 = vsub.f32 %v331, %v476
      %v525 = vsub.f32 %v332, %v477
      %v526 = vsub.f32 %v333, %v478
      %v527 = vsub.f32 %v334, %v479
      %v528 = vsub.f32 %v335, %v480
      %v529 = vsub.f32 %v336, %v481
      %v530 = vsub.f32 %v337, %v482
      %v531 = vsub.f32 %v338, %v483
      %v532 = vsub.f32 %v339, %v484
      %v533 = vsub.f32 %v340, %v485
      %v534 = vsub.f32 %v341, %v486
      %v535 = vsub.f32 %v342, %v487
      %v536 = vsub.f32 %v343, %v488
      %v537 = vsub.f32 %v344, %v489
      %v538 = vsub.f32 %v345, %v490
      %v539 = vsub.f32 %v346, %v491
      %v540 = vsub.f32 %v347, %v492
      %v541 = vsub.f32 %v348, %v493
      %v542 = vsub.f32 %v349, %v494
      %v543 = vsub.f32 %v350, %v495
      %v544 = vsub.f32 %v351, %v496
      %v545 = vsub.f32 %v352, %v497
      %v546 = vsub.f32 %v353, %v498
      %v547 = vsub.f32 %v354, %v499
      %v548 = vsub.f32 %v355, %v500
      %v549 = vsub.f32 %v356, %v501
      %v550 = vsub.f32 %v357, %v502
      %v551 = vsub.f32 %v358, %v503
      %v552 = vsub.f32 %v359, %v504
      %v553 = vsub.f32 %v360, %v505
      %v554 = vsub.f32 %v361, %v506
      %v555 = vsub.f32 %v362, %v507
      %v556 = vsub.f32 %v363, %v508
      %v557 = vsub.f32 %v364, %v509
      %v558 = vsub.f32 %v365, %v510
      %v559 = vsub.f32 %v366, %v511
      %v560 = vsub.f32 %v367, %v512
      %v561 = vsub.f32 %v368, %v513
      %v562 = vsub.f32 %v369, %v514
      %v563 = vsub.f32 %v370, %v515
      %v564 = vsub.f32 %v371, %v516
      %v565 = vsub.f32 %v372, %v517
      %v566 = vsub.f32 %v373, %v518
      %v567 = vsub.f32 %v374, %v519
      %v568 = vsub.f32 %v375, %v520
      %v569 = vsub.f32 %v376, %v521
      %vm570 = vcmp.lt.f32.partialorder %v522, 16.0
      %vm571 = vcmp.lt.f32.partialorder %v523, 16.0
      %vm572 = vcmp.lt.f32.partialorder %v524, 16.0
      %vm573 = vcmp.lt.f32.partialorder %v525, 16.0
      %vm574 = vcmp.lt.f32.partialorder %v526, 16.0
      %vm575 = vcmp.lt.f32.partialorder %v527, 16.0
      %vm576 = vcmp.lt.f32.partialorder %v528, 16.0
      %vm577 = vcmp.lt.f32.partialorder %v529, 16.0
      %vm578 = vcmp.lt.f32.partialorder %v530, 16.0
      %vm579 = vcmp.lt.f32.partialorder %v531, 16.0
      %vm580 = vcmp.lt.f32.partialorder %v532, 16.0
      %vm581 = vcmp.lt.f32.partialorder %v533, 16.0
      %vm582 = vcmp.lt.f32.partialorder %v534, 16.0
      %vm583 = vcmp.lt.f32.partialorder %v535, 16.0
      %vm584 = vcmp.lt.f32.partialorder %v536, 16.0
      %vm585 = vcmp.lt.f32.partialorder %v537, 16.0
      %vm586 = vcmp.lt.f32.partialorder %v538, 16.0
      %vm587 = vcmp.lt.f32.partialorder %v539, 16.0
      %vm588 = vcmp.lt.f32.partialorder %v540, 16.0
      %vm589 = vcmp.lt.f32.partialorder %v541, 16.0
      %vm590 = vcmp.lt.f32.partialorder %v542, 16.0
      %vm591 = vcmp.lt.f32.partialorder %v543, 16.0
      %vm592 = vcmp.lt.f32.partialorder %v544, 16.0
      %vm593 = vcmp.lt.f32.partialorder %v545, 16.0
      %vm594 = vcmp.lt.f32.partialorder %v546, 16.0
      %vm595 = vcmp.lt.f32.partialorder %v547, 16.0
      %vm596 = vcmp.lt.f32.partialorder %v548, 16.0
      %vm597 = vcmp.lt.f32.partialorder %v549, 16.0
      %vm598 = vcmp.lt.f32.partialorder %v550, 16.0
      %vm599 = vcmp.lt.f32.partialorder %v551, 16.0
      %vm600 = vcmp.lt.f32.partialorder %v552, 16.0
      %vm601 = vcmp.lt.f32.partialorder %v553, 16.0
      %vm602 = vcmp.lt.f32.partialorder %v554, 16.0
      %vm603 = vcmp.lt.f32.partialorder %v555, 16.0
      %vm604 = vcmp.lt.f32.partialorder %v556, 16.0
      %vm605 = vcmp.lt.f32.partialorder %v557, 16.0
      %vm606 = vcmp.lt.f32.partialorder %v558, 16.0
      %vm607 = vcmp.lt.f32.partialorder %v559, 16.0
      %vm608 = vcmp.lt.f32.partialorder %v560, 16.0
      %vm609 = vcmp.lt.f32.partialorder %v561, 16.0
      %vm610 = vcmp.lt.f32.partialorder %v562, 16.0
      %vm611 = vcmp.lt.f32.partialorder %v563, 16.0
      %vm612 = vcmp.lt.f32.partialorder %v564, 16.0
      %vm613 = vcmp.lt.f32.partialorder %v565, 16.0
      %vm614 = vcmp.lt.f32.partialorder %v566, 16.0
      %vm615 = vcmp.lt.f32.partialorder %v567, 16.0
      %vm616 = vcmp.lt.f32.partialorder %v568, 16.0
      %vm617 = vcmp.lt.f32.partialorder %v569, 16.0
      %v618 = vsel %vm570, 1, 0
      %v619 = vsel %vm571, 1, 0
      %v620 = vsel %vm572, 1, 0
      %v621 = vsel %vm573, 1, 0
      %v622 = vsel %vm574, 1, 0
      %v623 = vsel %vm575, 1, 0
      %v624 = vsel %vm576, 1, 0
      %v625 = vsel %vm577, 1, 0
      %v626 = vsel %vm578, 1, 0
      %v627 = vsel %vm579, 1, 0
      %v628 = vsel %vm580, 1, 0
      %v629 = vsel %vm581, 1, 0
      %v630 = vsel %vm582, 1, 0
      %v631 = vsel %vm583, 1, 0
      %v632 = vsel %vm584, 1, 0
      %v633 = vsel %vm585, 1, 0
      %v634 = vsel %vm586, 1, 0
      %v635 = vsel %vm587, 1, 0
      %v636 = vsel %vm588, 1, 0
      %v637 = vsel %vm589, 1, 0
      %v638 = vsel %vm590, 1, 0
      %v639 = vsel %vm591, 1, 0
      %v640 = vsel %vm592, 1, 0
      %v641 = vsel %vm593, 1, 0
      %v642 = vsel %vm594, 1, 0
      %v643 = vsel %vm595, 1, 0
      %v644 = vsel %vm596, 1, 0
      %v645 = vsel %vm597, 1, 0
      %v646 = vsel %vm598, 1, 0
      %v647 = vsel %vm599, 1, 0
      %v648 = vsel %vm600, 1, 0
      %v649 = vsel %vm601, 1, 0
      %v650 = vsel %vm602, 1, 0
      %v651 = vsel %vm603, 1, 0
      %v652 = vsel %vm604, 1, 0
      %v653 = vsel %vm605, 1, 0
      %v654 = vsel %vm606, 1, 0
      %v655 = vsel %vm607, 1, 0
      %v656 = vsel %vm608, 1, 0
      %v657 = vsel %vm609, 1, 0
      %v658 = vsel %vm610, 1, 0
      %v659 = vsel %vm611, 1, 0
      %v660 = vsel %vm612, 1, 0
      %v661 = vsel %vm613, 1, 0
      %v662 = vsel %vm614, 1, 0
      %v663 = vsel %vm615, 1, 0
      %v664 = vsel %vm616, 1, 0
      %v665 = vsel %vm617, 1, 0
      %v666 = vcvt.s32.f32 %v618
      %v667 = vcvt.s32.f32 %v619
      %v668 = vcvt.s32.f32 %v620
      %v669 = vcvt.s32.f32 %v621
      %v670 = vcvt.s32.f32 %v622
      %v671 = vcvt.s32.f32 %v623
      %v672 = vcvt.s32.f32 %v624
      %v673 = vcvt.s32.f32 %v625
      %v674 = vcvt.s32.f32 %v626
      %v675 = vcvt.s32.f32 %v627
      %v676 = vcvt.s32.f32 %v628
      %v677 = vcvt.s32.f32 %v629
      %v678 = vcvt.s32.f32 %v630
      %v679 = vcvt.s32.f32 %v631
      %v680 = vcvt.s32.f32 %v632
      %v681 = vcvt.s32.f32 %v633
      %v682 = vcvt.s32.f32 %v634
      %v683 = vcvt.s32.f32 %v635
      %v684 = vcvt.s32.f32 %v636
      %v685 = vcvt.s32.f32 %v637
      %v686 = vcvt.s32.f32 %v638
      %v687 = vcvt.s32.f32 %v639
      %v688 = vcvt.s32.f32 %v640
      %v689 = vcvt.s32.f32 %v641
      %v690 = vcvt.s32.f32 %v642
      %v691 = vcvt.s32.f32 %v643
      %v692 = vcvt.s32.f32 %v644
      %v693 = vcvt.s32.f32 %v645
      %v694 = vcvt.s32.f32 %v646
      %v695 = vcvt.s32.f32 %v647
      %v696 = vcvt.s32.f32 %v648
      %v697 = vcvt.s32.f32 %v649
      %v698 = vcvt.s32.f32 %v650
      %v699 = vcvt.s32.f32 %v651
      %v700 = vcvt.s32.f32 %v652
      %v701 = vcvt.s32.f32 %v653
      %v702 = vcvt.s32.f32 %v654
      %v703 = vcvt.s32.f32 %v655
      %v704 = vcvt.s32.f32 %v656
      %v705 = vcvt.s32.f32 %v657
      %v706 = vcvt.s32.f32 %v658
      %v707 = vcvt.s32.f32 %v659
      %v708 = vcvt.s32.f32 %v660
      %v709 = vcvt.s32.f32 %v661
      %v710 = vcvt.s32.f32 %v662
      %v711 = vcvt.s32.f32 %v663
      %v712 = vcvt.s32.f32 %v664
      %v713 = vcvt.s32.f32 %v665
      %714 = vst [vmem:[#allocation2] sm:$0xff] 0.0
      %715 = vst [vmem:[#allocation2 + $0x8] sm:$0xff] 0.0
      %716 = vst [vmem:[#allocation2 + $0x10] sm:$0xff] 0.0
      %717 = vst [vmem:[#allocation2 + $0x18] sm:$0xff] 0.0
      loop: start=0, step=1, limit=16
      $region49: #{_residual_block_nhwc_jit.1} parent=47 // loop_pre_header
        _
      $region50: #{_residual_block_nhwc_jit.1} parent=47 // loop_header
        %s719 = sphi 0, %s723
        %p720 = scmp.ge.s32.totalorder %s719, 16
      $region51: #{_residual_block_nhwc_jit.1} parent=47 // loop_header_branch
        %722 = sbr.rel (%p720) target = $region55
      $region52: #{_residual_block_nhwc_jit.1} parent=47 // loop_body
        %s724 = smul.u32 %s719, 24
        %s725 = sadd.s32 %s724, 32
        %s726 = smul.u32 %s719, 16
        %s727 = scalar_lea.vmem %s273, %s726
        %v728 = vld [vmem:[%s727] sm:$0xff]
        %v729 = vld [vmem:[%s727 + $0x8] sm:$0xff]
        %s730 = scalar_lea.vmem [#allocation2], %s725
        %731 = vst [vmem:[%s730] sm:$0xff] %v728
        %732 = vst [vmem:[%s730 + $0x8] sm:$0xff] %v729
        %s733 = sadd.s32 %s724, 48
        %s734 = scalar_lea.vmem [#allocation2], %s733
        %735 = vst [vmem:[%s734] sm:$0xff] 0.0
      $region53: #{_residual_block_nhwc_jit.1} parent=47 // loop_footer
        %s723 = sadd.s32 1, %s719
      $region54: #{_residual_block_nhwc_jit.1} parent=47 // loop_footer_branch
        %718 = sbr.rel target = $region50
      $region55: #{_residual_block_nhwc_jit.1} parent=47 // loop_exit
        _
      %736 = vst [vmem:[#allocation2 + $0x1a0] sm:$0xff] 0.0
      %737 = vst [vmem:[#allocation2 + $0x1a8] sm:$0xff] 0.0
      %738 = vst [vmem:[#allocation2 + $0x1b0] sm:$0xff] 0.0
      %739 = vst [vmem:[#allocation2 + $0x1b8] sm:$0xff] 0.0
      %v740 = vld [vmem:[#allocation2 + $0x7] sm:$0xff]
      %v741 = vld [vmem:[#allocation2 + $0xf] sm:$0xff]
      %v742 = vld [vmem:[#allocation2 + $0x17] sm:$0xff]
      %v743 = vld [vmem:[#allocation2 + $0x1f] sm:$0xff]
      %v744 = vld [vmem:[#allocation2 + $0x27] sm:$0xff]
      %v745 = vld [vmem:[#allocation2 + $0x2f] sm:$0xff]
      %v746 = vld [vmem:[#allocation2 + $0x37] sm:$0xff]
      %v747 = vld [vmem:[#allocation2 + $0x3f] sm:$0xff]
      %v748 = vld [vmem:[#allocation2 + $0x47] sm:$0xff]
      %v749 = vld [vmem:[#allocation2 + $0x4f] sm:$0xff]
      %v750 = vld [vmem:[#allocation2 + $0x57] sm:$0xff]
      %v751 = vld [vmem:[#allocation2 + $0x5f] sm:$0xff]
      %v752 = vld [vmem:[#allocation2 + $0x67] sm:$0xff]
      %v753 = vld [vmem:[#allocation2 + $0x6f] sm:$0xff]
      %v754 = vld [vmem:[#allocation2 + $0x77] sm:$0xff]
      %v755 = vld [vmem:[#allocation2 + $0x7f] sm:$0xff]
      %v756 = vld [vmem:[#allocation2 + $0x87] sm:$0xff]
      %v757 = vld [vmem:[#allocation2 + $0x8f] sm:$0xff]
      %v758 = vld [vmem:[#allocation2 + $0x97] sm:$0xff]
      %v759 = vld [vmem:[#allocation2 + $0x9f] sm:$0xff]
      %v760 = vld [vmem:[#allocation2 + $0xa7] sm:$0xff]
      %v761 = vld [vmem:[#allocation2 + $0xaf] sm:$0xff]
      %v762 = vld [vmem:[#allocation2 + $0xb7] sm:$0xff]
      %v763 = vld [vmem:[#allocation2 + $0xbf] sm:$0xff]
      %v764 = vld [vmem:[#allocation2 + $0xc7] sm:$0xff]
      %v765 = vld [vmem:[#allocation2 + $0xcf] sm:$0xff]
      %v766 = vld [vmem:[#allocation2 + $0xd7] sm:$0xff]
      %v767 = vld [vmem:[#allocation2 + $0xdf] sm:$0xff]
      %v768 = vld [vmem:[#allocation2 + $0xe7] sm:$0xff]
      %v769 = vld [vmem:[#allocation2 + $0xef] sm:$0xff]
      %v770 = vld [vmem:[#allocation2 + $0xf7] sm:$0xff]
      %v771 = vld [vmem:[#allocation2 + $0xff] sm:$0xff]
      %v772 = vld [vmem:[#allocation2 + $0x107] sm:$0xff]
      %v773 = vld [vmem:[#allocation2 + $0x10f] sm:$0xff]
      %v774 = vld [vmem:[#allocation2 + $0x117] sm:$0xff]
      %v775 = vld [vmem:[#allocation2 + $0x11f] sm:$0xff]
      %v776 = vld [vmem:[#allocation2 + $0x127] sm:$0xff]
      %v777 = vld [vmem:[#allocation2 + $0x12f] sm:$0xff]
      %v778 = vld [vmem:[#allocation2 + $0x137] sm:$0xff]
      %v779 = vld [vmem:[#allocation2 + $0x13f] sm:$0xff]
      %v780 = vld [vmem:[#allocation2 + $0x147] sm:$0xff]
      %v781 = vld [vmem:[#allocation2 + $0x14f] sm:$0xff]
      %v782 = vld [vmem:[#allocation2 + $0x157] sm:$0xff]
      %v783 = vld [vmem:[#allocation2 + $0x15f] sm:$0xff]
      %v784 = vld [vmem:[#allocation2 + $0x167] sm:$0xff]
      %v785 = vld [vmem:[#allocation2 + $0x16f] sm:$0xff]
      %v786 = vld [vmem:[#allocation2 + $0x177] sm:$0xff]
      %v787 = vld [vmem:[#allocation2 + $0x17f] sm:$0xff]
      %v788 = vpack.c.bf16 %v741, %v740
      %v789 = vpack.c.bf16 %v743, %v742
      %v790 = vpack.c.bf16 %v745, %v744
      %v791 = vpack.c.bf16 %v747, %v746
      %v792 = vpack.c.bf16 %v749, %v748
      %v793 = vpack.c.bf16 %v751, %v750
      %v794 = vpack.c.bf16 %v753, %v752
      %v795 = vpack.c.bf16 %v755, %v754
      %v796 = vpack.c.bf16 %v757, %v756
      %v797 = vpack.c.bf16 %v759, %v758
      %v798 = vpack.c.bf16 %v761, %v760
      %v799 = vpack.c.bf16 %v763, %v762
      %v800 = vpack.c.bf16 %v765, %v764
      %v801 = vpack.c.bf16 %v767, %v766
      %v802 = vpack.c.bf16 %v769, %v768
      %v803 = vpack.c.bf16 %v771, %v770
      %v804 = vpack.c.bf16 %v773, %v772
      %v805 = vpack.c.bf16 %v775, %v774
      %v806 = vpack.c.bf16 %v777, %v776
      %v807 = vpack.c.bf16 %v779, %v778
      %v808 = vpack.c.bf16 %v781, %v780
      %v809 = vpack.c.bf16 %v783, %v782
      %v810 = vpack.c.bf16 %v785, %v784
      %v811 = vpack.c.bf16 %v787, %v786
      %v812 = vld [vmem:[%s1] sm:$0xf]
      %v813 = vld [vmem:[%s1 + $0x4] sm:$0xf]
      %v814 = vld [vmem:[%s1 + $0x8] sm:$0xf]
      %v815 = vld [vmem:[%s1 + $0xc] sm:$0xf]
      %v816 = vld [vmem:[%s1 + $0x10] sm:$0xf]
      %v817 = vld [vmem:[%s1 + $0x14] sm:$0xf]
      %v818 = vld [vmem:[%s1 + $0x18] sm:$0xf]
      %v819 = vld [vmem:[%s1 + $0x1c] sm:$0xf]
      %v820 = vld [vmem:[%s1 + $0x20] sm:$0xf]
      %v821 = vld [vmem:[%s1 + $0x24] sm:$0xf]
      %v822 = vld [vmem:[%s1 + $0x28] sm:$0xf]
      %v823 = vld [vmem:[%s1 + $0x2c] sm:$0xf]
      %v824 = vld [vmem:[%s1 + $0x30] sm:$0xf]
      %v825 = vld [vmem:[%s1 + $0x34] sm:$0xf]
      %v826 = vld [vmem:[%s1 + $0x38] sm:$0xf]
      %v827 = vld [vmem:[%s1 + $0x3c] sm:$0xf]
      %v828 = vld [vmem:[#allocation2 + $0x8] sm:$0xff]
      %v829 = vld [vmem:[#allocation2 + $0x10] sm:$0xff]
      %v830 = vld [vmem:[#allocation2 + $0x18] sm:$0xff]
      %v831 = vld [vmem:[#allocation2 + $0x20] sm:$0xff]
      %v832 = vld [vmem:[#allocation2 + $0x28] sm:$0xff]
      %v833 = vld [vmem:[#allocation2 + $0x30] sm:$0xff]
      %v834 = vld [vmem:[#allocation2 + $0x38] sm:$0xff]
      %v835 = vld [vmem:[#allocation2 + $0x40] sm:$0xff]
      %v836 = vld [vmem:[#allocation2 + $0x48] sm:$0xff]
      %v837 = vld [vmem:[#allocation2 + $0x50] sm:$0xff]
      %v838 = vld [vmem:[#allocation2 + $0x58] sm:$0xff]
      %v839 = vld [vmem:[#allocation2 + $0x60] sm:$0xff]
      %v840 = vld [vmem:[#allocation2 + $0x68] sm:$0xff]
      %v841 = vld [vmem:[#allocation2 + $0x70] sm:$0xff]
      %v842 = vld [vmem:[#allocation2 + $0x78] sm:$0xff]
      %v843 = vld [vmem:[#allocation2 + $0x80] sm:$0xff]
      %v844 = vld [vmem:[#allocation2 + $0x88] sm:$0xff]
      %v845 = vld [vmem:[#allocation2 + $0x90] sm:$0xff]
      %v846 = vld [vmem:[#allocation2 + $0x98] sm:$0xff]
      %v847 = vld [vmem:[#allocation2 + $0xa0] sm:$0xff]
      %v848 = vld [vmem:[#allocation2 + $0xa8] sm:$0xff]
      %v849 = vld [vmem:[#allocation2 + $0xb0] sm:$0xff]
      %v850 = vld [vmem:[#allocation2 + $0xb8] sm:$0xff]
      %v851 = vld [vmem:[#allocation2 + $0xc0] sm:$0xff]
      %v852 = vld [vmem:[#allocation2 + $0xc8] sm:$0xff]
      %v853 = vld [vmem:[#allocation2 + $0xd0] sm:$0xff]
      %v854 = vld [vmem:[#allocation2 + $0xd8] sm:$0xff]
      %v855 = vld [vmem:[#allocation2 + $0xe0] sm:$0xff]
      %v856 = vld [vmem:[#allocation2 + $0xe8] sm:$0xff]
      %v857 = vld [vmem:[#allocation2 + $0xf0] sm:$0xff]
      %v858 = vld [vmem:[#allocation2 + $0xf8] sm:$0xff]
      %v859 = vld [vmem:[#allocation2 + $0x100] sm:$0xff]
      %v860 = vld [vmem:[#allocation2 + $0x108] sm:$0xff]
      %v861 = vld [vmem:[#allocation2 + $0x110] sm:$0xff]
      %v862 = vld [vmem:[#allocation2 + $0x118] sm:$0xff]
      %v863 = vld [vmem:[#allocation2 + $0x120] sm:$0xff]
      %v864 = vld [vmem:[#allocation2 + $0x128] sm:$0xff]
      %v865 = vld [vmem:[#allocation2 + $0x130] sm:$0xff]
      %v866 = vld [vmem:[#allocation2 + $0x138] sm:$0xff]
      %v867 = vld [vmem:[#allocation2 + $0x140] sm:$0xff]
      %v868 = vld [vmem:[#allocation2 + $0x148] sm:$0xff]
      %v869 = vld [vmem:[#allocation2 + $0x150] sm:$0xff]
      %v870 = vld [vmem:[#allocation2 + $0x158] sm:$0xff]
      %v871 = vld [vmem:[#allocation2 + $0x160] sm:$0xff]
      %v872 = vld [vmem:[#allocation2 + $0x168] sm:$0xff]
      %v873 = vld [vmem:[#allocation2 + $0x170] sm:$0xff]
      %v874 = vld [vmem:[#allocation2 + $0x178] sm:$0xff]
      %v875 = vld [vmem:[#allocation2 + $0x180] sm:$0xff]
      %v876 = vpack.c.bf16 %v829, %v828
      %v877 = vpack.c.bf16 %v831, %v830
      %v878 = vpack.c.bf16 %v833, %v832
      %v879 = vpack.c.bf16 %v835, %v834
      %v880 = vpack.c.bf16 %v837, %v836
      %v881 = vpack.c.bf16 %v839, %v838
      %v882 = vpack.c.bf16 %v841, %v840
      %v883 = vpack.c.bf16 %v843, %v842
      %v884 = vpack.c.bf16 %v845, %v844
      %v885 = vpack.c.bf16 %v847, %v846
      %v886 = vpack.c.bf16 %v849, %v848
      %v887 = vpack.c.bf16 %v851, %v850
      %v888 = vpack.c.bf16 %v853, %v852
      %v889 = vpack.c.bf16 %v855, %v854
      %v890 = vpack.c.bf16 %v857, %v856
      %v891 = vpack.c.bf16 %v859, %v858
      %v892 = vpack.c.bf16 %v861, %v860
      %v893 = vpack.c.bf16 %v863, %v862
      %v894 = vpack.c.bf16 %v865, %v864
      %v895 = vpack.c.bf16 %v867, %v866
      %v896 = vpack.c.bf16 %v869, %v868
      %v897 = vpack.c.bf16 %v871, %v870
      %v898 = vpack.c.bf16 %v873, %v872
      %v899 = vpack.c.bf16 %v875, %v874
      %s900 = scalar_lea.vmem %s1, 64
      %v901 = vld [vmem:[%s900] sm:$0xf]
      %v902 = vld [vmem:[%s900 + $0x4] sm:$0xf]
      %v903 = vld [vmem:[%s900 + $0x8] sm:$0xf]
      %v904 = vld [vmem:[%s900 + $0xc] sm:$0xf]
      %v905 = vld [vmem:[%s900 + $0x10] sm:$0xf]
      %v906 = vld [vmem:[%s900 + $0x14] sm:$0xf]
      %v907 = vld [vmem:[%s900 + $0x18] sm:$0xf]
      %v908 = vld [vmem:[%s900 + $0x1c] sm:$0xf]
      %v909 = vld [vmem:[%s900 + $0x20] sm:$0xf]
      %v910 = vld [vmem:[%s900 + $0x24] sm:$0xf]
      %v911 = vld [vmem:[%s900 + $0x28] sm:$0xf]
      %v912 = vld [vmem:[%s900 + $0x2c] sm:$0xf]
      %v913 = vld [vmem:[%s900 + $0x30] sm:$0xf]
      %v914 = vld [vmem:[%s900 + $0x34] sm:$0xf]
      %v915 = vld [vmem:[%s900 + $0x38] sm:$0xf]
      %v916 = vld [vmem:[%s900 + $0x3c] sm:$0xf]
      %v933 = vunpack.c.l.b16 %v901
      %v934 = vunpack.c.l.b16 %v902
      %v935 = vunpack.c.l.b16 %v903
      %v936 = vunpack.c.l.b16 %v904
      %v937 = vunpack.c.l.b16 %v905
      %v938 = vunpack.c.l.b16 %v906
      %v939 = vunpack.c.l.b16 %v907
      %v940 = vunpack.c.l.b16 %v908
      %v941 = vunpack.c.l.b16 %v909
      %v942 = vunpack.c.l.b16 %v910
      %v943 = vunpack.c.l.b16 %v911
      %v944 = vunpack.c.l.b16 %v912
      %v945 = vunpack.c.l.b16 %v913
      %v946 = vunpack.c.l.b16 %v914
      %v947 = vunpack.c.l.b16 %v915
      %v948 = vunpack.c.l.b16 %v916
      %v949 = vpack.c.b16 %v934, %v933
      %v950 = vpack.c.b16 %v936, %v935
      %v951 = vpack.c.b16 %v938, %v937
      %v952 = vpack.c.b16 %v940, %v939
      %v953 = vpack.c.b16 %v942, %v941
      %v954 = vpack.c.b16 %v944, %v943
      %v955 = vpack.c.b16 %v946, %v945
      %v956 = vpack.c.b16 %v948, %v947
      %965 = vmatprep.subr.bf16.mxu0 0
      %966 = vmatpush1.bf16.msra.mxu0 %v956
      %967 = vmatprep.subr.bf16.mxu0 0
      %968 = vmatpush1.bf16.msra.mxu0 %v955
      %969 = vmatprep.subr.bf16.mxu0 0
      %970 = vmatpush1.bf16.msra.mxu0 %v954
      %971 = vmatprep.subr.bf16.mxu0 0
      %972 = vmatpush1.bf16.msra.mxu0 %v953
      %973 = vmatprep.subr.bf16.mxu0 0
      %974 = vmatpush1.bf16.msra.mxu0 %v952
      %975 = vmatprep.subr.bf16.mxu0 0
      %976 = vmatpush1.bf16.msra.mxu0 %v951
      %977 = vmatprep.subr.bf16.mxu0 0
      %978 = vmatpush1.bf16.msra.mxu0 %v950
      %979 = vmatprep.subr.bf16.mxu0 0
      %980 = vmatpush1.bf16.msra.mxu0 %v949
      %981 = vmatprep.subr.bf16.mxu0 0
      %982 = vmatpush2.bf16.msra.mxu0 0
      %983 = vmatprep.subr.bf16.mxu0 0
      %984 = vmatpush2.bf16.msra.mxu0 0
      %985 = vmatprep.subr.bf16.mxu0 0
      %986 = vmatpush2.bf16.msra.mxu0 0
      %987 = vmatprep.subr.bf16.mxu0 0
      %988 = vmatpush2.bf16.msra.mxu0 0
      %989 = vmatprep.subr.bf16.mxu0 0
      %990 = vmatpush2.bf16.msra.mxu0 0
      %991 = vmatprep.subr.bf16.mxu0 0
      %992 = vmatpush2.bf16.msra.mxu0 0
      %993 = vmatprep.subr.bf16.mxu0 0
      %994 = vmatpush2.bf16.msra.mxu0 0
      %995 = vmatprep.subr.bf16.mxu0 0
      %996 = vmatpush2.bf16.msra.mxu0 0
      %997 = vmatprep.mubr.bf16.mxu0 0
      %998 = vmatmul.mubr.bf16.gmra.mxu0 %v876
      %v999 = vpop.f32.mrf.mxu0
      %v1000 = vadd.f32 0.0, %v999
      %v1001 = vpop.f32.mrf.mxu0
      %v1002 = vpop.f32.mrf.mxu0
      %v1003 = vadd.f32 0.0, %v1002
      %v1004 = vpop.f32.mrf.mxu0
      %1005 = vmatprep.mubr.bf16.mxu0 0
      %1006 = vmatmul.mubr.bf16.gmra.mxu0 %v877
      %v1007 = vpop.f32.mrf.mxu0
      %v1008 = vadd.f32 0.0, %v1007
      %v1009 = vpop.f32.mrf.mxu0
      %v1010 = vpop.f32.mrf.mxu0
      %v1011 = vadd.f32 0.0, %v1010
      %v1012 = vpop.f32.mrf.mxu0
      %1013 = vmatprep.mubr.bf16.mxu0 0
      %1014 = vmatmul.mubr.bf16.gmra.mxu0 %v878
      %v1015 = vpop.f32.mrf.mxu0
      %v1016 = vadd.f32 0.0, %v1015
      %v1017 = vpop.f32.mrf.mxu0
      %v1018 = vpop.f32.mrf.mxu0
      %v1019 = vadd.f32 0.0, %v1018
      %v1020 = vpop.f32.mrf.mxu0
      %1021 = vmatprep.mubr.bf16.mxu0 0
      %1022 = vmatmul.mubr.bf16.gmra.mxu0 %v879
      %v1023 = vpop.f32.mrf.mxu0
      %v1024 = vadd.f32 0.0, %v1023
      %v1025 = vpop.f32.mrf.mxu0
      %v1026 = vpop.f32.mrf.mxu0
      %v1027 = vadd.f32 0.0, %v1026
      %v1028 = vpop.f32.mrf.mxu0
      %1029 = vmatprep.mubr.bf16.mxu0 0
      %1030 = vmatmul.mubr.bf16.gmra.mxu0 %v880
      %v1031 = vpop.f32.mrf.mxu0
      %v1032 = vadd.f32 0.0, %v1031
      %v1033 = vpop.f32.mrf.mxu0
      %v1034 = vpop.f32.mrf.mxu0
      %v1035 = vadd.f32 0.0, %v1034
      %v1036 = vpop.f32.mrf.mxu0
      %1037 = vmatprep.mubr.bf16.mxu0 0
      %1038 = vmatmul.mubr.bf16.gmra.mxu0 %v881
      %v1039 = vpop.f32.mrf.mxu0
      %v1040 = vadd.f32 0.0, %v1039
      %v1041 = vpop.f32.mrf.mxu0
      %v1042 = vpop.f32.mrf.mxu0
      %v1043 = vadd.f32 0.0, %v1042
      %v1044 = vpop.f32.mrf.mxu0
      %1045 = vmatprep.mubr.bf16.mxu0 0
      %1046 = vmatmul.mubr.bf16.gmra.mxu0 %v882
      %v1047 = vpop.f32.mrf.mxu0
      %v1048 = vadd.f32 0.0, %v1047
      %v1049 = vpop.f32.mrf.mxu0
      %v1050 = vpop.f32.mrf.mxu0
      %v1051 = vadd.f32 0.0, %v1050
      %v1052 = vpop.f32.mrf.mxu0
      %1053 = vmatprep.mubr.bf16.mxu0 0
      %1054 = vmatmul.mubr.bf16.gmra.mxu0 %v883
      %v1055 = vpop.f32.mrf.mxu0
      %v1056 = vadd.f32 0.0, %v1055
      %v1057 = vpop.f32.mrf.mxu0
      %v1058 = vpop.f32.mrf.mxu0
      %v1059 = vadd.f32 0.0, %v1058
      %v1060 = vpop.f32.mrf.mxu0
      %1061 = vmatprep.mubr.bf16.mxu0 0
      %1062 = vmatmul.mubr.bf16.gmra.mxu0 %v884
      %v1063 = vpop.f32.mrf.mxu0
      %v1064 = vadd.f32 0.0, %v1063
      %v1065 = vpop.f32.mrf.mxu0
      %v1066 = vpop.f32.mrf.mxu0
      %v1067 = vadd.f32 0.0, %v1066
      %v1068 = vpop.f32.mrf.mxu0
      %1069 = vmatprep.mubr.bf16.mxu0 0
      %1070 = vmatmul.mubr.bf16.gmra.mxu0 %v885
      %v1071 = vpop.f32.mrf.mxu0
      %v1072 = vadd.f32 0.0, %v1071
      %v1073 = vpop.f32.mrf.mxu0
      %v1074 = vpop.f32.mrf.mxu0
      %v1075 = vadd.f32 0.0, %v1074
      %v1076 = vpop.f32.mrf.mxu0
      %1077 = vmatprep.mubr.bf16.mxu0 0
      %1078 = vmatmul.mubr.bf16.gmra.mxu0 %v886
      %v1079 = vpop.f32.mrf.mxu0
      %v1080 = vadd.f32 0.0, %v1079
      %v1081 = vpop.f32.mrf.mxu0
      %v1082 = vpop.f32.mrf.mxu0
      %v1083 = vadd.f32 0.0, %v1082
      %v1084 = vpop.f32.mrf.mxu0
      %1085 = vmatprep.mubr.bf16.mxu0 0
      %1086 = vmatmul.mubr.bf16.gmra.mxu0 %v887
      %v1087 = vpop.f32.mrf.mxu0
      %v1088 = vadd.f32 0.0, %v1087
      %v1089 = vpop.f32.mrf.mxu0
      %v1090 = vpop.f32.mrf.mxu0
      %v1091 = vadd.f32 0.0, %v1090
      %v1092 = vpop.f32.mrf.mxu0
      %1093 = vmatprep.mubr.bf16.mxu0 0
      %1094 = vmatmul.mubr.bf16.gmra.mxu0 %v888
      %v1095 = vpop.f32.mrf.mxu0
      %v1096 = vadd.f32 0.0, %v1095
      %v1097 = vpop.f32.mrf.mxu0
      %v1098 = vpop.f32.mrf.mxu0
      %v1099 = vadd.f32 0.0, %v1098
      %v1100 = vpop.f32.mrf.mxu0
      %1101 = vmatprep.mubr.bf16.mxu0 0
      %1102 = vmatmul.mubr.bf16.gmra.mxu0 %v889
      %v1103 = vpop.f32.mrf.mxu0
      %v1104 = vadd.f32 0.0, %v1103
      %v1105 = vpop.f32.mrf.mxu0
      %v1106 = vpop.f32.mrf.mxu0
      %v1107 = vadd.f32 0.0, %v1106
      %v1108 = vpop.f32.mrf.mxu0
      %1109 = vmatprep.mubr.bf16.mxu0 0
      %1110 = vmatmul.mubr.bf16.gmra.mxu0 %v890
      %v1111 = vpop.f32.mrf.mxu0
      %v1112 = vadd.f32 0.0, %v1111
      %v1113 = vpop.f32.mrf.mxu0
      %v1114 = vpop.f32.mrf.mxu0
      %v1115 = vadd.f32 0.0, %v1114
      %v1116 = vpop.f32.mrf.mxu0
      %1117 = vmatprep.mubr.bf16.mxu0 0
      %1118 = vmatmul.mubr.bf16.gmra.mxu0 %v891
      %v1119 = vpop.f32.mrf.mxu0
      %v1120 = vadd.f32 0.0, %v1119
      %v1121 = vpop.f32.mrf.mxu0
      %v1122 = vpop.f32.mrf.mxu0
      %v1123 = vadd.f32 0.0, %v1122
      %v1124 = vpop.f32.mrf.mxu0
      %1125 = vmatprep.mubr.bf16.mxu0 0
      %1126 = vmatmul.mubr.bf16.gmra.mxu0 %v892
      %v1127 = vpop.f32.mrf.mxu0
      %v1128 = vadd.f32 0.0, %v1127
      %v1129 = vpop.f32.mrf.mxu0
      %v1130 = vpop.f32.mrf.mxu0
      %v1131 = vadd.f32 0.0, %v1130
      %v1132 = vpop.f32.mrf.mxu0
      %1133 = vmatprep.mubr.bf16.mxu0 0
      %1134 = vmatmul.mubr.bf16.gmra.mxu0 %v893
      %v1135 = vpop.f32.mrf.mxu0
      %v1136 = vadd.f32 0.0, %v1135
      %v1137 = vpop.f32.mrf.mxu0
      %v1138 = vpop.f32.mrf.mxu0
      %v1139 = vadd.f32 0.0, %v1138
      %v1140 = vpop.f32.mrf.mxu0
      %1141 = vmatprep.mubr.bf16.mxu0 0
      %1142 = vmatmul.mubr.bf16.gmra.mxu0 %v894
      %v1143 = vpop.f32.mrf.mxu0
      %v1144 = vadd.f32 0.0, %v1143
      %v1145 = vpop.f32.mrf.mxu0
      %v1146 = vpop.f32.mrf.mxu0
      %v1147 = vadd.f32 0.0, %v1146
      %v1148 = vpop.f32.mrf.mxu0
      %1149 = vmatprep.mubr.bf16.mxu0 0
      %1150 = vmatmul.mubr.bf16.gmra.mxu0 %v895
      %v1151 = vpop.f32.mrf.mxu0
      %v1152 = vadd.f32 0.0, %v1151
      %v1153 = vpop.f32.mrf.mxu0
      %v1154 = vpop.f32.mrf.mxu0
      %v1155 = vadd.f32 0.0, %v1154
      %v1156 = vpop.f32.mrf.mxu0
      %1157 = vmatprep.mubr.bf16.mxu0 0
      %1158 = vmatmul.mubr.bf16.gmra.mxu0 %v896
      %v1159 = vpop.f32.mrf.mxu0
      %v1160 = vadd.f32 0.0, %v1159
      %v1161 = vpop.f32.mrf.mxu0
      %v1162 = vpop.f32.mrf.mxu0
      %v1163 = vadd.f32 0.0, %v1162
      %v1164 = vpop.f32.mrf.mxu0
      %1165 = vmatprep.mubr.bf16.mxu0 0
      %1166 = vmatmul.mubr.bf16.gmra.mxu0 %v897
      %v1167 = vpop.f32.mrf.mxu0
      %v1168 = vadd.f32 0.0, %v1167
      %v1169 = vpop.f32.mrf.mxu0
      %v1170 = vpop.f32.mrf.mxu0
      %v1171 = vadd.f32 0.0, %v1170
      %v1172 = vpop.f32.mrf.mxu0
      %1173 = vmatprep.mubr.bf16.mxu0 0
      %1174 = vmatmul.mubr.bf16.gmra.mxu0 %v898
      %v1175 = vpop.f32.mrf.mxu0
      %v1176 = vadd.f32 0.0, %v1175
      %v1177 = vpop.f32.mrf.mxu0
      %v1178 = vpop.f32.mrf.mxu0
      %v1179 = vadd.f32 0.0, %v1178
      %v1180 = vpop.f32.mrf.mxu0
      %1181 = vmatprep.mubr.bf16.mxu0 0
      %1182 = vmatmul.mubr.bf16.gmra.mxu0 %v899
      %v1183 = vpop.f32.mrf.mxu0
      %v1184 = vadd.f32 0.0, %v1183
      %v1185 = vpop.f32.mrf.mxu0
      %v1186 = vpop.f32.mrf.mxu0
      %v1187 = vadd.f32 0.0, %v1186
      %v1188 = vpop.f32.mrf.mxu0
      %1189 = vdwg.mxu0
      %v1206 = vunpack.c.l.b16 %v812
      %v1207 = vunpack.c.l.b16 %v813
      %v1208 = vunpack.c.l.b16 %v814
      %v1209 = vunpack.c.l.b16 %v815
      %v1210 = vunpack.c.l.b16 %v816
      %v1211 = vunpack.c.l.b16 %v817
      %v1212 = vunpack.c.l.b16 %v818
      %v1213 = vunpack.c.l.b16 %v819
      %v1214 = vunpack.c.l.b16 %v820
      %v1215 = vunpack.c.l.b16 %v821
      %v1216 = vunpack.c.l.b16 %v822
      %v1217 = vunpack.c.l.b16 %v823
      %v1218 = vunpack.c.l.b16 %v824
      %v1219 = vunpack.c.l.b16 %v825
      %v1220 = vunpack.c.l.b16 %v826
      %v1221 = vunpack.c.l.b16 %v827
      %v1222 = vpack.c.b16 %v1207, %v1206
      %v1223 = vpack.c.b16 %v1209, %v1208
      %v1224 = vpack.c.b16 %v1211, %v1210
      %v1225 = vpack.c.b16 %v1213, %v1212
      %v1226 = vpack.c.b16 %v1215, %v1214
      %v1227 = vpack.c.b16 %v1217, %v1216
      %v1228 = vpack.c.b16 %v1219, %v1218
      %v1229 = vpack.c.b16 %v1221, %v1220
      %1238 = vmatprep.subr.bf16.mxu0 0
      %1239 = vmatpush1.bf16.msra.mxu0 %v1229
      %1240 = vmatprep.subr.bf16.mxu0 0
      %1241 = vmatpush1.bf16.msra.mxu0 %v1228
      %1242 = vmatprep.subr.bf16.mxu0 0
      %1243 = vmatpush1.bf16.msra.mxu0 %v1227
      %1244 = vmatprep.subr.bf16.mxu0 0
      %1245 = vmatpush1.bf16.msra.mxu0 %v1226
      %1246 = vmatprep.subr.bf16.mxu0 0
      %1247 = vmatpush1.bf16.msra.mxu0 %v1225
      %1248 = vmatprep.subr.bf16.mxu0 0
      %1249 = vmatpush1.bf16.msra.mxu0 %v1224
      %1250 = vmatprep.subr.bf16.mxu0 0
      %1251 = vmatpush1.bf16.msra.mxu0 %v1223
      %1252 = vmatprep.subr.bf16.mxu0 0
      %1253 = vmatpush1.bf16.msra.mxu0 %v1222
      %1254 = vmatprep.subr.bf16.mxu0 0
      %1255 = vmatpush2.bf16.msra.mxu0 0
      %1256 = vmatprep.subr.bf16.mxu0 0
      %1257 = vmatpush2.bf16.msra.mxu0 0
      %1258 = vmatprep.subr.bf16.mxu0 0
      %1259 = vmatpush2.bf16.msra.mxu0 0
      %1260 = vmatprep.subr.bf16.mxu0 0
      %1261 = vmatpush2.bf16.msra.mxu0 0
      %1262 = vmatprep.subr.bf16.mxu0 0
      %1263 = vmatpush2.bf16.msra.mxu0 0
      %1264 = vmatprep.subr.bf16.mxu0 0
      %1265 = vmatpush2.bf16.msra.mxu0 0
      %1266 = vmatprep.subr.bf16.mxu0 0
      %1267 = vmatpush2.bf16.msra.mxu0 0
      %1268 = vmatprep.subr.bf16.mxu0 0
      %1269 = vmatpush2.bf16.msra.mxu0 0
      %1270 = vmatprep.mubr.bf16.mxu0 0
      %1271 = vmatmul.mubr.bf16.gmra.mxu0 %v788
      %v1272 = vpop.f32.mrf.mxu0
      %v1273 = vadd.f32 %v1000, %v1272
      %v1274 = vpop.f32.mrf.mxu0
      %v1275 = vpop.f32.mrf.mxu0
      %v1276 = vadd.f32 %v1003, %v1275
      %v1277 = vpop.f32.mrf.mxu0
      %1278 = vmatprep.mubr.bf16.mxu0 0
      %1279 = vmatmul.mubr.bf16.gmra.mxu0 %v789
      %v1280 = vpop.f32.mrf.mxu0
      %v1281 = vadd.f32 %v1008, %v1280
      %v1282 = vpop.f32.mrf.mxu0
      %v1283 = vpop.f32.mrf.mxu0
      %v1284 = vadd.f32 %v1011, %v1283
      %v1285 = vpop.f32.mrf.mxu0
      %1286 = vmatprep.mubr.bf16.mxu0 0
      %1287 = vmatmul.mubr.bf16.gmra.mxu0 %v790
      %v1288 = vpop.f32.mrf.mxu0
      %v1289 = vadd.f32 %v1016, %v1288
      %v1290 = vpop.f32.mrf.mxu0
      %v1291 = vpop.f32.mrf.mxu0
      %v1292 = vadd.f32 %v1019, %v1291
      %v1293 = vpop.f32.mrf.mxu0
      %1294 = vmatprep.mubr.bf16.mxu0 0
      %1295 = vmatmul.mubr.bf16.gmra.mxu0 %v791
      %v1296 = vpop.f32.mrf.mxu0
      %v1297 = vadd.f32 %v1024, %v1296
      %v1298 = vpop.f32.mrf.mxu0
      %v1299 = vpop.f32.mrf.mxu0
      %v1300 = vadd.f32 %v1027, %v1299
      %v1301 = vpop.f32.mrf.mxu0
      %1302 = vmatprep.mubr.bf16.mxu0 0
      %1303 = vmatmul.mubr.bf16.gmra.mxu0 %v792
      %v1304 = vpop.f32.mrf.mxu0
      %v1305 = vadd.f32 %v1032, %v1304
      %v1306 = vpop.f32.mrf.mxu0
      %v1307 = vpop.f32.mrf.mxu0
      %v1308 = vadd.f32 %v1035, %v1307
      %v1309 = vpop.f32.mrf.mxu0
      %1310 = vmatprep.mubr.bf16.mxu0 0
      %1311 = vmatmul.mubr.bf16.gmra.mxu0 %v793
      %v1312 = vpop.f32.mrf.mxu0
      %v1313 = vadd.f32 %v1040, %v1312
      %v1314 = vpop.f32.mrf.mxu0
      %v1315 = vpop.f32.mrf.mxu0
      %v1316 = vadd.f32 %v1043, %v1315
      %v1317 = vpop.f32.mrf.mxu0
      %1318 = vmatprep.mubr.bf16.mxu0 0
      %1319 = vmatmul.mubr.bf16.gmra.mxu0 %v794
      %v1320 = vpop.f32.mrf.mxu0
      %v1321 = vadd.f32 %v1048, %v1320
      %v1322 = vpop.f32.mrf.mxu0
      %v1323 = vpop.f32.mrf.mxu0
      %v1324 = vadd.f32 %v1051, %v1323
      %v1325 = vpop.f32.mrf.mxu0
      %1326 = vmatprep.mubr.bf16.mxu0 0
      %1327 = vmatmul.mubr.bf16.gmra.mxu0 %v795
      %v1328 = vpop.f32.mrf.mxu0
      %v1329 = vadd.f32 %v1056, %v1328
      %v1330 = vpop.f32.mrf.mxu0
      %v1331 = vpop.f32.mrf.mxu0
      %v1332 = vadd.f32 %v1059, %v1331
      %v1333 = vpop.f32.mrf.mxu0
      %1334 = vmatprep.mubr.bf16.mxu0 0
      %1335 = vmatmul.mubr.bf16.gmra.mxu0 %v796
      %v1336 = vpop.f32.mrf.mxu0
      %v1337 = vadd.f32 %v1064, %v1336
      %v1338 = vpop.f32.mrf.mxu0
      %v1339 = vpop.f32.mrf.mxu0
      %v1340 = vadd.f32 %v1067, %v1339
      %v1341 = vpop.f32.mrf.mxu0
      %1342 = vmatprep.mubr.bf16.mxu0 0
      %1343 = vmatmul.mubr.bf16.gmra.mxu0 %v797
      %v1344 = vpop.f32.mrf.mxu0
      %v1345 = vadd.f32 %v1072, %v1344
      %v1346 = vpop.f32.mrf.mxu0
      %v1347 = vpop.f32.mrf.mxu0
      %v1348 = vadd.f32 %v1075, %v1347
      %v1349 = vpop.f32.mrf.mxu0
      %1350 = vmatprep.mubr.bf16.mxu0 0
      %1351 = vmatmul.mubr.bf16.gmra.mxu0 %v798
      %v1352 = vpop.f32.mrf.mxu0
      %v1353 = vadd.f32 %v1080, %v1352
      %v1354 = vpop.f32.mrf.mxu0
      %v1355 = vpop.f32.mrf.mxu0
      %v1356 = vadd.f32 %v1083, %v1355
      %v1357 = vpop.f32.mrf.mxu0
      %1358 = vmatprep.mubr.bf16.mxu0 0
      %1359 = vmatmul.mubr.bf16.gmra.mxu0 %v799
      %v1360 = vpop.f32.mrf.mxu0
      %v1361 = vadd.f32 %v1088, %v1360
      %v1362 = vpop.f32.mrf.mxu0
      %v1363 = vpop.f32.mrf.mxu0
      %v1364 = vadd.f32 %v1091, %v1363
      %v1365 = vpop.f32.mrf.mxu0
      %1366 = vmatprep.mubr.bf16.mxu0 0
      %1367 = vmatmul.mubr.bf16.gmra.mxu0 %v800
      %v1368 = vpop.f32.mrf.mxu0
      %v1369 = vadd.f32 %v1096, %v1368
      %v1370 = vpop.f32.mrf.mxu0
      %v1371 = vpop.f32.mrf.mxu0
      %v1372 = vadd.f32 %v1099, %v1371
      %v1373 = vpop.f32.mrf.mxu0
      %1374 = vmatprep.mubr.bf16.mxu0 0
      %1375 = vmatmul.mubr.bf16.gmra.mxu0 %v801
      %v1376 = vpop.f32.mrf.mxu0
      %v1377 = vadd.f32 %v1104, %v1376
      %v1378 = vpop.f32.mrf.mxu0
      %v1379 = vpop.f32.mrf.mxu0
      %v1380 = vadd.f32 %v1107, %v1379
      %v1381 = vpop.f32.mrf.mxu0
      %1382 = vmatprep.mubr.bf16.mxu0 0
      %1383 = vmatmul.mubr.bf16.gmra.mxu0 %v802
      %v1384 = vpop.f32.mrf.mxu0
      %v1385 = vadd.f32 %v1112, %v1384
      %v1386 = vpop.f32.mrf.mxu0
      %v1387 = vpop.f32.mrf.mxu0
      %v1388 = vadd.f32 %v1115, %v1387
      %v1389 = vpop.f32.mrf.mxu0
      %1390 = vmatprep.mubr.bf16.mxu0 0
      %1391 = vmatmul.mubr.bf16.gmra.mxu0 %v803
      %v1392 = vpop.f32.mrf.mxu0
      %v1393 = vadd.f32 %v1120, %v1392
      %v1394 = vpop.f32.mrf.mxu0
      %v1395 = vpop.f32.mrf.mxu0
      %v1396 = vadd.f32 %v1123, %v1395
      %v1397 = vpop.f32.mrf.mxu0
      %1398 = vmatprep.mubr.bf16.mxu0 0
      %1399 = vmatmul.mubr.bf16.gmra.mxu0 %v804
      %v1400 = vpop.f32.mrf.mxu0
      %v1401 = vadd.f32 %v1128, %v1400
      %v1402 = vpop.f32.mrf.mxu0
      %v1403 = vpop.f32.mrf.mxu0
      %v1404 = vadd.f32 %v1131, %v1403
      %v1405 = vpop.f32.mrf.mxu0
      %1406 = vmatprep.mubr.bf16.mxu0 0
      %1407 = vmatmul.mubr.bf16.gmra.mxu0 %v805
      %v1408 = vpop.f32.mrf.mxu0
      %v1409 = vadd.f32 %v1136, %v1408
      %v1410 = vpop.f32.mrf.mxu0
      %v1411 = vpop.f32.mrf.mxu0
      %v1412 = vadd.f32 %v1139, %v1411
      %v1413 = vpop.f32.mrf.mxu0
      %1414 = vmatprep.mubr.bf16.mxu0 0
      %1415 = vmatmul.mubr.bf16.gmra.mxu0 %v806
      %v1416 = vpop.f32.mrf.mxu0
      %v1417 = vadd.f32 %v1144, %v1416
      %v1418 = vpop.f32.mrf.mxu0
      %v1419 = vpop.f32.mrf.mxu0
      %v1420 = vadd.f32 %v1147, %v1419
      %v1421 = vpop.f32.mrf.mxu0
      %1422 = vmatprep.mubr.bf16.mxu0 0
      %1423 = vmatmul.mubr.bf16.gmra.mxu0 %v807
      %v1424 = vpop.f32.mrf.mxu0
      %v1425 = vadd.f32 %v1152, %v1424
      %v1426 = vpop.f32.mrf.mxu0
      %v1427 = vpop.f32.mrf.mxu0
      %v1428 = vadd.f32 %v1155, %v1427
      %v1429 = vpop.f32.mrf.mxu0
      %1430 = vmatprep.mubr.bf16.mxu0 0
      %1431 = vmatmul.mubr.bf16.gmra.mxu0 %v808
      %v1432 = vpop.f32.mrf.mxu0
      %v1433 = vadd.f32 %v1160, %v1432
      %v1434 = vpop.f32.mrf.mxu0
      %v1435 = vpop.f32.mrf.mxu0
      %v1436 = vadd.f32 %v1163, %v1435
      %v1437 = vpop.f32.mrf.mxu0
      %1438 = vmatprep.mubr.bf16.mxu0 0
      %1439 = vmatmul.mubr.bf16.gmra.mxu0 %v809
      %v1440 = vpop.f32.mrf.mxu0
      %v1441 = vadd.f32 %v1168, %v1440
      %v1442 = vpop.f32.mrf.mxu0
      %v1443 = vpop.f32.mrf.mxu0
      %v1444 = vadd.f32 %v1171, %v1443
      %v1445 = vpop.f32.mrf.mxu0
      %1446 = vmatprep.mubr.bf16.mxu0 0
      %1447 = vmatmul.mubr.bf16.gmra.mxu0 %v810
      %v1448 = vpop.f32.mrf.mxu0
      %v1449 = vadd.f32 %v1176, %v1448
      %v1450 = vpop.f32.mrf.mxu0
      %v1451 = vpop.f32.mrf.mxu0
      %v1452 = vadd.f32 %v1179, %v1451
      %v1453 = vpop.f32.mrf.mxu0
      %1454 = vmatprep.mubr.bf16.mxu0 0
      %1455 = vmatmul.mubr.bf16.gmra.mxu0 %v811
      %v1456 = vpop.f32.mrf.mxu0
      %v1457 = vadd.f32 %v1184, %v1456
      %v1458 = vpop.f32.mrf.mxu0
      %v1459 = vpop.f32.mrf.mxu0
      %v1460 = vadd.f32 %v1187, %v1459
      %v1461 = vpop.f32.mrf.mxu0
      %1462 = vdwg.mxu0
      %v1463 = vld [vmem:[#allocation2 + $0x9] sm:$0xff]
      %v1464 = vld [vmem:[#allocation2 + $0x11] sm:$0xff]
      %v1465 = vld [vmem:[#allocation2 + $0x19] sm:$0xff]
      %v1466 = vld [vmem:[#allocation2 + $0x21] sm:$0xff]
      %v1467 = vld [vmem:[#allocation2 + $0x29] sm:$0xff]
      %v1468 = vld [vmem:[#allocation2 + $0x31] sm:$0xff]
      %v1469 = vld [vmem:[#allocation2 + $0x39] sm:$0xff]
      %v1470 = vld [vmem:[#allocation2 + $0x41] sm:$0xff]
      %v1471 = vld [vmem:[#allocation2 + $0x49] sm:$0xff]
      %v1472 = vld [vmem:[#allocation2 + $0x51] sm:$0xff]
      %v1473 = vld [vmem:[#allocation2 + $0x59] sm:$0xff]
      %v1474 = vld [vmem:[#allocation2 + $0x61] sm:$0xff]
      %v1475 = vld [vmem:[#allocation2 + $0x69] sm:$0xff]
      %v1476 = vld [vmem:[#allocation2 + $0x71] sm:$0xff]
      %v1477 = vld [vmem:[#allocation2 + $0x79] sm:$0xff]
      %v1478 = vld [vmem:[#allocation2 + $0x81] sm:$0xff]
      %v1479 = vld [vmem:[#allocation2 + $0x89] sm:$0xff]
      %v1480 = vld [vmem:[#allocation2 + $0x91] sm:$0xff]
      %v1481 = vld [vmem:[#allocation2 + $0x99] sm:$0xff]
      %v1482 = vld [vmem:[#allocation2 + $0xa1] sm:$0xff]
      %v1483 = vld [vmem:[#allocation2 + $0xa9] sm:$0xff]
      %v1484 = vld [vmem:[#allocation2 + $0xb1] sm:$0xff]
      %v1485 = vld [vmem:[#allocation2 + $0xb9] sm:$0xff]
      %v1486 = vld [vmem:[#allocation2 + $0xc1] sm:$0xff]
      %v1487 = vld [vmem:[#allocation2 + $0xc9] sm:$0xff]
      %v1488 = vld [vmem:[#allocation2 + $0xd1] sm:$0xff]
      %v1489 = vld [vmem:[#allocation2 + $0xd9] sm:$0xff]
      %v1490 = vld [vmem:[#allocation2 + $0xe1] sm:$0xff]
      %v1491 = vld [vmem:[#allocation2 + $0xe9] sm:$0xff]
      %v1492 = vld [vmem:[#allocation2 + $0xf1] sm:$0xff]
      %v1493 = vld [vmem:[#allocation2 + $0xf9] sm:$0xff]
      %v1494 = vld [vmem:[#allocation2 + $0x101] sm:$0xff]
      %v1495 = vld [vmem:[#allocation2 + $0x109] sm:$0xff]
      %v1496 = vld [vmem:[#allocation2 + $0x111] sm:$0xff]
      %v1497 = vld [vmem:[#allocation2 + $0x119] sm:$0xff]
      %v1498 = vld [vmem:[#allocation2 + $0x121] sm:$0xff]
      %v1499 = vld [vmem:[#allocation2 + $0x129] sm:$0xff]
      %v1500 = vld [vmem:[#allocation2 + $0x131] sm:$0xff]
      %v1501 = vld [vmem:[#allocation2 + $0x139] sm:$0xff]
      %v1502 = vld [vmem:[#allocation2 + $0x141] sm:$0xff]
      %v1503 = vld [vmem:[#allocation2 + $0x149] sm:$0xff]
      %v1504 = vld [vmem:[#allocation2 + $0x151] sm:$0xff]
      %v1505 = vld [vmem:[#allocation2 + $0x159] sm:$0xff]
      %v1506 = vld [vmem:[#allocation2 + $0x161] sm:$0xff]
      %v1507 = vld [vmem:[#allocation2 + $0x169] sm:$0xff]
      %v1508 = vld [vmem:[#allocation2 + $0x171] sm:$0xff]
      %v1509 = vld [vmem:[#allocation2 + $0x179] sm:$0xff]
      %v1510 = vld [vmem:[#allocation2 + $0x181] sm:$0xff]
      %v1511 = vpack.c.bf16 %v1464, %v1463
      %v1512 = vpack.c.bf16 %v1466, %v1465
      %v1513 = vpack.c.bf16 %v1468, %v1467
      %v1514 = vpack.c.bf16 %v1470, %v1469
      %v1515 = vpack.c.bf16 %v1472, %v1471
      %v1516 = vpack.c.bf16 %v1474, %v1473
      %v1517 = vpack.c.bf16 %v1476, %v1475
      %v1518 = vpack.c.bf16 %v1478, %v1477
      %v1519 = vpack.c.bf16 %v1480, %v1479
      %v1520 = vpack.c.bf16 %v1482, %v1481
      %v1521 = vpack.c.bf16 %v1484, %v1483
      %v1522 = vpack.c.bf16 %v1486, %v1485
      %v1523 = vpack.c.bf16 %v1488, %v1487
      %v1524 = vpack.c.bf16 %v1490, %v1489
      %v1525 = vpack.c.bf16 %v1492, %v1491
      %v1526 = vpack.c.bf16 %v1494, %v1493
      %v1527 = vpack.c.bf16 %v1496, %v1495
      %v1528 = vpack.c.bf16 %v1498, %v1497
      %v1529 = vpack.c.bf16 %v1500, %v1499
      %v1530 = vpack.c.bf16 %v1502, %v1501
      %v1531 = vpack.c.bf16 %v1504, %v1503
      %v1532 = vpack.c.bf16 %v1506, %v1505
      %v1533 = vpack.c.bf16 %v1508, %v1507
      %v1534 = vpack.c.bf16 %v1510, %v1509
      %s1535 = scalar_lea.vmem %s1, 128
      %v1536 = vld [vmem:[%s1535] sm:$0xf]
      %v1537 = vld [vmem:[%s1535 + $0x4] sm:$0xf]
      %v1538 = vld [vmem:[%s1535 + $0x8] sm:$0xf]
      %v1539 = vld [vmem:[%s1535 + $0xc] sm:$0xf]
      %v1540 = vld [vmem:[%s1535 + $0x10] sm:$0xf]
      %v1541 = vld [vmem:[%s1535 + $0x14] sm:$0xf]
      %v1542 = vld [vmem:[%s1535 + $0x18] sm:$0xf]
      %v1543 = vld [vmem:[%s1535 + $0x1c] sm:$0xf]
      %v1544 = vld [vmem:[%s1535 + $0x20] sm:$0xf]
      %v1545 = vld [vmem:[%s1535 + $0x24] sm:$0xf]
      %v1546 = vld [vmem:[%s1535 + $0x28] sm:$0xf]
      %v1547 = vld [vmem:[%s1535 + $0x2c] sm:$0xf]
      %v1548 = vld [vmem:[%s1535 + $0x30] sm:$0xf]
      %v1549 = vld [vmem:[%s1535 + $0x34] sm:$0xf]
      %v1550 = vld [vmem:[%s1535 + $0x38] sm:$0xf]
      %v1551 = vld [vmem:[%s1535 + $0x3c] sm:$0xf]
      %v1568 = vunpack.c.l.b16 %v1536
      %v1569 = vunpack.c.l.b16 %v1537
      %v1570 = vunpack.c.l.b16 %v1538
      %v1571 = vunpack.c.l.b16 %v1539
      %v1572 = vunpack.c.l.b16 %v1540
      %v1573 = vunpack.c.l.b16 %v1541
      %v1574 = vunpack.c.l.b16 %v1542
      %v1575 = vunpack.c.l.b16 %v1543
      %v1576 = vunpack.c.l.b16 %v1544
      %v1577 = vunpack.c.l.b16 %v1545
      %v1578 = vunpack.c.l.b16 %v1546
      %v1579 = vunpack.c.l.b16 %v1547
      %v1580 = vunpack.c.l.b16 %v1548
      %v1581 = vunpack.c.l.b16 %v1549
      %v1582 = vunpack.c.l.b16 %v1550
      %v1583 = vunpack.c.l.b16 %v1551
      %v1584 = vpack.c.b16 %v1569, %v1568
      %v1585 = vpack.c.b16 %v1571, %v1570
      %v1586 = vpack.c.b16 %v1573, %v1572
      %v1587 = vpack.c.b16 %v1575, %v1574
      %v1588 = vpack.c.b16 %v1577, %v1576
      %v1589 = vpack.c.b16 %v1579, %v1578
      %v1590 = vpack.c.b16 %v1581, %v1580
      %v1591 = vpack.c.b16 %v1583, %v1582
      %1600 = vmatprep.subr.bf16.mxu0 0
      %1601 = vmatpush1.bf16.msra.mxu0 %v1591
      %1602 = vmatprep.subr.bf16.mxu0 0
      %1603 = vmatpush1.bf16.msra.mxu0 %v1590
      %1604 = vmatprep.subr.bf16.mxu0 0
      %1605 = vmatpush1.bf16.msra.mxu0 %v1589
      %1606 = vmatprep.subr.bf16.mxu0 0
      %1607 = vmatpush1.bf16.msra.mxu0 %v1588
      %1608 = vmatprep.subr.bf16.mxu0 0
      %1609 = vmatpush1.bf16.msra.mxu0 %v1587
      %1610 = vmatprep.subr.bf16.mxu0 0
      %1611 = vmatpush1.bf16.msra.mxu0 %v1586
      %1612 = vmatprep.subr.bf16.mxu0 0
      %1613 = vmatpush1.bf16.msra.mxu0 %v1585
      %1614 = vmatprep.subr.bf16.mxu0 0
      %1615 = vmatpush1.bf16.msra.mxu0 %v1584
      %1616 = vmatprep.subr.bf16.mxu0 0
      %1617 = vmatpush2.bf16.msra.mxu0 0
      %1618 = vmatprep.subr.bf16.mxu0 0
      %1619 = vmatpush2.bf16.msra.mxu0 0
      %1620 = vmatprep.subr.bf16.mxu0 0
      %1621 = vmatpush2.bf16.msra.mxu0 0
      %1622 = vmatprep.subr.bf16.mxu0 0
      %1623 = vmatpush2.bf16.msra.mxu0 0
      %1624 = vmatprep.subr.bf16.mxu0 0
      %1625 = vmatpush2.bf16.msra.mxu0 0
      %1626 = vmatprep.subr.bf16.mxu0 0
      %1627 = vmatpush2.bf16.msra.mxu0 0
      %1628 = vmatprep.subr.bf16.mxu0 0
      %1629 = vmatpush2.bf16.msra.mxu0 0
      %1630 = vmatprep.subr.bf16.mxu0 0
      %1631 = vmatpush2.bf16.msra.mxu0 0
      %1632 = vmatprep.mubr.bf16.mxu0 0
      %1633 = vmatmul.mubr.bf16.gmra.mxu0 %v1511
      %v1634 = vpop.f32.mrf.mxu0
      %v1635 = vadd.f32 0.0, %v1634
      %v1636 = vpop.f32.mrf.mxu0
      %v1637 = vpop.f32.mrf.mxu0
      %v1638 = vadd.f32 0.0, %v1637
      %v1639 = vpop.f32.mrf.mxu0
      %1640 = vmatprep.mubr.bf16.mxu0 0
      %1641 = vmatmul.mubr.bf16.gmra.mxu0 %v1512
      %v1642 = vpop.f32.mrf.mxu0
      %v1643 = vadd.f32 0.0, %v1642
      %v1644 = vpop.f32.mrf.mxu0
      %v1645 = vpop.f32.mrf.mxu0
      %v1646 = vadd.f32 0.0, %v1645
      %v1647 = vpop.f32.mrf.mxu0
      %1648 = vmatprep.mubr.bf16.mxu0 0
      %1649 = vmatmul.mubr.bf16.gmra.mxu0 %v1513
      %v1650 = vpop.f32.mrf.mxu0
      %v1651 = vadd.f32 0.0, %v1650
      %v1652 = vpop.f32.mrf.mxu0
      %v1653 = vpop.f32.mrf.mxu0
      %v1654 = vadd.f32 0.0, %v1653
      %v1655 = vpop.f32.mrf.mxu0
      %1656 = vmatprep.mubr.bf16.mxu0 0
      %1657 = vmatmul.mubr.bf16.gmra.mxu0 %v1514
      %v1658 = vpop.f32.mrf.mxu0
      %v1659 = vadd.f32 0.0, %v1658
      %v1660 = vpop.f32.mrf.mxu0
      %v1661 = vpop.f32.mrf.mxu0
      %v1662 = vadd.f32 0.0, %v1661
      %v1663 = vpop.f32.mrf.mxu0
      %1664 = vmatprep.mubr.bf16.mxu0 0
      %1665 = vmatmul.mubr.bf16.gmra.mxu0 %v1515
      %v1666 = vpop.f32.mrf.mxu0
      %v1667 = vadd.f32 0.0, %v1666
      %v1668 = vpop.f32.mrf.mxu0
      %v1669 = vpop.f32.mrf.mxu0
      %v1670 = vadd.f32 0.0, %v1669
      %v1671 = vpop.f32.mrf.mxu0
      %1672 = vmatprep.mubr.bf16.mxu0 0
      %1673 = vmatmul.mubr.bf16.gmra.mxu0 %v1516
      %v1674 = vpop.f32.mrf.mxu0
      %v1675 = vadd.f32 0.0, %v1674
      %v1676 = vpop.f32.mrf.mxu0
      %v1677 = vpop.f32.mrf.mxu0
      %v1678 = vadd.f32 0.0, %v1677
      %v1679 = vpop.f32.mrf.mxu0
      %1680 = vmatprep.mubr.bf16.mxu0 0
      %1681 = vmatmul.mubr.bf16.gmra.mxu0 %v1517
      %v1682 = vpop.f32.mrf.mxu0
      %v1683 = vadd.f32 0.0, %v1682
      %v1684 = vpop.f32.mrf.mxu0
      %v1685 = vpop.f32.mrf.mxu0
      %v1686 = vadd.f32 0.0, %v1685
      %v1687 = vpop.f32.mrf.mxu0
      %1688 = vmatprep.mubr.bf16.mxu0 0
      %1689 = vmatmul.mubr.bf16.gmra.mxu0 %v1518
      %v1690 = vpop.f32.mrf.mxu0
      %v1691 = vadd.f32 0.0, %v1690
      %v1692 = vpop.f32.mrf.mxu0
      %v1693 = vpop.f32.mrf.mxu0
      %v1694 = vadd.f32 0.0, %v1693
      %v1695 = vpop.f32.mrf.mxu0
      %1696 = vmatprep.mubr.bf16.mxu0 0
      %1697 = vmatmul.mubr.bf16.gmra.mxu0 %v1519
      %v1698 = vpop.f32.mrf.mxu0
      %v1699 = vadd.f32 0.0, %v1698
      %v1700 = vpop.f32.mrf.mxu0
      %v1701 = vpop.f32.mrf.mxu0
      %v1702 = vadd.f32 0.0, %v1701
      %v1703 = vpop.f32.mrf.mxu0
      %1704 = vmatprep.mubr.bf16.mxu0 0
      %1705 = vmatmul.mubr.bf16.gmra.mxu0 %v1520
      %v1706 = vpop.f32.mrf.mxu0
      %v1707 = vadd.f32 0.0, %v1706
      %v1708 = vpop.f32.mrf.mxu0
      %v1709 = vpop.f32.mrf.mxu0
      %v1710 = vadd.f32 0.0, %v1709
      %v1711 = vpop.f32.mrf.mxu0
      %1712 = vmatprep.mubr.bf16.mxu0 0
      %1713 = vmatmul.mubr.bf16.gmra.mxu0 %v1521
      %v1714 = vpop.f32.mrf.mxu0
      %v1715 = vadd.f32 0.0, %v1714
      %v1716 = vpop.f32.mrf.mxu0
      %v1717 = vpop.f32.mrf.mxu0
      %v1718 = vadd.f32 0.0, %v1717
      %v1719 = vpop.f32.mrf.mxu0
      %1720 = vmatprep.mubr.bf16.mxu0 0
      %1721 = vmatmul.mubr.bf16.gmra.mxu0 %v1522
      %v1722 = vpop.f32.mrf.mxu0
      %v1723 = vadd.f32 0.0, %v1722
      %v1724 = vpop.f32.mrf.mxu0
      %v1725 = vpop.f32.mrf.mxu0
      %v1726 = vadd.f32 0.0, %v1725
      %v1727 = vpop.f32.mrf.mxu0
      %1728 = vmatprep.mubr.bf16.mxu0 0
      %1729 = vmatmul.mubr.bf16.gmra.mxu0 %v1523
      %v1730 = vpop.f32.mrf.mxu0
      %v1731 = vadd.f32 0.0, %v1730
      %v1732 = vpop.f32.mrf.mxu0
      %v1733 = vpop.f32.mrf.mxu0
      %v1734 = vadd.f32 0.0, %v1733
      %v1735 = vpop.f32.mrf.mxu0
      %1736 = vmatprep.mubr.bf16.mxu0 0
      %1737 = vmatmul.mubr.bf16.gmra.mxu0 %v1524
      %v1738 = vpop.f32.mrf.mxu0
      %v1739 = vadd.f32 0.0, %v1738
      %v1740 = vpop.f32.mrf.mxu0
      %v1741 = vpop.f32.mrf.mxu0
      %v1742 = vadd.f32 0.0, %v1741
      %v1743 = vpop.f32.mrf.mxu0
      %1744 = vmatprep.mubr.bf16.mxu0 0
      %1745 = vmatmul.mubr.bf16.gmra.mxu0 %v1525
      %v1746 = vpop.f32.mrf.mxu0
      %v1747 = vadd.f32 0.0, %v1746
      %v1748 = vpop.f32.mrf.mxu0
      %v1749 = vpop.f32.mrf.mxu0
      %v1750 = vadd.f32 0.0, %v1749
      %v1751 = vpop.f32.mrf.mxu0
      %1752 = vmatprep.mubr.bf16.mxu0 0
      %1753 = vmatmul.mubr.bf16.gmra.mxu0 %v1526
      %v1754 = vpop.f32.mrf.mxu0
      %v1755 = vadd.f32 0.0, %v1754
      %v1756 = vpop.f32.mrf.mxu0
      %v1757 = vpop.f32.mrf.mxu0
      %v1758 = vadd.f32 0.0, %v1757
      %v1759 = vpop.f32.mrf.mxu0
      %1760 = vmatprep.mubr.bf16.mxu0 0
      %1761 = vmatmul.mubr.bf16.gmra.mxu0 %v1527
      %v1762 = vpop.f32.mrf.mxu0
      %v1763 = vadd.f32 0.0, %v1762
      %v1764 = vpop.f32.mrf.mxu0
      %v1765 = vpop.f32.mrf.mxu0
      %v1766 = vadd.f32 0.0, %v1765
      %v1767 = vpop.f32.mrf.mxu0
      %1768 = vmatprep.mubr.bf16.mxu0 0
      %1769 = vmatmul.mubr.bf16.gmra.mxu0 %v1528
      %v1770 = vpop.f32.mrf.mxu0
      %v1771 = vadd.f32 0.0, %v1770
      %v1772 = vpop.f32.mrf.mxu0
      %v1773 = vpop.f32.mrf.mxu0
      %v1774 = vadd.f32 0.0, %v1773
      %v1775 = vpop.f32.mrf.mxu0
      %1776 = vmatprep.mubr.bf16.mxu0 0
      %1777 = vmatmul.mubr.bf16.gmra.mxu0 %v1529
      %v1778 = vpop.f32.mrf.mxu0
      %v1779 = vadd.f32 0.0, %v1778
      %v1780 = vpop.f32.mrf.mxu0
      %v1781 = vpop.f32.mrf.mxu0
      %v1782 = vadd.f32 0.0, %v1781
      %v1783 = vpop.f32.mrf.mxu0
      %1784 = vmatprep.mubr.bf16.mxu0 0
      %1785 = vmatmul.mubr.bf16.gmra.mxu0 %v1530
      %v1786 = vpop.f32.mrf.mxu0
      %v1787 = vadd.f32 0.0, %v1786
      %v1788 = vpop.f32.mrf.mxu0
      %v1789 = vpop.f32.mrf.mxu0
      %v1790 = vadd.f32 0.0, %v1789
      %v1791 = vpop.f32.mrf.mxu0
      %1792 = vmatprep.mubr.bf16.mxu0 0
      %1793 = vmatmul.mubr.bf16.gmra.mxu0 %v1531
      %v1794 = vpop.f32.mrf.mxu0
      %v1795 = vadd.f32 0.0, %v1794
      %v1796 = vpop.f32.mrf.mxu0
      %v1797 = vpop.f32.mrf.mxu0
      %v1798 = vadd.f32 0.0, %v1797
      %v1799 = vpop.f32.mrf.mxu0
      %1800 = vmatprep.mubr.bf16.mxu0 0
      %1801 = vmatmul.mubr.bf16.gmra.mxu0 %v1532
      %v1802 = vpop.f32.mrf.mxu0
      %v1803 = vadd.f32 0.0, %v1802
      %v1804 = vpop.f32.mrf.mxu0
      %v1805 = vpop.f32.mrf.mxu0
      %v1806 = vadd.f32 0.0, %v1805
      %v1807 = vpop.f32.mrf.mxu0
      %1808 = vmatprep.mubr.bf16.mxu0 0
      %1809 = vmatmul.mubr.bf16.gmra.mxu0 %v1533
      %v1810 = vpop.f32.mrf.mxu0
      %v1811 = vadd.f32 0.0, %v1810
      %v1812 = vpop.f32.mrf.mxu0
      %v1813 = vpop.f32.mrf.mxu0
      %v1814 = vadd.f32 0.0, %v1813
      %v1815 = vpop.f32.mrf.mxu0
      %1816 = vmatprep.mubr.bf16.mxu0 0
      %1817 = vmatmul.mubr.bf16.gmra.mxu0 %v1534
      %v1818 = vpop.f32.mrf.mxu0
      %v1819 = vadd.f32 0.0, %v1818
      %v1820 = vpop.f32.mrf.mxu0
      %v1821 = vpop.f32.mrf.mxu0
      %v1822 = vadd.f32 0.0, %v1821
      %v1823 = vpop.f32.mrf.mxu0
      %1824 = vdwg.mxu0
      %v1825 = vadd.f32 %v1273, %v1635
      %v1826 = vadd.f32 %v1276, %v1638
      %v1827 = vadd.f32 %v1281, %v1643
      %v1828 = vadd.f32 %v1284, %v1646
      %v1829 = vadd.f32 %v1289, %v1651
      %v1830 = vadd.f32 %v1292, %v1654
      %v1831 = vadd.f32 %v1297, %v1659
      %v1832 = vadd.f32 %v1300, %v1662
      %v1833 = vadd.f32 %v1305, %v1667
      %v1834 = vadd.f32 %v1308, %v1670
      %v1835 = vadd.f32 %v1313, %v1675
      %v1836 = vadd.f32 %v1316, %v1678
      %v1837 = vadd.f32 %v1321, %v1683
      %v1838 = vadd.f32 %v1324, %v1686
      %v1839 = vadd.f32 %v1329, %v1691
      %v1840 = vadd.f32 %v1332, %v1694
      %v1841 = vadd.f32 %v1337, %v1699
      %v1842 = vadd.f32 %v1340, %v1702
      %v1843 = vadd.f32 %v1345, %v1707
      %v1844 = vadd.f32 %v1348, %v1710
      %v1845 = vadd.f32 %v1353, %v1715
      %v1846 = vadd.f32 %v1356, %v1718
      %v1847 = vadd.f32 %v1361, %v1723
      %v1848 = vadd.f32 %v1364, %v1726
      %v1849 = vadd.f32 %v1369, %v1731
      %v1850 = vadd.f32 %v1372, %v1734
      %v1851 = vadd.f32 %v1377, %v1739
      %v1852 = vadd.f32 %v1380, %v1742
      %v1853 = vadd.f32 %v1385, %v1747
      %v1854 = vadd.f32 %v1388, %v1750
      %v1855 = vadd.f32 %v1393, %v1755
      %v1856 = vadd.f32 %v1396, %v1758
      %v1857 = vadd.f32 %v1401, %v1763
      %v1858 = vadd.f32 %v1404, %v1766
      %v1859 = vadd.f32 %v1409, %v1771
      %v1860 = vadd.f32 %v1412, %v1774
      %v1861 = vadd.f32 %v1417, %v1779
      %v1862 = vadd.f32 %v1420, %v1782
      %v1863 = vadd.f32 %v1425, %v1787
      %v1864 = vadd.f32 %v1428, %v1790
      %v1865 = vadd.f32 %v1433, %v1795
      %v1866 = vadd.f32 %v1436, %v1798
      %v1867 = vadd.f32 %v1441, %v1803
      %v1868 = vadd.f32 %v1444, %v1806
      %v1869 = vadd.f32 %v1449, %v1811
      %v1870 = vadd.f32 %v1452, %v1814
      %v1871 = vadd.f32 %v1457, %v1819
      %v1872 = vadd.f32 %v1460, %v1822
      %v1873 = vld [vmem:[#allocation2 + $0x1f] sm:$0xff]
      %v1874 = vld [vmem:[#allocation2 + $0x27] sm:$0xff]
      %v1875 = vld [vmem:[#allocation2 + $0x2f] sm:$0xff]
      %v1876 = vld [vmem:[#allocation2 + $0x37] sm:$0xff]
      %v1877 = vld [vmem:[#allocation2 + $0x3f] sm:$0xff]
      %v1878 = vld [vmem:[#allocation2 + $0x47] sm:$0xff]
      %v1879 = vld [vmem:[#allocation2 + $0x4f] sm:$0xff]
      %v1880 = vld [vmem:[#allocation2 + $0x57] sm:$0xff]
      %v1881 = vld [vmem:[#allocation2 + $0x5f] sm:$0xff]
      %v1882 = vld [vmem:[#allocation2 + $0x67] sm:$0xff]
      %v1883 = vld [vmem:[#allocation2 + $0x6f] sm:$0xff]
      %v1884 = vld [vmem:[#allocation2 + $0x77] sm:$0xff]
      %v1885 = vld [vmem:[#allocation2 + $0x7f] sm:$0xff]
      %v1886 = vld [vmem:[#allocation2 + $0x87] sm:$0xff]
      %v1887 = vld [vmem:[#allocation2 + $0x8f] sm:$0xff]
      %v1888 = vld [vmem:[#allocation2 + $0x97] sm:$0xff]
      %v1889 = vld [vmem:[#allocation2 + $0x9f] sm:$0xff]
      %v1890 = vld [vmem:[#allocation2 + $0xa7] sm:$0xff]
      %v1891 = vld [vmem:[#allocation2 + $0xaf] sm:$0xff]
      %v1892 = vld [vmem:[#allocation2 + $0xb7] sm:$0xff]
      %v1893 = vld [vmem:[#allocation2 + $0xbf] sm:$0xff]
      %v1894 = vld [vmem:[#allocation2 + $0xc7] sm:$0xff]
      %v1895 = vld [vmem:[#allocation2 + $0xcf] sm:$0xff]
      %v1896 = vld [vmem:[#allocation2 + $0xd7] sm:$0xff]
      %v1897 = vld [vmem:[#allocation2 + $0xdf] sm:$0xff]
      %v1898 = vld [vmem:[#allocation2 + $0xe7] sm:$0xff]
      %v1899 = vld [vmem:[#allocation2 + $0xef] sm:$0xff]
      %v1900 = vld [vmem:[#allocation2 + $0xf7] sm:$0xff]
      %v1901 = vld [vmem:[#allocation2 + $0xff] sm:$0xff]
      %v1902 = vld [vmem:[#allocation2 + $0x107] sm:$0xff]
      %v1903 = vld [vmem:[#allocation2 + $0x10f] sm:$0xff]
      %v1904 = vld [vmem:[#allocation2 + $0x117] sm:$0xff]
      %v1905 = vld [vmem:[#allocation2 + $0x11f] sm:$0xff]
      %v1906 = vld [vmem:[#allocation2 + $0x127] sm:$0xff]
      %v1907 = vld [vmem:[#allocation2 + $0x12f] sm:$0xff]
      %v1908 = vld [vmem:[#allocation2 + $0x137] sm:$0xff]
      %v1909 = vld [vmem:[#allocation2 + $0x13f] sm:$0xff]
      %v1910 = vld [vmem:[#allocation2 + $0x147] sm:$0xff]
      %v1911 = vld [vmem:[#allocation2 + $0x14f] sm:$0xff]
      %v1912 = vld [vmem:[#allocation2 + $0x157] sm:$0xff]
      %v1913 = vld [vmem:[#allocation2 + $0x15f] sm:$0xff]
      %v1914 = vld [vmem:[#allocation2 + $0x167] sm:$0xff]
      %v1915 = vld [vmem:[#allocation2 + $0x16f] sm:$0xff]
      %v1916 = vld [vmem:[#allocation2 + $0x177] sm:$0xff]
      %v1917 = vld [vmem:[#allocation2 + $0x17f] sm:$0xff]
      %v1918 = vld [vmem:[#allocation2 + $0x187] sm:$0xff]
      %v1919 = vld [vmem:[#allocation2 + $0x18f] sm:$0xff]
      %v1920 = vld [vmem:[#allocation2 + $0x197] sm:$0xff]
      %v1921 = vpack.c.bf16 %v1874, %v1873
      %v1922 = vpack.c.bf16 %v1876, %v1875
      %v1923 = vpack.c.bf16 %v1878, %v1877
      %v1924 = vpack.c.bf16 %v1880, %v1879
      %v1925 = vpack.c.bf16 %v1882, %v1881
      %v1926 = vpack.c.bf16 %v1884, %v1883
      %v1927 = vpack.c.bf16 %v1886, %v1885
      %v1928 = vpack.c.bf16 %v1888, %v1887
      %v1929 = vpack.c.bf16 %v1890, %v1889
      %v1930 = vpack.c.bf16 %v1892, %v1891
      %v1931 = vpack.c.bf16 %v1894, %v1893
      %v1932 = vpack.c.bf16 %v1896, %v1895
      %v1933 = vpack.c.bf16 %v1898, %v1897
      %v1934 = vpack.c.bf16 %v1900, %v1899
      %v1935 = vpack.c.bf16 %v1902, %v1901
      %v1936 = vpack.c.bf16 %v1904, %v1903
      %v1937 = vpack.c.bf16 %v1906, %v1905
      %v1938 = vpack.c.bf16 %v1908, %v1907
      %v1939 = vpack.c.bf16 %v1910, %v1909
      %v1940 = vpack.c.bf16 %v1912, %v1911
      %v1941 = vpack.c.bf16 %v1914, %v1913
      %v1942 = vpack.c.bf16 %v1916, %v1915
      %v1943 = vpack.c.bf16 %v1918, %v1917
      %v1944 = vpack.c.bf16 %v1920, %v1919
      %s1945 = scalar_lea.vmem %s1, 192
      %v1946 = vld [vmem:[%s1945] sm:$0xf]
      %v1947 = vld [vmem:[%s1945 + $0x4] sm:$0xf]
      %v1948 = vld [vmem:[%s1945 + $0x8] sm:$0xf]
      %v1949 = vld [vmem:[%s1945 + $0xc] sm:$0xf]
      %v1950 = vld [vmem:[%s1945 + $0x10] sm:$0xf]
      %v1951 = vld [vmem:[%s1945 + $0x14] sm:$0xf]
      %v1952 = vld [vmem:[%s1945 + $0x18] sm:$0xf]
      %v1953 = vld [vmem:[%s1945 + $0x1c] sm:$0xf]
      %v1954 = vld [vmem:[%s1945 + $0x20] sm:$0xf]
      %v1955 = vld [vmem:[%s1945 + $0x24] sm:$0xf]
      %v1956 = vld [vmem:[%s1945 + $0x28] sm:$0xf]
      %v1957 = vld [vmem:[%s1945 + $0x2c] sm:$0xf]
      %v1958 = vld [vmem:[%s1945 + $0x30] sm:$0xf]
      %v1959 = vld [vmem:[%s1945 + $0x34] sm:$0xf]
      %v1960 = vld [vmem:[%s1945 + $0x38] sm:$0xf]
      %v1961 = vld [vmem:[%s1945 + $0x3c] sm:$0xf]
      %v1962 = vld [vmem:[#allocation2 + $0x20] sm:$0xff]
      %v1963 = vld [vmem:[#allocation2 + $0x28] sm:$0xff]
      %v1964 = vld [vmem:[#allocation2 + $0x30] sm:$0xff]
      %v1965 = vld [vmem:[#allocation2 + $0x38] sm:$0xff]
      %v1966 = vld [vmem:[#allocation2 + $0x40] sm:$0xff]
      %v1967 = vld [vmem:[#allocation2 + $0x48] sm:$0xff]
      %v1968 = vld [vmem:[#allocation2 + $0x50] sm:$0xff]
      %v1969 = vld [vmem:[#allocation2 + $0x58] sm:$0xff]
      %v1970 = vld [vmem:[#allocation2 + $0x60] sm:$0xff]
      %v1971 = vld [vmem:[#allocation2 + $0x68] sm:$0xff]
      %v1972 = vld [vmem:[#allocation2 + $0x70] sm:$0xff]
      %v1973 = vld [vmem:[#allocation2 + $0x78] sm:$0xff]
      %v1974 = vld [vmem:[#allocation2 + $0x80] sm:$0xff]
      %v1975 = vld [vmem:[#allocation2 + $0x88] sm:$0xff]
      %v1976 = vld [vmem:[#allocation2 + $0x90] sm:$0xff]
      %v1977 = vld [vmem:[#allocation2 + $0x98] sm:$0xff]
      %v1978 = vld [vmem:[#allocation2 + $0xa0] sm:$0xff]
      %v1979 = vld [vmem:[#allocation2 + $0xa8] sm:$0xff]
      %v1980 = vld [vmem:[#allocation2 + $0xb0] sm:$0xff]
      %v1981 = vld [vmem:[#allocation2 + $0xb8] sm:$0xff]
      %v1982 = vld [vmem:[#allocation2 + $0xc0] sm:$0xff]
      %v1983 = vld [vmem:[#allocation2 + $0xc8] sm:$0xff]
      %v1984 = vld [vmem:[#allocation2 + $0xd0] sm:$0xff]
      %v1985 = vld [vmem:[#allocation2 + $0xd8] sm:$0xff]
      %v1986 = vld [vmem:[#allocation2 + $0xe0] sm:$0xff]
      %v1987 = vld [vmem:[#allocation2 + $0xe8] sm:$0xff]
      %v1988 = vld [vmem:[#allocation2 + $0xf0] sm:$0xff]
      %v1989 = vld [vmem:[#allocation2 + $0xf8] sm:$0xff]
      %v1990 = vld [vmem:[#allocation2 + $0x100] sm:$0xff]
      %v1991 = vld [vmem:[#allocation2 + $0x108] sm:$0xff]
      %v1992 = vld [vmem:[#allocation2 + $0x110] sm:$0xff]
      %v1993 = vld [vmem:[#allocation2 + $0x118] sm:$0xff]
      %v1994 = vld [vmem:[#allocation2 + $0x120] sm:$0xff]
      %v1995 = vld [vmem:[#allocation2 + $0x128] sm:$0xff]
      %v1996 = vld [vmem:[#allocation2 + $0x130] sm:$0xff]
      %v1997 = vld [vmem:[#allocation2 + $0x138] sm:$0xff]
      %v1998 = vld [vmem:[#allocation2 + $0x140] sm:$0xff]
      %v1999 = vld [vmem:[#allocation2 + $0x148] sm:$0xff]
      %v2000 = vld [vmem:[#allocation2 + $0x150] sm:$0xff]
      %v2001 = vld [vmem:[#allocation2 + $0x158] sm:$0xff]
      %v2002 = vld [vmem:[#allocation2 + $0x160] sm:$0xff]
      %v2003 = vld [vmem:[#allocation2 + $0x168] sm:$0xff]
      %v2004 = vld [vmem:[#allocation2 + $0x170] sm:$0xff]
      %v2005 = vld [vmem:[#allocation2 + $0x178] sm:$0xff]
      %v2006 = vld [vmem:[#allocation2 + $0x180] sm:$0xff]
      %v2007 = vld [vmem:[#allocation2 + $0x188] sm:$0xff]
      %v2008 = vld [vmem:[#allocation2 + $0x190] sm:$0xff]
      %v2009 = vld [vmem:[#allocation2 + $0x198] sm:$0xff]
      %v2010 = vpack.c.bf16 %v1963, %v1962
      %v2011 = vpack.c.bf16 %v1965, %v1964
      %v2012 = vpack.c.bf16 %v1967, %v1966
      %v2013 = vpack.c.bf16 %v1969, %v1968
      %v2014 = vpack.c.bf16 %v1971, %v1970
      %v2015 = vpack.c.bf16 %v1973, %v1972
      %v2016 = vpack.c.bf16 %v1975, %v1974
      %v2017 = vpack.c.bf16 %v1977, %v1976
      %v2018 = vpack.c.bf16 %v1979, %v1978
      %v2019 = vpack.c.bf16 %v1981, %v1980
      %v2020 = vpack.c.bf16 %v1983, %v1982
      %v2021 = vpack.c.bf16 %v1985, %v1984
      %v2022 = vpack.c.bf16 %v1987, %v1986
      %v2023 = vpack.c.bf16 %v1989, %v1988
      %v2024 = vpack.c.bf16 %v1991, %v1990
      %v2025 = vpack.c.bf16 %v1993, %v1992
      %v2026 = vpack.c.bf16 %v1995, %v1994
      %v2027 = vpack.c.bf16 %v1997, %v1996
      %v2028 = vpack.c.bf16 %v1999, %v1998
      %v2029 = vpack.c.bf16 %v2001, %v2000
      %v2030 = vpack.c.bf16 %v2003, %v2002
      %v2031 = vpack.c.bf16 %v2005, %v2004
      %v2032 = vpack.c.bf16 %v2007, %v2006
      %v2033 = vpack.c.bf16 %v2009, %v2008
      %s2034 = scalar_lea.vmem %s1, 256
      %v2035 = vld [vmem:[%s2034] sm:$0xf]
      %v2036 = vld [vmem:[%s2034 + $0x4] sm:$0xf]
      %v2037 = vld [vmem:[%s2034 + $0x8] sm:$0xf]
      %v2038 = vld [vmem:[%s2034 + $0xc] sm:$0xf]
      %v2039 = vld [vmem:[%s2034 + $0x10] sm:$0xf]
      %v2040 = vld [vmem:[%s2034 + $0x14] sm:$0xf]
      %v2041 = vld [vmem:[%s2034 + $0x18] sm:$0xf]
      %v2042 = vld [vmem:[%s2034 + $0x1c] sm:$0xf]
      %v2043 = vld [vmem:[%s2034 + $0x20] sm:$0xf]
      %v2044 = vld [vmem:[%s2034 + $0x24] sm:$0xf]
      %v2045 = vld [vmem:[%s2034 + $0x28] sm:$0xf]
      %v2046 = vld [vmem:[%s2034 + $0x2c] sm:$0xf]
      %v2047 = vld [vmem:[%s2034 + $0x30] sm:$0xf]
      %v2048 = vld [vmem:[%s2034 + $0x34] sm:$0xf]
      %v2049 = vld [vmem:[%s2034 + $0x38] sm:$0xf]
      %v2050 = vld [vmem:[%s2034 + $0x3c] sm:$0xf]
      %v2067 = vunpack.c.l.b16 %v2035
      %v2068 = vunpack.c.l.b16 %v2036
      %v2069 = vunpack.c.l.b16 %v2037
      %v2070 = vunpack.c.l.b16 %v2038
      %v2071 = vunpack.c.l.b16 %v2039
      %v2072 = vunpack.c.l.b16 %v2040
      %v2073 = vunpack.c.l.b16 %v2041
      %v2074 = vunpack.c.l.b16 %v2042
      %v2075 = vunpack.c.l.b16 %v2043
      %v2076 = vunpack.c.l.b16 %v2044
      %v2077 = vunpack.c.l.b16 %v2045
      %v2078 = vunpack.c.l.b16 %v2046
      %v2079 = vunpack.c.l.b16 %v2047
      %v2080 = vunpack.c.l.b16 %v2048
      %v2081 = vunpack.c.l.b16 %v2049
      %v2082 = vunpack.c.l.b16 %v2050
      %v2083 = vpack.c.b16 %v2068, %v2067
      %v2084 = vpack.c.b16 %v2070, %v2069
      %v2085 = vpack.c.b16 %v2072, %v2071
      %v2086 = vpack.c.b16 %v2074, %v2073
      %v2087 = vpack.c.b16 %v2076, %v2075
      %v2088 = vpack.c.b16 %v2078, %v2077
      %v2089 = vpack.c.b16 %v2080, %v2079
      %v2090 = vpack.c.b16 %v2082, %v2081
      %2099 = vmatprep.subr.bf16.mxu0 0
      %2100 = vmatpush1.bf16.msra.mxu0 %v2090
      %2101 = vmatprep.subr.bf16.mxu0 0
      %2102 = vmatpush1.bf16.msra.mxu0 %v2089
      %2103 = vmatprep.subr.bf16.mxu0 0
      %2104 = vmatpush1.bf16.msra.mxu0 %v2088
      %2105 = vmatprep.subr.bf16.mxu0 0
      %2106 = vmatpush1.bf16.msra.mxu0 %v2087
      %2107 = vmatprep.subr.bf16.mxu0 0
      %2108 = vmatpush1.bf16.msra.mxu0 %v2086
      %2109 = vmatprep.subr.bf16.mxu0 0
      %2110 = vmatpush1.bf16.msra.mxu0 %v2085
      %2111 = vmatprep.subr.bf16.mxu0 0
      %2112 = vmatpush1.bf16.msra.mxu0 %v2084
      %2113 = vmatprep.subr.bf16.mxu0 0
      %2114 = vmatpush1.bf16.msra.mxu0 %v2083
      %2115 = vmatprep.subr.bf16.mxu0 0
      %2116 = vmatpush2.bf16.msra.mxu0 0
      %2117 = vmatprep.subr.bf16.mxu0 0
      %2118 = vmatpush2.bf16.msra.mxu0 0
      %2119 = vmatprep.subr.bf16.mxu0 0
      %2120 = vmatpush2.bf16.msra.mxu0 0
      %2121 = vmatprep.subr.bf16.mxu0 0
      %2122 = vmatpush2.bf16.msra.mxu0 0
      %2123 = vmatprep.subr.bf16.mxu0 0
      %2124 = vmatpush2.bf16.msra.mxu0 0
      %2125 = vmatprep.subr.bf16.mxu0 0
      %2126 = vmatpush2.bf16.msra.mxu0 0
      %2127 = vmatprep.subr.bf16.mxu0 0
      %2128 = vmatpush2.bf16.msra.mxu0 0
      %2129 = vmatprep.subr.bf16.mxu0 0
      %2130 = vmatpush2.bf16.msra.mxu0 0
      %2131 = vmatprep.mubr.bf16.mxu0 0
      %2132 = vmatmul.mubr.bf16.gmra.mxu0 %v2010
      %v2133 = vpop.f32.mrf.mxu0
      %v2134 = vadd.f32 0.0, %v2133
      %v2135 = vpop.f32.mrf.mxu0
      %v2136 = vpop.f32.mrf.mxu0
      %v2137 = vadd.f32 0.0, %v2136
      %v2138 = vpop.f32.mrf.mxu0
      %2139 = vmatprep.mubr.bf16.mxu0 0
      %2140 = vmatmul.mubr.bf16.gmra.mxu0 %v2011
      %v2141 = vpop.f32.mrf.mxu0
      %v2142 = vadd.f32 0.0, %v2141
      %v2143 = vpop.f32.mrf.mxu0
      %v2144 = vpop.f32.mrf.mxu0
      %v2145 = vadd.f32 0.0, %v2144
      %v2146 = vpop.f32.mrf.mxu0
      %2147 = vmatprep.mubr.bf16.mxu0 0
      %2148 = vmatmul.mubr.bf16.gmra.mxu0 %v2012
      %v2149 = vpop.f32.mrf.mxu0
      %v2150 = vadd.f32 0.0, %v2149
      %v2151 = vpop.f32.mrf.mxu0
      %v2152 = vpop.f32.mrf.mxu0
      %v2153 = vadd.f32 0.0, %v2152
      %v2154 = vpop.f32.mrf.mxu0
      %2155 = vmatprep.mubr.bf16.mxu0 0
      %2156 = vmatmul.mubr.bf16.gmra.mxu0 %v2013
      %v2157 = vpop.f32.mrf.mxu0
      %v2158 = vadd.f32 0.0, %v2157
      %v2159 = vpop.f32.mrf.mxu0
      %v2160 = vpop.f32.mrf.mxu0
      %v2161 = vadd.f32 0.0, %v2160
      %v2162 = vpop.f32.mrf.mxu0
      %2163 = vmatprep.mubr.bf16.mxu0 0
      %2164 = vmatmul.mubr.bf16.gmra.mxu0 %v2014
      %v2165 = vpop.f32.mrf.mxu0
      %v2166 = vadd.f32 0.0, %v2165
      %v2167 = vpop.f32.mrf.mxu0
      %v2168 = vpop.f32.mrf.mxu0
      %v2169 = vadd.f32 0.0, %v2168
      %v2170 = vpop.f32.mrf.mxu0
      %2171 = vmatprep.mubr.bf16.mxu0 0
      %2172 = vmatmul.mubr.bf16.gmra.mxu0 %v2015
      %v2173 = vpop.f32.mrf.mxu0
      %v2174 = vadd.f32 0.0, %v2173
      %v2175 = vpop.f32.mrf.mxu0
      %v2176 = vpop.f32.mrf.mxu0
      %v2177 = vadd.f32 0.0, %v2176
      %v2178 = vpop.f32.mrf.mxu0
      %2179 = vmatprep.mubr.bf16.mxu0 0
      %2180 = vmatmul.mubr.bf16.gmra.mxu0 %v2016
      %v2181 = vpop.f32.mrf.mxu0
      %v2182 = vadd.f32 0.0, %v2181
      %v2183 = vpop.f32.mrf.mxu0
      %v2184 = vpop.f32.mrf.mxu0
      %v2185 = vadd.f32 0.0, %v2184
      %v2186 = vpop.f32.mrf.mxu0
      %2187 = vmatprep.mubr.bf16.mxu0 0
      %2188 = vmatmul.mubr.bf16.gmra.mxu0 %v2017
      %v2189 = vpop.f32.mrf.mxu0
      %v2190 = vadd.f32 0.0, %v2189
      %v2191 = vpop.f32.mrf.mxu0
      %v2192 = vpop.f32.mrf.mxu0
      %v2193 = vadd.f32 0.0, %v2192
      %v2194 = vpop.f32.mrf.mxu0
      %2195 = vmatprep.mubr.bf16.mxu0 0
      %2196 = vmatmul.mubr.bf16.gmra.mxu0 %v2018
      %v2197 = vpop.f32.mrf.mxu0
      %v2198 = vadd.f32 0.0, %v2197
      %v2199 = vpop.f32.mrf.mxu0
      %v2200 = vpop.f32.mrf.mxu0
      %v2201 = vadd.f32 0.0, %v2200
      %v2202 = vpop.f32.mrf.mxu0
      %2203 = vmatprep.mubr.bf16.mxu0 0
      %2204 = vmatmul.mubr.bf16.gmra.mxu0 %v2019
      %v2205 = vpop.f32.mrf.mxu0
      %v2206 = vadd.f32 0.0, %v2205
      %v2207 = vpop.f32.mrf.mxu0
      %v2208 = vpop.f32.mrf.mxu0
      %v2209 = vadd.f32 0.0, %v2208
      %v2210 = vpop.f32.mrf.mxu0
      %2211 = vmatprep.mubr.bf16.mxu0 0
      %2212 = vmatmul.mubr.bf16.gmra.mxu0 %v2020
      %v2213 = vpop.f32.mrf.mxu0
      %v2214 = vadd.f32 0.0, %v2213
      %v2215 = vpop.f32.mrf.mxu0
      %v2216 = vpop.f32.mrf.mxu0
      %v2217 = vadd.f32 0.0, %v2216
      %v2218 = vpop.f32.mrf.mxu0
      %2219 = vmatprep.mubr.bf16.mxu0 0
      %2220 = vmatmul.mubr.bf16.gmra.mxu0 %v2021
      %v2221 = vpop.f32.mrf.mxu0
      %v2222 = vadd.f32 0.0, %v2221
      %v2223 = vpop.f32.mrf.mxu0
      %v2224 = vpop.f32.mrf.mxu0
      %v2225 = vadd.f32 0.0, %v2224
      %v2226 = vpop.f32.mrf.mxu0
      %2227 = vmatprep.mubr.bf16.mxu0 0
      %2228 = vmatmul.mubr.bf16.gmra.mxu0 %v2022
      %v2229 = vpop.f32.mrf.mxu0
      %v2230 = vadd.f32 0.0, %v2229
      %v2231 = vpop.f32.mrf.mxu0
      %v2232 = vpop.f32.mrf.mxu0
      %v2233 = vadd.f32 0.0, %v2232
      %v2234 = vpop.f32.mrf.mxu0
      %2235 = vmatprep.mubr.bf16.mxu0 0
      %2236 = vmatmul.mubr.bf16.gmra.mxu0 %v2023
      %v2237 = vpop.f32.mrf.mxu0
      %v2238 = vadd.f32 0.0, %v2237
      %v2239 = vpop.f32.mrf.mxu0
      %v2240 = vpop.f32.mrf.mxu0
      %v2241 = vadd.f32 0.0, %v2240
      %v2242 = vpop.f32.mrf.mxu0
      %2243 = vmatprep.mubr.bf16.mxu0 0
      %2244 = vmatmul.mubr.bf16.gmra.mxu0 %v2024
      %v2245 = vpop.f32.mrf.mxu0
      %v2246 = vadd.f32 0.0, %v2245
      %v2247 = vpop.f32.mrf.mxu0
      %v2248 = vpop.f32.mrf.mxu0
      %v2249 = vadd.f32 0.0, %v2248
      %v2250 = vpop.f32.mrf.mxu0
      %2251 = vmatprep.mubr.bf16.mxu0 0
      %2252 = vmatmul.mubr.bf16.gmra.mxu0 %v2025
      %v2253 = vpop.f32.mrf.mxu0
      %v2254 = vadd.f32 0.0, %v2253
      %v2255 = vpop.f32.mrf.mxu0
      %v2256 = vpop.f32.mrf.mxu0
      %v2257 = vadd.f32 0.0, %v2256
      %v2258 = vpop.f32.mrf.mxu0
      %2259 = vmatprep.mubr.bf16.mxu0 0
      %2260 = vmatmul.mubr.bf16.gmra.mxu0 %v2026
      %v2261 = vpop.f32.mrf.mxu0
      %v2262 = vadd.f32 0.0, %v2261
      %v2263 = vpop.f32.mrf.mxu0
      %v2264 = vpop.f32.mrf.mxu0
      %v2265 = vadd.f32 0.0, %v2264
      %v2266 = vpop.f32.mrf.mxu0
      %2267 = vmatprep.mubr.bf16.mxu0 0
      %2268 = vmatmul.mubr.bf16.gmra.mxu0 %v2027
      %v2269 = vpop.f32.mrf.mxu0
      %v2270 = vadd.f32 0.0, %v2269
      %v2271 = vpop.f32.mrf.mxu0
      %v2272 = vpop.f32.mrf.mxu0
      %v2273 = vadd.f32 0.0, %v2272
      %v2274 = vpop.f32.mrf.mxu0
      %2275 = vmatprep.mubr.bf16.mxu0 0
      %2276 = vmatmul.mubr.bf16.gmra.mxu0 %v2028
      %v2277 = vpop.f32.mrf.mxu0
      %v2278 = vadd.f32 0.0, %v2277
      %v2279 = vpop.f32.mrf.mxu0
      %v2280 = vpop.f32.mrf.mxu0
      %v2281 = vadd.f32 0.0, %v2280
      %v2282 = vpop.f32.mrf.mxu0
      %2283 = vmatprep.mubr.bf16.mxu0 0
      %2284 = vmatmul.mubr.bf16.gmra.mxu0 %v2029
      %v2285 = vpop.f32.mrf.mxu0
      %v2286 = vadd.f32 0.0, %v2285
      %v2287 = vpop.f32.mrf.mxu0
      %v2288 = vpop.f32.mrf.mxu0
      %v2289 = vadd.f32 0.0, %v2288
      %v2290 = vpop.f32.mrf.mxu0
      %2291 = vmatprep.mubr.bf16.mxu0 0
      %2292 = vmatmul.mubr.bf16.gmra.mxu0 %v2030
      %v2293 = vpop.f32.mrf.mxu0
      %v2294 = vadd.f32 0.0, %v2293
      %v2295 = vpop.f32.mrf.mxu0
      %v2296 = vpop.f32.mrf.mxu0
      %v2297 = vadd.f32 0.0, %v2296
      %v2298 = vpop.f32.mrf.mxu0
      %2299 = vmatprep.mubr.bf16.mxu0 0
      %2300 = vmatmul.mubr.bf16.gmra.mxu0 %v2031
      %v2301 = vpop.f32.mrf.mxu0
      %v2302 = vadd.f32 0.0, %v2301
      %v2303 = vpop.f32.mrf.mxu0
      %v2304 = vpop.f32.mrf.mxu0
      %v2305 = vadd.f32 0.0, %v2304
      %v2306 = vpop.f32.mrf.mxu0
      %2307 = vmatprep.mubr.bf16.mxu0 0
      %2308 = vmatmul.mubr.bf16.gmra.mxu0 %v2032
      %v2309 = vpop.f32.mrf.mxu0
      %v2310 = vadd.f32 0.0, %v2309
      %v2311 = vpop.f32.mrf.mxu0
      %v2312 = vpop.f32.mrf.mxu0
      %v2313 = vadd.f32 0.0, %v2312
      %v2314 = vpop.f32.mrf.mxu0
      %2315 = vmatprep.mubr.bf16.mxu0 0
      %2316 = vmatmul.mubr.bf16.gmra.mxu0 %v2033
      %v2317 = vpop.f32.mrf.mxu0
      %v2318 = vadd.f32 0.0, %v2317
      %v2319 = vpop.f32.mrf.mxu0
      %v2320 = vpop.f32.mrf.mxu0
      %v2321 = vadd.f32 0.0, %v2320
      %v2322 = vpop.f32.mrf.mxu0
      %2323 = vdwg.mxu0
      %v2340 = vunpack.c.l.b16 %v1946
      %v2341 = vunpack.c.l.b16 %v1947
      %v2342 = vunpack.c.l.b16 %v1948
      %v2343 = vunpack.c.l.b16 %v1949
      %v2344 = vunpack.c.l.b16 %v1950
      %v2345 = vunpack.c.l.b16 %v1951
      %v2346 = vunpack.c.l.b16 %v1952
      %v2347 = vunpack.c.l.b16 %v1953
      %v2348 = vunpack.c.l.b16 %v1954
      %v2349 = vunpack.c.l.b16 %v1955
      %v2350 = vunpack.c.l.b16 %v1956
      %v2351 = vunpack.c.l.b16 %v1957
      %v2352 = vunpack.c.l.b16 %v1958
      %v2353 = vunpack.c.l.b16 %v1959
      %v2354 = vunpack.c.l.b16 %v1960
      %v2355 = vunpack.c.l.b16 %v1961
      %v2356 = vpack.c.b16 %v2341, %v2340
      %v2357 = vpack.c.b16 %v2343, %v2342
      %v2358 = vpack.c.b16 %v2345, %v2344
      %v2359 = vpack.c.b16 %v2347, %v2346
      %v2360 = vpack.c.b16 %v2349, %v2348
      %v2361 = vpack.c.b16 %v2351, %v2350
      %v2362 = vpack.c.b16 %v2353, %v2352
      %v2363 = vpack.c.b16 %v2355, %v2354
      %2372 = vmatprep.subr.bf16.mxu0 0
      %2373 = vmatpush1.bf16.msra.mxu0 %v2363
      %2374 = vmatprep.subr.bf16.mxu0 0
      %2375 = vmatpush1.bf16.msra.mxu0 %v2362
      %2376 = vmatprep.subr.bf16.mxu0 0
      %2377 = vmatpush1.bf16.msra.mxu0 %v2361
      %2378 = vmatprep.subr.bf16.mxu0 0
      %2379 = vmatpush1.bf16.msra.mxu0 %v2360
      %2380 = vmatprep.subr.bf16.mxu0 0
      %2381 = vmatpush1.bf16.msra.mxu0 %v2359
      %2382 = vmatprep.subr.bf16.mxu0 0
      %2383 = vmatpush1.bf16.msra.mxu0 %v2358
      %2384 = vmatprep.subr.bf16.mxu0 0
      %2385 = vmatpush1.bf16.msra.mxu0 %v2357
      %2386 = vmatprep.subr.bf16.mxu0 0
      %2387 = vmatpush1.bf16.msra.mxu0 %v2356
      %2388 = vmatprep.subr.bf16.mxu0 0
      %2389 = vmatpush2.bf16.msra.mxu0 0
      %2390 = vmatprep.subr.bf16.mxu0 0
      %2391 = vmatpush2.bf16.msra.mxu0 0
      %2392 = vmatprep.subr.bf16.mxu0 0
      %2393 = vmatpush2.bf16.msra.mxu0 0
      %2394 = vmatprep.subr.bf16.mxu0 0
      %2395 = vmatpush2.bf16.msra.mxu0 0
      %2396 = vmatprep.subr.bf16.mxu0 0
      %2397 = vmatpush2.bf16.msra.mxu0 0
      %2398 = vmatprep.subr.bf16.mxu0 0
      %2399 = vmatpush2.bf16.msra.mxu0 0
      %2400 = vmatprep.subr.bf16.mxu0 0
      %2401 = vmatpush2.bf16.msra.mxu0 0
      %2402 = vmatprep.subr.bf16.mxu0 0
      %2403 = vmatpush2.bf16.msra.mxu0 0
      %2404 = vmatprep.mubr.bf16.mxu0 0
      %2405 = vmatmul.mubr.bf16.gmra.mxu0 %v1921
      %v2406 = vpop.f32.mrf.mxu0
      %v2407 = vadd.f32 %v2134, %v2406
      %v2408 = vpop.f32.mrf.mxu0
      %v2409 = vpop.f32.mrf.mxu0
      %v2410 = vadd.f32 %v2137, %v2409
      %v2411 = vpop.f32.mrf.mxu0
      %2412 = vmatprep.mubr.bf16.mxu0 0
      %2413 = vmatmul.mubr.bf16.gmra.mxu0 %v1922
      %v2414 = vpop.f32.mrf.mxu0
      %v2415 = vadd.f32 %v2142, %v2414
      %v2416 = vpop.f32.mrf.mxu0
      %v2417 = vpop.f32.mrf.mxu0
      %v2418 = vadd.f32 %v2145, %v2417
      %v2419 = vpop.f32.mrf.mxu0
      %2420 = vmatprep.mubr.bf16.mxu0 0
      %2421 = vmatmul.mubr.bf16.gmra.mxu0 %v1923
      %v2422 = vpop.f32.mrf.mxu0
      %v2423 = vadd.f32 %v2150, %v2422
      %v2424 = vpop.f32.mrf.mxu0
      %v2425 = vpop.f32.mrf.mxu0
      %v2426 = vadd.f32 %v2153, %v2425
      %v2427 = vpop.f32.mrf.mxu0
      %2428 = vmatprep.mubr.bf16.mxu0 0
      %2429 = vmatmul.mubr.bf16.gmra.mxu0 %v1924
      %v2430 = vpop.f32.mrf.mxu0
      %v2431 = vadd.f32 %v2158, %v2430
      %v2432 = vpop.f32.mrf.mxu0
      %v2433 = vpop.f32.mrf.mxu0
      %v2434 = vadd.f32 %v2161, %v2433
      %v2435 = vpop.f32.mrf.mxu0
      %2436 = vmatprep.mubr.bf16.mxu0 0
      %2437 = vmatmul.mubr.bf16.gmra.mxu0 %v1925
      %v2438 = vpop.f32.mrf.mxu0
      %v2439 = vadd.f32 %v2166, %v2438
      %v2440 = vpop.f32.mrf.mxu0
      %v2441 = vpop.f32.mrf.mxu0
      %v2442 = vadd.f32 %v2169, %v2441
      %v2443 = vpop.f32.mrf.mxu0
      %2444 = vmatprep.mubr.bf16.mxu0 0
      %2445 = vmatmul.mubr.bf16.gmra.mxu0 %v1926
      %v2446 = vpop.f32.mrf.mxu0
      %v2447 = vadd.f32 %v2174, %v2446
      %v2448 = vpop.f32.mrf.mxu0
      %v2449 = vpop.f32.mrf.mxu0
      %v2450 = vadd.f32 %v2177, %v2449
      %v2451 = vpop.f32.mrf.mxu0
      %2452 = vmatprep.mubr.bf16.mxu0 0
      %2453 = vmatmul.mubr.bf16.gmra.mxu0 %v1927
      %v2454 = vpop.f32.mrf.mxu0
      %v2455 = vadd.f32 %v2182, %v2454
      %v2456 = vpop.f32.mrf.mxu0
      %v2457 = vpop.f32.mrf.mxu0
      %v2458 = vadd.f32 %v2185, %v2457
      %v2459 = vpop.f32.mrf.mxu0
      %2460 = vmatprep.mubr.bf16.mxu0 0
      %2461 = vmatmul.mubr.bf16.gmra.mxu0 %v1928
      %v2462 = vpop.f32.mrf.mxu0
      %v2463 = vadd.f32 %v2190, %v2462
      %v2464 = vpop.f32.mrf.mxu0
      %v2465 = vpop.f32.mrf.mxu0
      %v2466 = vadd.f32 %v2193, %v2465
      %v2467 = vpop.f32.mrf.mxu0
      %2468 = vmatprep.mubr.bf16.mxu0 0
      %2469 = vmatmul.mubr.bf16.gmra.mxu0 %v1929
      %v2470 = vpop.f32.mrf.mxu0
      %v2471 = vadd.f32 %v2198, %v2470
      %v2472 = vpop.f32.mrf.mxu0
      %v2473 = vpop.f32.mrf.mxu0
      %v2474 = vadd.f32 %v2201, %v2473
      %v2475 = vpop.f32.mrf.mxu0
      %2476 = vmatprep.mubr.bf16.mxu0 0
      %2477 = vmatmul.mubr.bf16.gmra.mxu0 %v1930
      %v2478 = vpop.f32.mrf.mxu0
      %v2479 = vadd.f32 %v2206, %v2478
      %v2480 = vpop.f32.mrf.mxu0
      %v2481 = vpop.f32.mrf.mxu0
      %v2482 = vadd.f32 %v2209, %v2481
      %v2483 = vpop.f32.mrf.mxu0
      %2484 = vmatprep.mubr.bf16.mxu0 0
      %2485 = vmatmul.mubr.bf16.gmra.mxu0 %v1931
      %v2486 = vpop.f32.mrf.mxu0
      %v2487 = vadd.f32 %v2214, %v2486
      %v2488 = vpop.f32.mrf.mxu0
      %v2489 = vpop.f32.mrf.mxu0
      %v2490 = vadd.f32 %v2217, %v2489
      %v2491 = vpop.f32.mrf.mxu0
      %2492 = vmatprep.mubr.bf16.mxu0 0
      %2493 = vmatmul.mubr.bf16.gmra.mxu0 %v1932
      %v2494 = vpop.f32.mrf.mxu0
      %v2495 = vadd.f32 %v2222, %v2494
      %v2496 = vpop.f32.mrf.mxu0
      %v2497 = vpop.f32.mrf.mxu0
      %v2498 = vadd.f32 %v2225, %v2497
      %v2499 = vpop.f32.mrf.mxu0
      %2500 = vmatprep.mubr.bf16.mxu0 0
      %2501 = vmatmul.mubr.bf16.gmra.mxu0 %v1933
      %v2502 = vpop.f32.mrf.mxu0
      %v2503 = vadd.f32 %v2230, %v2502
      %v2504 = vpop.f32.mrf.mxu0
      %v2505 = vpop.f32.mrf.mxu0
      %v2506 = vadd.f32 %v2233, %v2505
      %v2507 = vpop.f32.mrf.mxu0
      %2508 = vmatprep.mubr.bf16.mxu0 0
      %2509 = vmatmul.mubr.bf16.gmra.mxu0 %v1934
      %v2510 = vpop.f32.mrf.mxu0
      %v2511 = vadd.f32 %v2238, %v2510
      %v2512 = vpop.f32.mrf.mxu0
      %v2513 = vpop.f32.mrf.mxu0
      %v2514 = vadd.f32 %v2241, %v2513
      %v2515 = vpop.f32.mrf.mxu0
      %2516 = vmatprep.mubr.bf16.mxu0 0
      %2517 = vmatmul.mubr.bf16.gmra.mxu0 %v1935
      %v2518 = vpop.f32.mrf.mxu0
      %v2519 = vadd.f32 %v2246, %v2518
      %v2520 = vpop.f32.mrf.mxu0
      %v2521 = vpop.f32.mrf.mxu0
      %v2522 = vadd.f32 %v2249, %v2521
      %v2523 = vpop.f32.mrf.mxu0
      %2524 = vmatprep.mubr.bf16.mxu0 0
      %2525 = vmatmul.mubr.bf16.gmra.mxu0 %v1936
      %v2526 = vpop.f32.mrf.mxu0
      %v2527 = vadd.f32 %v2254, %v2526
      %v2528 = vpop.f32.mrf.mxu0
      %v2529 = vpop.f32.mrf.mxu0
      %v2530 = vadd.f32 %v2257, %v2529
      %v2531 = vpop.f32.mrf.mxu0
      %2532 = vmatprep.mubr.bf16.mxu0 0
      %2533 = vmatmul.mubr.bf16.gmra.mxu0 %v1937
      %v2534 = vpop.f32.mrf.mxu0
      %v2535 = vadd.f32 %v2262, %v2534
      %v2536 = vpop.f32.mrf.mxu0
      %v2537 = vpop.f32.mrf.mxu0
      %v2538 = vadd.f32 %v2265, %v2537
      %v2539 = vpop.f32.mrf.mxu0
      %2540 = vmatprep.mubr.bf16.mxu0 0
      %2541 = vmatmul.mubr.bf16.gmra.mxu0 %v1938
      %v2542 = vpop.f32.mrf.mxu0
      %v2543 = vadd.f32 %v2270, %v2542
      %v2544 = vpop.f32.mrf.mxu0
      %v2545 = vpop.f32.mrf.mxu0
      %v2546 = vadd.f32 %v2273, %v2545
      %v2547 = vpop.f32.mrf.mxu0
      %2548 = vmatprep.mubr.bf16.mxu0 0
      %2549 = vmatmul.mubr.bf16.gmra.mxu0 %v1939
      %v2550 = vpop.f32.mrf.mxu0
      %v2551 = vadd.f32 %v2278, %v2550
      %v2552 = vpop.f32.mrf.mxu0
      %v2553 = vpop.f32.mrf.mxu0
      %v2554 = vadd.f32 %v2281, %v2553
      %v2555 = vpop.f32.mrf.mxu0
      %2556 = vmatprep.mubr.bf16.mxu0 0
      %2557 = vmatmul.mubr.bf16.gmra.mxu0 %v1940
      %v2558 = vpop.f32.mrf.mxu0
      %v2559 = vadd.f32 %v2286, %v2558
      %v2560 = vpop.f32.mrf.mxu0
      %v2561 = vpop.f32.mrf.mxu0
      %v2562 = vadd.f32 %v2289, %v2561
      %v2563 = vpop.f32.mrf.mxu0
      %2564 = vmatprep.mubr.bf16.mxu0 0
      %2565 = vmatmul.mubr.bf16.gmra.mxu0 %v1941
      %v2566 = vpop.f32.mrf.mxu0
      %v2567 = vadd.f32 %v2294, %v2566
      %v2568 = vpop.f32.mrf.mxu0
      %v2569 = vpop.f32.mrf.mxu0
      %v2570 = vadd.f32 %v2297, %v2569
      %v2571 = vpop.f32.mrf.mxu0
      %2572 = vmatprep.mubr.bf16.mxu0 0
      %2573 = vmatmul.mubr.bf16.gmra.mxu0 %v1942
      %v2574 = vpop.f32.mrf.mxu0
      %v2575 = vadd.f32 %v2302, %v2574
      %v2576 = vpop.f32.mrf.mxu0
      %v2577 = vpop.f32.mrf.mxu0
      %v2578 = vadd.f32 %v2305, %v2577
      %v2579 = vpop.f32.mrf.mxu0
      %2580 = vmatprep.mubr.bf16.mxu0 0
      %2581 = vmatmul.mubr.bf16.gmra.mxu0 %v1943
      %v2582 = vpop.f32.mrf.mxu0
      %v2583 = vadd.f32 %v2310, %v2582
      %v2584 = vpop.f32.mrf.mxu0
      %v2585 = vpop.f32.mrf.mxu0
      %v2586 = vadd.f32 %v2313, %v2585
      %v2587 = vpop.f32.mrf.mxu0
      %2588 = vmatprep.mubr.bf16.mxu0 0
      %2589 = vmatmul.mubr.bf16.gmra.mxu0 %v1944
      %v2590 = vpop.f32.mrf.mxu0
      %v2591 = vadd.f32 %v2318, %v2590
      %v2592 = vpop.f32.mrf.mxu0
      %v2593 = vpop.f32.mrf.mxu0
      %v2594 = vadd.f32 %v2321, %v2593
      %v2595 = vpop.f32.mrf.mxu0
      %2596 = vdwg.mxu0
      %v2597 = vld [vmem:[#allocation2 + $0x21] sm:$0xff]
      %v2598 = vld [vmem:[#allocation2 + $0x29] sm:$0xff]
      %v2599 = vld [vmem:[#allocation2 + $0x31] sm:$0xff]
      %v2600 = vld [vmem:[#allocation2 + $0x39] sm:$0xff]
      %v2601 = vld [vmem:[#allocation2 + $0x41] sm:$0xff]
      %v2602 = vld [vmem:[#allocation2 + $0x49] sm:$0xff]
      %v2603 = vld [vmem:[#allocation2 + $0x51] sm:$0xff]
      %v2604 = vld [vmem:[#allocation2 + $0x59] sm:$0xff]
      %v2605 = vld [vmem:[#allocation2 + $0x61] sm:$0xff]
      %v2606 = vld [vmem:[#allocation2 + $0x69] sm:$0xff]
      %v2607 = vld [vmem:[#allocation2 + $0x71] sm:$0xff]
      %v2608 = vld [vmem:[#allocation2 + $0x79] sm:$0xff]
      %v2609 = vld [vmem:[#allocation2 + $0x81] sm:$0xff]
      %v2610 = vld [vmem:[#allocation2 + $0x89] sm:$0xff]
      %v2611 = vld [vmem:[#allocation2 + $0x91] sm:$0xff]
      %v2612 = vld [vmem:[#allocation2 + $0x99] sm:$0xff]
      %v2613 = vld [vmem:[#allocation2 + $0xa1] sm:$0xff]
      %v2614 = vld [vmem:[#allocation2 + $0xa9] sm:$0xff]
      %v2615 = vld [vmem:[#allocation2 + $0xb1] sm:$0xff]
      %v2616 = vld [vmem:[#allocation2 + $0xb9] sm:$0xff]
      %v2617 = vld [vmem:[#allocation2 + $0xc1] sm:$0xff]
      %v2618 = vld [vmem:[#allocation2 + $0xc9] sm:$0xff]
      %v2619 = vld [vmem:[#allocation2 + $0xd1] sm:$0xff]
      %v2620 = vld [vmem:[#allocation2 + $0xd9] sm:$0xff]
      %v2621 = vld [vmem:[#allocation2 + $0xe1] sm:$0xff]
      %v2622 = vld [vmem:[#allocation2 + $0xe9] sm:$0xff]
      %v2623 = vld [vmem:[#allocation2 + $0xf1] sm:$0xff]
      %v2624 = vld [vmem:[#allocation2 + $0xf9] sm:$0xff]
      %v2625 = vld [vmem:[#allocation2 + $0x101] sm:$0xff]
      %v2626 = vld [vmem:[#allocation2 + $0x109] sm:$0xff]
      %v2627 = vld [vmem:[#allocation2 + $0x111] sm:$0xff]
      %v2628 = vld [vmem:[#allocation2 + $0x119] sm:$0xff]
      %v2629 = vld [vmem:[#allocation2 + $0x121] sm:$0xff]
      %v2630 = vld [vmem:[#allocation2 + $0x129] sm:$0xff]
      %v2631 = vld [vmem:[#allocation2 + $0x131] sm:$0xff]
      %v2632 = vld [vmem:[#allocation2 + $0x139] sm:$0xff]
      %v2633 = vld [vmem:[#allocation2 + $0x141] sm:$0xff]
      %v2634 = vld [vmem:[#allocation2 + $0x149] sm:$0xff]
      %v2635 = vld [vmem:[#allocation2 + $0x151] sm:$0xff]
      %v2636 = vld [vmem:[#allocation2 + $0x159] sm:$0xff]
      %v2637 = vld [vmem:[#allocation2 + $0x161] sm:$0xff]
      %v2638 = vld [vmem:[#allocation2 + $0x169] sm:$0xff]
      %v2639 = vld [vmem:[#allocation2 + $0x171] sm:$0xff]
      %v2640 = vld [vmem:[#allocation2 + $0x179] sm:$0xff]
      %v2641 = vld [vmem:[#allocation2 + $0x181] sm:$0xff]
      %v2642 = vld [vmem:[#allocation2 + $0x189] sm:$0xff]
      %v2643 = vld [vmem:[#allocation2 + $0x191] sm:$0xff]
      %v2644 = vld [vmem:[#allocation2 + $0x199] sm:$0xff]
      %v2645 = vpack.c.bf16 %v2598, %v2597
      %v2646 = vpack.c.bf16 %v2600, %v2599
      %v2647 = vpack.c.bf16 %v2602, %v2601
      %v2648 = vpack.c.bf16 %v2604, %v2603
      %v2649 = vpack.c.bf16 %v2606, %v2605
      %v2650 = vpack.c.bf16 %v2608, %v2607
      %v2651 = vpack.c.bf16 %v2610, %v2609
      %v2652 = vpack.c.bf16 %v2612, %v2611
      %v2653 = vpack.c.bf16 %v2614, %v2613
      %v2654 = vpack.c.bf16 %v2616, %v2615
      %v2655 = vpack.c.bf16 %v2618, %v2617
      %v2656 = vpack.c.bf16 %v2620, %v2619
      %v2657 = vpack.c.bf16 %v2622, %v2621
      %v2658 = vpack.c.bf16 %v2624, %v2623
      %v2659 = vpack.c.bf16 %v2626, %v2625
      %v2660 = vpack.c.bf16 %v2628, %v2627
      %v2661 = vpack.c.bf16 %v2630, %v2629
      %v2662 = vpack.c.bf16 %v2632, %v2631
      %v2663 = vpack.c.bf16 %v2634, %v2633
      %v2664 = vpack.c.bf16 %v2636, %v2635
      %v2665 = vpack.c.bf16 %v2638, %v2637
      %v2666 = vpack.c.bf16 %v2640, %v2639
      %v2667 = vpack.c.bf16 %v2642, %v2641
      %v2668 = vpack.c.bf16 %v2644, %v2643
      %s2669 = scalar_lea.vmem %s1, 320
      %v2670 = vld [vmem:[%s2669] sm:$0xf]
      %v2671 = vld [vmem:[%s2669 + $0x4] sm:$0xf]
      %v2672 = vld [vmem:[%s2669 + $0x8] sm:$0xf]
      %v2673 = vld [vmem:[%s2669 + $0xc] sm:$0xf]
      %v2674 = vld [vmem:[%s2669 + $0x10] sm:$0xf]
      %v2675 = vld [vmem:[%s2669 + $0x14] sm:$0xf]
      %v2676 = vld [vmem:[%s2669 + $0x18] sm:$0xf]
      %v2677 = vld [vmem:[%s2669 + $0x1c] sm:$0xf]
      %v2678 = vld [vmem:[%s2669 + $0x20] sm:$0xf]
      %v2679 = vld [vmem:[%s2669 + $0x24] sm:$0xf]
      %v2680 = vld [vmem:[%s2669 + $0x28] sm:$0xf]
      %v2681 = vld [vmem:[%s2669 + $0x2c] sm:$0xf]
      %v2682 = vld [vmem:[%s2669 + $0x30] sm:$0xf]
      %v2683 = vld [vmem:[%s2669 + $0x34] sm:$0xf]
      %v2684 = vld [vmem:[%s2669 + $0x38] sm:$0xf]
      %v2685 = vld [vmem:[%s2669 + $0x3c] sm:$0xf]
      %v2702 = vunpack.c.l.b16 %v2670
      %v2703 = vunpack.c.l.b16 %v2671
      %v2704 = vunpack.c.l.b16 %v2672
      %v2705 = vunpack.c.l.b16 %v2673
      %v2706 = vunpack.c.l.b16 %v2674
      %v2707 = vunpack.c.l.b16 %v2675
      %v2708 = vunpack.c.l.b16 %v2676
      %v2709 = vunpack.c.l.b16 %v2677
      %v2710 = vunpack.c.l.b16 %v2678
      %v2711 = vunpack.c.l.b16 %v2679
      %v2712 = vunpack.c.l.b16 %v2680
      %v2713 = vunpack.c.l.b16 %v2681
      %v2714 = vunpack.c.l.b16 %v2682
      %v2715 = vunpack.c.l.b16 %v2683
      %v2716 = vunpack.c.l.b16 %v2684
      %v2717 = vunpack.c.l.b16 %v2685
      %v2718 = vpack.c.b16 %v2703, %v2702
      %v2719 = vpack.c.b16 %v2705, %v2704
      %v2720 = vpack.c.b16 %v2707, %v2706
      %v2721 = vpack.c.b16 %v2709, %v2708
      %v2722 = vpack.c.b16 %v2711, %v2710
      %v2723 = vpack.c.b16 %v2713, %v2712
      %v2724 = vpack.c.b16 %v2715, %v2714
      %v2725 = vpack.c.b16 %v2717, %v2716
      %2734 = vmatprep.subr.bf16.mxu0 0
      %2735 = vmatpush1.bf16.msra.mxu0 %v2725
      %2736 = vmatprep.subr.bf16.mxu0 0
      %2737 = vmatpush1.bf16.msra.mxu0 %v2724
      %2738 = vmatprep.subr.bf16.mxu0 0
      %2739 = vmatpush1.bf16.msra.mxu0 %v2723
      %2740 = vmatprep.subr.bf16.mxu0 0
      %2741 = vmatpush1.bf16.msra.mxu0 %v2722
      %2742 = vmatprep.subr.bf16.mxu0 0
      %2743 = vmatpush1.bf16.msra.mxu0 %v2721
      %2744 = vmatprep.subr.bf16.mxu0 0
      %2745 = vmatpush1.bf16.msra.mxu0 %v2720
      %2746 = vmatprep.subr.bf16.mxu0 0
      %2747 = vmatpush1.bf16.msra.mxu0 %v2719
      %2748 = vmatprep.subr.bf16.mxu0 0
      %2749 = vmatpush1.bf16.msra.mxu0 %v2718
      %2750 = vmatprep.subr.bf16.mxu0 0
      %2751 = vmatpush2.bf16.msra.mxu0 0
      %2752 = vmatprep.subr.bf16.mxu0 0
      %2753 = vmatpush2.bf16.msra.mxu0 0
      %2754 = vmatprep.subr.bf16.mxu0 0
      %2755 = vmatpush2.bf16.msra.mxu0 0
      %2756 = vmatprep.subr.bf16.mxu0 0
      %2757 = vmatpush2.bf16.msra.mxu0 0
      %2758 = vmatprep.subr.bf16.mxu0 0
      %2759 = vmatpush2.bf16.msra.mxu0 0
      %2760 = vmatprep.subr.bf16.mxu0 0
      %2761 = vmatpush2.bf16.msra.mxu0 0
      %2762 = vmatprep.subr.bf16.mxu0 0
      %2763 = vmatpush2.bf16.msra.mxu0 0
      %2764 = vmatprep.subr.bf16.mxu0 0
      %2765 = vmatpush2.bf16.msra.mxu0 0
      %2766 = vmatprep.mubr.bf16.mxu0 0
      %2767 = vmatmul.mubr.bf16.gmra.mxu0 %v2645
      %v2768 = vpop.f32.mrf.mxu0
      %v2769 = vadd.f32 0.0, %v2768
      %v2770 = vpop.f32.mrf.mxu0
      %v2771 = vpop.f32.mrf.mxu0
      %v2772 = vadd.f32 0.0, %v2771
      %v2773 = vpop.f32.mrf.mxu0
      %2774 = vmatprep.mubr.bf16.mxu0 0
      %2775 = vmatmul.mubr.bf16.gmra.mxu0 %v2646
      %v2776 = vpop.f32.mrf.mxu0
      %v2777 = vadd.f32 0.0, %v2776
      %v2778 = vpop.f32.mrf.mxu0
      %v2779 = vpop.f32.mrf.mxu0
      %v2780 = vadd.f32 0.0, %v2779
      %v2781 = vpop.f32.mrf.mxu0
      %2782 = vmatprep.mubr.bf16.mxu0 0
      %2783 = vmatmul.mubr.bf16.gmra.mxu0 %v2647
      %v2784 = vpop.f32.mrf.mxu0
      %v2785 = vadd.f32 0.0, %v2784
      %v2786 = vpop.f32.mrf.mxu0
      %v2787 = vpop.f32.mrf.mxu0
      %v2788 = vadd.f32 0.0, %v2787
      %v2789 = vpop.f32.mrf.mxu0
      %2790 = vmatprep.mubr.bf16.mxu0 0
      %2791 = vmatmul.mubr.bf16.gmra.mxu0 %v2648
      %v2792 = vpop.f32.mrf.mxu0
      %v2793 = vadd.f32 0.0, %v2792
      %v2794 = vpop.f32.mrf.mxu0
      %v2795 = vpop.f32.mrf.mxu0
      %v2796 = vadd.f32 0.0, %v2795
      %v2797 = vpop.f32.mrf.mxu0
      %2798 = vmatprep.mubr.bf16.mxu0 0
      %2799 = vmatmul.mubr.bf16.gmra.mxu0 %v2649
      %v2800 = vpop.f32.mrf.mxu0
      %v2801 = vadd.f32 0.0, %v2800
      %v2802 = vpop.f32.mrf.mxu0
      %v2803 = vpop.f32.mrf.mxu0
      %v2804 = vadd.f32 0.0, %v2803
      %v2805 = vpop.f32.mrf.mxu0
      %2806 = vmatprep.mubr.bf16.mxu0 0
      %2807 = vmatmul.mubr.bf16.gmra.mxu0 %v2650
      %v2808 = vpop.f32.mrf.mxu0
      %v2809 = vadd.f32 0.0, %v2808
      %v2810 = vpop.f32.mrf.mxu0
      %v2811 = vpop.f32.mrf.mxu0
      %v2812 = vadd.f32 0.0, %v2811
      %v2813 = vpop.f32.mrf.mxu0
      %2814 = vmatprep.mubr.bf16.mxu0 0
      %2815 = vmatmul.mubr.bf16.gmra.mxu0 %v2651
      %v2816 = vpop.f32.mrf.mxu0
      %v2817 = vadd.f32 0.0, %v2816
      %v2818 = vpop.f32.mrf.mxu0
      %v2819 = vpop.f32.mrf.mxu0
      %v2820 = vadd.f32 0.0, %v2819
      %v2821 = vpop.f32.mrf.mxu0
      %2822 = vmatprep.mubr.bf16.mxu0 0
      %2823 = vmatmul.mubr.bf16.gmra.mxu0 %v2652
      %v2824 = vpop.f32.mrf.mxu0
      %v2825 = vadd.f32 0.0, %v2824
      %v2826 = vpop.f32.mrf.mxu0
      %v2827 = vpop.f32.mrf.mxu0
      %v2828 = vadd.f32 0.0, %v2827
      %v2829 = vpop.f32.mrf.mxu0
      %2830 = vmatprep.mubr.bf16.mxu0 0
      %2831 = vmatmul.mubr.bf16.gmra.mxu0 %v2653
      %v2832 = vpop.f32.mrf.mxu0
      %v2833 = vadd.f32 0.0, %v2832
      %v2834 = vpop.f32.mrf.mxu0
      %v2835 = vpop.f32.mrf.mxu0
      %v2836 = vadd.f32 0.0, %v2835
      %v2837 = vpop.f32.mrf.mxu0
      %2838 = vmatprep.mubr.bf16.mxu0 0
      %2839 = vmatmul.mubr.bf16.gmra.mxu0 %v2654
      %v2840 = vpop.f32.mrf.mxu0
      %v2841 = vadd.f32 0.0, %v2840
      %v2842 = vpop.f32.mrf.mxu0
      %v2843 = vpop.f32.mrf.mxu0
      %v2844 = vadd.f32 0.0, %v2843
      %v2845 = vpop.f32.mrf.mxu0
      %2846 = vmatprep.mubr.bf16.mxu0 0
      %2847 = vmatmul.mubr.bf16.gmra.mxu0 %v2655
      %v2848 = vpop.f32.mrf.mxu0
      %v2849 = vadd.f32 0.0, %v2848
      %v2850 = vpop.f32.mrf.mxu0
      %v2851 = vpop.f32.mrf.mxu0
      %v2852 = vadd.f32 0.0, %v2851
      %v2853 = vpop.f32.mrf.mxu0
      %2854 = vmatprep.mubr.bf16.mxu0 0
      %2855 = vmatmul.mubr.bf16.gmra.mxu0 %v2656
      %v2856 = vpop.f32.mrf.mxu0
      %v2857 = vadd.f32 0.0, %v2856
      %v2858 = vpop.f32.mrf.mxu0
      %v2859 = vpop.f32.mrf.mxu0
      %v2860 = vadd.f32 0.0, %v2859
      %v2861 = vpop.f32.mrf.mxu0
      %2862 = vmatprep.mubr.bf16.mxu0 0
      %2863 = vmatmul.mubr.bf16.gmra.mxu0 %v2657
      %v2864 = vpop.f32.mrf.mxu0
      %v2865 = vadd.f32 0.0, %v2864
      %v2866 = vpop.f32.mrf.mxu0
      %v2867 = vpop.f32.mrf.mxu0
      %v2868 = vadd.f32 0.0, %v2867
      %v2869 = vpop.f32.mrf.mxu0
      %2870 = vmatprep.mubr.bf16.mxu0 0
      %2871 = vmatmul.mubr.bf16.gmra.mxu0 %v2658
      %v2872 = vpop.f32.mrf.mxu0
      %v2873 = vadd.f32 0.0, %v2872
      %v2874 = vpop.f32.mrf.mxu0
      %v2875 = vpop.f32.mrf.mxu0
      %v2876 = vadd.f32 0.0, %v2875
      %v2877 = vpop.f32.mrf.mxu0
      %2878 = vmatprep.mubr.bf16.mxu0 0
      %2879 = vmatmul.mubr.bf16.gmra.mxu0 %v2659
      %v2880 = vpop.f32.mrf.mxu0
      %v2881 = vadd.f32 0.0, %v2880
      %v2882 = vpop.f32.mrf.mxu0
      %v2883 = vpop.f32.mrf.mxu0
      %v2884 = vadd.f32 0.0, %v2883
      %v2885 = vpop.f32.mrf.mxu0
      %2886 = vmatprep.mubr.bf16.mxu0 0
      %2887 = vmatmul.mubr.bf16.gmra.mxu0 %v2660
      %v2888 = vpop.f32.mrf.mxu0
      %v2889 = vadd.f32 0.0, %v2888
      %v2890 = vpop.f32.mrf.mxu0
      %v2891 = vpop.f32.mrf.mxu0
      %v2892 = vadd.f32 0.0, %v2891
      %v2893 = vpop.f32.mrf.mxu0
      %2894 = vmatprep.mubr.bf16.mxu0 0
      %2895 = vmatmul.mubr.bf16.gmra.mxu0 %v2661
      %v2896 = vpop.f32.mrf.mxu0
      %v2897 = vadd.f32 0.0, %v2896
      %v2898 = vpop.f32.mrf.mxu0
      %v2899 = vpop.f32.mrf.mxu0
      %v2900 = vadd.f32 0.0, %v2899
      %v2901 = vpop.f32.mrf.mxu0
      %2902 = vmatprep.mubr.bf16.mxu0 0
      %2903 = vmatmul.mubr.bf16.gmra.mxu0 %v2662
      %v2904 = vpop.f32.mrf.mxu0
      %v2905 = vadd.f32 0.0, %v2904
      %v2906 = vpop.f32.mrf.mxu0
      %v2907 = vpop.f32.mrf.mxu0
      %v2908 = vadd.f32 0.0, %v2907
      %v2909 = vpop.f32.mrf.mxu0
      %2910 = vmatprep.mubr.bf16.mxu0 0
      %2911 = vmatmul.mubr.bf16.gmra.mxu0 %v2663
      %v2912 = vpop.f32.mrf.mxu0
      %v2913 = vadd.f32 0.0, %v2912
      %v2914 = vpop.f32.mrf.mxu0
      %v2915 = vpop.f32.mrf.mxu0
      %v2916 = vadd.f32 0.0, %v2915
      %v2917 = vpop.f32.mrf.mxu0
      %2918 = vmatprep.mubr.bf16.mxu0 0
      %2919 = vmatmul.mubr.bf16.gmra.mxu0 %v2664
      %v2920 = vpop.f32.mrf.mxu0
      %v2921 = vadd.f32 0.0, %v2920
      %v2922 = vpop.f32.mrf.mxu0
      %v2923 = vpop.f32.mrf.mxu0
      %v2924 = vadd.f32 0.0, %v2923
      %v2925 = vpop.f32.mrf.mxu0
      %2926 = vmatprep.mubr.bf16.mxu0 0
      %2927 = vmatmul.mubr.bf16.gmra.mxu0 %v2665
      %v2928 = vpop.f32.mrf.mxu0
      %v2929 = vadd.f32 0.0, %v2928
      %v2930 = vpop.f32.mrf.mxu0
      %v2931 = vpop.f32.mrf.mxu0
      %v2932 = vadd.f32 0.0, %v2931
      %v2933 = vpop.f32.mrf.mxu0
      %2934 = vmatprep.mubr.bf16.mxu0 0
      %2935 = vmatmul.mubr.bf16.gmra.mxu0 %v2666
      %v2936 = vpop.f32.mrf.mxu0
      %v2937 = vadd.f32 0.0, %v2936
      %v2938 = vpop.f32.mrf.mxu0
      %v2939 = vpop.f32.mrf.mxu0
      %v2940 = vadd.f32 0.0, %v2939
      %v2941 = vpop.f32.mrf.mxu0
      %2942 = vmatprep.mubr.bf16.mxu0 0
      %2943 = vmatmul.mubr.bf16.gmra.mxu0 %v2667
      %v2944 = vpop.f32.mrf.mxu0
      %v2945 = vadd.f32 0.0, %v2944
      %v2946 = vpop.f32.mrf.mxu0
      %v2947 = vpop.f32.mrf.mxu0
      %v2948 = vadd.f32 0.0, %v2947
      %v2949 = vpop.f32.mrf.mxu0
      %2950 = vmatprep.mubr.bf16.mxu0 0
      %2951 = vmatmul.mubr.bf16.gmra.mxu0 %v2668
      %v2952 = vpop.f32.mrf.mxu0
      %v2953 = vadd.f32 0.0, %v2952
      %v2954 = vpop.f32.mrf.mxu0
      %v2955 = vpop.f32.mrf.mxu0
      %v2956 = vadd.f32 0.0, %v2955
      %v2957 = vpop.f32.mrf.mxu0
      %2958 = vdwg.mxu0
      %v2959 = vadd.f32 %v2407, %v2769
      %v2960 = vadd.f32 %v2410, %v2772
      %v2961 = vadd.f32 %v2415, %v2777
      %v2962 = vadd.f32 %v2418, %v2780
      %v2963 = vadd.f32 %v2423, %v2785
      %v2964 = vadd.f32 %v2426, %v2788
      %v2965 = vadd.f32 %v2431, %v2793
      %v2966 = vadd.f32 %v2434, %v2796
      %v2967 = vadd.f32 %v2439, %v2801
      %v2968 = vadd.f32 %v2442, %v2804
      %v2969 = vadd.f32 %v2447, %v2809
      %v2970 = vadd.f32 %v2450, %v2812
      %v2971 = vadd.f32 %v2455, %v2817
      %v2972 = vadd.f32 %v2458, %v2820
      %v2973 = vadd.f32 %v2463, %v2825
      %v2974 = vadd.f32 %v2466, %v2828
      %v2975 = vadd.f32 %v2471, %v2833
      %v2976 = vadd.f32 %v2474, %v2836
      %v2977 = vadd.f32 %v2479, %v2841
      %v2978 = vadd.f32 %v2482, %v2844
      %v2979 = vadd.f32 %v2487, %v2849
      %v2980 = vadd.f32 %v2490, %v2852
      %v2981 = vadd.f32 %v2495, %v2857
      %v2982 = vadd.f32 %v2498, %v2860
      %v2983 = vadd.f32 %v2503, %v2865
      %v2984 = vadd.f32 %v2506, %v2868
      %v2985 = vadd.f32 %v2511, %v2873
      %v2986 = vadd.f32 %v2514, %v2876
      %v2987 = vadd.f32 %v2519, %v2881
      %v2988 = vadd.f32 %v2522, %v2884
      %v2989 = vadd.f32 %v2527, %v2889
      %v2990 = vadd.f32 %v2530, %v2892
      %v2991 = vadd.f32 %v2535, %v2897
      %v2992 = vadd.f32 %v2538, %v2900
      %v2993 = vadd.f32 %v2543, %v2905
      %v2994 = vadd.f32 %v2546, %v2908
      %v2995 = vadd.f32 %v2551, %v2913
      %v2996 = vadd.f32 %v2554, %v2916
      %v2997 = vadd.f32 %v2559, %v2921
      %v2998 = vadd.f32 %v2562, %v2924
      %v2999 = vadd.f32 %v2567, %v2929
      %v3000 = vadd.f32 %v2570, %v2932
      %v3001 = vadd.f32 %v2575, %v2937
      %v3002 = vadd.f32 %v2578, %v2940
      %v3003 = vadd.f32 %v2583, %v2945
      %v3004 = vadd.f32 %v2586, %v2948
      %v3005 = vadd.f32 %v2591, %v2953
      %v3006 = vadd.f32 %v2594, %v2956
      %v3007 = vadd.f32 %v1825, %v2959
      %v3008 = vadd.f32 %v1826, %v2960
      %v3009 = vadd.f32 %v1827, %v2961
      %v3010 = vadd.f32 %v1828, %v2962
      %v3011 = vadd.f32 %v1829, %v2963
      %v3012 = vadd.f32 %v1830, %v2964
      %v3013 = vadd.f32 %v1831, %v2965
      %v3014 = vadd.f32 %v1832, %v2966
      %v3015 = vadd.f32 %v1833, %v2967
      %v3016 = vadd.f32 %v1834, %v2968
      %v3017 = vadd.f32 %v1835, %v2969
      %v3018 = vadd.f32 %v1836, %v2970
      %v3019 = vadd.f32 %v1837, %v2971
      %v3020 = vadd.f32 %v1838, %v2972
      %v3021 = vadd.f32 %v1839, %v2973
      %v3022 = vadd.f32 %v1840, %v2974
      %v3023 = vadd.f32 %v1841, %v2975
      %v3024 = vadd.f32 %v1842, %v2976
      %v3025 = vadd.f32 %v1843, %v2977
      %v3026 = vadd.f32 %v1844, %v2978
      %v3027 = vadd.f32 %v1845, %v2979
      %v3028 = vadd.f32 %v1846, %v2980
      %v3029 = vadd.f32 %v1847, %v2981
      %v3030 = vadd.f32 %v1848, %v2982
      %v3031 = vadd.f32 %v1849, %v2983
      %v3032 = vadd.f32 %v1850, %v2984
      %v3033 = vadd.f32 %v1851, %v2985
      %v3034 = vadd.f32 %v1852, %v2986
      %v3035 = vadd.f32 %v1853, %v2987
      %v3036 = vadd.f32 %v1854, %v2988
      %v3037 = vadd.f32 %v1855, %v2989
      %v3038 = vadd.f32 %v1856, %v2990
      %v3039 = vadd.f32 %v1857, %v2991
      %v3040 = vadd.f32 %v1858, %v2992
      %v3041 = vadd.f32 %v1859, %v2993
      %v3042 = vadd.f32 %v1860, %v2994
      %v3043 = vadd.f32 %v1861, %v2995
      %v3044 = vadd.f32 %v1862, %v2996
      %v3045 = vadd.f32 %v1863, %v2997
      %v3046 = vadd.f32 %v1864, %v2998
      %v3047 = vadd.f32 %v1865, %v2999
      %v3048 = vadd.f32 %v1866, %v3000
      %v3049 = vadd.f32 %v1867, %v3001
      %v3050 = vadd.f32 %v1868, %v3002
      %v3051 = vadd.f32 %v1869, %v3003
      %v3052 = vadd.f32 %v1870, %v3004
      %v3053 = vadd.f32 %v1871, %v3005
      %v3054 = vadd.f32 %v1872, %v3006
      %v3055 = vld [vmem:[#allocation2 + $0x37] sm:$0xff]
      %v3056 = vld [vmem:[#allocation2 + $0x3f] sm:$0xff]
      %v3057 = vld [vmem:[#allocation2 + $0x47] sm:$0xff]
      %v3058 = vld [vmem:[#allocation2 + $0x4f] sm:$0xff]
      %v3059 = vld [vmem:[#allocation2 + $0x57] sm:$0xff]
      %v3060 = vld [vmem:[#allocation2 + $0x5f] sm:$0xff]
      %v3061 = vld [vmem:[#allocation2 + $0x67] sm:$0xff]
      %v3062 = vld [vmem:[#allocation2 + $0x6f] sm:$0xff]
      %v3063 = vld [vmem:[#allocation2 + $0x77] sm:$0xff]
      %v3064 = vld [vmem:[#allocation2 + $0x7f] sm:$0xff]
      %v3065 = vld [vmem:[#allocation2 + $0x87] sm:$0xff]
      %v3066 = vld [vmem:[#allocation2 + $0x8f] sm:$0xff]
      %v3067 = vld [vmem:[#allocation2 + $0x97] sm:$0xff]
      %v3068 = vld [vmem:[#allocation2 + $0x9f] sm:$0xff]
      %v3069 = vld [vmem:[#allocation2 + $0xa7] sm:$0xff]
      %v3070 = vld [vmem:[#allocation2 + $0xaf] sm:$0xff]
      %v3071 = vld [vmem:[#allocation2 + $0xb7] sm:$0xff]
      %v3072 = vld [vmem:[#allocation2 + $0xbf] sm:$0xff]
      %v3073 = vld [vmem:[#allocation2 + $0xc7] sm:$0xff]
      %v3074 = vld [vmem:[#allocation2 + $0xcf] sm:$0xff]
      %v3075 = vld [vmem:[#allocation2 + $0xd7] sm:$0xff]
      %v3076 = vld [vmem:[#allocation2 + $0xdf] sm:$0xff]
      %v3077 = vld [vmem:[#allocation2 + $0xe7] sm:$0xff]
      %v3078 = vld [vmem:[#allocation2 + $0xef] sm:$0xff]
      %v3079 = vld [vmem:[#allocation2 + $0xf7] sm:$0xff]
      %v3080 = vld [vmem:[#allocation2 + $0xff] sm:$0xff]
      %v3081 = vld [vmem:[#allocation2 + $0x107] sm:$0xff]
      %v3082 = vld [vmem:[#allocation2 + $0x10f] sm:$0xff]
      %v3083 = vld [vmem:[#allocation2 + $0x117] sm:$0xff]
      %v3084 = vld [vmem:[#allocation2 + $0x11f] sm:$0xff]
      %v3085 = vld [vmem:[#allocation2 + $0x127] sm:$0xff]
      %v3086 = vld [vmem:[#allocation2 + $0x12f] sm:$0xff]
      %v3087 = vld [vmem:[#allocation2 + $0x137] sm:$0xff]
      %v3088 = vld [vmem:[#allocation2 + $0x13f] sm:$0xff]
      %v3089 = vld [vmem:[#allocation2 + $0x147] sm:$0xff]
      %v3090 = vld [vmem:[#allocation2 + $0x14f] sm:$0xff]
      %v3091 = vld [vmem:[#allocation2 + $0x157] sm:$0xff]
      %v3092 = vld [vmem:[#allocation2 + $0x15f] sm:$0xff]
      %v3093 = vld [vmem:[#allocation2 + $0x167] sm:$0xff]
      %v3094 = vld [vmem:[#allocation2 + $0x16f] sm:$0xff]
      %v3095 = vld [vmem:[#allocation2 + $0x177] sm:$0xff]
      %v3096 = vld [vmem:[#allocation2 + $0x17f] sm:$0xff]
      %v3097 = vld [vmem:[#allocation2 + $0x187] sm:$0xff]
      %v3098 = vld [vmem:[#allocation2 + $0x18f] sm:$0xff]
      %v3099 = vld [vmem:[#allocation2 + $0x197] sm:$0xff]
      %v3100 = vld [vmem:[#allocation2 + $0x19f] sm:$0xff]
      %v3101 = vld [vmem:[#allocation2 + $0x1a7] sm:$0xff]
      %v3102 = vld [vmem:[#allocation2 + $0x1af] sm:$0xff]
      %v3103 = vpack.c.bf16 %v3056, %v3055
      %v3104 = vpack.c.bf16 %v3058, %v3057
      %v3105 = vpack.c.bf16 %v3060, %v3059
      %v3106 = vpack.c.bf16 %v3062, %v3061
      %v3107 = vpack.c.bf16 %v3064, %v3063
      %v3108 = vpack.c.bf16 %v3066, %v3065
      %v3109 = vpack.c.bf16 %v3068, %v3067
      %v3110 = vpack.c.bf16 %v3070, %v3069
      %v3111 = vpack.c.bf16 %v3072, %v3071
      %v3112 = vpack.c.bf16 %v3074, %v3073
      %v3113 = vpack.c.bf16 %v3076, %v3075
      %v3114 = vpack.c.bf16 %v3078, %v3077
      %v3115 = vpack.c.bf16 %v3080, %v3079
      %v3116 = vpack.c.bf16 %v3082, %v3081
      %v3117 = vpack.c.bf16 %v3084, %v3083
      %v3118 = vpack.c.bf16 %v3086, %v3085
      %v3119 = vpack.c.bf16 %v3088, %v3087
      %v3120 = vpack.c.bf16 %v3090, %v3089
      %v3121 = vpack.c.bf16 %v3092, %v3091
      %v3122 = vpack.c.bf16 %v3094, %v3093
      %v3123 = vpack.c.bf16 %v3096, %v3095
      %v3124 = vpack.c.bf16 %v3098, %v3097
      %v3125 = vpack.c.bf16 %v3100, %v3099
      %v3126 = vpack.c.bf16 %v3102, %v3101
      %s3127 = scalar_lea.vmem %s1, 384
      %v3128 = vld [vmem:[%s3127] sm:$0xf]
      %v3129 = vld [vmem:[%s3127 + $0x4] sm:$0xf]
      %v3130 = vld [vmem:[%s3127 + $0x8] sm:$0xf]
      %v3131 = vld [vmem:[%s3127 + $0xc] sm:$0xf]
      %v3132 = vld [vmem:[%s3127 + $0x10] sm:$0xf]
      %v3133 = vld [vmem:[%s3127 + $0x14] sm:$0xf]
      %v3134 = vld [vmem:[%s3127 + $0x18] sm:$0xf]
      %v3135 = vld [vmem:[%s3127 + $0x1c] sm:$0xf]
      %v3136 = vld [vmem:[%s3127 + $0x20] sm:$0xf]
      %v3137 = vld [vmem:[%s3127 + $0x24] sm:$0xf]
      %v3138 = vld [vmem:[%s3127 + $0x28] sm:$0xf]
      %v3139 = vld [vmem:[%s3127 + $0x2c] sm:$0xf]
      %v3140 = vld [vmem:[%s3127 + $0x30] sm:$0xf]
      %v3141 = vld [vmem:[%s3127 + $0x34] sm:$0xf]
      %v3142 = vld [vmem:[%s3127 + $0x38] sm:$0xf]
      %v3143 = vld [vmem:[%s3127 + $0x3c] sm:$0xf]
      %v3144 = vld [vmem:[#allocation2 + $0x38] sm:$0xff]
      %v3145 = vld [vmem:[#allocation2 + $0x40] sm:$0xff]
      %v3146 = vld [vmem:[#allocation2 + $0x48] sm:$0xff]
      %v3147 = vld [vmem:[#allocation2 + $0x50] sm:$0xff]
      %v3148 = vld [vmem:[#allocation2 + $0x58] sm:$0xff]
      %v3149 = vld [vmem:[#allocation2 + $0x60] sm:$0xff]
      %v3150 = vld [vmem:[#allocation2 + $0x68] sm:$0xff]
      %v3151 = vld [vmem:[#allocation2 + $0x70] sm:$0xff]
      %v3152 = vld [vmem:[#allocation2 + $0x78] sm:$0xff]
      %v3153 = vld [vmem:[#allocation2 + $0x80] sm:$0xff]
      %v3154 = vld [vmem:[#allocation2 + $0x88] sm:$0xff]
      %v3155 = vld [vmem:[#allocation2 + $0x90] sm:$0xff]
      %v3156 = vld [vmem:[#allocation2 + $0x98] sm:$0xff]
      %v3157 = vld [vmem:[#allocation2 + $0xa0] sm:$0xff]
      %v3158 = vld [vmem:[#allocation2 + $0xa8] sm:$0xff]
      %v3159 = vld [vmem:[#allocation2 + $0xb0] sm:$0xff]
      %v3160 = vld [vmem:[#allocation2 + $0xb8] sm:$0xff]
      %v3161 = vld [vmem:[#allocation2 + $0xc0] sm:$0xff]
      %v3162 = vld [vmem:[#allocation2 + $0xc8] sm:$0xff]
      %v3163 = vld [vmem:[#allocation2 + $0xd0] sm:$0xff]
      %v3164 = vld [vmem:[#allocation2 + $0xd8] sm:$0xff]
      %v3165 = vld [vmem:[#allocation2 + $0xe0] sm:$0xff]
      %v3166 = vld [vmem:[#allocation2 + $0xe8] sm:$0xff]
      %v3167 = vld [vmem:[#allocation2 + $0xf0] sm:$0xff]
      %v3168 = vld [vmem:[#allocation2 + $0xf8] sm:$0xff]
      %v3169 = vld [vmem:[#allocation2 + $0x100] sm:$0xff]
      %v3170 = vld [vmem:[#allocation2 + $0x108] sm:$0xff]
      %v3171 = vld [vmem:[#allocation2 + $0x110] sm:$0xff]
      %v3172 = vld [vmem:[#allocation2 + $0x118] sm:$0xff]
      %v3173 = vld [vmem:[#allocation2 + $0x120] sm:$0xff]
      %v3174 = vld [vmem:[#allocation2 + $0x128] sm:$0xff]
      %v3175 = vld [vmem:[#allocation2 + $0x130] sm:$0xff]
      %v3176 = vld [vmem:[#allocation2 + $0x138] sm:$0xff]
      %v3177 = vld [vmem:[#allocation2 + $0x140] sm:$0xff]
      %v3178 = vld [vmem:[#allocation2 + $0x148] sm:$0xff]
      %v3179 = vld [vmem:[#allocation2 + $0x150] sm:$0xff]
      %v3180 = vld [vmem:[#allocation2 + $0x158] sm:$0xff]
      %v3181 = vld [vmem:[#allocation2 + $0x160] sm:$0xff]
      %v3182 = vld [vmem:[#allocation2 + $0x168] sm:$0xff]
      %v3183 = vld [vmem:[#allocation2 + $0x170] sm:$0xff]
      %v3184 = vld [vmem:[#allocation2 + $0x178] sm:$0xff]
      %v3185 = vld [vmem:[#allocation2 + $0x180] sm:$0xff]
      %v3186 = vld [vmem:[#allocation2 + $0x188] sm:$0xff]
      %v3187 = vld [vmem:[#allocation2 + $0x190] sm:$0xff]
      %v3188 = vld [vmem:[#allocation2 + $0x198] sm:$0xff]
      %v3189 = vld [vmem:[#allocation2 + $0x1a0] sm:$0xff]
      %v3190 = vld [vmem:[#allocation2 + $0x1a8] sm:$0xff]
      %v3191 = vld [vmem:[#allocation2 + $0x1b0] sm:$0xff]
      %v3192 = vpack.c.bf16 %v3145, %v3144
      %v3193 = vpack.c.bf16 %v3147, %v3146
      %v3194 = vpack.c.bf16 %v3149, %v3148
      %v3195 = vpack.c.bf16 %v3151, %v3150
      %v3196 = vpack.c.bf16 %v3153, %v3152
      %v3197 = vpack.c.bf16 %v3155, %v3154
      %v3198 = vpack.c.bf16 %v3157, %v3156
      %v3199 = vpack.c.bf16 %v3159, %v3158
      %v3200 = vpack.c.bf16 %v3161, %v3160
      %v3201 = vpack.c.bf16 %v3163, %v3162
      %v3202 = vpack.c.bf16 %v3165, %v3164
      %v3203 = vpack.c.bf16 %v3167, %v3166
      %v3204 = vpack.c.bf16 %v3169, %v3168
      %v3205 = vpack.c.bf16 %v3171, %v3170
      %v3206 = vpack.c.bf16 %v3173, %v3172
      %v3207 = vpack.c.bf16 %v3175, %v3174
      %v3208 = vpack.c.bf16 %v3177, %v3176
      %v3209 = vpack.c.bf16 %v3179, %v3178
      %v3210 = vpack.c.bf16 %v3181, %v3180
      %v3211 = vpack.c.bf16 %v3183, %v3182
      %v3212 = vpack.c.bf16 %v3185, %v3184
      %v3213 = vpack.c.bf16 %v3187, %v3186
      %v3214 = vpack.c.bf16 %v3189, %v3188
      %v3215 = vpack.c.bf16 %v3191, %v3190
      %s3216 = scalar_lea.vmem %s1, 448
      %v3217 = vld [vmem:[%s3216] sm:$0xf]
      %v3218 = vld [vmem:[%s3216 + $0x4] sm:$0xf]
      %v3219 = vld [vmem:[%s3216 + $0x8] sm:$0xf]
      %v3220 = vld [vmem:[%s3216 + $0xc] sm:$0xf]
      %v3221 = vld [vmem:[%s3216 + $0x10] sm:$0xf]
      %v3222 = vld [vmem:[%s3216 + $0x14] sm:$0xf]
      %v3223 = vld [vmem:[%s3216 + $0x18] sm:$0xf]
      %v3224 = vld [vmem:[%s3216 + $0x1c] sm:$0xf]
      %v3225 = vld [vmem:[%s3216 + $0x20] sm:$0xf]
      %v3226 = vld [vmem:[%s3216 + $0x24] sm:$0xf]
      %v3227 = vld [vmem:[%s3216 + $0x28] sm:$0xf]
      %v3228 = vld [vmem:[%s3216 + $0x2c] sm:$0xf]
      %v3229 = vld [vmem:[%s3216 + $0x30] sm:$0xf]
      %v3230 = vld [vmem:[%s3216 + $0x34] sm:$0xf]
      %v3231 = vld [vmem:[%s3216 + $0x38] sm:$0xf]
      %v3232 = vld [vmem:[%s3216 + $0x3c] sm:$0xf]
      %v3249 = vunpack.c.l.b16 %v3217
      %v3250 = vunpack.c.l.b16 %v3218
      %v3251 = vunpack.c.l.b16 %v3219
      %v3252 = vunpack.c.l.b16 %v3220
      %v3253 = vunpack.c.l.b16 %v3221
      %v3254 = vunpack.c.l.b16 %v3222
      %v3255 = vunpack.c.l.b16 %v3223
      %v3256 = vunpack.c.l.b16 %v3224
      %v3257 = vunpack.c.l.b16 %v3225
      %v3258 = vunpack.c.l.b16 %v3226
      %v3259 = vunpack.c.l.b16 %v3227
      %v3260 = vunpack.c.l.b16 %v3228
      %v3261 = vunpack.c.l.b16 %v3229
      %v3262 = vunpack.c.l.b16 %v3230
      %v3263 = vunpack.c.l.b16 %v3231
      %v3264 = vunpack.c.l.b16 %v3232
      %v3265 = vpack.c.b16 %v3250, %v3249
      %v3266 = vpack.c.b16 %v3252, %v3251
      %v3267 = vpack.c.b16 %v3254, %v3253
      %v3268 = vpack.c.b16 %v3256, %v3255
      %v3269 = vpack.c.b16 %v3258, %v3257
      %v3270 = vpack.c.b16 %v3260, %v3259
      %v3271 = vpack.c.b16 %v3262, %v3261
      %v3272 = vpack.c.b16 %v3264, %v3263
      %3281 = vmatprep.subr.bf16.mxu0 0
      %3282 = vmatpush1.bf16.msra.mxu0 %v3272
      %3283 = vmatprep.subr.bf16.mxu0 0
      %3284 = vmatpush1.bf16.msra.mxu0 %v3271
      %3285 = vmatprep.subr.bf16.mxu0 0
      %3286 = vmatpush1.bf16.msra.mxu0 %v3270
      %3287 = vmatprep.subr.bf16.mxu0 0
      %3288 = vmatpush1.bf16.msra.mxu0 %v3269
      %3289 = vmatprep.subr.bf16.mxu0 0
      %3290 = vmatpush1.bf16.msra.mxu0 %v3268
      %3291 = vmatprep.subr.bf16.mxu0 0
      %3292 = vmatpush1.bf16.msra.mxu0 %v3267
      %3293 = vmatprep.subr.bf16.mxu0 0
      %3294 = vmatpush1.bf16.msra.mxu0 %v3266
      %3295 = vmatprep.subr.bf16.mxu0 0
      %3296 = vmatpush1.bf16.msra.mxu0 %v3265
      %3297 = vmatprep.subr.bf16.mxu0 0
      %3298 = vmatpush2.bf16.msra.mxu0 0
      %3299 = vmatprep.subr.bf16.mxu0 0
      %3300 = vmatpush2.bf16.msra.mxu0 0
      %3301 = vmatprep.subr.bf16.mxu0 0
      %3302 = vmatpush2.bf16.msra.mxu0 0
      %3303 = vmatprep.subr.bf16.mxu0 0
      %3304 = vmatpush2.bf16.msra.mxu0 0
      %3305 = vmatprep.subr.bf16.mxu0 0
      %3306 = vmatpush2.bf16.msra.mxu0 0
      %3307 = vmatprep.subr.bf16.mxu0 0
      %3308 = vmatpush2.bf16.msra.mxu0 0
      %3309 = vmatprep.subr.bf16.mxu0 0
      %3310 = vmatpush2.bf16.msra.mxu0 0
      %3311 = vmatprep.subr.bf16.mxu0 0
      %3312 = vmatpush2.bf16.msra.mxu0 0
      %3313 = vmatprep.mubr.bf16.mxu0 0
      %3314 = vmatmul.mubr.bf16.gmra.mxu0 %v3192
      %v3315 = vpop.f32.mrf.mxu0
      %v3316 = vadd.f32 0.0, %v3315
      %v3317 = vpop.f32.mrf.mxu0
      %v3318 = vpop.f32.mrf.mxu0
      %v3319 = vadd.f32 0.0, %v3318
      %v3320 = vpop.f32.mrf.mxu0
      %3321 = vmatprep.mubr.bf16.mxu0 0
      %3322 = vmatmul.mubr.bf16.gmra.mxu0 %v3193
      %v3323 = vpop.f32.mrf.mxu0
      %v3324 = vadd.f32 0.0, %v3323
      %v3325 = vpop.f32.mrf.mxu0
      %v3326 = vpop.f32.mrf.mxu0
      %v3327 = vadd.f32 0.0, %v3326
      %v3328 = vpop.f32.mrf.mxu0
      %3329 = vmatprep.mubr.bf16.mxu0 0
      %3330 = vmatmul.mubr.bf16.gmra.mxu0 %v3194
      %v3331 = vpop.f32.mrf.mxu0
      %v3332 = vadd.f32 0.0, %v3331
      %v3333 = vpop.f32.mrf.mxu0
      %v3334 = vpop.f32.mrf.mxu0
      %v3335 = vadd.f32 0.0, %v3334
      %v3336 = vpop.f32.mrf.mxu0
      %3337 = vmatprep.mubr.bf16.mxu0 0
      %3338 = vmatmul.mubr.bf16.gmra.mxu0 %v3195
      %v3339 = vpop.f32.mrf.mxu0
      %v3340 = vadd.f32 0.0, %v3339
      %v3341 = vpop.f32.mrf.mxu0
      %v3342 = vpop.f32.mrf.mxu0
      %v3343 = vadd.f32 0.0, %v3342
      %v3344 = vpop.f32.mrf.mxu0
      %3345 = vmatprep.mubr.bf16.mxu0 0
      %3346 = vmatmul.mubr.bf16.gmra.mxu0 %v3196
      %v3347 = vpop.f32.mrf.mxu0
      %v3348 = vadd.f32 0.0, %v3347
      %v3349 = vpop.f32.mrf.mxu0
      %v3350 = vpop.f32.mrf.mxu0
      %v3351 = vadd.f32 0.0, %v3350
      %v3352 = vpop.f32.mrf.mxu0
      %3353 = vmatprep.mubr.bf16.mxu0 0
      %3354 = vmatmul.mubr.bf16.gmra.mxu0 %v3197
      %v3355 = vpop.f32.mrf.mxu0
      %v3356 = vadd.f32 0.0, %v3355
      %v3357 = vpop.f32.mrf.mxu0
      %v3358 = vpop.f32.mrf.mxu0
      %v3359 = vadd.f32 0.0, %v3358
      %v3360 = vpop.f32.mrf.mxu0
      %3361 = vmatprep.mubr.bf16.mxu0 0
      %3362 = vmatmul.mubr.bf16.gmra.mxu0 %v3198
      %v3363 = vpop.f32.mrf.mxu0
      %v3364 = vadd.f32 0.0, %v3363
      %v3365 = vpop.f32.mrf.mxu0
      %v3366 = vpop.f32.mrf.mxu0
      %v3367 = vadd.f32 0.0, %v3366
      %v3368 = vpop.f32.mrf.mxu0
      %3369 = vmatprep.mubr.bf16.mxu0 0
      %3370 = vmatmul.mubr.bf16.gmra.mxu0 %v3199
      %v3371 = vpop.f32.mrf.mxu0
      %v3372 = vadd.f32 0.0, %v3371
      %v3373 = vpop.f32.mrf.mxu0
      %v3374 = vpop.f32.mrf.mxu0
      %v3375 = vadd.f32 0.0, %v3374
      %v3376 = vpop.f32.mrf.mxu0
      %3377 = vmatprep.mubr.bf16.mxu0 0
      %3378 = vmatmul.mubr.bf16.gmra.mxu0 %v3200
      %v3379 = vpop.f32.mrf.mxu0
      %v3380 = vadd.f32 0.0, %v3379
      %v3381 = vpop.f32.mrf.mxu0
      %v3382 = vpop.f32.mrf.mxu0
      %v3383 = vadd.f32 0.0, %v3382
      %v3384 = vpop.f32.mrf.mxu0
      %3385 = vmatprep.mubr.bf16.mxu0 0
      %3386 = vmatmul.mubr.bf16.gmra.mxu0 %v3201
      %v3387 = vpop.f32.mrf.mxu0
      %v3388 = vadd.f32 0.0, %v3387
      %v3389 = vpop.f32.mrf.mxu0
      %v3390 = vpop.f32.mrf.mxu0
      %v3391 = vadd.f32 0.0, %v3390
      %v3392 = vpop.f32.mrf.mxu0
      %3393 = vmatprep.mubr.bf16.mxu0 0
      %3394 = vmatmul.mubr.bf16.gmra.mxu0 %v3202
      %v3395 = vpop.f32.mrf.mxu0
      %v3396 = vadd.f32 0.0, %v3395
      %v3397 = vpop.f32.mrf.mxu0
      %v3398 = vpop.f32.mrf.mxu0
      %v3399 = vadd.f32 0.0, %v3398
      %v3400 = vpop.f32.mrf.mxu0
      %3401 = vmatprep.mubr.bf16.mxu0 0
      %3402 = vmatmul.mubr.bf16.gmra.mxu0 %v3203
      %v3403 = vpop.f32.mrf.mxu0
      %v3404 = vadd.f32 0.0, %v3403
      %v3405 = vpop.f32.mrf.mxu0
      %v3406 = vpop.f32.mrf.mxu0
      %v3407 = vadd.f32 0.0, %v3406
      %v3408 = vpop.f32.mrf.mxu0
      %3409 = vmatprep.mubr.bf16.mxu0 0
      %3410 = vmatmul.mubr.bf16.gmra.mxu0 %v3204
      %v3411 = vpop.f32.mrf.mxu0
      %v3412 = vadd.f32 0.0, %v3411
      %v3413 = vpop.f32.mrf.mxu0
      %v3414 = vpop.f32.mrf.mxu0
      %v3415 = vadd.f32 0.0, %v3414
      %v3416 = vpop.f32.mrf.mxu0
      %3417 = vmatprep.mubr.bf16.mxu0 0
      %3418 = vmatmul.mubr.bf16.gmra.mxu0 %v3205
      %v3419 = vpop.f32.mrf.mxu0
      %v3420 = vadd.f32 0.0, %v3419
      %v3421 = vpop.f32.mrf.mxu0
      %v3422 = vpop.f32.mrf.mxu0
      %v3423 = vadd.f32 0.0, %v3422
      %v3424 = vpop.f32.mrf.mxu0
      %3425 = vmatprep.mubr.bf16.mxu0 0
      %3426 = vmatmul.mubr.bf16.gmra.mxu0 %v3206
      %v3427 = vpop.f32.mrf.mxu0
      %v3428 = vadd.f32 0.0, %v3427
      %v3429 = vpop.f32.mrf.mxu0
      %v3430 = vpop.f32.mrf.mxu0
      %v3431 = vadd.f32 0.0, %v3430
      %v3432 = vpop.f32.mrf.mxu0
      %3433 = vmatprep.mubr.bf16.mxu0 0
      %3434 = vmatmul.mubr.bf16.gmra.mxu0 %v3207
      %v3435 = vpop.f32.mrf.mxu0
      %v3436 = vadd.f32 0.0, %v3435
      %v3437 = vpop.f32.mrf.mxu0
      %v3438 = vpop.f32.mrf.mxu0
      %v3439 = vadd.f32 0.0, %v3438
      %v3440 = vpop.f32.mrf.mxu0
      %3441 = vmatprep.mubr.bf16.mxu0 0
      %3442 = vmatmul.mubr.bf16.gmra.mxu0 %v3208
      %v3443 = vpop.f32.mrf.mxu0
      %v3444 = vadd.f32 0.0, %v3443
      %v3445 = vpop.f32.mrf.mxu0
      %v3446 = vpop.f32.mrf.mxu0
      %v3447 = vadd.f32 0.0, %v3446
      %v3448 = vpop.f32.mrf.mxu0
      %3449 = vmatprep.mubr.bf16.mxu0 0
      %3450 = vmatmul.mubr.bf16.gmra.mxu0 %v3209
      %v3451 = vpop.f32.mrf.mxu0
      %v3452 = vadd.f32 0.0, %v3451
      %v3453 = vpop.f32.mrf.mxu0
      %v3454 = vpop.f32.mrf.mxu0
      %v3455 = vadd.f32 0.0, %v3454
      %v3456 = vpop.f32.mrf.mxu0
      %3457 = vmatprep.mubr.bf16.mxu0 0
      %3458 = vmatmul.mubr.bf16.gmra.mxu0 %v3210
      %v3459 = vpop.f32.mrf.mxu0
      %v3460 = vadd.f32 0.0, %v3459
      %v3461 = vpop.f32.mrf.mxu0
      %v3462 = vpop.f32.mrf.mxu0
      %v3463 = vadd.f32 0.0, %v3462
      %v3464 = vpop.f32.mrf.mxu0
      %3465 = vmatprep.mubr.bf16.mxu0 0
      %3466 = vmatmul.mubr.bf16.gmra.mxu0 %v3211
      %v3467 = vpop.f32.mrf.mxu0
      %v3468 = vadd.f32 0.0, %v3467
      %v3469 = vpop.f32.mrf.mxu0
      %v3470 = vpop.f32.mrf.mxu0
      %v3471 = vadd.f32 0.0, %v3470
      %v3472 = vpop.f32.mrf.mxu0
      %3473 = vmatprep.mubr.bf16.mxu0 0
      %3474 = vmatmul.mubr.bf16.gmra.mxu0 %v3212
      %v3475 = vpop.f32.mrf.mxu0
      %v3476 = vadd.f32 0.0, %v3475
      %v3477 = vpop.f32.mrf.mxu0
      %v3478 = vpop.f32.mrf.mxu0
      %v3479 = vadd.f32 0.0, %v3478
      %v3480 = vpop.f32.mrf.mxu0
      %3481 = vmatprep.mubr.bf16.mxu0 0
      %3482 = vmatmul.mubr.bf16.gmra.mxu0 %v3213
      %v3483 = vpop.f32.mrf.mxu0
      %v3484 = vadd.f32 0.0, %v3483
      %v3485 = vpop.f32.mrf.mxu0
      %v3486 = vpop.f32.mrf.mxu0
      %v3487 = vadd.f32 0.0, %v3486
      %v3488 = vpop.f32.mrf.mxu0
      %3489 = vmatprep.mubr.bf16.mxu0 0
      %3490 = vmatmul.mubr.bf16.gmra.mxu0 %v3214
      %v3491 = vpop.f32.mrf.mxu0
      %v3492 = vadd.f32 0.0, %v3491
      %v3493 = vpop.f32.mrf.mxu0
      %v3494 = vpop.f32.mrf.mxu0
      %v3495 = vadd.f32 0.0, %v3494
      %v3496 = vpop.f32.mrf.mxu0
      %3497 = vmatprep.mubr.bf16.mxu0 0
      %3498 = vmatmul.mubr.bf16.gmra.mxu0 %v3215
      %v3499 = vpop.f32.mrf.mxu0
      %v3500 = vadd.f32 0.0, %v3499
      %v3501 = vpop.f32.mrf.mxu0
      %v3502 = vpop.f32.mrf.mxu0
      %v3503 = vadd.f32 0.0, %v3502
      %v3504 = vpop.f32.mrf.mxu0
      %3505 = vdwg.mxu0
      %v3522 = vunpack.c.l.b16 %v3128
      %v3523 = vunpack.c.l.b16 %v3129
      %v3524 = vunpack.c.l.b16 %v3130
      %v3525 = vunpack.c.l.b16 %v3131
      %v3526 = vunpack.c.l.b16 %v3132
      %v3527 = vunpack.c.l.b16 %v3133
      %v3528 = vunpack.c.l.b16 %v3134
      %v3529 = vunpack.c.l.b16 %v3135
      %v3530 = vunpack.c.l.b16 %v3136
      %v3531 = vunpack.c.l.b16 %v3137
      %v3532 = vunpack.c.l.b16 %v3138
      %v3533 = vunpack.c.l.b16 %v3139
      %v3534 = vunpack.c.l.b16 %v3140
      %v3535 = vunpack.c.l.b16 %v3141
      %v3536 = vunpack.c.l.b16 %v3142
      %v3537 = vunpack.c.l.b16 %v3143
      %v3538 = vpack.c.b16 %v3523, %v3522
      %v3539 = vpack.c.b16 %v3525, %v3524
      %v3540 = vpack.c.b16 %v3527, %v3526
      %v3541 = vpack.c.b16 %v3529, %v3528
      %v3542 = vpack.c.b16 %v3531, %v3530
      %v3543 = vpack.c.b16 %v3533, %v3532
      %v3544 = vpack.c.b16 %v3535, %v3534
      %v3545 = vpack.c.b16 %v3537, %v3536
      %3554 = vmatprep.subr.bf16.mxu0 0
      %3555 = vmatpush1.bf16.msra.mxu0 %v3545
      %3556 = vmatprep.subr.bf16.mxu0 0
      %3557 = vmatpush1.bf16.msra.mxu0 %v3544
      %3558 = vmatprep.subr.bf16.mxu0 0
      %3559 = vmatpush1.bf16.msra.mxu0 %v3543
      %3560 = vmatprep.subr.bf16.mxu0 0
      %3561 = vmatpush1.bf16.msra.mxu0 %v3542
      %3562 = vmatprep.subr.bf16.mxu0 0
      %3563 = vmatpush1.bf16.msra.mxu0 %v3541
      %3564 = vmatprep.subr.bf16.mxu0 0
      %3565 = vmatpush1.bf16.msra.mxu0 %v3540
      %3566 = vmatprep.subr.bf16.mxu0 0
      %3567 = vmatpush1.bf16.msra.mxu0 %v3539
      %3568 = vmatprep.subr.bf16.mxu0 0
      %3569 = vmatpush1.bf16.msra.mxu0 %v3538
      %3570 = vmatprep.subr.bf16.mxu0 0
      %3571 = vmatpush2.bf16.msra.mxu0 0
      %3572 = vmatprep.subr.bf16.mxu0 0
      %3573 = vmatpush2.bf16.msra.mxu0 0
      %3574 = vmatprep.subr.bf16.mxu0 0
      %3575 = vmatpush2.bf16.msra.mxu0 0
      %3576 = vmatprep.subr.bf16.mxu0 0
      %3577 = vmatpush2.bf16.msra.mxu0 0
      %3578 = vmatprep.subr.bf16.mxu0 0
      %3579 = vmatpush2.bf16.msra.mxu0 0
      %3580 = vmatprep.subr.bf16.mxu0 0
      %3581 = vmatpush2.bf16.msra.mxu0 0
      %3582 = vmatprep.subr.bf16.mxu0 0
      %3583 = vmatpush2.bf16.msra.mxu0 0
      %3584 = vmatprep.subr.bf16.mxu0 0
      %3585 = vmatpush2.bf16.msra.mxu0 0
      %3586 = vmatprep.mubr.bf16.mxu0 0
      %3587 = vmatmul.mubr.bf16.gmra.mxu0 %v3103
      %v3588 = vpop.f32.mrf.mxu0
      %v3589 = vadd.f32 %v3316, %v3588
      %v3590 = vpop.f32.mrf.mxu0
      %v3591 = vpop.f32.mrf.mxu0
      %v3592 = vadd.f32 %v3319, %v3591
      %v3593 = vpop.f32.mrf.mxu0
      %3594 = vmatprep.mubr.bf16.mxu0 0
      %3595 = vmatmul.mubr.bf16.gmra.mxu0 %v3104
      %v3596 = vpop.f32.mrf.mxu0
      %v3597 = vadd.f32 %v3324, %v3596
      %v3598 = vpop.f32.mrf.mxu0
      %v3599 = vpop.f32.mrf.mxu0
      %v3600 = vadd.f32 %v3327, %v3599
      %v3601 = vpop.f32.mrf.mxu0
      %3602 = vmatprep.mubr.bf16.mxu0 0
      %3603 = vmatmul.mubr.bf16.gmra.mxu0 %v3105
      %v3604 = vpop.f32.mrf.mxu0
      %v3605 = vadd.f32 %v3332, %v3604
      %v3606 = vpop.f32.mrf.mxu0
      %v3607 = vpop.f32.mrf.mxu0
      %v3608 = vadd.f32 %v3335, %v3607
      %v3609 = vpop.f32.mrf.mxu0
      %3610 = vmatprep.mubr.bf16.mxu0 0
      %3611 = vmatmul.mubr.bf16.gmra.mxu0 %v3106
      %v3612 = vpop.f32.mrf.mxu0
      %v3613 = vadd.f32 %v3340, %v3612
      %v3614 = vpop.f32.mrf.mxu0
      %v3615 = vpop.f32.mrf.mxu0
      %v3616 = vadd.f32 %v3343, %v3615
      %v3617 = vpop.f32.mrf.mxu0
      %3618 = vmatprep.mubr.bf16.mxu0 0
      %3619 = vmatmul.mubr.bf16.gmra.mxu0 %v3107
      %v3620 = vpop.f32.mrf.mxu0
      %v3621 = vadd.f32 %v3348, %v3620
      %v3622 = vpop.f32.mrf.mxu0
      %v3623 = vpop.f32.mrf.mxu0
      %v3624 = vadd.f32 %v3351, %v3623
      %v3625 = vpop.f32.mrf.mxu0
      %3626 = vmatprep.mubr.bf16.mxu0 0
      %3627 = vmatmul.mubr.bf16.gmra.mxu0 %v3108
      %v3628 = vpop.f32.mrf.mxu0
      %v3629 = vadd.f32 %v3356, %v3628
      %v3630 = vpop.f32.mrf.mxu0
      %v3631 = vpop.f32.mrf.mxu0
      %v3632 = vadd.f32 %v3359, %v3631
      %v3633 = vpop.f32.mrf.mxu0
      %3634 = vmatprep.mubr.bf16.mxu0 0
      %3635 = vmatmul.mubr.bf16.gmra.mxu0 %v3109
      %v3636 = vpop.f32.mrf.mxu0
      %v3637 = vadd.f32 %v3364, %v3636
      %v3638 = vpop.f32.mrf.mxu0
      %v3639 = vpop.f32.mrf.mxu0
      %v3640 = vadd.f32 %v3367, %v3639
      %v3641 = vpop.f32.mrf.mxu0
      %3642 = vmatprep.mubr.bf16.mxu0 0
      %3643 = vmatmul.mubr.bf16.gmra.mxu0 %v3110
      %v3644 = vpop.f32.mrf.mxu0
      %v3645 = vadd.f32 %v3372, %v3644
      %v3646 = vpop.f32.mrf.mxu0
      %v3647 = vpop.f32.mrf.mxu0
      %v3648 = vadd.f32 %v3375, %v3647
      %v3649 = vpop.f32.mrf.mxu0
      %3650 = vmatprep.mubr.bf16.mxu0 0
      %3651 = vmatmul.mubr.bf16.gmra.mxu0 %v3111
      %v3652 = vpop.f32.mrf.mxu0
      %v3653 = vadd.f32 %v3380, %v3652
      %v3654 = vpop.f32.mrf.mxu0
      %v3655 = vpop.f32.mrf.mxu0
      %v3656 = vadd.f32 %v3383, %v3655
      %v3657 = vpop.f32.mrf.mxu0
      %3658 = vmatprep.mubr.bf16.mxu0 0
      %3659 = vmatmul.mubr.bf16.gmra.mxu0 %v3112
      %v3660 = vpop.f32.mrf.mxu0
      %v3661 = vadd.f32 %v3388, %v3660
      %v3662 = vpop.f32.mrf.mxu0
      %v3663 = vpop.f32.mrf.mxu0
      %v3664 = vadd.f32 %v3391, %v3663
      %v3665 = vpop.f32.mrf.mxu0
      %3666 = vmatprep.mubr.bf16.mxu0 0
      %3667 = vmatmul.mubr.bf16.gmra.mxu0 %v3113
      %v3668 = vpop.f32.mrf.mxu0
      %v3669 = vadd.f32 %v3396, %v3668
      %v3670 = vpop.f32.mrf.mxu0
      %v3671 = vpop.f32.mrf.mxu0
      %v3672 = vadd.f32 %v3399, %v3671
      %v3673 = vpop.f32.mrf.mxu0
      %3674 = vmatprep.mubr.bf16.mxu0 0
      %3675 = vmatmul.mubr.bf16.gmra.mxu0 %v3114
      %v3676 = vpop.f32.mrf.mxu0
      %v3677 = vadd.f32 %v3404, %v3676
      %v3678 = vpop.f32.mrf.mxu0
      %v3679 = vpop.f32.mrf.mxu0
      %v3680 = vadd.f32 %v3407, %v3679
      %v3681 = vpop.f32.mrf.mxu0
      %3682 = vmatprep.mubr.bf16.mxu0 0
      %3683 = vmatmul.mubr.bf16.gmra.mxu0 %v3115
      %v3684 = vpop.f32.mrf.mxu0
      %v3685 = vadd.f32 %v3412, %v3684
      %v3686 = vpop.f32.mrf.mxu0
      %v3687 = vpop.f32.mrf.mxu0
      %v3688 = vadd.f32 %v3415, %v3687
      %v3689 = vpop.f32.mrf.mxu0
      %3690 = vmatprep.mubr.bf16.mxu0 0
      %3691 = vmatmul.mubr.bf16.gmra.mxu0 %v3116
      %v3692 = vpop.f32.mrf.mxu0
      %v3693 = vadd.f32 %v3420, %v3692
      %v3694 = vpop.f32.mrf.mxu0
      %v3695 = vpop.f32.mrf.mxu0
      %v3696 = vadd.f32 %v3423, %v3695
      %v3697 = vpop.f32.mrf.mxu0
      %3698 = vmatprep.mubr.bf16.mxu0 0
      %3699 = vmatmul.mubr.bf16.gmra.mxu0 %v3117
      %v3700 = vpop.f32.mrf.mxu0
      %v3701 = vadd.f32 %v3428, %v3700
      %v3702 = vpop.f32.mrf.mxu0
      %v3703 = vpop.f32.mrf.mxu0
      %v3704 = vadd.f32 %v3431, %v3703
      %v3705 = vpop.f32.mrf.mxu0
      %3706 = vmatprep.mubr.bf16.mxu0 0
      %3707 = vmatmul.mubr.bf16.gmra.mxu0 %v3118
      %v3708 = vpop.f32.mrf.mxu0
      %v3709 = vadd.f32 %v3436, %v3708
      %v3710 = vpop.f32.mrf.mxu0
      %v3711 = vpop.f32.mrf.mxu0
      %v3712 = vadd.f32 %v3439, %v3711
      %v3713 = vpop.f32.mrf.mxu0
      %3714 = vmatprep.mubr.bf16.mxu0 0
      %3715 = vmatmul.mubr.bf16.gmra.mxu0 %v3119
      %v3716 = vpop.f32.mrf.mxu0
      %v3717 = vadd.f32 %v3444, %v3716
      %v3718 = vpop.f32.mrf.mxu0
      %v3719 = vpop.f32.mrf.mxu0
      %v3720 = vadd.f32 %v3447, %v3719
      %v3721 = vpop.f32.mrf.mxu0
      %3722 = vmatprep.mubr.bf16.mxu0 0
      %3723 = vmatmul.mubr.bf16.gmra.mxu0 %v3120
      %v3724 = vpop.f32.mrf.mxu0
      %v3725 = vadd.f32 %v3452, %v3724
      %v3726 = vpop.f32.mrf.mxu0
      %v3727 = vpop.f32.mrf.mxu0
      %v3728 = vadd.f32 %v3455, %v3727
      %v3729 = vpop.f32.mrf.mxu0
      %3730 = vmatprep.mubr.bf16.mxu0 0
      %3731 = vmatmul.mubr.bf16.gmra.mxu0 %v3121
      %v3732 = vpop.f32.mrf.mxu0
      %v3733 = vadd.f32 %v3460, %v3732
      %v3734 = vpop.f32.mrf.mxu0
      %v3735 = vpop.f32.mrf.mxu0
      %v3736 = vadd.f32 %v3463, %v3735
      %v3737 = vpop.f32.mrf.mxu0
      %3738 = vmatprep.mubr.bf16.mxu0 0
      %3739 = vmatmul.mubr.bf16.gmra.mxu0 %v3122
      %v3740 = vpop.f32.mrf.mxu0
      %v3741 = vadd.f32 %v3468, %v3740
      %v3742 = vpop.f32.mrf.mxu0
      %v3743 = vpop.f32.mrf.mxu0
      %v3744 = vadd.f32 %v3471, %v3743
      %v3745 = vpop.f32.mrf.mxu0
      %3746 = vmatprep.mubr.bf16.mxu0 0
      %3747 = vmatmul.mubr.bf16.gmra.mxu0 %v3123
      %v3748 = vpop.f32.mrf.mxu0
      %v3749 = vadd.f32 %v3476, %v3748
      %v3750 = vpop.f32.mrf.mxu0
      %v3751 = vpop.f32.mrf.mxu0
      %v3752 = vadd.f32 %v3479, %v3751
      %v3753 = vpop.f32.mrf.mxu0
      %3754 = vmatprep.mubr.bf16.mxu0 0
      %3755 = vmatmul.mubr.bf16.gmra.mxu0 %v3124
      %v3756 = vpop.f32.mrf.mxu0
      %v3757 = vadd.f32 %v3484, %v3756
      %v3758 = vpop.f32.mrf.mxu0
      %v3759 = vpop.f32.mrf.mxu0
      %v3760 = vadd.f32 %v3487, %v3759
      %v3761 = vpop.f32.mrf.mxu0
      %3762 = vmatprep.mubr.bf16.mxu0 0
      %3763 = vmatmul.mubr.bf16.gmra.mxu0 %v3125
      %v3764 = vpop.f32.mrf.mxu0
      %v3765 = vadd.f32 %v3492, %v3764
      %v3766 = vpop.f32.mrf.mxu0
      %v3767 = vpop.f32.mrf.mxu0
      %v3768 = vadd.f32 %v3495, %v3767
      %v3769 = vpop.f32.mrf.mxu0
      %3770 = vmatprep.mubr.bf16.mxu0 0
      %3771 = vmatmul.mubr.bf16.gmra.mxu0 %v3126
      %v3772 = vpop.f32.mrf.mxu0
      %v3773 = vadd.f32 %v3500, %v3772
      %v3774 = vpop.f32.mrf.mxu0
      %v3775 = vpop.f32.mrf.mxu0
      %v3776 = vadd.f32 %v3503, %v3775
      %v3777 = vpop.f32.mrf.mxu0
      %3778 = vdwg.mxu0
      %v3779 = vld [vmem:[#allocation2 + $0x39] sm:$0xff]
      %v3780 = vld [vmem:[#allocation2 + $0x41] sm:$0xff]
      %v3781 = vld [vmem:[#allocation2 + $0x49] sm:$0xff]
      %v3782 = vld [vmem:[#allocation2 + $0x51] sm:$0xff]
      %v3783 = vld [vmem:[#allocation2 + $0x59] sm:$0xff]
      %v3784 = vld [vmem:[#allocation2 + $0x61] sm:$0xff]
      %v3785 = vld [vmem:[#allocation2 + $0x69] sm:$0xff]
      %v3786 = vld [vmem:[#allocation2 + $0x71] sm:$0xff]
      %v3787 = vld [vmem:[#allocation2 + $0x79] sm:$0xff]
      %v3788 = vld [vmem:[#allocation2 + $0x81] sm:$0xff]
      %v3789 = vld [vmem:[#allocation2 + $0x89] sm:$0xff]
      %v3790 = vld [vmem:[#allocation2 + $0x91] sm:$0xff]
      %v3791 = vld [vmem:[#allocation2 + $0x99] sm:$0xff]
      %v3792 = vld [vmem:[#allocation2 + $0xa1] sm:$0xff]
      %v3793 = vld [vmem:[#allocation2 + $0xa9] sm:$0xff]
      %v3794 = vld [vmem:[#allocation2 + $0xb1] sm:$0xff]
      %v3795 = vld [vmem:[#allocation2 + $0xb9] sm:$0xff]
      %v3796 = vld [vmem:[#allocation2 + $0xc1] sm:$0xff]
      %v3797 = vld [vmem:[#allocation2 + $0xc9] sm:$0xff]
      %v3798 = vld [vmem:[#allocation2 + $0xd1] sm:$0xff]
      %v3799 = vld [vmem:[#allocation2 + $0xd9] sm:$0xff]
      %v3800 = vld [vmem:[#allocation2 + $0xe1] sm:$0xff]
      %v3801 = vld [vmem:[#allocation2 + $0xe9] sm:$0xff]
      %v3802 = vld [vmem:[#allocation2 + $0xf1] sm:$0xff]
      %v3803 = vld [vmem:[#allocation2 + $0xf9] sm:$0xff]
      %v3804 = vld [vmem:[#allocation2 + $0x101] sm:$0xff]
      %v3805 = vld [vmem:[#allocation2 + $0x109] sm:$0xff]
      %v3806 = vld [vmem:[#allocation2 + $0x111] sm:$0xff]
      %v3807 = vld [vmem:[#allocation2 + $0x119] sm:$0xff]
      %v3808 = vld [vmem:[#allocation2 + $0x121] sm:$0xff]
      %v3809 = vld [vmem:[#allocation2 + $0x129] sm:$0xff]
      %v3810 = vld [vmem:[#allocation2 + $0x131] sm:$0xff]
      %v3811 = vld [vmem:[#allocation2 + $0x139] sm:$0xff]
      %v3812 = vld [vmem:[#allocation2 + $0x141] sm:$0xff]
      %v3813 = vld [vmem:[#allocation2 + $0x149] sm:$0xff]
      %v3814 = vld [vmem:[#allocation2 + $0x151] sm:$0xff]
      %v3815 = vld [vmem:[#allocation2 + $0x159] sm:$0xff]
      %v3816 = vld [vmem:[#allocation2 + $0x161] sm:$0xff]
      %v3817 = vld [vmem:[#allocation2 + $0x169] sm:$0xff]
      %v3818 = vld [vmem:[#allocation2 + $0x171] sm:$0xff]
      %v3819 = vld [vmem:[#allocation2 + $0x179] sm:$0xff]
      %v3820 = vld [vmem:[#allocation2 + $0x181] sm:$0xff]
      %v3821 = vld [vmem:[#allocation2 + $0x189] sm:$0xff]
      %v3822 = vld [vmem:[#allocation2 + $0x191] sm:$0xff]
      %v3823 = vld [vmem:[#allocation2 + $0x199] sm:$0xff]
      %v3824 = vld [vmem:[#allocation2 + $0x1a1] sm:$0xff]
      %v3825 = vld [vmem:[#allocation2 + $0x1a9] sm:$0xff]
      %v3826 = vld [vmem:[#allocation2 + $0x1b1] sm:$0xff]
      %v3827 = vpack.c.bf16 %v3780, %v3779
      %v3828 = vpack.c.bf16 %v3782, %v3781
      %v3829 = vpack.c.bf16 %v3784, %v3783
      %v3830 = vpack.c.bf16 %v3786, %v3785
      %v3831 = vpack.c.bf16 %v3788, %v3787
      %v3832 = vpack.c.bf16 %v3790, %v3789
      %v3833 = vpack.c.bf16 %v3792, %v3791
      %v3834 = vpack.c.bf16 %v3794, %v3793
      %v3835 = vpack.c.bf16 %v3796, %v3795
      %v3836 = vpack.c.bf16 %v3798, %v3797
      %v3837 = vpack.c.bf16 %v3800, %v3799
      %v3838 = vpack.c.bf16 %v3802, %v3801
      %v3839 = vpack.c.bf16 %v3804, %v3803
      %v3840 = vpack.c.bf16 %v3806, %v3805
      %v3841 = vpack.c.bf16 %v3808, %v3807
      %v3842 = vpack.c.bf16 %v3810, %v3809
      %v3843 = vpack.c.bf16 %v3812, %v3811
      %v3844 = vpack.c.bf16 %v3814, %v3813
      %v3845 = vpack.c.bf16 %v3816, %v3815
      %v3846 = vpack.c.bf16 %v3818, %v3817
      %v3847 = vpack.c.bf16 %v3820, %v3819
      %v3848 = vpack.c.bf16 %v3822, %v3821
      %v3849 = vpack.c.bf16 %v3824, %v3823
      %v3850 = vpack.c.bf16 %v3826, %v3825
      %s3851 = scalar_lea.vmem %s1, 512
      %v3852 = vld [vmem:[%s3851] sm:$0xf]
      %v3853 = vld [vmem:[%s3851 + $0x4] sm:$0xf]
      %v3854 = vld [vmem:[%s3851 + $0x8] sm:$0xf]
      %v3855 = vld [vmem:[%s3851 + $0xc] sm:$0xf]
      %v3856 = vld [vmem:[%s3851 + $0x10] sm:$0xf]
      %v3857 = vld [vmem:[%s3851 + $0x14] sm:$0xf]
      %v3858 = vld [vmem:[%s3851 + $0x18] sm:$0xf]
      %v3859 = vld [vmem:[%s3851 + $0x1c] sm:$0xf]
      %v3860 = vld [vmem:[%s3851 + $0x20] sm:$0xf]
      %v3861 = vld [vmem:[%s3851 + $0x24] sm:$0xf]
      %v3862 = vld [vmem:[%s3851 + $0x28] sm:$0xf]
      %v3863 = vld [vmem:[%s3851 + $0x2c] sm:$0xf]
      %v3864 = vld [vmem:[%s3851 + $0x30] sm:$0xf]
      %v3865 = vld [vmem:[%s3851 + $0x34] sm:$0xf]
      %v3866 = vld [vmem:[%s3851 + $0x38] sm:$0xf]
      %v3867 = vld [vmem:[%s3851 + $0x3c] sm:$0xf]
      %v3884 = vunpack.c.l.b16 %v3852
      %v3885 = vunpack.c.l.b16 %v3853
      %v3886 = vunpack.c.l.b16 %v3854
      %v3887 = vunpack.c.l.b16 %v3855
      %v3888 = vunpack.c.l.b16 %v3856
      %v3889 = vunpack.c.l.b16 %v3857
      %v3890 = vunpack.c.l.b16 %v3858
      %v3891 = vunpack.c.l.b16 %v3859
      %v3892 = vunpack.c.l.b16 %v3860
      %v3893 = vunpack.c.l.b16 %v3861
      %v3894 = vunpack.c.l.b16 %v3862
      %v3895 = vunpack.c.l.b16 %v3863
      %v3896 = vunpack.c.l.b16 %v3864
      %v3897 = vunpack.c.l.b16 %v3865
      %v3898 = vunpack.c.l.b16 %v3866
      %v3899 = vunpack.c.l.b16 %v3867
      %v3900 = vpack.c.b16 %v3885, %v3884
      %v3901 = vpack.c.b16 %v3887, %v3886
      %v3902 = vpack.c.b16 %v3889, %v3888
      %v3903 = vpack.c.b16 %v3891, %v3890
      %v3904 = vpack.c.b16 %v3893, %v3892
      %v3905 = vpack.c.b16 %v3895, %v3894
      %v3906 = vpack.c.b16 %v3897, %v3896
      %v3907 = vpack.c.b16 %v3899, %v3898
      %3916 = vmatprep.subr.bf16.mxu0 0
      %3917 = vmatpush1.bf16.msra.mxu0 %v3907
      %3918 = vmatprep.subr.bf16.mxu0 0
      %3919 = vmatpush1.bf16.msra.mxu0 %v3906
      %3920 = vmatprep.subr.bf16.mxu0 0
      %3921 = vmatpush1.bf16.msra.mxu0 %v3905
      %3922 = vmatprep.subr.bf16.mxu0 0
      %3923 = vmatpush1.bf16.msra.mxu0 %v3904
      %3924 = vmatprep.subr.bf16.mxu0 0
      %3925 = vmatpush1.bf16.msra.mxu0 %v3903
      %3926 = vmatprep.subr.bf16.mxu0 0
      %3927 = vmatpush1.bf16.msra.mxu0 %v3902
      %3928 = vmatprep.subr.bf16.mxu0 0
      %3929 = vmatpush1.bf16.msra.mxu0 %v3901
      %3930 = vmatprep.subr.bf16.mxu0 0
      %3931 = vmatpush1.bf16.msra.mxu0 %v3900
      %3932 = vmatprep.subr.bf16.mxu0 0
      %3933 = vmatpush2.bf16.msra.mxu0 0
      %3934 = vmatprep.subr.bf16.mxu0 0
      %3935 = vmatpush2.bf16.msra.mxu0 0
      %3936 = vmatprep.subr.bf16.mxu0 0
      %3937 = vmatpush2.bf16.msra.mxu0 0
      %3938 = vmatprep.subr.bf16.mxu0 0
      %3939 = vmatpush2.bf16.msra.mxu0 0
      %3940 = vmatprep.subr.bf16.mxu0 0
      %3941 = vmatpush2.bf16.msra.mxu0 0
      %3942 = vmatprep.subr.bf16.mxu0 0
      %3943 = vmatpush2.bf16.msra.mxu0 0
      %3944 = vmatprep.subr.bf16.mxu0 0
      %3945 = vmatpush2.bf16.msra.mxu0 0
      %3946 = vmatprep.subr.bf16.mxu0 0
      %3947 = vmatpush2.bf16.msra.mxu0 0
      %3948 = vmatprep.mubr.bf16.mxu0 0
      %3949 = vmatmul.mubr.bf16.gmra.mxu0 %v3827
      %v3950 = vpop.f32.mrf.mxu0
      %v3951 = vadd.f32 0.0, %v3950
      %v3952 = vpop.f32.mrf.mxu0
      %v3953 = vpop.f32.mrf.mxu0
      %v3954 = vadd.f32 0.0, %v3953
      %v3955 = vpop.f32.mrf.mxu0
      %3956 = vmatprep.mubr.bf16.mxu0 0
      %3957 = vmatmul.mubr.bf16.gmra.mxu0 %v3828
      %v3958 = vpop.f32.mrf.mxu0
      %v3959 = vadd.f32 0.0, %v3958
      %v3960 = vpop.f32.mrf.mxu0
      %v3961 = vpop.f32.mrf.mxu0
      %v3962 = vadd.f32 0.0, %v3961
      %v3963 = vpop.f32.mrf.mxu0
      %3964 = vmatprep.mubr.bf16.mxu0 0
      %3965 = vmatmul.mubr.bf16.gmra.mxu0 %v3829
      %v3966 = vpop.f32.mrf.mxu0
      %v3967 = vadd.f32 0.0, %v3966
      %v3968 = vpop.f32.mrf.mxu0
      %v3969 = vpop.f32.mrf.mxu0
      %v3970 = vadd.f32 0.0, %v3969
      %v3971 = vpop.f32.mrf.mxu0
      %3972 = vmatprep.mubr.bf16.mxu0 0
      %3973 = vmatmul.mubr.bf16.gmra.mxu0 %v3830
      %v3974 = vpop.f32.mrf.mxu0
      %v3975 = vadd.f32 0.0, %v3974
      %v3976 = vpop.f32.mrf.mxu0
      %v3977 = vpop.f32.mrf.mxu0
      %v3978 = vadd.f32 0.0, %v3977
      %v3979 = vpop.f32.mrf.mxu0
      %3980 = vmatprep.mubr.bf16.mxu0 0
      %3981 = vmatmul.mubr.bf16.gmra.mxu0 %v3831
      %v3982 = vpop.f32.mrf.mxu0
      %v3983 = vadd.f32 0.0, %v3982
      %v3984 = vpop.f32.mrf.mxu0
      %v3985 = vpop.f32.mrf.mxu0
      %v3986 = vadd.f32 0.0, %v3985
      %v3987 = vpop.f32.mrf.mxu0
      %3988 = vmatprep.mubr.bf16.mxu0 0
      %3989 = vmatmul.mubr.bf16.gmra.mxu0 %v3832
      %v3990 = vpop.f32.mrf.mxu0
      %v3991 = vadd.f32 0.0, %v3990
      %v3992 = vpop.f32.mrf.mxu0
      %v3993 = vpop.f32.mrf.mxu0
      %v3994 = vadd.f32 0.0, %v3993
      %v3995 = vpop.f32.mrf.mxu0
      %3996 = vmatprep.mubr.bf16.mxu0 0
      %3997 = vmatmul.mubr.bf16.gmra.mxu0 %v3833
      %v3998 = vpop.f32.mrf.mxu0
      %v3999 = vadd.f32 0.0, %v3998
      %v4000 = vpop.f32.mrf.mxu0
      %v4001 = vpop.f32.mrf.mxu0
      %v4002 = vadd.f32 0.0, %v4001
      %v4003 = vpop.f32.mrf.mxu0
      %4004 = vmatprep.mubr.bf16.mxu0 0
      %4005 = vmatmul.mubr.bf16.gmra.mxu0 %v3834
      %v4006 = vpop.f32.mrf.mxu0
      %v4007 = vadd.f32 0.0, %v4006
      %v4008 = vpop.f32.mrf.mxu0
      %v4009 = vpop.f32.mrf.mxu0
      %v4010 = vadd.f32 0.0, %v4009
      %v4011 = vpop.f32.mrf.mxu0
      %4012 = vmatprep.mubr.bf16.mxu0 0
      %4013 = vmatmul.mubr.bf16.gmra.mxu0 %v3835
      %v4014 = vpop.f32.mrf.mxu0
      %v4015 = vadd.f32 0.0, %v4014
      %v4016 = vpop.f32.mrf.mxu0
      %v4017 = vpop.f32.mrf.mxu0
      %v4018 = vadd.f32 0.0, %v4017
      %v4019 = vpop.f32.mrf.mxu0
      %4020 = vmatprep.mubr.bf16.mxu0 0
      %4021 = vmatmul.mubr.bf16.gmra.mxu0 %v3836
      %v4022 = vpop.f32.mrf.mxu0
      %v4023 = vadd.f32 0.0, %v4022
      %v4024 = vpop.f32.mrf.mxu0
      %v4025 = vpop.f32.mrf.mxu0
      %v4026 = vadd.f32 0.0, %v4025
      %v4027 = vpop.f32.mrf.mxu0
      %4028 = vmatprep.mubr.bf16.mxu0 0
      %4029 = vmatmul.mubr.bf16.gmra.mxu0 %v3837
      %v4030 = vpop.f32.mrf.mxu0
      %v4031 = vadd.f32 0.0, %v4030
      %v4032 = vpop.f32.mrf.mxu0
      %v4033 = vpop.f32.mrf.mxu0
      %v4034 = vadd.f32 0.0, %v4033
      %v4035 = vpop.f32.mrf.mxu0
      %4036 = vmatprep.mubr.bf16.mxu0 0
      %4037 = vmatmul.mubr.bf16.gmra.mxu0 %v3838
      %v4038 = vpop.f32.mrf.mxu0
      %v4039 = vadd.f32 0.0, %v4038
      %v4040 = vpop.f32.mrf.mxu0
      %v4041 = vpop.f32.mrf.mxu0
      %v4042 = vadd.f32 0.0, %v4041
      %v4043 = vpop.f32.mrf.mxu0
      %4044 = vmatprep.mubr.bf16.mxu0 0
      %4045 = vmatmul.mubr.bf16.gmra.mxu0 %v3839
      %v4046 = vpop.f32.mrf.mxu0
      %v4047 = vadd.f32 0.0, %v4046
      %v4048 = vpop.f32.mrf.mxu0
      %v4049 = vpop.f32.mrf.mxu0
      %v4050 = vadd.f32 0.0, %v4049
      %v4051 = vpop.f32.mrf.mxu0
      %4052 = vmatprep.mubr.bf16.mxu0 0
      %4053 = vmatmul.mubr.bf16.gmra.mxu0 %v3840
      %v4054 = vpop.f32.mrf.mxu0
      %v4055 = vadd.f32 0.0, %v4054
      %v4056 = vpop.f32.mrf.mxu0
      %v4057 = vpop.f32.mrf.mxu0
      %v4058 = vadd.f32 0.0, %v4057
      %v4059 = vpop.f32.mrf.mxu0
      %4060 = vmatprep.mubr.bf16.mxu0 0
      %4061 = vmatmul.mubr.bf16.gmra.mxu0 %v3841
      %v4062 = vpop.f32.mrf.mxu0
      %v4063 = vadd.f32 0.0, %v4062
      %v4064 = vpop.f32.mrf.mxu0
      %v4065 = vpop.f32.mrf.mxu0
      %v4066 = vadd.f32 0.0, %v4065
      %v4067 = vpop.f32.mrf.mxu0
      %4068 = vmatprep.mubr.bf16.mxu0 0
      %4069 = vmatmul.mubr.bf16.gmra.mxu0 %v3842
      %v4070 = vpop.f32.mrf.mxu0
      %v4071 = vadd.f32 0.0, %v4070
      %v4072 = vpop.f32.mrf.mxu0
      %v4073 = vpop.f32.mrf.mxu0
      %v4074 = vadd.f32 0.0, %v4073
      %v4075 = vpop.f32.mrf.mxu0
      %4076 = vmatprep.mubr.bf16.mxu0 0
      %4077 = vmatmul.mubr.bf16.gmra.mxu0 %v3843
      %v4078 = vpop.f32.mrf.mxu0
      %v4079 = vadd.f32 0.0, %v4078
      %v4080 = vpop.f32.mrf.mxu0
      %v4081 = vpop.f32.mrf.mxu0
      %v4082 = vadd.f32 0.0, %v4081
      %v4083 = vpop.f32.mrf.mxu0
      %4084 = vmatprep.mubr.bf16.mxu0 0
      %4085 = vmatmul.mubr.bf16.gmra.mxu0 %v3844
      %v4086 = vpop.f32.mrf.mxu0
      %v4087 = vadd.f32 0.0, %v4086
      %v4088 = vpop.f32.mrf.mxu0
      %v4089 = vpop.f32.mrf.mxu0
      %v4090 = vadd.f32 0.0, %v4089
      %v4091 = vpop.f32.mrf.mxu0
      %4092 = vmatprep.mubr.bf16.mxu0 0
      %4093 = vmatmul.mubr.bf16.gmra.mxu0 %v3845
      %v4094 = vpop.f32.mrf.mxu0
      %v4095 = vadd.f32 0.0, %v4094
      %v4096 = vpop.f32.mrf.mxu0
      %v4097 = vpop.f32.mrf.mxu0
      %v4098 = vadd.f32 0.0, %v4097
      %v4099 = vpop.f32.mrf.mxu0
      %4100 = vmatprep.mubr.bf16.mxu0 0
      %4101 = vmatmul.mubr.bf16.gmra.mxu0 %v3846
      %v4102 = vpop.f32.mrf.mxu0
      %v4103 = vadd.f32 0.0, %v4102
      %v4104 = vpop.f32.mrf.mxu0
      %v4105 = vpop.f32.mrf.mxu0
      %v4106 = vadd.f32 0.0, %v4105
      %v4107 = vpop.f32.mrf.mxu0
      %4108 = vmatprep.mubr.bf16.mxu0 0
      %4109 = vmatmul.mubr.bf16.gmra.mxu0 %v3847
      %v4110 = vpop.f32.mrf.mxu0
      %v4111 = vadd.f32 0.0, %v4110
      %v4112 = vpop.f32.mrf.mxu0
      %v4113 = vpop.f32.mrf.mxu0
      %v4114 = vadd.f32 0.0, %v4113
      %v4115 = vpop.f32.mrf.mxu0
      %4116 = vmatprep.mubr.bf16.mxu0 0
      %4117 = vmatmul.mubr.bf16.gmra.mxu0 %v3848
      %v4118 = vpop.f32.mrf.mxu0
      %v4119 = vadd.f32 0.0, %v4118
      %v4120 = vpop.f32.mrf.mxu0
      %v4121 = vpop.f32.mrf.mxu0
      %v4122 = vadd.f32 0.0, %v4121
      %v4123 = vpop.f32.mrf.mxu0
      %4124 = vmatprep.mubr.bf16.mxu0 0
      %4125 = vmatmul.mubr.bf16.gmra.mxu0 %v3849
      %v4126 = vpop.f32.mrf.mxu0
      %v4127 = vadd.f32 0.0, %v4126
      %v4128 = vpop.f32.mrf.mxu0
      %v4129 = vpop.f32.mrf.mxu0
      %v4130 = vadd.f32 0.0, %v4129
      %v4131 = vpop.f32.mrf.mxu0
      %4132 = vmatprep.mubr.bf16.mxu0 0
      %4133 = vmatmul.mubr.bf16.gmra.mxu0 %v3850
      %v4134 = vpop.f32.mrf.mxu0
      %v4135 = vadd.f32 0.0, %v4134
      %v4136 = vpop.f32.mrf.mxu0
      %v4137 = vpop.f32.mrf.mxu0
      %v4138 = vadd.f32 0.0, %v4137
      %v4139 = vpop.f32.mrf.mxu0
      %4140 = vdwg.mxu0
      %v4141 = vadd.f32 %v3589, %v3951
      %v4142 = vadd.f32 %v3592, %v3954
      %v4143 = vadd.f32 %v3597, %v3959
      %v4144 = vadd.f32 %v3600, %v3962
      %v4145 = vadd.f32 %v3605, %v3967
      %v4146 = vadd.f32 %v3608, %v3970
      %v4147 = vadd.f32 %v3613, %v3975
      %v4148 = vadd.f32 %v3616, %v3978
      %v4149 = vadd.f32 %v3621, %v3983
      %v4150 = vadd.f32 %v3624, %v3986
      %v4151 = vadd.f32 %v3629, %v3991
      %v4152 = vadd.f32 %v3632, %v3994
      %v4153 = vadd.f32 %v3637, %v3999
      %v4154 = vadd.f32 %v3640, %v4002
      %v4155 = vadd.f32 %v3645, %v4007
      %v4156 = vadd.f32 %v3648, %v4010
      %v4157 = vadd.f32 %v3653, %v4015
      %v4158 = vadd.f32 %v3656, %v4018
      %v4159 = vadd.f32 %v3661, %v4023
      %v4160 = vadd.f32 %v3664, %v4026
      %v4161 = vadd.f32 %v3669, %v4031
      %v4162 = vadd.f32 %v3672, %v4034
      %v4163 = vadd.f32 %v3677, %v4039
      %v4164 = vadd.f32 %v3680, %v4042
      %v4165 = vadd.f32 %v3685, %v4047
      %v4166 = vadd.f32 %v3688, %v4050
      %v4167 = vadd.f32 %v3693, %v4055
      %v4168 = vadd.f32 %v3696, %v4058
      %v4169 = vadd.f32 %v3701, %v4063
      %v4170 = vadd.f32 %v3704, %v4066
      %v4171 = vadd.f32 %v3709, %v4071
      %v4172 = vadd.f32 %v3712, %v4074
      %v4173 = vadd.f32 %v3717, %v4079
      %v4174 = vadd.f32 %v3720, %v4082
      %v4175 = vadd.f32 %v3725, %v4087
      %v4176 = vadd.f32 %v3728, %v4090
      %v4177 = vadd.f32 %v3733, %v4095
      %v4178 = vadd.f32 %v3736, %v4098
      %v4179 = vadd.f32 %v3741, %v4103
      %v4180 = vadd.f32 %v3744, %v4106
      %v4181 = vadd.f32 %v3749, %v4111
      %v4182 = vadd.f32 %v3752, %v4114
      %v4183 = vadd.f32 %v3757, %v4119
      %v4184 = vadd.f32 %v3760, %v4122
      %v4185 = vadd.f32 %v3765, %v4127
      %v4186 = vadd.f32 %v3768, %v4130
      %v4187 = vadd.f32 %v3773, %v4135
      %v4188 = vadd.f32 %v3776, %v4138
      %v4189 = vadd.f32 %v3007, %v4141
      %v4190 = vadd.f32 %v3008, %v4142
      %v4191 = vadd.f32 %v3009, %v4143
      %v4192 = vadd.f32 %v3010, %v4144
      %v4193 = vadd.f32 %v3011, %v4145
      %v4194 = vadd.f32 %v3012, %v4146
      %v4195 = vadd.f32 %v3013, %v4147
      %v4196 = vadd.f32 %v3014, %v4148
      %v4197 = vadd.f32 %v3015, %v4149
      %v4198 = vadd.f32 %v3016, %v4150
      %v4199 = vadd.f32 %v3017, %v4151
      %v4200 = vadd.f32 %v3018, %v4152
      %v4201 = vadd.f32 %v3019, %v4153
      %v4202 = vadd.f32 %v3020, %v4154
      %v4203 = vadd.f32 %v3021, %v4155
      %v4204 = vadd.f32 %v3022, %v4156
      %v4205 = vadd.f32 %v3023, %v4157
      %v4206 = vadd.f32 %v3024, %v4158
      %v4207 = vadd.f32 %v3025, %v4159
      %v4208 = vadd.f32 %v3026, %v4160
      %v4209 = vadd.f32 %v3027, %v4161
      %v4210 = vadd.f32 %v3028, %v4162
      %v4211 = vadd.f32 %v3029, %v4163
      %v4212 = vadd.f32 %v3030, %v4164
      %v4213 = vadd.f32 %v3031, %v4165
      %v4214 = vadd.f32 %v3032, %v4166
      %v4215 = vadd.f32 %v3033, %v4167
      %v4216 = vadd.f32 %v3034, %v4168
      %v4217 = vadd.f32 %v3035, %v4169
      %v4218 = vadd.f32 %v3036, %v4170
      %v4219 = vadd.f32 %v3037, %v4171
      %v4220 = vadd.f32 %v3038, %v4172
      %v4221 = vadd.f32 %v3039, %v4173
      %v4222 = vadd.f32 %v3040, %v4174
      %v4223 = vadd.f32 %v3041, %v4175
      %v4224 = vadd.f32 %v3042, %v4176
      %v4225 = vadd.f32 %v3043, %v4177
      %v4226 = vadd.f32 %v3044, %v4178
      %v4227 = vadd.f32 %v3045, %v4179
      %v4228 = vadd.f32 %v3046, %v4180
      %v4229 = vadd.f32 %v3047, %v4181
      %v4230 = vadd.f32 %v3048, %v4182
      %v4231 = vadd.f32 %v3049, %v4183
      %v4232 = vadd.f32 %v3050, %v4184
      %v4233 = vadd.f32 %v3051, %v4185
      %v4234 = vadd.f32 %v3052, %v4186
      %v4235 = vadd.f32 %v3053, %v4187
      %v4236 = vadd.f32 %v3054, %v4188
      %4237 = vst [vmem:[#allocation3] sm:$0xff] %v4189
      %4238 = vst [vmem:[#allocation3 + $0x8] sm:$0xff] %v4190
      %4239 = vst [vmem:[#allocation3 + $0x10] sm:$0xff] %v4191
      %4240 = vst [vmem:[#allocation3 + $0x18] sm:$0xff] %v4192
      %4241 = vst [vmem:[#allocation3 + $0x20] sm:$0xff] %v4193
      %4242 = vst [vmem:[#allocation3 + $0x28] sm:$0xff] %v4194
      %4243 = vst [vmem:[#allocation3 + $0x30] sm:$0xff] %v4195
      %4244 = vst [vmem:[#allocation3 + $0x38] sm:$0xff] %v4196
      %4245 = vst [vmem:[#allocation3 + $0x40] sm:$0xff] %v4197
      %4246 = vst [vmem:[#allocation3 + $0x48] sm:$0xff] %v4198
      %4247 = vst [vmem:[#allocation3 + $0x50] sm:$0xff] %v4199
      %4248 = vst [vmem:[#allocation3 + $0x58] sm:$0xff] %v4200
      %4249 = vst [vmem:[#allocation3 + $0x60] sm:$0xff] %v4201
      %4250 = vst [vmem:[#allocation3 + $0x68] sm:$0xff] %v4202
      %4251 = vst [vmem:[#allocation3 + $0x70] sm:$0xff] %v4203
      %4252 = vst [vmem:[#allocation3 + $0x78] sm:$0xff] %v4204
      %4253 = vst [vmem:[#allocation3 + $0x80] sm:$0xff] %v4205
      %4254 = vst [vmem:[#allocation3 + $0x88] sm:$0xff] %v4206
      %4255 = vst [vmem:[#allocation3 + $0x90] sm:$0xff] %v4207
      %4256 = vst [vmem:[#allocation3 + $0x98] sm:$0xff] %v4208
      %4257 = vst [vmem:[#allocation3 + $0xa0] sm:$0xff] %v4209
      %4258 = vst [vmem:[#allocation3 + $0xa8] sm:$0xff] %v4210
      %4259 = vst [vmem:[#allocation3 + $0xb0] sm:$0xff] %v4211
      %4260 = vst [vmem:[#allocation3 + $0xb8] sm:$0xff] %v4212
      %4261 = vst [vmem:[#allocation3 + $0xc0] sm:$0xff] %v4213
      %4262 = vst [vmem:[#allocation3 + $0xc8] sm:$0xff] %v4214
      %4263 = vst [vmem:[#allocation3 + $0xd0] sm:$0xff] %v4215
      %4264 = vst [vmem:[#allocation3 + $0xd8] sm:$0xff] %v4216
      %4265 = vst [vmem:[#allocation3 + $0xe0] sm:$0xff] %v4217
      %4266 = vst [vmem:[#allocation3 + $0xe8] sm:$0xff] %v4218
      %4267 = vst [vmem:[#allocation3 + $0xf0] sm:$0xff] %v4219
      %4268 = vst [vmem:[#allocation3 + $0xf8] sm:$0xff] %v4220
      %4269 = vst [vmem:[#allocation3 + $0x100] sm:$0xff] %v4221
      %4270 = vst [vmem:[#allocation3 + $0x108] sm:$0xff] %v4222
      %4271 = vst [vmem:[#allocation3 + $0x110] sm:$0xff] %v4223
      %4272 = vst [vmem:[#allocation3 + $0x118] sm:$0xff] %v4224
      %4273 = vst [vmem:[#allocation3 + $0x120] sm:$0xff] %v4225
      %4274 = vst [vmem:[#allocation3 + $0x128] sm:$0xff] %v4226
      %4275 = vst [vmem:[#allocation3 + $0x130] sm:$0xff] %v4227
      %4276 = vst [vmem:[#allocation3 + $0x138] sm:$0xff] %v4228
      %4277 = vst [vmem:[#allocation3 + $0x140] sm:$0xff] %v4229
      %4278 = vst [vmem:[#allocation3 + $0x148] sm:$0xff] %v4230
      %4279 = vst [vmem:[#allocation3 + $0x150] sm:$0xff] %v4231
      %4280 = vst [vmem:[#allocation3 + $0x158] sm:$0xff] %v4232
      %4281 = vst [vmem:[#allocation3 + $0x160] sm:$0xff] %v4233
      %4282 = vst [vmem:[#allocation3 + $0x168] sm:$0xff] %v4234
      %4283 = vst [vmem:[#allocation3 + $0x170] sm:$0xff] %v4235
      %4284 = vst [vmem:[#allocation3 + $0x178] sm:$0xff] %v4236
      %v4285 = vld [vmem:[#allocation3] sm:$0xff]
      %v4286 = vld [vmem:[#allocation3 + $0x8] sm:$0xff]
      %v4287 = vld [vmem:[#allocation3 + $0x10] sm:$0xff]
      %v4288 = vld [vmem:[#allocation3 + $0x18] sm:$0xff]
      %v4289 = vld [vmem:[#allocation3 + $0x20] sm:$0xff]
      %v4290 = vld [vmem:[#allocation3 + $0x28] sm:$0xff]
      %v4291 = vld [vmem:[#allocation3 + $0x30] sm:$0xff]
      %v4292 = vld [vmem:[#allocation3 + $0x38] sm:$0xff]
      %v4293 = vld [vmem:[#allocation3 + $0x40] sm:$0xff]
      %v4294 = vld [vmem:[#allocation3 + $0x48] sm:$0xff]
      %v4295 = vld [vmem:[#allocation3 + $0x50] sm:$0xff]
      %v4296 = vld [vmem:[#allocation3 + $0x58] sm:$0xff]
      %v4297 = vld [vmem:[#allocation3 + $0x60] sm:$0xff]
      %v4298 = vld [vmem:[#allocation3 + $0x68] sm:$0xff]
      %v4299 = vld [vmem:[#allocation3 + $0x70] sm:$0xff]
      %v4300 = vld [vmem:[#allocation3 + $0x78] sm:$0xff]
      %v4301 = vld [vmem:[#allocation3 + $0x80] sm:$0xff]
      %v4302 = vld [vmem:[#allocation3 + $0x88] sm:$0xff]
      %v4303 = vld [vmem:[#allocation3 + $0x90] sm:$0xff]
      %v4304 = vld [vmem:[#allocation3 + $0x98] sm:$0xff]
      %v4305 = vld [vmem:[#allocation3 + $0xa0] sm:$0xff]
      %v4306 = vld [vmem:[#allocation3 + $0xa8] sm:$0xff]
      %v4307 = vld [vmem:[#allocation3 + $0xb0] sm:$0xff]
      %v4308 = vld [vmem:[#allocation3 + $0xb8] sm:$0xff]
      %v4309 = vld [vmem:[#allocation3 + $0xc0] sm:$0xff]
      %v4310 = vld [vmem:[#allocation3 + $0xc8] sm:$0xff]
      %v4311 = vld [vmem:[#allocation3 + $0xd0] sm:$0xff]
      %v4312 = vld [vmem:[#allocation3 + $0xd8] sm:$0xff]
      %v4313 = vld [vmem:[#allocation3 + $0xe0] sm:$0xff]
      %v4314 = vld [vmem:[#allocation3 + $0xe8] sm:$0xff]
      %v4315 = vld [vmem:[#allocation3 + $0xf0] sm:$0xff]
      %v4316 = vld [vmem:[#allocation3 + $0xf8] sm:$0xff]
      %v4317 = vld [vmem:[#allocation3 + $0x100] sm:$0xff]
      %v4318 = vld [vmem:[#allocation3 + $0x108] sm:$0xff]
      %v4319 = vld [vmem:[#allocation3 + $0x110] sm:$0xff]
      %v4320 = vld [vmem:[#allocation3 + $0x118] sm:$0xff]
      %v4321 = vld [vmem:[#allocation3 + $0x120] sm:$0xff]
      %v4322 = vld [vmem:[#allocation3 + $0x128] sm:$0xff]
      %v4323 = vld [vmem:[#allocation3 + $0x130] sm:$0xff]
      %v4324 = vld [vmem:[#allocation3 + $0x138] sm:$0xff]
      %v4325 = vld [vmem:[#allocation3 + $0x140] sm:$0xff]
      %v4326 = vld [vmem:[#allocation3 + $0x148] sm:$0xff]
      %v4327 = vld [vmem:[#allocation3 + $0x150] sm:$0xff]
      %v4328 = vld [vmem:[#allocation3 + $0x158] sm:$0xff]
      %v4329 = vld [vmem:[#allocation3 + $0x160] sm:$0xff]
      %v4330 = vld [vmem:[#allocation3 + $0x168] sm:$0xff]
      %v4331 = vld [vmem:[#allocation3 + $0x170] sm:$0xff]
      %v4332 = vld [vmem:[#allocation3 + $0x178] sm:$0xff]
      %v4333 = vmul.f32 %v4285, %v666
      %v4334 = vmul.f32 %v4286, %v667
      %v4335 = vmul.f32 %v4287, %v668
      %v4336 = vmul.f32 %v4288, %v669
      %v4337 = vmul.f32 %v4289, %v670
      %v4338 = vmul.f32 %v4290, %v671
      %v4339 = vmul.f32 %v4291, %v672
      %v4340 = vmul.f32 %v4292, %v673
      %v4341 = vmul.f32 %v4293, %v674
      %v4342 = vmul.f32 %v4294, %v675
      %v4343 = vmul.f32 %v4295, %v676
      %v4344 = vmul.f32 %v4296, %v677
      %v4345 = vmul.f32 %v4297, %v678
      %v4346 = vmul.f32 %v4298, %v679
      %v4347 = vmul.f32 %v4299, %v680
      %v4348 = vmul.f32 %v4300, %v681
      %v4349 = vmul.f32 %v4301, %v682
      %v4350 = vmul.f32 %v4302, %v683
      %v4351 = vmul.f32 %v4303, %v684
      %v4352 = vmul.f32 %v4304, %v685
      %v4353 = vmul.f32 %v4305, %v686
      %v4354 = vmul.f32 %v4306, %v687
      %v4355 = vmul.f32 %v4307, %v688
      %v4356 = vmul.f32 %v4308, %v689
      %v4357 = vmul.f32 %v4309, %v690
      %v4358 = vmul.f32 %v4310, %v691
      %v4359 = vmul.f32 %v4311, %v692
      %v4360 = vmul.f32 %v4312, %v693
      %v4361 = vmul.f32 %v4313, %v694
      %v4362 = vmul.f32 %v4314, %v695
      %v4363 = vmul.f32 %v4315, %v696
      %v4364 = vmul.f32 %v4316, %v697
      %v4365 = vmul.f32 %v4317, %v698
      %v4366 = vmul.f32 %v4318, %v699
      %v4367 = vmul.f32 %v4319, %v700
      %v4368 = vmul.f32 %v4320, %v701
      %v4369 = vmul.f32 %v4321, %v702
      %v4370 = vmul.f32 %v4322, %v703
      %v4371 = vmul.f32 %v4323, %v704
      %v4372 = vmul.f32 %v4324, %v705
      %v4373 = vmul.f32 %v4325, %v706
      %v4374 = vmul.f32 %v4326, %v707
      %v4375 = vmul.f32 %v4327, %v708
      %v4376 = vmul.f32 %v4328, %v709
      %v4377 = vmul.f32 %v4329, %v710
      %v4378 = vmul.f32 %v4330, %v711
      %v4379 = vmul.f32 %v4331, %v712
      %v4380 = vmul.f32 %v4332, %v713
      %v4381 = vadd.f32 %v4333, %v4334
      %v4382 = vadd.f32 %v4381, %v4335
      %v4383 = vadd.f32 %v4382, %v4336
      %v4384 = vadd.f32 %v4383, %v4337
      %v4385 = vadd.f32 %v4384, %v4338
      %v4386 = vadd.f32 %v4385, %v4339
      %v4387 = vadd.f32 %v4386, %v4340
      %v4388 = vadd.f32 %v4387, %v4341
      %v4389 = vadd.f32 %v4388, %v4342
      %v4390 = vadd.f32 %v4389, %v4343
      %v4391 = vadd.f32 %v4390, %v4344
      %v4392 = vadd.f32 %v4391, %v4345
      %v4393 = vadd.f32 %v4392, %v4346
      %v4394 = vadd.f32 %v4393, %v4347
      %v4395 = vadd.f32 %v4394, %v4348
      %v4396 = vadd.f32 %v4395, %v4349
      %v4397 = vadd.f32 %v4396, %v4350
      %v4398 = vadd.f32 %v4397, %v4351
      %v4399 = vadd.f32 %v4398, %v4352
      %v4400 = vadd.f32 %v4399, %v4353
      %v4401 = vadd.f32 %v4400, %v4354
      %v4402 = vadd.f32 %v4401, %v4355
      %v4403 = vadd.f32 %v4402, %v4356
      %v4404 = vadd.f32 %v4403, %v4357
      %v4405 = vadd.f32 %v4404, %v4358
      %v4406 = vadd.f32 %v4405, %v4359
      %v4407 = vadd.f32 %v4406, %v4360
      %v4408 = vadd.f32 %v4407, %v4361
      %v4409 = vadd.f32 %v4408, %v4362
      %v4410 = vadd.f32 %v4409, %v4363
      %v4411 = vadd.f32 %v4410, %v4364
      %v4412 = vadd.f32 %v4411, %v4365
      %v4413 = vadd.f32 %v4412, %v4366
      %v4414 = vadd.f32 %v4413, %v4367
      %v4415 = vadd.f32 %v4414, %v4368
      %v4416 = vadd.f32 %v4415, %v4369
      %v4417 = vadd.f32 %v4416, %v4370
      %v4418 = vadd.f32 %v4417, %v4371
      %v4419 = vadd.f32 %v4418, %v4372
      %v4420 = vadd.f32 %v4419, %v4373
      %v4421 = vadd.f32 %v4420, %v4374
      %v4422 = vadd.f32 %v4421, %v4375
      %v4423 = vadd.f32 %v4422, %v4376
      %v4424 = vadd.f32 %v4423, %v4377
      %v4425 = vadd.f32 %v4424, %v4378
      %v4426 = vadd.f32 %v4425, %v4379
      %v4427 = vadd.f32 %v4426, %v4380
      %v4428 = vrot.slane %v4427, 4
      %v4429 = vadd.f32 %v4427, %v4428
      %v4430 = vrot.slane %v4429, 2
      %v4431 = vadd.f32 %v4429, %v4430
      %v4432 = vrot.slane %v4431, 1
      %v4433 = vadd.f32 %v4431, %v4432
      %v4434 = vmul.f32 %v4333, %v4333
      %v4435 = vmul.f32 %v4334, %v4334
      %v4436 = vmul.f32 %v4335, %v4335
      %v4437 = vmul.f32 %v4336, %v4336
      %v4438 = vmul.f32 %v4337, %v4337
      %v4439 = vmul.f32 %v4338, %v4338
      %v4440 = vmul.f32 %v4339, %v4339
      %v4441 = vmul.f32 %v4340, %v4340
      %v4442 = vmul.f32 %v4341, %v4341
      %v4443 = vmul.f32 %v4342, %v4342
      %v4444 = vmul.f32 %v4343, %v4343
      %v4445 = vmul.f32 %v4344, %v4344
      %v4446 = vmul.f32 %v4345, %v4345
      %v4447 = vmul.f32 %v4346, %v4346
      %v4448 = vmul.f32 %v4347, %v4347
      %v4449 = vmul.f32 %v4348, %v4348
      %v4450 = vmul.f32 %v4349, %v4349
      %v4451 = vmul.f32 %v4350, %v4350
      %v4452 = vmul.f32 %v4351, %v4351
      %v4453 = vmul.f32 %v4352, %v4352
      %v4454 = vmul.f32 %v4353, %v4353
      %v4455 = vmul.f32 %v4354, %v4354
      %v4456 = vmul.f32 %v4355, %v4355
      %v4457 = vmul.f32 %v4356, %v4356
      %v4458 = vmul.f32 %v4357, %v4357
      %v4459 = vmul.f32 %v4358, %v4358
      %v4460 = vmul.f32 %v4359, %v4359
      %v4461 = vmul.f32 %v4360, %v4360
      %v4462 = vmul.f32 %v4361, %v4361
      %v4463 = vmul.f32 %v4362, %v4362
      %v4464 = vmul.f32 %v4363, %v4363
      %v4465 = vmul.f32 %v4364, %v4364
      %v4466 = vmul.f32 %v4365, %v4365
      %v4467 = vmul.f32 %v4366, %v4366
      %v4468 = vmul.f32 %v4367, %v4367
      %v4469 = vmul.f32 %v4368, %v4368
      %v4470 = vmul.f32 %v4369, %v4369
      %v4471 = vmul.f32 %v4370, %v4370
      %v4472 = vmul.f32 %v4371, %v4371
      %v4473 = vmul.f32 %v4372, %v4372
      %v4474 = vmul.f32 %v4373, %v4373
      %v4475 = vmul.f32 %v4374, %v4374
      %v4476 = vmul.f32 %v4375, %v4375
      %v4477 = vmul.f32 %v4376, %v4376
      %v4478 = vmul.f32 %v4377, %v4377
      %v4479 = vmul.f32 %v4378, %v4378
      %v4480 = vmul.f32 %v4379, %v4379
      %v4481 = vmul.f32 %v4380, %v4380
      %v4482 = vadd.f32 %v4434, %v4435
      %v4483 = vadd.f32 %v4482, %v4436
      %v4484 = vadd.f32 %v4483, %v4437
      %v4485 = vadd.f32 %v4484, %v4438
      %v4486 = vadd.f32 %v4485, %v4439
      %v4487 = vadd.f32 %v4486, %v4440
      %v4488 = vadd.f32 %v4487, %v4441
      %v4489 = vadd.f32 %v4488, %v4442
      %v4490 = vadd.f32 %v4489, %v4443
      %v4491 = vadd.f32 %v4490, %v4444
      %v4492 = vadd.f32 %v4491, %v4445
      %v4493 = vadd.f32 %v4492, %v4446
      %v4494 = vadd.f32 %v4493, %v4447
      %v4495 = vadd.f32 %v4494, %v4448
      %v4496 = vadd.f32 %v4495, %v4449
      %v4497 = vadd.f32 %v4496, %v4450
      %v4498 = vadd.f32 %v4497, %v4451
      %v4499 = vadd.f32 %v4498, %v4452
      %v4500 = vadd.f32 %v4499, %v4453
      %v4501 = vadd.f32 %v4500, %v4454
      %v4502 = vadd.f32 %v4501, %v4455
      %v4503 = vadd.f32 %v4502, %v4456
      %v4504 = vadd.f32 %v4503, %v4457
      %v4505 = vadd.f32 %v4504, %v4458
      %v4506 = vadd.f32 %v4505, %v4459
      %v4507 = vadd.f32 %v4506, %v4460
      %v4508 = vadd.f32 %v4507, %v4461
      %v4509 = vadd.f32 %v4508, %v4462
      %v4510 = vadd.f32 %v4509, %v4463
      %v4511 = vadd.f32 %v4510, %v4464
      %v4512 = vadd.f32 %v4511, %v4465
      %v4513 = vadd.f32 %v4512, %v4466
      %v4514 = vadd.f32 %v4513, %v4467
      %v4515 = vadd.f32 %v4514, %v4468
      %v4516 = vadd.f32 %v4515, %v4469
      %v4517 = vadd.f32 %v4516, %v4470
      %v4518 = vadd.f32 %v4517, %v4471
      %v4519 = vadd.f32 %v4518, %v4472
      %v4520 = vadd.f32 %v4519, %v4473
      %v4521 = vadd.f32 %v4520, %v4474
      %v4522 = vadd.f32 %v4521, %v4475
      %v4523 = vadd.f32 %v4522, %v4476
      %v4524 = vadd.f32 %v4523, %v4477
      %v4525 = vadd.f32 %v4524, %v4478
      %v4526 = vadd.f32 %v4525, %v4479
      %v4527 = vadd.f32 %v4526, %v4480
      %v4528 = vadd.f32 %v4527, %v4481
      %v4529 = vrot.slane %v4528, 4
      %v4530 = vadd.f32 %v4528, %v4529
      %v4531 = vrot.slane %v4530, 2
      %v4532 = vadd.f32 %v4530, %v4531
      %v4533 = vrot.slane %v4532, 1
      %v4534 = vadd.f32 %v4532, %v4533
      %v4535 = vmul.f32 %v4433, 0.00390625
      %v4536 = vmul.f32 %v4534, 0.00390625
      %v4537 = vmul.f32 %v4535, %v4535
      %v4538 = vsub.f32 %v4536, %v4537
      %v4539 = vadd.f32 %v4538, 1e-05
      %v4540 = vrsqrt.pop %v4539
      %v4541 = vld [vmem:[%s2] sm:$0x1]
      %v4542 = vmul.f32 %v4540, %v4541
      %v4543 = vld [vmem:[%s3] sm:$0x1]
      %v4544 = vmul.f32 %v4535, %v4542
      %v4545 = vsub.f32 %v4543, %v4544
      %v4546 = vlaneseq
      %v4547 = vshrl.u32 %v4546, 7
      %v4548 = vsub.s32 0, %v4547
      %v4549 = vrot.slane %v4542, %v4548
      %v4550 = vmul.f32 %v4285, %v4549
      %v4551 = vmul.f32 %v4286, %v4549
      %v4552 = vmul.f32 %v4287, %v4549
      %v4553 = vmul.f32 %v4288, %v4549
      %v4554 = vmul.f32 %v4289, %v4549
      %v4555 = vmul.f32 %v4290, %v4549
      %v4556 = vmul.f32 %v4291, %v4549
      %v4557 = vmul.f32 %v4292, %v4549
      %v4558 = vmul.f32 %v4293, %v4549
      %v4559 = vmul.f32 %v4294, %v4549
      %v4560 = vmul.f32 %v4295, %v4549
      %v4561 = vmul.f32 %v4296, %v4549
      %v4562 = vmul.f32 %v4297, %v4549
      %v4563 = vmul.f32 %v4298, %v4549
      %v4564 = vmul.f32 %v4299, %v4549
      %v4565 = vmul.f32 %v4300, %v4549
      %v4566 = vmul.f32 %v4301, %v4549
      %v4567 = vmul.f32 %v4302, %v4549
      %v4568 = vmul.f32 %v4303, %v4549
      %v4569 = vmul.f32 %v4304, %v4549
      %v4570 = vmul.f32 %v4305, %v4549
      %v4571 = vmul.f32 %v4306, %v4549
      %v4572 = vmul.f32 %v4307, %v4549
      %v4573 = vmul.f32 %v4308, %v4549
      %v4574 = vmul.f32 %v4309, %v4549
      %v4575 = vmul.f32 %v4310, %v4549
      %v4576 = vmul.f32 %v4311, %v4549
      %v4577 = vmul.f32 %v4312, %v4549
      %v4578 = vmul.f32 %v4313, %v4549
      %v4579 = vmul.f32 %v4314, %v4549
      %v4580 = vmul.f32 %v4315, %v4549
      %v4581 = vmul.f32 %v4316, %v4549
      %v4582 = vmul.f32 %v4317, %v4549
      %v4583 = vmul.f32 %v4318, %v4549
      %v4584 = vmul.f32 %v4319, %v4549
      %v4585 = vmul.f32 %v4320, %v4549
      %v4586 = vmul.f32 %v4321, %v4549
      %v4587 = vmul.f32 %v4322, %v4549
      %v4588 = vmul.f32 %v4323, %v4549
      %v4589 = vmul.f32 %v4324, %v4549
      %v4590 = vmul.f32 %v4325, %v4549
      %v4591 = vmul.f32 %v4326, %v4549
      %v4592 = vmul.f32 %v4327, %v4549
      %v4593 = vmul.f32 %v4328, %v4549
      %v4594 = vmul.f32 %v4329, %v4549
      %v4595 = vmul.f32 %v4330, %v4549
      %v4596 = vmul.f32 %v4331, %v4549
      %v4597 = vmul.f32 %v4332, %v4549
      %v4599 = vlaneseq
      %v4600 = vshrl.u32 %v4599, 7
      %v4601 = vsub.s32 0, %v4600
      %v4602 = vrot.slane %v4545, %v4601
      %v4604 = vadd.f32 %v4550, %v4602
      %v4605 = vadd.f32 %v4551, %v4602
      %v4606 = vadd.f32 %v4552, %v4602
      %v4607 = vadd.f32 %v4553, %v4602
      %v4608 = vadd.f32 %v4554, %v4602
      %v4609 = vadd.f32 %v4555, %v4602
      %v4610 = vadd.f32 %v4556, %v4602
      %v4611 = vadd.f32 %v4557, %v4602
      %v4612 = vadd.f32 %v4558, %v4602
      %v4613 = vadd.f32 %v4559, %v4602
      %v4614 = vadd.f32 %v4560, %v4602
      %v4615 = vadd.f32 %v4561, %v4602
      %v4616 = vadd.f32 %v4562, %v4602
      %v4617 = vadd.f32 %v4563, %v4602
      %v4618 = vadd.f32 %v4564, %v4602
      %v4619 = vadd.f32 %v4565, %v4602
      %v4620 = vadd.f32 %v4566, %v4602
      %v4621 = vadd.f32 %v4567, %v4602
      %v4622 = vadd.f32 %v4568, %v4602
      %v4623 = vadd.f32 %v4569, %v4602
      %v4624 = vadd.f32 %v4570, %v4602
      %v4625 = vadd.f32 %v4571, %v4602
      %v4626 = vadd.f32 %v4572, %v4602
      %v4627 = vadd.f32 %v4573, %v4602
      %v4628 = vadd.f32 %v4574, %v4602
      %v4629 = vadd.f32 %v4575, %v4602
      %v4630 = vadd.f32 %v4576, %v4602
      %v4631 = vadd.f32 %v4577, %v4602
      %v4632 = vadd.f32 %v4578, %v4602
      %v4633 = vadd.f32 %v4579, %v4602
      %v4634 = vadd.f32 %v4580, %v4602
      %v4635 = vadd.f32 %v4581, %v4602
      %v4636 = vadd.f32 %v4582, %v4602
      %v4637 = vadd.f32 %v4583, %v4602
      %v4638 = vadd.f32 %v4584, %v4602
      %v4639 = vadd.f32 %v4585, %v4602
      %v4640 = vadd.f32 %v4586, %v4602
      %v4641 = vadd.f32 %v4587, %v4602
      %v4642 = vadd.f32 %v4588, %v4602
      %v4643 = vadd.f32 %v4589, %v4602
      %v4644 = vadd.f32 %v4590, %v4602
      %v4645 = vadd.f32 %v4591, %v4602
      %v4646 = vadd.f32 %v4592, %v4602
      %v4647 = vadd.f32 %v4593, %v4602
      %v4648 = vadd.f32 %v4594, %v4602
      %v4649 = vadd.f32 %v4595, %v4602
      %v4650 = vadd.f32 %v4596, %v4602
      %v4651 = vadd.f32 %v4597, %v4602
      %v4652 = vmax.f32 %v4604, 0.0
      %v4653 = vmax.f32 %v4605, 0.0
      %v4654 = vmax.f32 %v4606, 0.0
      %v4655 = vmax.f32 %v4607, 0.0
      %v4656 = vmax.f32 %v4608, 0.0
      %v4657 = vmax.f32 %v4609, 0.0
      %v4658 = vmax.f32 %v4610, 0.0
      %v4659 = vmax.f32 %v4611, 0.0
      %v4660 = vmax.f32 %v4612, 0.0
      %v4661 = vmax.f32 %v4613, 0.0
      %v4662 = vmax.f32 %v4614, 0.0
      %v4663 = vmax.f32 %v4615, 0.0
      %v4664 = vmax.f32 %v4616, 0.0
      %v4665 = vmax.f32 %v4617, 0.0
      %v4666 = vmax.f32 %v4618, 0.0
      %v4667 = vmax.f32 %v4619, 0.0
      %v4668 = vmax.f32 %v4620, 0.0
      %v4669 = vmax.f32 %v4621, 0.0
      %v4670 = vmax.f32 %v4622, 0.0
      %v4671 = vmax.f32 %v4623, 0.0
      %v4672 = vmax.f32 %v4624, 0.0
      %v4673 = vmax.f32 %v4625, 0.0
      %v4674 = vmax.f32 %v4626, 0.0
      %v4675 = vmax.f32 %v4627, 0.0
      %v4676 = vmax.f32 %v4628, 0.0
      %v4677 = vmax.f32 %v4629, 0.0
      %v4678 = vmax.f32 %v4630, 0.0
      %v4679 = vmax.f32 %v4631, 0.0
      %v4680 = vmax.f32 %v4632, 0.0
      %v4681 = vmax.f32 %v4633, 0.0
      %v4682 = vmax.f32 %v4634, 0.0
      %v4683 = vmax.f32 %v4635, 0.0
      %v4684 = vmax.f32 %v4636, 0.0
      %v4685 = vmax.f32 %v4637, 0.0
      %v4686 = vmax.f32 %v4638, 0.0
      %v4687 = vmax.f32 %v4639, 0.0
      %v4688 = vmax.f32 %v4640, 0.0
      %v4689 = vmax.f32 %v4641, 0.0
      %v4690 = vmax.f32 %v4642, 0.0
      %v4691 = vmax.f32 %v4643, 0.0
      %v4692 = vmax.f32 %v4644, 0.0
      %v4693 = vmax.f32 %v4645, 0.0
      %v4694 = vmax.f32 %v4646, 0.0
      %v4695 = vmax.f32 %v4647, 0.0
      %v4696 = vmax.f32 %v4648, 0.0
      %v4697 = vmax.f32 %v4649, 0.0
      %v4698 = vmax.f32 %v4650, 0.0
      %v4699 = vmax.f32 %v4651, 0.0
      %v4700 = vmul.f32 %v4652, %v666
      %v4701 = vmul.f32 %v4653, %v667
      %v4702 = vmul.f32 %v4654, %v668
      %v4703 = vmul.f32 %v4655, %v669
      %v4704 = vmul.f32 %v4656, %v670
      %v4705 = vmul.f32 %v4657, %v671
      %v4706 = vmul.f32 %v4658, %v672
      %v4707 = vmul.f32 %v4659, %v673
      %v4708 = vmul.f32 %v4660, %v674
      %v4709 = vmul.f32 %v4661, %v675
      %v4710 = vmul.f32 %v4662, %v676
      %v4711 = vmul.f32 %v4663, %v677
      %v4712 = vmul.f32 %v4664, %v678
      %v4713 = vmul.f32 %v4665, %v679
      %v4714 = vmul.f32 %v4666, %v680
      %v4715 = vmul.f32 %v4667, %v681
      %v4716 = vmul.f32 %v4668, %v682
      %v4717 = vmul.f32 %v4669, %v683
      %v4718 = vmul.f32 %v4670, %v684
      %v4719 = vmul.f32 %v4671, %v685
      %v4720 = vmul.f32 %v4672, %v686
      %v4721 = vmul.f32 %v4673, %v687
      %v4722 = vmul.f32 %v4674, %v688
      %v4723 = vmul.f32 %v4675, %v689
      %v4724 = vmul.f32 %v4676, %v690
      %v4725 = vmul.f32 %v4677, %v691
      %v4726 = vmul.f32 %v4678, %v692
      %v4727 = vmul.f32 %v4679, %v693
      %v4728 = vmul.f32 %v4680, %v694
      %v4729 = vmul.f32 %v4681, %v695
      %v4730 = vmul.f32 %v4682, %v696
      %v4731 = vmul.f32 %v4683, %v697
      %v4732 = vmul.f32 %v4684, %v698
      %v4733 = vmul.f32 %v4685, %v699
      %v4734 = vmul.f32 %v4686, %v700
      %v4735 = vmul.f32 %v4687, %v701
      %v4736 = vmul.f32 %v4688, %v702
      %v4737 = vmul.f32 %v4689, %v703
      %v4738 = vmul.f32 %v4690, %v704
      %v4739 = vmul.f32 %v4691, %v705
      %v4740 = vmul.f32 %v4692, %v706
      %v4741 = vmul.f32 %v4693, %v707
      %v4742 = vmul.f32 %v4694, %v708
      %v4743 = vmul.f32 %v4695, %v709
      %v4744 = vmul.f32 %v4696, %v710
      %v4745 = vmul.f32 %v4697, %v711
      %v4746 = vmul.f32 %v4698, %v712
      %v4747 = vmul.f32 %v4699, %v713
      %4748 = vst [vmem:[#allocation2 + $0x20] sm:$0xff] %v4700
      %4749 = vst [vmem:[#allocation2 + $0x28] sm:$0xff] %v4701
      %4750 = vst [vmem:[#allocation2 + $0x30] sm:$0xff] %v4702
      %4751 = vst [vmem:[#allocation2 + $0x38] sm:$0xff] %v4703
      %4752 = vst [vmem:[#allocation2 + $0x40] sm:$0xff] %v4704
      %4753 = vst [vmem:[#allocation2 + $0x48] sm:$0xff] %v4705
      %4754 = vst [vmem:[#allocation2 + $0x50] sm:$0xff] %v4706
      %4755 = vst [vmem:[#allocation2 + $0x58] sm:$0xff] %v4707
      %4756 = vst [vmem:[#allocation2 + $0x60] sm:$0xff] %v4708
      %4757 = vst [vmem:[#allocation2 + $0x68] sm:$0xff] %v4709
      %4758 = vst [vmem:[#allocation2 + $0x70] sm:$0xff] %v4710
      %4759 = vst [vmem:[#allocation2 + $0x78] sm:$0xff] %v4711
      %4760 = vst [vmem:[#allocation2 + $0x80] sm:$0xff] %v4712
      %4761 = vst [vmem:[#allocation2 + $0x88] sm:$0xff] %v4713
      %4762 = vst [vmem:[#allocation2 + $0x90] sm:$0xff] %v4714
      %4763 = vst [vmem:[#allocation2 + $0x98] sm:$0xff] %v4715
      %4764 = vst [vmem:[#allocation2 + $0xa0] sm:$0xff] %v4716
      %4765 = vst [vmem:[#allocation2 + $0xa8] sm:$0xff] %v4717
      %4766 = vst [vmem:[#allocation2 + $0xb0] sm:$0xff] %v4718
      %4767 = vst [vmem:[#allocation2 + $0xb8] sm:$0xff] %v4719
      %4768 = vst [vmem:[#allocation2 + $0xc0] sm:$0xff] %v4720
      %4769 = vst [vmem:[#allocation2 + $0xc8] sm:$0xff] %v4721
      %4770 = vst [vmem:[#allocation2 + $0xd0] sm:$0xff] %v4722
      %4771 = vst [vmem:[#allocation2 + $0xd8] sm:$0xff] %v4723
      %4772 = vst [vmem:[#allocation2 + $0xe0] sm:$0xff] %v4724
      %4773 = vst [vmem:[#allocation2 + $0xe8] sm:$0xff] %v4725
      %4774 = vst [vmem:[#allocation2 + $0xf0] sm:$0xff] %v4726
      %4775 = vst [vmem:[#allocation2 + $0xf8] sm:$0xff] %v4727
      %4776 = vst [vmem:[#allocation2 + $0x100] sm:$0xff] %v4728
      %4777 = vst [vmem:[#allocation2 + $0x108] sm:$0xff] %v4729
      %4778 = vst [vmem:[#allocation2 + $0x110] sm:$0xff] %v4730
      %4779 = vst [vmem:[#allocation2 + $0x118] sm:$0xff] %v4731
      %4780 = vst [vmem:[#allocation2 + $0x120] sm:$0xff] %v4732
      %4781 = vst [vmem:[#allocation2 + $0x128] sm:$0xff] %v4733
      %4782 = vst [vmem:[#allocation2 + $0x130] sm:$0xff] %v4734
      %4783 = vst [vmem:[#allocation2 + $0x138] sm:$0xff] %v4735
      %4784 = vst [vmem:[#allocation2 + $0x140] sm:$0xff] %v4736
      %4785 = vst [vmem:[#allocation2 + $0x148] sm:$0xff] %v4737
      %4786 = vst [vmem:[#allocation2 + $0x150] sm:$0xff] %v4738
      %4787 = vst [vmem:[#allocation2 + $0x158] sm:$0xff] %v4739
      %4788 = vst [vmem:[#allocation2 + $0x160] sm:$0xff] %v4740
      %4789 = vst [vmem:[#allocation2 + $0x168] sm:$0xff] %v4741
      %4790 = vst [vmem:[#allocation2 + $0x170] sm:$0xff] %v4742
      %4791 = vst [vmem:[#allocation2 + $0x178] sm:$0xff] %v4743
      %4792 = vst [vmem:[#allocation2 + $0x180] sm:$0xff] %v4744
      %4793 = vst [vmem:[#allocation2 + $0x188] sm:$0xff] %v4745
      %4794 = vst [vmem:[#allocation2 + $0x190] sm:$0xff] %v4746
      %4795 = vst [vmem:[#allocation2 + $0x198] sm:$0xff] %v4747
      %v4796 = vld [vmem:[#allocation2 + $0x7] sm:$0xff]
      %v4797 = vld [vmem:[#allocation2 + $0xf] sm:$0xff]
      %v4798 = vld [vmem:[#allocation2 + $0x17] sm:$0xff]
      %v4799 = vld [vmem:[#allocation2 + $0x1f] sm:$0xff]
      %v4800 = vld [vmem:[#allocation2 + $0x27] sm:$0xff]
      %v4801 = vld [vmem:[#allocation2 + $0x2f] sm:$0xff]
      %v4802 = vld [vmem:[#allocation2 + $0x37] sm:$0xff]
      %v4803 = vld [vmem:[#allocation2 + $0x3f] sm:$0xff]
      %v4804 = vld [vmem:[#allocation2 + $0x47] sm:$0xff]
      %v4805 = vld [vmem:[#allocation2 + $0x4f] sm:$0xff]
      %v4806 = vld [vmem:[#allocation2 + $0x57] sm:$0xff]
      %v4807 = vld [vmem:[#allocation2 + $0x5f] sm:$0xff]
      %v4808 = vld [vmem:[#allocation2 + $0x67] sm:$0xff]
      %v4809 = vld [vmem:[#allocation2 + $0x6f] sm:$0xff]
      %v4810 = vld [vmem:[#allocation2 + $0x77] sm:$0xff]
      %v4811 = vld [vmem:[#allocation2 + $0x7f] sm:$0xff]
      %v4812 = vld [vmem:[#allocation2 + $0x87] sm:$0xff]
      %v4813 = vld [vmem:[#allocation2 + $0x8f] sm:$0xff]
      %v4814 = vld [vmem:[#allocation2 + $0x97] sm:$0xff]
      %v4815 = vld [vmem:[#allocation2 + $0x9f] sm:$0xff]
      %v4816 = vld [vmem:[#allocation2 + $0xa7] sm:$0xff]
      %v4817 = vld [vmem:[#allocation2 + $0xaf] sm:$0xff]
      %v4818 = vld [vmem:[#allocation2 + $0xb7] sm:$0xff]
      %v4819 = vld [vmem:[#allocation2 + $0xbf] sm:$0xff]
      %v4820 = vld [vmem:[#allocation2 + $0xc7] sm:$0xff]
      %v4821 = vld [vmem:[#allocation2 + $0xcf] sm:$0xff]
      %v4822 = vld [vmem:[#allocation2 + $0xd7] sm:$0xff]
      %v4823 = vld [vmem:[#allocation2 + $0xdf] sm:$0xff]
      %v4824 = vld [vmem:[#allocation2 + $0xe7] sm:$0xff]
      %v4825 = vld [vmem:[#allocation2 + $0xef] sm:$0xff]
      %v4826 = vld [vmem:[#allocation2 + $0xf7] sm:$0xff]
      %v4827 = vld [vmem:[#allocation2 + $0xff] sm:$0xff]
      %v4828 = vld [vmem:[#allocation2 + $0x107] sm:$0xff]
      %v4829 = vld [vmem:[#allocation2 + $0x10f] sm:$0xff]
      %v4830 = vld [vmem:[#allocation2 + $0x117] sm:$0xff]
      %v4831 = vld [vmem:[#allocation2 + $0x11f] sm:$0xff]
      %v4832 = vld [vmem:[#allocation2 + $0x127] sm:$0xff]
      %v4833 = vld [vmem:[#allocation2 + $0x12f] sm:$0xff]
      %v4834 = vld [vmem:[#allocation2 + $0x137] sm:$0xff]
      %v4835 = vld [vmem:[#allocation2 + $0x13f] sm:$0xff]
      %v4836 = vld [vmem:[#allocation2 + $0x147] sm:$0xff]
      %v4837 = vld [vmem:[#allocation2 + $0x14f] sm:$0xff]
      %v4838 = vld [vmem:[#allocation2 + $0x157] sm:$0xff]
      %v4839 = vld [vmem:[#allocation2 + $0x15f] sm:$0xff]
      %v4840 = vld [vmem:[#allocation2 + $0x167] sm:$0xff]
      %v4841 = vld [vmem:[#allocation2 + $0x16f] sm:$0xff]
      %v4842 = vld [vmem:[#allocation2 + $0x177] sm:$0xff]
      %v4843 = vld [vmem:[#allocation2 + $0x17f] sm:$0xff]
      %v4844 = vpack.c.bf16 %v4797, %v4796
      %v4845 = vpack.c.bf16 %v4799, %v4798
      %v4846 = vpack.c.bf16 %v4801, %v4800
      %v4847 = vpack.c.bf16 %v4803, %v4802
      %v4848 = vpack.c.bf16 %v4805, %v4804
      %v4849 = vpack.c.bf16 %v4807, %v4806
      %v4850 = vpack.c.bf16 %v4809, %v4808
      %v4851 = vpack.c.bf16 %v4811, %v4810
      %v4852 = vpack.c.bf16 %v4813, %v4812
      %v4853 = vpack.c.bf16 %v4815, %v4814
      %v4854 = vpack.c.bf16 %v4817, %v4816
      %v4855 = vpack.c.bf16 %v4819, %v4818
      %v4856 = vpack.c.bf16 %v4821, %v4820
      %v4857 = vpack.c.bf16 %v4823, %v4822
      %v4858 = vpack.c.bf16 %v4825, %v4824
      %v4859 = vpack.c.bf16 %v4827, %v4826
      %v4860 = vpack.c.bf16 %v4829, %v4828
      %v4861 = vpack.c.bf16 %v4831, %v4830
      %v4862 = vpack.c.bf16 %v4833, %v4832
      %v4863 = vpack.c.bf16 %v4835, %v4834
      %v4864 = vpack.c.bf16 %v4837, %v4836
      %v4865 = vpack.c.bf16 %v4839, %v4838
      %v4866 = vpack.c.bf16 %v4841, %v4840
      %v4867 = vpack.c.bf16 %v4843, %v4842
      %v4868 = vld [vmem:[%s4] sm:$0xf]
      %v4869 = vld [vmem:[%s4 + $0x4] sm:$0xf]
      %v4870 = vld [vmem:[%s4 + $0x8] sm:$0xf]
      %v4871 = vld [vmem:[%s4 + $0xc] sm:$0xf]
      %v4872 = vld [vmem:[%s4 + $0x10] sm:$0xf]
      %v4873 = vld [vmem:[%s4 + $0x14] sm:$0xf]
      %v4874 = vld [vmem:[%s4 + $0x18] sm:$0xf]
      %v4875 = vld [vmem:[%s4 + $0x1c] sm:$0xf]
      %v4876 = vld [vmem:[%s4 + $0x20] sm:$0xf]
      %v4877 = vld [vmem:[%s4 + $0x24] sm:$0xf]
      %v4878 = vld [vmem:[%s4 + $0x28] sm:$0xf]
      %v4879 = vld [vmem:[%s4 + $0x2c] sm:$0xf]
      %v4880 = vld [vmem:[%s4 + $0x30] sm:$0xf]
      %v4881 = vld [vmem:[%s4 + $0x34] sm:$0xf]
      %v4882 = vld [vmem:[%s4 + $0x38] sm:$0xf]
      %v4883 = vld [vmem:[%s4 + $0x3c] sm:$0xf]
      %v4884 = vld [vmem:[#allocation2 + $0x8] sm:$0xff]
      %v4885 = vld [vmem:[#allocation2 + $0x10] sm:$0xff]
      %v4886 = vld [vmem:[#allocation2 + $0x18] sm:$0xff]
      %v4887 = vld [vmem:[#allocation2 + $0x20] sm:$0xff]
      %v4888 = vld [vmem:[#allocation2 + $0x28] sm:$0xff]
      %v4889 = vld [vmem:[#allocation2 + $0x30] sm:$0xff]
      %v4890 = vld [vmem:[#allocation2 + $0x38] sm:$0xff]
      %v4891 = vld [vmem:[#allocation2 + $0x40] sm:$0xff]
      %v4892 = vld [vmem:[#allocation2 + $0x48] sm:$0xff]
      %v4893 = vld [vmem:[#allocation2 + $0x50] sm:$0xff]
      %v4894 = vld [vmem:[#allocation2 + $0x58] sm:$0xff]
      %v4895 = vld [vmem:[#allocation2 + $0x60] sm:$0xff]
      %v4896 = vld [vmem:[#allocation2 + $0x68] sm:$0xff]
      %v4897 = vld [vmem:[#allocation2 + $0x70] sm:$0xff]
      %v4898 = vld [vmem:[#allocation2 + $0x78] sm:$0xff]
      %v4899 = vld [vmem:[#allocation2 + $0x80] sm:$0xff]
      %v4900 = vld [vmem:[#allocation2 + $0x88] sm:$0xff]
      %v4901 = vld [vmem:[#allocation2 + $0x90] sm:$0xff]
      %v4902 = vld [vmem:[#allocation2 + $0x98] sm:$0xff]
      %v4903 = vld [vmem:[#allocation2 + $0xa0] sm:$0xff]
      %v4904 = vld [vmem:[#allocation2 + $0xa8] sm:$0xff]
      %v4905 = vld [vmem:[#allocation2 + $0xb0] sm:$0xff]
      %v4906 = vld [vmem:[#allocation2 + $0xb8] sm:$0xff]
      %v4907 = vld [vmem:[#allocation2 + $0xc0] sm:$0xff]
      %v4908 = vld [vmem:[#allocation2 + $0xc8] sm:$0xff]
      %v4909 = vld [vmem:[#allocation2 + $0xd0] sm:$0xff]
      %v4910 = vld [vmem:[#allocation2 + $0xd8] sm:$0xff]
      %v4911 = vld [vmem:[#allocation2 + $0xe0] sm:$0xff]
      %v4912 = vld [vmem:[#allocation2 + $0xe8] sm:$0xff]
      %v4913 = vld [vmem:[#allocation2 + $0xf0] sm:$0xff]
      %v4914 = vld [vmem:[#allocation2 + $0xf8] sm:$0xff]
      %v4915 = vld [vmem:[#allocation2 + $0x100] sm:$0xff]
      %v4916 = vld [vmem:[#allocation2 + $0x108] sm:$0xff]
      %v4917 = vld [vmem:[#allocation2 + $0x110] sm:$0xff]
      %v4918 = vld [vmem:[#allocation2 + $0x118] sm:$0xff]
      %v4919 = vld [vmem:[#allocation2 + $0x120] sm:$0xff]
      %v4920 = vld [vmem:[#allocation2 + $0x128] sm:$0xff]
      %v4921 = vld [vmem:[#allocation2 + $0x130] sm:$0xff]
      %v4922 = vld [vmem:[#allocation2 + $0x138] sm:$0xff]
      %v4923 = vld [vmem:[#allocation2 + $0x140] sm:$0xff]
      %v4924 = vld [vmem:[#allocation2 + $0x148] sm:$0xff]
      %v4925 = vld [vmem:[#allocation2 + $0x150] sm:$0xff]
      %v4926 = vld [vmem:[#allocation2 + $0x158] sm:$0xff]
      %v4927 = vld [vmem:[#allocation2 + $0x160] sm:$0xff]
      %v4928 = vld [vmem:[#allocation2 + $0x168] sm:$0xff]
      %v4929 = vld [vmem:[#allocation2 + $0x170] sm:$0xff]
      %v4930 = vld [vmem:[#allocation2 + $0x178] sm:$0xff]
      %v4931 = vld [vmem:[#allocation2 + $0x180] sm:$0xff]
      %v4932 = vpack.c.bf16 %v4885, %v4884
      %v4933 = vpack.c.bf16 %v4887, %v4886
      %v4934 = vpack.c.bf16 %v4889, %v4888
      %v4935 = vpack.c.bf16 %v4891, %v4890
      %v4936 = vpack.c.bf16 %v4893, %v4892
      %v4937 = vpack.c.bf16 %v4895, %v4894
      %v4938 = vpack.c.bf16 %v4897, %v4896
      %v4939 = vpack.c.bf16 %v4899, %v4898
      %v4940 = vpack.c.bf16 %v4901, %v4900
      %v4941 = vpack.c.bf16 %v4903, %v4902
      %v4942 = vpack.c.bf16 %v4905, %v4904
      %v4943 = vpack.c.bf16 %v4907, %v4906
      %v4944 = vpack.c.bf16 %v4909, %v4908
      %v4945 = vpack.c.bf16 %v4911, %v4910
      %v4946 = vpack.c.bf16 %v4913, %v4912
      %v4947 = vpack.c.bf16 %v4915, %v4914
      %v4948 = vpack.c.bf16 %v4917, %v4916
      %v4949 = vpack.c.bf16 %v4919, %v4918
      %v4950 = vpack.c.bf16 %v4921, %v4920
      %v4951 = vpack.c.bf16 %v4923, %v4922
      %v4952 = vpack.c.bf16 %v4925, %v4924
      %v4953 = vpack.c.bf16 %v4927, %v4926
      %v4954 = vpack.c.bf16 %v4929, %v4928
      %v4955 = vpack.c.bf16 %v4931, %v4930
      %s4956 = scalar_lea.vmem %s4, 64
      %v4957 = vld [vmem:[%s4956] sm:$0xf]
      %v4958 = vld [vmem:[%s4956 + $0x4] sm:$0xf]
      %v4959 = vld [vmem:[%s4956 + $0x8] sm:$0xf]
      %v4960 = vld [vmem:[%s4956 + $0xc] sm:$0xf]
      %v4961 = vld [vmem:[%s4956 + $0x10] sm:$0xf]
      %v4962 = vld [vmem:[%s4956 + $0x14] sm:$0xf]
      %v4963 = vld [vmem:[%s4956 + $0x18] sm:$0xf]
      %v4964 = vld [vmem:[%s4956 + $0x1c] sm:$0xf]
      %v4965 = vld [vmem:[%s4956 + $0x20] sm:$0xf]
      %v4966 = vld [vmem:[%s4956 + $0x24] sm:$0xf]
      %v4967 = vld [vmem:[%s4956 + $0x28] sm:$0xf]
      %v4968 = vld [vmem:[%s4956 + $0x2c] sm:$0xf]
      %v4969 = vld [vmem:[%s4956 + $0x30] sm:$0xf]
      %v4970 = vld [vmem:[%s4956 + $0x34] sm:$0xf]
      %v4971 = vld [vmem:[%s4956 + $0x38] sm:$0xf]
      %v4972 = vld [vmem:[%s4956 + $0x3c] sm:$0xf]
      %v4989 = vunpack.c.l.b16 %v4957
      %v4990 = vunpack.c.l.b16 %v4958
      %v4991 = vunpack.c.l.b16 %v4959
      %v4992 = vunpack.c.l.b16 %v4960
      %v4993 = vunpack.c.l.b16 %v4961
      %v4994 = vunpack.c.l.b16 %v4962
      %v4995 = vunpack.c.l.b16 %v4963
      %v4996 = vunpack.c.l.b16 %v4964
      %v4997 = vunpack.c.l.b16 %v4965
      %v4998 = vunpack.c.l.b16 %v4966
      %v4999 = vunpack.c.l.b16 %v4967
      %v5000 = vunpack.c.l.b16 %v4968
      %v5001 = vunpack.c.l.b16 %v4969
      %v5002 = vunpack.c.l.b16 %v4970
      %v5003 = vunpack.c.l.b16 %v4971
      %v5004 = vunpack.c.l.b16 %v4972
      %v5005 = vpack.c.b16 %v4990, %v4989
      %v5006 = vpack.c.b16 %v4992, %v4991
      %v5007 = vpack.c.b16 %v4994, %v4993
      %v5008 = vpack.c.b16 %v4996, %v4995
      %v5009 = vpack.c.b16 %v4998, %v4997
      %v5010 = vpack.c.b16 %v5000, %v4999
      %v5011 = vpack.c.b16 %v5002, %v5001
      %v5012 = vpack.c.b16 %v5004, %v5003
      %5021 = vmatprep.subr.bf16.mxu0 0
      %5022 = vmatpush1.bf16.msra.mxu0 %v5012
      %5023 = vmatprep.subr.bf16.mxu0 0
      %5024 = vmatpush1.bf16.msra.mxu0 %v5011
      %5025 = vmatprep.subr.bf16.mxu0 0
      %5026 = vmatpush1.bf16.msra.mxu0 %v5010
      %5027 = vmatprep.subr.bf16.mxu0 0
      %5028 = vmatpush1.bf16.msra.mxu0 %v5009
      %5029 = vmatprep.subr.bf16.mxu0 0
      %5030 = vmatpush1.bf16.msra.mxu0 %v5008
      %5031 = vmatprep.subr.bf16.mxu0 0
      %5032 = vmatpush1.bf16.msra.mxu0 %v5007
      %5033 = vmatprep.subr.bf16.mxu0 0
      %5034 = vmatpush1.bf16.msra.mxu0 %v5006
      %5035 = vmatprep.subr.bf16.mxu0 0
      %5036 = vmatpush1.bf16.msra.mxu0 %v5005
      %5037 = vmatprep.subr.bf16.mxu0 0
      %5038 = vmatpush2.bf16.msra.mxu0 0
      %5039 = vmatprep.subr.bf16.mxu0 0
      %5040 = vmatpush2.bf16.msra.mxu0 0
      %5041 = vmatprep.subr.bf16.mxu0 0
      %5042 = vmatpush2.bf16.msra.mxu0 0
      %5043 = vmatprep.subr.bf16.mxu0 0
      %5044 = vmatpush2.bf16.msra.mxu0 0
      %5045 = vmatprep.subr.bf16.mxu0 0
      %5046 = vmatpush2.bf16.msra.mxu0 0
      %5047 = vmatprep.subr.bf16.mxu0 0
      %5048 = vmatpush2.bf16.msra.mxu0 0
      %5049 = vmatprep.subr.bf16.mxu0 0
      %5050 = vmatpush2.bf16.msra.mxu0 0
      %5051 = vmatprep.subr.bf16.mxu0 0
      %5052 = vmatpush2.bf16.msra.mxu0 0
      %5053 = vmatprep.mubr.bf16.mxu0 0
      %5054 = vmatmul.mubr.bf16.gmra.mxu0 %v4932
      %v5055 = vpop.f32.mrf.mxu0
      %v5056 = vadd.f32 0.0, %v5055
      %v5057 = vpop.f32.mrf.mxu0
      %v5058 = vpop.f32.mrf.mxu0
      %v5059 = vadd.f32 0.0, %v5058
      %v5060 = vpop.f32.mrf.mxu0
      %5061 = vmatprep.mubr.bf16.mxu0 0
      %5062 = vmatmul.mubr.bf16.gmra.mxu0 %v4933
      %v5063 = vpop.f32.mrf.mxu0
      %v5064 = vadd.f32 0.0, %v5063
      %v5065 = vpop.f32.mrf.mxu0
      %v5066 = vpop.f32.mrf.mxu0
      %v5067 = vadd.f32 0.0, %v5066
      %v5068 = vpop.f32.mrf.mxu0
      %5069 = vmatprep.mubr.bf16.mxu0 0
      %5070 = vmatmul.mubr.bf16.gmra.mxu0 %v4934
      %v5071 = vpop.f32.mrf.mxu0
      %v5072 = vadd.f32 0.0, %v5071
      %v5073 = vpop.f32.mrf.mxu0
      %v5074 = vpop.f32.mrf.mxu0
      %v5075 = vadd.f32 0.0, %v5074
      %v5076 = vpop.f32.mrf.mxu0
      %5077 = vmatprep.mubr.bf16.mxu0 0
      %5078 = vmatmul.mubr.bf16.gmra.mxu0 %v4935
      %v5079 = vpop.f32.mrf.mxu0
      %v5080 = vadd.f32 0.0, %v5079
      %v5081 = vpop.f32.mrf.mxu0
      %v5082 = vpop.f32.mrf.mxu0
      %v5083 = vadd.f32 0.0, %v5082
      %v5084 = vpop.f32.mrf.mxu0
      %5085 = vmatprep.mubr.bf16.mxu0 0
      %5086 = vmatmul.mubr.bf16.gmra.mxu0 %v4936
      %v5087 = vpop.f32.mrf.mxu0
      %v5088 = vadd.f32 0.0, %v5087
      %v5089 = vpop.f32.mrf.mxu0
      %v5090 = vpop.f32.mrf.mxu0
      %v5091 = vadd.f32 0.0, %v5090
      %v5092 = vpop.f32.mrf.mxu0
      %5093 = vmatprep.mubr.bf16.mxu0 0
      %5094 = vmatmul.mubr.bf16.gmra.mxu0 %v4937
      %v5095 = vpop.f32.mrf.mxu0
      %v5096 = vadd.f32 0.0, %v5095
      %v5097 = vpop.f32.mrf.mxu0
      %v5098 = vpop.f32.mrf.mxu0
      %v5099 = vadd.f32 0.0, %v5098
      %v5100 = vpop.f32.mrf.mxu0
      %5101 = vmatprep.mubr.bf16.mxu0 0
      %5102 = vmatmul.mubr.bf16.gmra.mxu0 %v4938
      %v5103 = vpop.f32.mrf.mxu0
      %v5104 = vadd.f32 0.0, %v5103
      %v5105 = vpop.f32.mrf.mxu0
      %v5106 = vpop.f32.mrf.mxu0
      %v5107 = vadd.f32 0.0, %v5106
      %v5108 = vpop.f32.mrf.mxu0
      %5109 = vmatprep.mubr.bf16.mxu0 0
      %5110 = vmatmul.mubr.bf16.gmra.mxu0 %v4939
      %v5111 = vpop.f32.mrf.mxu0
      %v5112 = vadd.f32 0.0, %v5111
      %v5113 = vpop.f32.mrf.mxu0
      %v5114 = vpop.f32.mrf.mxu0
      %v5115 = vadd.f32 0.0, %v5114
      %v5116 = vpop.f32.mrf.mxu0
      %5117 = vmatprep.mubr.bf16.mxu0 0
      %5118 = vmatmul.mubr.bf16.gmra.mxu0 %v4940
      %v5119 = vpop.f32.mrf.mxu0
      %v5120 = vadd.f32 0.0, %v5119
      %v5121 = vpop.f32.mrf.mxu0
      %v5122 = vpop.f32.mrf.mxu0
      %v5123 = vadd.f32 0.0, %v5122
      %v5124 = vpop.f32.mrf.mxu0
      %5125 = vmatprep.mubr.bf16.mxu0 0
      %5126 = vmatmul.mubr.bf16.gmra.mxu0 %v4941
      %v5127 = vpop.f32.mrf.mxu0
      %v5128 = vadd.f32 0.0, %v5127
      %v5129 = vpop.f32.mrf.mxu0
      %v5130 = vpop.f32.mrf.mxu0
      %v5131 = vadd.f32 0.0, %v5130
      %v5132 = vpop.f32.mrf.mxu0
      %5133 = vmatprep.mubr.bf16.mxu0 0
      %5134 = vmatmul.mubr.bf16.gmra.mxu0 %v4942
      %v5135 = vpop.f32.mrf.mxu0
      %v5136 = vadd.f32 0.0, %v5135
      %v5137 = vpop.f32.mrf.mxu0
      %v5138 = vpop.f32.mrf.mxu0
      %v5139 = vadd.f32 0.0, %v5138
      %v5140 = vpop.f32.mrf.mxu0
      %5141 = vmatprep.mubr.bf16.mxu0 0
      %5142 = vmatmul.mubr.bf16.gmra.mxu0 %v4943
      %v5143 = vpop.f32.mrf.mxu0
      %v5144 = vadd.f32 0.0, %v5143
      %v5145 = vpop.f32.mrf.mxu0
      %v5146 = vpop.f32.mrf.mxu0
      %v5147 = vadd.f32 0.0, %v5146
      %v5148 = vpop.f32.mrf.mxu0
      %5149 = vmatprep.mubr.bf16.mxu0 0
      %5150 = vmatmul.mubr.bf16.gmra.mxu0 %v4944
      %v5151 = vpop.f32.mrf.mxu0
      %v5152 = vadd.f32 0.0, %v5151
      %v5153 = vpop.f32.mrf.mxu0
      %v5154 = vpop.f32.mrf.mxu0
      %v5155 = vadd.f32 0.0, %v5154
      %v5156 = vpop.f32.mrf.mxu0
      %5157 = vmatprep.mubr.bf16.mxu0 0
      %5158 = vmatmul.mubr.bf16.gmra.mxu0 %v4945
      %v5159 = vpop.f32.mrf.mxu0
      %v5160 = vadd.f32 0.0, %v5159
      %v5161 = vpop.f32.mrf.mxu0
      %v5162 = vpop.f32.mrf.mxu0
      %v5163 = vadd.f32 0.0, %v5162
      %v5164 = vpop.f32.mrf.mxu0
      %5165 = vmatprep.mubr.bf16.mxu0 0
      %5166 = vmatmul.mubr.bf16.gmra.mxu0 %v4946
      %v5167 = vpop.f32.mrf.mxu0
      %v5168 = vadd.f32 0.0, %v5167
      %v5169 = vpop.f32.mrf.mxu0
      %v5170 = vpop.f32.mrf.mxu0
      %v5171 = vadd.f32 0.0, %v5170
      %v5172 = vpop.f32.mrf.mxu0
      %5173 = vmatprep.mubr.bf16.mxu0 0
      %5174 = vmatmul.mubr.bf16.gmra.mxu0 %v4947
      %v5175 = vpop.f32.mrf.mxu0
      %v5176 = vadd.f32 0.0, %v5175
      %v5177 = vpop.f32.mrf.mxu0
      %v5178 = vpop.f32.mrf.mxu0
      %v5179 = vadd.f32 0.0, %v5178
      %v5180 = vpop.f32.mrf.mxu0
      %5181 = vmatprep.mubr.bf16.mxu0 0
      %5182 = vmatmul.mubr.bf16.gmra.mxu0 %v4948
      %v5183 = vpop.f32.mrf.mxu0
      %v5184 = vadd.f32 0.0, %v5183
      %v5185 = vpop.f32.mrf.mxu0
      %v5186 = vpop.f32.mrf.mxu0
      %v5187 = vadd.f32 0.0, %v5186
      %v5188 = vpop.f32.mrf.mxu0
      %5189 = vmatprep.mubr.bf16.mxu0 0
      %5190 = vmatmul.mubr.bf16.gmra.mxu0 %v4949
      %v5191 = vpop.f32.mrf.mxu0
      %v5192 = vadd.f32 0.0, %v5191
      %v5193 = vpop.f32.mrf.mxu0
      %v5194 = vpop.f32.mrf.mxu0
      %v5195 = vadd.f32 0.0, %v5194
      %v5196 = vpop.f32.mrf.mxu0
      %5197 = vmatprep.mubr.bf16.mxu0 0
      %5198 = vmatmul.mubr.bf16.gmra.mxu0 %v4950
      %v5199 = vpop.f32.mrf.mxu0
      %v5200 = vadd.f32 0.0, %v5199
      %v5201 = vpop.f32.mrf.mxu0
      %v5202 = vpop.f32.mrf.mxu0
      %v5203 = vadd.f32 0.0, %v5202
      %v5204 = vpop.f32.mrf.mxu0
      %5205 = vmatprep.mubr.bf16.mxu0 0
      %5206 = vmatmul.mubr.bf16.gmra.mxu0 %v4951
      %v5207 = vpop.f32.mrf.mxu0
      %v5208 = vadd.f32 0.0, %v5207
      %v5209 = vpop.f32.mrf.mxu0
      %v5210 = vpop.f32.mrf.mxu0
      %v5211 = vadd.f32 0.0, %v5210
      %v5212 = vpop.f32.mrf.mxu0
      %5213 = vmatprep.mubr.bf16.mxu0 0
      %5214 = vmatmul.mubr.bf16.gmra.mxu0 %v4952
      %v5215 = vpop.f32.mrf.mxu0
      %v5216 = vadd.f32 0.0, %v5215
      %v5217 = vpop.f32.mrf.mxu0
      %v5218 = vpop.f32.mrf.mxu0
      %v5219 = vadd.f32 0.0, %v5218
      %v5220 = vpop.f32.mrf.mxu0
      %5221 = vmatprep.mubr.bf16.mxu0 0
      %5222 = vmatmul.mubr.bf16.gmra.mxu0 %v4953
      %v5223 = vpop.f32.mrf.mxu0
      %v5224 = vadd.f32 0.0, %v5223
      %v5225 = vpop.f32.mrf.mxu0
      %v5226 = vpop.f32.mrf.mxu0
      %v5227 = vadd.f32 0.0, %v5226
      %v5228 = vpop.f32.mrf.mxu0
      %5229 = vmatprep.mubr.bf16.mxu0 0
      %5230 = vmatmul.mubr.bf16.gmra.mxu0 %v4954
      %v5231 = vpop.f32.mrf.mxu0
      %v5232 = vadd.f32 0.0, %v5231
      %v5233 = vpop.f32.mrf.mxu0
      %v5234 = vpop.f32.mrf.mxu0
      %v5235 = vadd.f32 0.0, %v5234
      %v5236 = vpop.f32.mrf.mxu0
      %5237 = vmatprep.mubr.bf16.mxu0 0
      %5238 = vmatmul.mubr.bf16.gmra.mxu0 %v4955
      %v5239 = vpop.f32.mrf.mxu0
      %v5240 = vadd.f32 0.0, %v5239
      %v5241 = vpop.f32.mrf.mxu0
      %v5242 = vpop.f32.mrf.mxu0
      %v5243 = vadd.f32 0.0, %v5242
      %v5244 = vpop.f32.mrf.mxu0
      %5245 = vdwg.mxu0
      %v5262 = vunpack.c.l.b16 %v4868
      %v5263 = vunpack.c.l.b16 %v4869
      %v5264 = vunpack.c.l.b16 %v4870
      %v5265 = vunpack.c.l.b16 %v4871
      %v5266 = vunpack.c.l.b16 %v4872
      %v5267 = vunpack.c.l.b16 %v4873
      %v5268 = vunpack.c.l.b16 %v4874
      %v5269 = vunpack.c.l.b16 %v4875
      %v5270 = vunpack.c.l.b16 %v4876
      %v5271 = vunpack.c.l.b16 %v4877
      %v5272 = vunpack.c.l.b16 %v4878
      %v5273 = vunpack.c.l.b16 %v4879
      %v5274 = vunpack.c.l.b16 %v4880
      %v5275 = vunpack.c.l.b16 %v4881
      %v5276 = vunpack.c.l.b16 %v4882
      %v5277 = vunpack.c.l.b16 %v4883
      %v5278 = vpack.c.b16 %v5263, %v5262
      %v5279 = vpack.c.b16 %v5265, %v5264
      %v5280 = vpack.c.b16 %v5267, %v5266
      %v5281 = vpack.c.b16 %v5269, %v5268
      %v5282 = vpack.c.b16 %v5271, %v5270
      %v5283 = vpack.c.b16 %v5273, %v5272
      %v5284 = vpack.c.b16 %v5275, %v5274
      %v5285 = vpack.c.b16 %v5277, %v5276
      %5294 = vmatprep.subr.bf16.mxu0 0
      %5295 = vmatpush1.bf16.msra.mxu0 %v5285
      %5296 = vmatprep.subr.bf16.mxu0 0
      %5297 = vmatpush1.bf16.msra.mxu0 %v5284
      %5298 = vmatprep.subr.bf16.mxu0 0
      %5299 = vmatpush1.bf16.msra.mxu0 %v5283
      %5300 = vmatprep.subr.bf16.mxu0 0
      %5301 = vmatpush1.bf16.msra.mxu0 %v5282
      %5302 = vmatprep.subr.bf16.mxu0 0
      %5303 = vmatpush1.bf16.msra.mxu0 %v5281
      %5304 = vmatprep.subr.bf16.mxu0 0
      %5305 = vmatpush1.bf16.msra.mxu0 %v5280
      %5306 = vmatprep.subr.bf16.mxu0 0
      %5307 = vmatpush1.bf16.msra.mxu0 %v5279
      %5308 = vmatprep.subr.bf16.mxu0 0
      %5309 = vmatpush1.bf16.msra.mxu0 %v5278
      %5310 = vmatprep.subr.bf16.mxu0 0
      %5311 = vmatpush2.bf16.msra.mxu0 0
      %5312 = vmatprep.subr.bf16.mxu0 0
      %5313 = vmatpush2.bf16.msra.mxu0 0
      %5314 = vmatprep.subr.bf16.mxu0 0
      %5315 = vmatpush2.bf16.msra.mxu0 0
      %5316 = vmatprep.subr.bf16.mxu0 0
      %5317 = vmatpush2.bf16.msra.mxu0 0
      %5318 = vmatprep.subr.bf16.mxu0 0
      %5319 = vmatpush2.bf16.msra.mxu0 0
      %5320 = vmatprep.subr.bf16.mxu0 0
      %5321 = vmatpush2.bf16.msra.mxu0 0
      %5322 = vmatprep.subr.bf16.mxu0 0
      %5323 = vmatpush2.bf16.msra.mxu0 0
      %5324 = vmatprep.subr.bf16.mxu0 0
      %5325 = vmatpush2.bf16.msra.mxu0 0
      %5326 = vmatprep.mubr.bf16.mxu0 0
      %5327 = vmatmul.mubr.bf16.gmra.mxu0 %v4844
      %v5328 = vpop.f32.mrf.mxu0
      %v5329 = vadd.f32 %v5056, %v5328
      %v5330 = vpop.f32.mrf.mxu0
      %v5331 = vpop.f32.mrf.mxu0
      %v5332 = vadd.f32 %v5059, %v5331
      %v5333 = vpop.f32.mrf.mxu0
      %5334 = vmatprep.mubr.bf16.mxu0 0
      %5335 = vmatmul.mubr.bf16.gmra.mxu0 %v4845
      %v5336 = vpop.f32.mrf.mxu0
      %v5337 = vadd.f32 %v5064, %v5336
      %v5338 = vpop.f32.mrf.mxu0
      %v5339 = vpop.f32.mrf.mxu0
      %v5340 = vadd.f32 %v5067, %v5339
      %v5341 = vpop.f32.mrf.mxu0
      %5342 = vmatprep.mubr.bf16.mxu0 0
      %5343 = vmatmul.mubr.bf16.gmra.mxu0 %v4846
      %v5344 = vpop.f32.mrf.mxu0
      %v5345 = vadd.f32 %v5072, %v5344
      %v5346 = vpop.f32.mrf.mxu0
      %v5347 = vpop.f32.mrf.mxu0
      %v5348 = vadd.f32 %v5075, %v5347
      %v5349 = vpop.f32.mrf.mxu0
      %5350 = vmatprep.mubr.bf16.mxu0 0
      %5351 = vmatmul.mubr.bf16.gmra.mxu0 %v4847
      %v5352 = vpop.f32.mrf.mxu0
      %v5353 = vadd.f32 %v5080, %v5352
      %v5354 = vpop.f32.mrf.mxu0
      %v5355 = vpop.f32.mrf.mxu0
      %v5356 = vadd.f32 %v5083, %v5355
      %v5357 = vpop.f32.mrf.mxu0
      %5358 = vmatprep.mubr.bf16.mxu0 0
      %5359 = vmatmul.mubr.bf16.gmra.mxu0 %v4848
      %v5360 = vpop.f32.mrf.mxu0
      %v5361 = vadd.f32 %v5088, %v5360
      %v5362 = vpop.f32.mrf.mxu0
      %v5363 = vpop.f32.mrf.mxu0
      %v5364 = vadd.f32 %v5091, %v5363
      %v5365 = vpop.f32.mrf.mxu0
      %5366 = vmatprep.mubr.bf16.mxu0 0
      %5367 = vmatmul.mubr.bf16.gmra.mxu0 %v4849
      %v5368 = vpop.f32.mrf.mxu0
      %v5369 = vadd.f32 %v5096, %v5368
      %v5370 = vpop.f32.mrf.mxu0
      %v5371 = vpop.f32.mrf.mxu0
      %v5372 = vadd.f32 %v5099, %v5371
      %v5373 = vpop.f32.mrf.mxu0
      %5374 = vmatprep.mubr.bf16.mxu0 0
      %5375 = vmatmul.mubr.bf16.gmra.mxu0 %v4850
      %v5376 = vpop.f32.mrf.mxu0
      %v5377 = vadd.f32 %v5104, %v5376
      %v5378 = vpop.f32.mrf.mxu0
      %v5379 = vpop.f32.mrf.mxu0
      %v5380 = vadd.f32 %v5107, %v5379
      %v5381 = vpop.f32.mrf.mxu0
      %5382 = vmatprep.mubr.bf16.mxu0 0
      %5383 = vmatmul.mubr.bf16.gmra.mxu0 %v4851
      %v5384 = vpop.f32.mrf.mxu0
      %v5385 = vadd.f32 %v5112, %v5384
      %v5386 = vpop.f32.mrf.mxu0
      %v5387 = vpop.f32.mrf.mxu0
      %v5388 = vadd.f32 %v5115, %v5387
      %v5389 = vpop.f32.mrf.mxu0
      %5390 = vmatprep.mubr.bf16.mxu0 0
      %5391 = vmatmul.mubr.bf16.gmra.mxu0 %v4852
      %v5392 = vpop.f32.mrf.mxu0
      %v5393 = vadd.f32 %v5120, %v5392
      %v5394 = vpop.f32.mrf.mxu0
      %v5395 = vpop.f32.mrf.mxu0
      %v5396 = vadd.f32 %v5123, %v5395
      %v5397 = vpop.f32.mrf.mxu0
      %5398 = vmatprep.mubr.bf16.mxu0 0
      %5399 = vmatmul.mubr.bf16.gmra.mxu0 %v4853
      %v5400 = vpop.f32.mrf.mxu0
      %v5401 = vadd.f32 %v5128, %v5400
      %v5402 = vpop.f32.mrf.mxu0
      %v5403 = vpop.f32.mrf.mxu0
      %v5404 = vadd.f32 %v5131, %v5403
      %v5405 = vpop.f32.mrf.mxu0
      %5406 = vmatprep.mubr.bf16.mxu0 0
      %5407 = vmatmul.mubr.bf16.gmra.mxu0 %v4854
      %v5408 = vpop.f32.mrf.mxu0
      %v5409 = vadd.f32 %v5136, %v5408
      %v5410 = vpop.f32.mrf.mxu0
      %v5411 = vpop.f32.mrf.mxu0
      %v5412 = vadd.f32 %v5139, %v5411
      %v5413 = vpop.f32.mrf.mxu0
      %5414 = vmatprep.mubr.bf16.mxu0 0
      %5415 = vmatmul.mubr.bf16.gmra.mxu0 %v4855
      %v5416 = vpop.f32.mrf.mxu0
      %v5417 = vadd.f32 %v5144, %v5416
      %v5418 = vpop.f32.mrf.mxu0
      %v5419 = vpop.f32.mrf.mxu0
      %v5420 = vadd.f32 %v5147, %v5419
      %v5421 = vpop.f32.mrf.mxu0
      %5422 = vmatprep.mubr.bf16.mxu0 0
      %5423 = vmatmul.mubr.bf16.gmra.mxu0 %v4856
      %v5424 = vpop.f32.mrf.mxu0
      %v5425 = vadd.f32 %v5152, %v5424
      %v5426 = vpop.f32.mrf.mxu0
      %v5427 = vpop.f32.mrf.mxu0
      %v5428 = vadd.f32 %v5155, %v5427
      %v5429 = vpop.f32.mrf.mxu0
      %5430 = vmatprep.mubr.bf16.mxu0 0
      %5431 = vmatmul.mubr.bf16.gmra.mxu0 %v4857
      %v5432 = vpop.f32.mrf.mxu0
      %v5433 = vadd.f32 %v5160, %v5432
      %v5434 = vpop.f32.mrf.mxu0
      %v5435 = vpop.f32.mrf.mxu0
      %v5436 = vadd.f32 %v5163, %v5435
      %v5437 = vpop.f32.mrf.mxu0
      %5438 = vmatprep.mubr.bf16.mxu0 0
      %5439 = vmatmul.mubr.bf16.gmra.mxu0 %v4858
      %v5440 = vpop.f32.mrf.mxu0
      %v5441 = vadd.f32 %v5168, %v5440
      %v5442 = vpop.f32.mrf.mxu0
      %v5443 = vpop.f32.mrf.mxu0
      %v5444 = vadd.f32 %v5171, %v5443
      %v5445 = vpop.f32.mrf.mxu0
      %5446 = vmatprep.mubr.bf16.mxu0 0
      %5447 = vmatmul.mubr.bf16.gmra.mxu0 %v4859
      %v5448 = vpop.f32.mrf.mxu0
      %v5449 = vadd.f32 %v5176, %v5448
      %v5450 = vpop.f32.mrf.mxu0
      %v5451 = vpop.f32.mrf.mxu0
      %v5452 = vadd.f32 %v5179, %v5451
      %v5453 = vpop.f32.mrf.mxu0
      %5454 = vmatprep.mubr.bf16.mxu0 0
      %5455 = vmatmul.mubr.bf16.gmra.mxu0 %v4860
      %v5456 = vpop.f32.mrf.mxu0
      %v5457 = vadd.f32 %v5184, %v5456
      %v5458 = vpop.f32.mrf.mxu0
      %v5459 = vpop.f32.mrf.mxu0
      %v5460 = vadd.f32 %v5187, %v5459
      %v5461 = vpop.f32.mrf.mxu0
      %5462 = vmatprep.mubr.bf16.mxu0 0
      %5463 = vmatmul.mubr.bf16.gmra.mxu0 %v4861
      %v5464 = vpop.f32.mrf.mxu0
      %v5465 = vadd.f32 %v5192, %v5464
      %v5466 = vpop.f32.mrf.mxu0
      %v5467 = vpop.f32.mrf.mxu0
      %v5468 = vadd.f32 %v5195, %v5467
      %v5469 = vpop.f32.mrf.mxu0
      %5470 = vmatprep.mubr.bf16.mxu0 0
      %5471 = vmatmul.mubr.bf16.gmra.mxu0 %v4862
      %v5472 = vpop.f32.mrf.mxu0
      %v5473 = vadd.f32 %v5200, %v5472
      %v5474 = vpop.f32.mrf.mxu0
      %v5475 = vpop.f32.mrf.mxu0
      %v5476 = vadd.f32 %v5203, %v5475
      %v5477 = vpop.f32.mrf.mxu0
      %5478 = vmatprep.mubr.bf16.mxu0 0
      %5479 = vmatmul.mubr.bf16.gmra.mxu0 %v4863
      %v5480 = vpop.f32.mrf.mxu0
      %v5481 = vadd.f32 %v5208, %v5480
      %v5482 = vpop.f32.mrf.mxu0
      %v5483 = vpop.f32.mrf.mxu0
      %v5484 = vadd.f32 %v5211, %v5483
      %v5485 = vpop.f32.mrf.mxu0
      %5486 = vmatprep.mubr.bf16.mxu0 0
      %5487 = vmatmul.mubr.bf16.gmra.mxu0 %v4864
      %v5488 = vpop.f32.mrf.mxu0
      %v5489 = vadd.f32 %v5216, %v5488
      %v5490 = vpop.f32.mrf.mxu0
      %v5491 = vpop.f32.mrf.mxu0
      %v5492 = vadd.f32 %v5219, %v5491
      %v5493 = vpop.f32.mrf.mxu0
      %5494 = vmatprep.mubr.bf16.mxu0 0
      %5495 = vmatmul.mubr.bf16.gmra.mxu0 %v4865
      %v5496 = vpop.f32.mrf.mxu0
      %v5497 = vadd.f32 %v5224, %v5496
      %v5498 = vpop.f32.mrf.mxu0
      %v5499 = vpop.f32.mrf.mxu0
      %v5500 = vadd.f32 %v5227, %v5499
      %v5501 = vpop.f32.mrf.mxu0
      %5502 = vmatprep.mubr.bf16.mxu0 0
      %5503 = vmatmul.mubr.bf16.gmra.mxu0 %v4866
      %v5504 = vpop.f32.mrf.mxu0
      %v5505 = vadd.f32 %v5232, %v5504
      %v5506 = vpop.f32.mrf.mxu0
      %v5507 = vpop.f32.mrf.mxu0
      %v5508 = vadd.f32 %v5235, %v5507
      %v5509 = vpop.f32.mrf.mxu0
      %5510 = vmatprep.mubr.bf16.mxu0 0
      %5511 = vmatmul.mubr.bf16.gmra.mxu0 %v4867
      %v5512 = vpop.f32.mrf.mxu0
      %v5513 = vadd.f32 %v5240, %v5512
      %v5514 = vpop.f32.mrf.mxu0
      %v5515 = vpop.f32.mrf.mxu0
      %v5516 = vadd.f32 %v5243, %v5515
      %v5517 = vpop.f32.mrf.mxu0
      %5518 = vdwg.mxu0
      %v5519 = vld [vmem:[#allocation2 + $0x9] sm:$0xff]
      %v5520 = vld [vmem:[#allocation2 + $0x11] sm:$0xff]
      %v5521 = vld [vmem:[#allocation2 + $0x19] sm:$0xff]
      %v5522 = vld [vmem:[#allocation2 + $0x21] sm:$0xff]
      %v5523 = vld [vmem:[#allocation2 + $0x29] sm:$0xff]
      %v5524 = vld [vmem:[#allocation2 + $0x31] sm:$0xff]
      %v5525 = vld [vmem:[#allocation2 + $0x39] sm:$0xff]
      %v5526 = vld [vmem:[#allocation2 + $0x41] sm:$0xff]
      %v5527 = vld [vmem:[#allocation2 + $0x49] sm:$0xff]
      %v5528 = vld [vmem:[#allocation2 + $0x51] sm:$0xff]
      %v5529 = vld [vmem:[#allocation2 + $0x59] sm:$0xff]
      %v5530 = vld [vmem:[#allocation2 + $0x61] sm:$0xff]
      %v5531 = vld [vmem:[#allocation2 + $0x69] sm:$0xff]
      %v5532 = vld [vmem:[#allocation2 + $0x71] sm:$0xff]
      %v5533 = vld [vmem:[#allocation2 + $0x79] sm:$0xff]
      %v5534 = vld [vmem:[#allocation2 + $0x81] sm:$0xff]
      %v5535 = vld [vmem:[#allocation2 + $0x89] sm:$0xff]
      %v5536 = vld [vmem:[#allocation2 + $0x91] sm:$0xff]
      %v5537 = vld [vmem:[#allocation2 + $0x99] sm:$0xff]
      %v5538 = vld [vmem:[#allocation2 + $0xa1] sm:$0xff]
      %v5539 = vld [vmem:[#allocation2 + $0xa9] sm:$0xff]
      %v5540 = vld [vmem:[#allocation2 + $0xb1] sm:$0xff]
      %v5541 = vld [vmem:[#allocation2 + $0xb9] sm:$0xff]
      %v5542 = vld [vmem:[#allocation2 + $0xc1] sm:$0xff]
      %v5543 = vld [vmem:[#allocation2 + $0xc9] sm:$0xff]
      %v5544 = vld [vmem:[#allocation2 + $0xd1] sm:$0xff]
      %v5545 = vld [vmem:[#allocation2 + $0xd9] sm:$0xff]
      %v5546 = vld [vmem:[#allocation2 + $0xe1] sm:$0xff]
      %v5547 = vld [vmem:[#allocation2 + $0xe9] sm:$0xff]
      %v5548 = vld [vmem:[#allocation2 + $0xf1] sm:$0xff]
      %v5549 = vld [vmem:[#allocation2 + $0xf9] sm:$0xff]
      %v5550 = vld [vmem:[#allocation2 + $0x101] sm:$0xff]
      %v5551 = vld [vmem:[#allocation2 + $0x109] sm:$0xff]
      %v5552 = vld [vmem:[#allocation2 + $0x111] sm:$0xff]
      %v5553 = vld [vmem:[#allocation2 + $0x119] sm:$0xff]
      %v5554 = vld [vmem:[#allocation2 + $0x121] sm:$0xff]
      %v5555 = vld [vmem:[#allocation2 + $0x129] sm:$0xff]
      %v5556 = vld [vmem:[#allocation2 + $0x131] sm:$0xff]
      %v5557 = vld [vmem:[#allocation2 + $0x139] sm:$0xff]
      %v5558 = vld [vmem:[#allocation2 + $0x141] sm:$0xff]
      %v5559 = vld [vmem:[#allocation2 + $0x149] sm:$0xff]
      %v5560 = vld [vmem:[#allocation2 + $0x151] sm:$0xff]
      %v5561 = vld [vmem:[#allocation2 + $0x159] sm:$0xff]
      %v5562 = vld [vmem:[#allocation2 + $0x161] sm:$0xff]
      %v5563 = vld [vmem:[#allocation2 + $0x169] sm:$0xff]
      %v5564 = vld [vmem:[#allocation2 + $0x171] sm:$0xff]
      %v5565 = vld [vmem:[#allocation2 + $0x179] sm:$0xff]
      %v5566 = vld [vmem:[#allocation2 + $0x181] sm:$0xff]
      %v5567 = vpack.c.bf16 %v5520, %v5519
      %v5568 = vpack.c.bf16 %v5522, %v5521
      %v5569 = vpack.c.bf16 %v5524, %v5523
      %v5570 = vpack.c.bf16 %v5526, %v5525
      %v5571 = vpack.c.bf16 %v5528, %v5527
      %v5572 = vpack.c.bf16 %v5530, %v5529
      %v5573 = vpack.c.bf16 %v5532, %v5531
      %v5574 = vpack.c.bf16 %v5534, %v5533
      %v5575 = vpack.c.bf16 %v5536, %v5535
      %v5576 = vpack.c.bf16 %v5538, %v5537
      %v5577 = vpack.c.bf16 %v5540, %v5539
      %v5578 = vpack.c.bf16 %v5542, %v5541
      %v5579 = vpack.c.bf16 %v5544, %v5543
      %v5580 = vpack.c.bf16 %v5546, %v5545
      %v5581 = vpack.c.bf16 %v5548, %v5547
      %v5582 = vpack.c.bf16 %v5550, %v5549
      %v5583 = vpack.c.bf16 %v5552, %v5551
      %v5584 = vpack.c.bf16 %v5554, %v5553
      %v5585 = vpack.c.bf16 %v5556, %v5555
      %v5586 = vpack.c.bf16 %v5558, %v5557
      %v5587 = vpack.c.bf16 %v5560, %v5559
      %v5588 = vpack.c.bf16 %v5562, %v5561
      %v5589 = vpack.c.bf16 %v5564, %v5563
      %v5590 = vpack.c.bf16 %v5566, %v5565
      %s5591 = scalar_lea.vmem %s4, 128
      %v5592 = vld [vmem:[%s5591] sm:$0xf]
      %v5593 = vld [vmem:[%s5591 + $0x4] sm:$0xf]
      %v5594 = vld [vmem:[%s5591 + $0x8] sm:$0xf]
      %v5595 = vld [vmem:[%s5591 + $0xc] sm:$0xf]
      %v5596 = vld [vmem:[%s5591 + $0x10] sm:$0xf]
      %v5597 = vld [vmem:[%s5591 + $0x14] sm:$0xf]
      %v5598 = vld [vmem:[%s5591 + $0x18] sm:$0xf]
      %v5599 = vld [vmem:[%s5591 + $0x1c] sm:$0xf]
      %v5600 = vld [vmem:[%s5591 + $0x20] sm:$0xf]
      %v5601 = vld [vmem:[%s5591 + $0x24] sm:$0xf]
      %v5602 = vld [vmem:[%s5591 + $0x28] sm:$0xf]
      %v5603 = vld [vmem:[%s5591 + $0x2c] sm:$0xf]
      %v5604 = vld [vmem:[%s5591 + $0x30] sm:$0xf]
      %v5605 = vld [vmem:[%s5591 + $0x34] sm:$0xf]
      %v5606 = vld [vmem:[%s5591 + $0x38] sm:$0xf]
      %v5607 = vld [vmem:[%s5591 + $0x3c] sm:$0xf]
      %v5624 = vunpack.c.l.b16 %v5592
      %v5625 = vunpack.c.l.b16 %v5593
      %v5626 = vunpack.c.l.b16 %v5594
      %v5627 = vunpack.c.l.b16 %v5595
      %v5628 = vunpack.c.l.b16 %v5596
      %v5629 = vunpack.c.l.b16 %v5597
      %v5630 = vunpack.c.l.b16 %v5598
      %v5631 = vunpack.c.l.b16 %v5599
      %v5632 = vunpack.c.l.b16 %v5600
      %v5633 = vunpack.c.l.b16 %v5601
      %v5634 = vunpack.c.l.b16 %v5602
      %v5635 = vunpack.c.l.b16 %v5603
      %v5636 = vunpack.c.l.b16 %v5604
      %v5637 = vunpack.c.l.b16 %v5605
      %v5638 = vunpack.c.l.b16 %v5606
      %v5639 = vunpack.c.l.b16 %v5607
      %v5640 = vpack.c.b16 %v5625, %v5624
      %v5641 = vpack.c.b16 %v5627, %v5626
      %v5642 = vpack.c.b16 %v5629, %v5628
      %v5643 = vpack.c.b16 %v5631, %v5630
      %v5644 = vpack.c.b16 %v5633, %v5632
      %v5645 = vpack.c.b16 %v5635, %v5634
      %v5646 = vpack.c.b16 %v5637, %v5636
      %v5647 = vpack.c.b16 %v5639, %v5638
      %5656 = vmatprep.subr.bf16.mxu0 0
      %5657 = vmatpush1.bf16.msra.mxu0 %v5647
      %5658 = vmatprep.subr.bf16.mxu0 0
      %5659 = vmatpush1.bf16.msra.mxu0 %v5646
      %5660 = vmatprep.subr.bf16.mxu0 0
      %5661 = vmatpush1.bf16.msra.mxu0 %v5645
      %5662 = vmatprep.subr.bf16.mxu0 0
      %5663 = vmatpush1.bf16.msra.mxu0 %v5644
      %5664 = vmatprep.subr.bf16.mxu0 0
      %5665 = vmatpush1.bf16.msra.mxu0 %v5643
      %5666 = vmatprep.subr.bf16.mxu0 0
      %5667 = vmatpush1.bf16.msra.mxu0 %v5642
      %5668 = vmatprep.subr.bf16.mxu0 0
      %5669 = vmatpush1.bf16.msra.mxu0 %v5641
      %5670 = vmatprep.subr.bf16.mxu0 0
      %5671 = vmatpush1.bf16.msra.mxu0 %v5640
      %5672 = vmatprep.subr.bf16.mxu0 0
      %5673 = vmatpush2.bf16.msra.mxu0 0
      %5674 = vmatprep.subr.bf16.mxu0 0
      %5675 = vmatpush2.bf16.msra.mxu0 0
      %5676 = vmatprep.subr.bf16.mxu0 0
      %5677 = vmatpush2.bf16.msra.mxu0 0
      %5678 = vmatprep.subr.bf16.mxu0 0
      %5679 = vmatpush2.bf16.msra.mxu0 0
      %5680 = vmatprep.subr.bf16.mxu0 0
      %5681 = vmatpush2.bf16.msra.mxu0 0
      %5682 = vmatprep.subr.bf16.mxu0 0
      %5683 = vmatpush2.bf16.msra.mxu0 0
      %5684 = vmatprep.subr.bf16.mxu0 0
      %5685 = vmatpush2.bf16.msra.mxu0 0
      %5686 = vmatprep.subr.bf16.mxu0 0
      %5687 = vmatpush2.bf16.msra.mxu0 0
      %5688 = vmatprep.mubr.bf16.mxu0 0
      %5689 = vmatmul.mubr.bf16.gmra.mxu0 %v5567
      %v5690 = vpop.f32.mrf.mxu0
      %v5691 = vadd.f32 0.0, %v5690
      %v5692 = vpop.f32.mrf.mxu0
      %v5693 = vpop.f32.mrf.mxu0
      %v5694 = vadd.f32 0.0, %v5693
      %v5695 = vpop.f32.mrf.mxu0
      %5696 = vmatprep.mubr.bf16.mxu0 0
      %5697 = vmatmul.mubr.bf16.gmra.mxu0 %v5568
      %v5698 = vpop.f32.mrf.mxu0
      %v5699 = vadd.f32 0.0, %v5698
      %v5700 = vpop.f32.mrf.mxu0
      %v5701 = vpop.f32.mrf.mxu0
      %v5702 = vadd.f32 0.0, %v5701
      %v5703 = vpop.f32.mrf.mxu0
      %5704 = vmatprep.mubr.bf16.mxu0 0
      %5705 = vmatmul.mubr.bf16.gmra.mxu0 %v5569
      %v5706 = vpop.f32.mrf.mxu0
      %v5707 = vadd.f32 0.0, %v5706
      %v5708 = vpop.f32.mrf.mxu0
      %v5709 = vpop.f32.mrf.mxu0
      %v5710 = vadd.f32 0.0, %v5709
      %v5711 = vpop.f32.mrf.mxu0
      %5712 = vmatprep.mubr.bf16.mxu0 0
      %5713 = vmatmul.mubr.bf16.gmra.mxu0 %v5570
      %v5714 = vpop.f32.mrf.mxu0
      %v5715 = vadd.f32 0.0, %v5714
      %v5716 = vpop.f32.mrf.mxu0
      %v5717 = vpop.f32.mrf.mxu0
      %v5718 = vadd.f32 0.0, %v5717
      %v5719 = vpop.f32.mrf.mxu0
      %5720 = vmatprep.mubr.bf16.mxu0 0
      %5721 = vmatmul.mubr.bf16.gmra.mxu0 %v5571
      %v5722 = vpop.f32.mrf.mxu0
      %v5723 = vadd.f32 0.0, %v5722
      %v5724 = vpop.f32.mrf.mxu0
      %v5725 = vpop.f32.mrf.mxu0
      %v5726 = vadd.f32 0.0, %v5725
      %v5727 = vpop.f32.mrf.mxu0
      %5728 = vmatprep.mubr.bf16.mxu0 0
      %5729 = vmatmul.mubr.bf16.gmra.mxu0 %v5572
      %v5730 = vpop.f32.mrf.mxu0
      %v5731 = vadd.f32 0.0, %v5730
      %v5732 = vpop.f32.mrf.mxu0
      %v5733 = vpop.f32.mrf.mxu0
      %v5734 = vadd.f32 0.0, %v5733
      %v5735 = vpop.f32.mrf.mxu0
      %5736 = vmatprep.mubr.bf16.mxu0 0
      %5737 = vmatmul.mubr.bf16.gmra.mxu0 %v5573
      %v5738 = vpop.f32.mrf.mxu0
      %v5739 = vadd.f32 0.0, %v5738
      %v5740 = vpop.f32.mrf.mxu0
      %v5741 = vpop.f32.mrf.mxu0
      %v5742 = vadd.f32 0.0, %v5741
      %v5743 = vpop.f32.mrf.mxu0
      %5744 = vmatprep.mubr.bf16.mxu0 0
      %5745 = vmatmul.mubr.bf16.gmra.mxu0 %v5574
      %v5746 = vpop.f32.mrf.mxu0
      %v5747 = vadd.f32 0.0, %v5746
      %v5748 = vpop.f32.mrf.mxu0
      %v5749 = vpop.f32.mrf.mxu0
      %v5750 = vadd.f32 0.0, %v5749
      %v5751 = vpop.f32.mrf.mxu0
      %5752 = vmatprep.mubr.bf16.mxu0 0
      %5753 = vmatmul.mubr.bf16.gmra.mxu0 %v5575
      %v5754 = vpop.f32.mrf.mxu0
      %v5755 = vadd.f32 0.0, %v5754
      %v5756 = vpop.f32.mrf.mxu0
      %v5757 = vpop.f32.mrf.mxu0
      %v5758 = vadd.f32 0.0, %v5757
      %v5759 = vpop.f32.mrf.mxu0
      %5760 = vmatprep.mubr.bf16.mxu0 0
      %5761 = vmatmul.mubr.bf16.gmra.mxu0 %v5576
      %v5762 = vpop.f32.mrf.mxu0
      %v5763 = vadd.f32 0.0, %v5762
      %v5764 = vpop.f32.mrf.mxu0
      %v5765 = vpop.f32.mrf.mxu0
      %v5766 = vadd.f32 0.0, %v5765
      %v5767 = vpop.f32.mrf.mxu0
      %5768 = vmatprep.mubr.bf16.mxu0 0
      %5769 = vmatmul.mubr.bf16.gmra.mxu0 %v5577
      %v5770 = vpop.f32.mrf.mxu0
      %v5771 = vadd.f32 0.0, %v5770
      %v5772 = vpop.f32.mrf.mxu0
      %v5773 = vpop.f32.mrf.mxu0
      %v5774 = vadd.f32 0.0, %v5773
      %v5775 = vpop.f32.mrf.mxu0
      %5776 = vmatprep.mubr.bf16.mxu0 0
      %5777 = vmatmul.mubr.bf16.gmra.mxu0 %v5578
      %v5778 = vpop.f32.mrf.mxu0
      %v5779 = vadd.f32 0.0, %v5778
      %v5780 = vpop.f32.mrf.mxu0
      %v5781 = vpop.f32.mrf.mxu0
      %v5782 = vadd.f32 0.0, %v5781
      %v5783 = vpop.f32.mrf.mxu0
      %5784 = vmatprep.mubr.bf16.mxu0 0
      %5785 = vmatmul.mubr.bf16.gmra.mxu0 %v5579
      %v5786 = vpop.f32.mrf.mxu0
      %v5787 = vadd.f32 0.0, %v5786
      %v5788 = vpop.f32.mrf.mxu0
      %v5789 = vpop.f32.mrf.mxu0
      %v5790 = vadd.f32 0.0, %v5789
      %v5791 = vpop.f32.mrf.mxu0
      %5792 = vmatprep.mubr.bf16.mxu0 0
      %5793 = vmatmul.mubr.bf16.gmra.mxu0 %v5580
      %v5794 = vpop.f32.mrf.mxu0
      %v5795 = vadd.f32 0.0, %v5794
      %v5796 = vpop.f32.mrf.mxu0
      %v5797 = vpop.f32.mrf.mxu0
      %v5798 = vadd.f32 0.0, %v5797
      %v5799 = vpop.f32.mrf.mxu0
      %5800 = vmatprep.mubr.bf16.mxu0 0
      %5801 = vmatmul.mubr.bf16.gmra.mxu0 %v5581
      %v5802 = vpop.f32.mrf.mxu0
      %v5803 = vadd.f32 0.0, %v5802
      %v5804 = vpop.f32.mrf.mxu0
      %v5805 = vpop.f32.mrf.mxu0
      %v5806 = vadd.f32 0.0, %v5805
      %v5807 = vpop.f32.mrf.mxu0
      %5808 = vmatprep.mubr.bf16.mxu0 0
      %5809 = vmatmul.mubr.bf16.gmra.mxu0 %v5582
      %v5810 = vpop.f32.mrf.mxu0
      %v5811 = vadd.f32 0.0, %v5810
      %v5812 = vpop.f32.mrf.mxu0
      %v5813 = vpop.f32.mrf.mxu0
      %v5814 = vadd.f32 0.0, %v5813
      %v5815 = vpop.f32.mrf.mxu0
      %5816 = vmatprep.mubr.bf16.mxu0 0
      %5817 = vmatmul.mubr.bf16.gmra.mxu0 %v5583
      %v5818 = vpop.f32.mrf.mxu0
      %v5819 = vadd.f32 0.0, %v5818
      %v5820 = vpop.f32.mrf.mxu0
      %v5821 = vpop.f32.mrf.mxu0
      %v5822 = vadd.f32 0.0, %v5821
      %v5823 = vpop.f32.mrf.mxu0
      %5824 = vmatprep.mubr.bf16.mxu0 0
      %5825 = vmatmul.mubr.bf16.gmra.mxu0 %v5584
      %v5826 = vpop.f32.mrf.mxu0
      %v5827 = vadd.f32 0.0, %v5826
      %v5828 = vpop.f32.mrf.mxu0
      %v5829 = vpop.f32.mrf.mxu0
      %v5830 = vadd.f32 0.0, %v5829
      %v5831 = vpop.f32.mrf.mxu0
      %5832 = vmatprep.mubr.bf16.mxu0 0
      %5833 = vmatmul.mubr.bf16.gmra.mxu0 %v5585
      %v5834 = vpop.f32.mrf.mxu0
      %v5835 = vadd.f32 0.0, %v5834
      %v5836 = vpop.f32.mrf.mxu0
      %v5837 = vpop.f32.mrf.mxu0
      %v5838 = vadd.f32 0.0, %v5837
      %v5839 = vpop.f32.mrf.mxu0
      %5840 = vmatprep.mubr.bf16.mxu0 0
      %5841 = vmatmul.mubr.bf16.gmra.mxu0 %v5586
      %v5842 = vpop.f32.mrf.mxu0
      %v5843 = vadd.f32 0.0, %v5842
      %v5844 = vpop.f32.mrf.mxu0
      %v5845 = vpop.f32.mrf.mxu0
      %v5846 = vadd.f32 0.0, %v5845
      %v5847 = vpop.f32.mrf.mxu0
      %5848 = vmatprep.mubr.bf16.mxu0 0
      %5849 = vmatmul.mubr.bf16.gmra.mxu0 %v5587
      %v5850 = vpop.f32.mrf.mxu0
      %v5851 = vadd.f32 0.0, %v5850
      %v5852 = vpop.f32.mrf.mxu0
      %v5853 = vpop.f32.mrf.mxu0
      %v5854 = vadd.f32 0.0, %v5853
      %v5855 = vpop.f32.mrf.mxu0
      %5856 = vmatprep.mubr.bf16.mxu0 0
      %5857 = vmatmul.mubr.bf16.gmra.mxu0 %v5588
      %v5858 = vpop.f32.mrf.mxu0
      %v5859 = vadd.f32 0.0, %v5858
      %v5860 = vpop.f32.mrf.mxu0
      %v5861 = vpop.f32.mrf.mxu0
      %v5862 = vadd.f32 0.0, %v5861
      %v5863 = vpop.f32.mrf.mxu0
      %5864 = vmatprep.mubr.bf16.mxu0 0
      %5865 = vmatmul.mubr.bf16.gmra.mxu0 %v5589
      %v5866 = vpop.f32.mrf.mxu0
      %v5867 = vadd.f32 0.0, %v5866
      %v5868 = vpop.f32.mrf.mxu0
      %v5869 = vpop.f32.mrf.mxu0
      %v5870 = vadd.f32 0.0, %v5869
      %v5871 = vpop.f32.mrf.mxu0
      %5872 = vmatprep.mubr.bf16.mxu0 0
      %5873 = vmatmul.mubr.bf16.gmra.mxu0 %v5590
      %v5874 = vpop.f32.mrf.mxu0
      %v5875 = vadd.f32 0.0, %v5874
      %v5876 = vpop.f32.mrf.mxu0
      %v5877 = vpop.f32.mrf.mxu0
      %v5878 = vadd.f32 0.0, %v5877
      %v5879 = vpop.f32.mrf.mxu0
      %5880 = vdwg.mxu0
      %v5881 = vadd.f32 %v5329, %v5691
      %v5882 = vadd.f32 %v5332, %v5694
      %v5883 = vadd.f32 %v5337, %v5699
      %v5884 = vadd.f32 %v5340, %v5702
      %v5885 = vadd.f32 %v5345, %v5707
      %v5886 = vadd.f32 %v5348, %v5710
      %v5887 = vadd.f32 %v5353, %v5715
      %v5888 = vadd.f32 %v5356, %v5718
      %v5889 = vadd.f32 %v5361, %v5723
      %v5890 = vadd.f32 %v5364, %v5726
      %v5891 = vadd.f32 %v5369, %v5731
      %v5892 = vadd.f32 %v5372, %v5734
      %v5893 = vadd.f32 %v5377, %v5739
      %v5894 = vadd.f32 %v5380, %v5742
      %v5895 = vadd.f32 %v5385, %v5747
      %v5896 = vadd.f32 %v5388, %v5750
      %v5897 = vadd.f32 %v5393, %v5755
      %v5898 = vadd.f32 %v5396, %v5758
      %v5899 = vadd.f32 %v5401, %v5763
      %v5900 = vadd.f32 %v5404, %v5766
      %v5901 = vadd.f32 %v5409, %v5771
      %v5902 = vadd.f32 %v5412, %v5774
      %v5903 = vadd.f32 %v5417, %v5779
      %v5904 = vadd.f32 %v5420, %v5782
      %v5905 = vadd.f32 %v5425, %v5787
      %v5906 = vadd.f32 %v5428, %v5790
      %v5907 = vadd.f32 %v5433, %v5795
      %v5908 = vadd.f32 %v5436, %v5798
      %v5909 = vadd.f32 %v5441, %v5803
      %v5910 = vadd.f32 %v5444, %v5806
      %v5911 = vadd.f32 %v5449, %v5811
      %v5912 = vadd.f32 %v5452, %v5814
      %v5913 = vadd.f32 %v5457, %v5819
      %v5914 = vadd.f32 %v5460, %v5822
      %v5915 = vadd.f32 %v5465, %v5827
      %v5916 = vadd.f32 %v5468, %v5830
      %v5917 = vadd.f32 %v5473, %v5835
      %v5918 = vadd.f32 %v5476, %v5838
      %v5919 = vadd.f32 %v5481, %v5843
      %v5920 = vadd.f32 %v5484, %v5846
      %v5921 = vadd.f32 %v5489, %v5851
      %v5922 = vadd.f32 %v5492, %v5854
      %v5923 = vadd.f32 %v5497, %v5859
      %v5924 = vadd.f32 %v5500, %v5862
      %v5925 = vadd.f32 %v5505, %v5867
      %v5926 = vadd.f32 %v5508, %v5870
      %v5927 = vadd.f32 %v5513, %v5875
      %v5928 = vadd.f32 %v5516, %v5878
      %v5929 = vld [vmem:[#allocation2 + $0x1f] sm:$0xff]
      %v5930 = vld [vmem:[#allocation2 + $0x27] sm:$0xff]
      %v5931 = vld [vmem:[#allocation2 + $0x2f] sm:$0xff]
      %v5932 = vld [vmem:[#allocation2 + $0x37] sm:$0xff]
      %v5933 = vld [vmem:[#allocation2 + $0x3f] sm:$0xff]
      %v5934 = vld [vmem:[#allocation2 + $0x47] sm:$0xff]
      %v5935 = vld [vmem:[#allocation2 + $0x4f] sm:$0xff]
      %v5936 = vld [vmem:[#allocation2 + $0x57] sm:$0xff]
      %v5937 = vld [vmem:[#allocation2 + $0x5f] sm:$0xff]
      %v5938 = vld [vmem:[#allocation2 + $0x67] sm:$0xff]
      %v5939 = vld [vmem:[#allocation2 + $0x6f] sm:$0xff]
      %v5940 = vld [vmem:[#allocation2 + $0x77] sm:$0xff]
      %v5941 = vld [vmem:[#allocation2 + $0x7f] sm:$0xff]
      %v5942 = vld [vmem:[#allocation2 + $0x87] sm:$0xff]
      %v5943 = vld [vmem:[#allocation2 + $0x8f] sm:$0xff]
      %v5944 = vld [vmem:[#allocation2 + $0x97] sm:$0xff]
      %v5945 = vld [vmem:[#allocation2 + $0x9f] sm:$0xff]
      %v5946 = vld [vmem:[#allocation2 + $0xa7] sm:$0xff]
      %v5947 = vld [vmem:[#allocation2 + $0xaf] sm:$0xff]
      %v5948 = vld [vmem:[#allocation2 + $0xb7] sm:$0xff]
      %v5949 = vld [vmem:[#allocation2 + $0xbf] sm:$0xff]
      %v5950 = vld [vmem:[#allocation2 + $0xc7] sm:$0xff]
      %v5951 = vld [vmem:[#allocation2 + $0xcf] sm:$0xff]
      %v5952 = vld [vmem:[#allocation2 + $0xd7] sm:$0xff]
      %v5953 = vld [vmem:[#allocation2 + $0xdf] sm:$0xff]
      %v5954 = vld [vmem:[#allocation2 + $0xe7] sm:$0xff]
      %v5955 = vld [vmem:[#allocation2 + $0xef] sm:$0xff]
      %v5956 = vld [vmem:[#allocation2 + $0xf7] sm:$0xff]
      %v5957 = vld [vmem:[#allocation2 + $0xff] sm:$0xff]
      %v5958 = vld [vmem:[#allocation2 + $0x107] sm:$0xff]
      %v5959 = vld [vmem:[#allocation2 + $0x10f] sm:$0xff]
      %v5960 = vld [vmem:[#allocation2 + $0x117] sm:$0xff]
      %v5961 = vld [vmem:[#allocation2 + $0x11f] sm:$0xff]
      %v5962 = vld [vmem:[#allocation2 + $0x127] sm:$0xff]
      %v5963 = vld [vmem:[#allocation2 + $0x12f] sm:$0xff]
      %v5964 = vld [vmem:[#allocation2 + $0x137] sm:$0xff]
      %v5965 = vld [vmem:[#allocation2 + $0x13f] sm:$0xff]
      %v5966 = vld [vmem:[#allocation2 + $0x147] sm:$0xff]
      %v5967 = vld [vmem:[#allocation2 + $0x14f] sm:$0xff]
      %v5968 = vld [vmem:[#allocation2 + $0x157] sm:$0xff]
      %v5969 = vld [vmem:[#allocation2 + $0x15f] sm:$0xff]
      %v5970 = vld [vmem:[#allocation2 + $0x167] sm:$0xff]
      %v5971 = vld [vmem:[#allocation2 + $0x16f] sm:$0xff]
      %v5972 = vld [vmem:[#allocation2 + $0x177] sm:$0xff]
      %v5973 = vld [vmem:[#allocation2 + $0x17f] sm:$0xff]
      %v5974 = vld [vmem:[#allocation2 + $0x187] sm:$0xff]
      %v5975 = vld [vmem:[#allocation2 + $0x18f] sm:$0xff]
      %v5976 = vld [vmem:[#allocation2 + $0x197] sm:$0xff]
      %v5977 = vpack.c.bf16 %v5930, %v5929
      %v5978 = vpack.c.bf16 %v5932, %v5931
      %v5979 = vpack.c.bf16 %v5934, %v5933
      %v5980 = vpack.c.bf16 %v5936, %v5935
      %v5981 = vpack.c.bf16 %v5938, %v5937
      %v5982 = vpack.c.bf16 %v5940, %v5939
      %v5983 = vpack.c.bf16 %v5942, %v5941
      %v5984 = vpack.c.bf16 %v5944, %v5943
      %v5985 = vpack.c.bf16 %v5946, %v5945
      %v5986 = vpack.c.bf16 %v5948, %v5947
      %v5987 = vpack.c.bf16 %v5950, %v5949
      %v5988 = vpack.c.bf16 %v5952, %v5951
      %v5989 = vpack.c.bf16 %v5954, %v5953
      %v5990 = vpack.c.bf16 %v5956, %v5955
      %v5991 = vpack.c.bf16 %v5958, %v5957
      %v5992 = vpack.c.bf16 %v5960, %v5959
      %v5993 = vpack.c.bf16 %v5962, %v5961
      %v5994 = vpack.c.bf16 %v5964, %v5963
      %v5995 = vpack.c.bf16 %v5966, %v5965
      %v5996 = vpack.c.bf16 %v5968, %v5967
      %v5997 = vpack.c.bf16 %v5970, %v5969
      %v5998 = vpack.c.bf16 %v5972, %v5971
      %v5999 = vpack.c.bf16 %v5974, %v5973
      %v6000 = vpack.c.bf16 %v5976, %v5975
      %s6001 = scalar_lea.vmem %s4, 192
      %v6002 = vld [vmem:[%s6001] sm:$0xf]
      %v6003 = vld [vmem:[%s6001 + $0x4] sm:$0xf]
      %v6004 = vld [vmem:[%s6001 + $0x8] sm:$0xf]
      %v6005 = vld [vmem:[%s6001 + $0xc] sm:$0xf]
      %v6006 = vld [vmem:[%s6001 + $0x10] sm:$0xf]
      %v6007 = vld [vmem:[%s6001 + $0x14] sm:$0xf]
      %v6008 = vld [vmem:[%s6001 + $0x18] sm:$0xf]
      %v6009 = vld [vmem:[%s6001 + $0x1c] sm:$0xf]
      %v6010 = vld [vmem:[%s6001 + $0x20] sm:$0xf]
      %v6011 = vld [vmem:[%s6001 + $0x24] sm:$0xf]
      %v6012 = vld [vmem:[%s6001 + $0x28] sm:$0xf]
      %v6013 = vld [vmem:[%s6001 + $0x2c] sm:$0xf]
      %v6014 = vld [vmem:[%s6001 + $0x30] sm:$0xf]
      %v6015 = vld [vmem:[%s6001 + $0x34] sm:$0xf]
      %v6016 = vld [vmem:[%s6001 + $0x38] sm:$0xf]
      %v6017 = vld [vmem:[%s6001 + $0x3c] sm:$0xf]
      %v6018 = vld [vmem:[#allocation2 + $0x20] sm:$0xff]
      %v6019 = vld [vmem:[#allocation2 + $0x28] sm:$0xff]
      %v6020 = vld [vmem:[#allocation2 + $0x30] sm:$0xff]
      %v6021 = vld [vmem:[#allocation2 + $0x38] sm:$0xff]
      %v6022 = vld [vmem:[#allocation2 + $0x40] sm:$0xff]
      %v6023 = vld [vmem:[#allocation2 + $0x48] sm:$0xff]
      %v6024 = vld [vmem:[#allocation2 + $0x50] sm:$0xff]
      %v6025 = vld [vmem:[#allocation2 + $0x58] sm:$0xff]
      %v6026 = vld [vmem:[#allocation2 + $0x60] sm:$0xff]
      %v6027 = vld [vmem:[#allocation2 + $0x68] sm:$0xff]
      %v6028 = vld [vmem:[#allocation2 + $0x70] sm:$0xff]
      %v6029 = vld [vmem:[#allocation2 + $0x78] sm:$0xff]
      %v6030 = vld [vmem:[#allocation2 + $0x80] sm:$0xff]
      %v6031 = vld [vmem:[#allocation2 + $0x88] sm:$0xff]
      %v6032 = vld [vmem:[#allocation2 + $0x90] sm:$0xff]
      %v6033 = vld [vmem:[#allocation2 + $0x98] sm:$0xff]
      %v6034 = vld [vmem:[#allocation2 + $0xa0] sm:$0xff]
      %v6035 = vld [vmem:[#allocation2 + $0xa8] sm:$0xff]
      %v6036 = vld [vmem:[#allocation2 + $0xb0] sm:$0xff]
      %v6037 = vld [vmem:[#allocation2 + $0xb8] sm:$0xff]
      %v6038 = vld [vmem:[#allocation2 + $0xc0] sm:$0xff]
      %v6039 = vld [vmem:[#allocation2 + $0xc8] sm:$0xff]
      %v6040 = vld [vmem:[#allocation2 + $0xd0] sm:$0xff]
      %v6041 = vld [vmem:[#allocation2 + $0xd8] sm:$0xff]
      %v6042 = vld [vmem:[#allocation2 + $0xe0] sm:$0xff]
      %v6043 = vld [vmem:[#allocation2 + $0xe8] sm:$0xff]
      %v6044 = vld [vmem:[#allocation2 + $0xf0] sm:$0xff]
      %v6045 = vld [vmem:[#allocation2 + $0xf8] sm:$0xff]
      %v6046 = vld [vmem:[#allocation2 + $0x100] sm:$0xff]
      %v6047 = vld [vmem:[#allocation2 + $0x108] sm:$0xff]
      %v6048 = vld [vmem:[#allocation2 + $0x110] sm:$0xff]
      %v6049 = vld [vmem:[#allocation2 + $0x118] sm:$0xff]
      %v6050 = vld [vmem:[#allocation2 + $0x120] sm:$0xff]
      %v6051 = vld [vmem:[#allocation2 + $0x128] sm:$0xff]
      %v6052 = vld [vmem:[#allocation2 + $0x130] sm:$0xff]
      %v6053 = vld [vmem:[#allocation2 + $0x138] sm:$0xff]
      %v6054 = vld [vmem:[#allocation2 + $0x140] sm:$0xff]
      %v6055 = vld [vmem:[#allocation2 + $0x148] sm:$0xff]
      %v6056 = vld [vmem:[#allocation2 + $0x150] sm:$0xff]
      %v6057 = vld [vmem:[#allocation2 + $0x158] sm:$0xff]
      %v6058 = vld [vmem:[#allocation2 + $0x160] sm:$0xff]
      %v6059 = vld [vmem:[#allocation2 + $0x168] sm:$0xff]
      %v6060 = vld [vmem:[#allocation2 + $0x170] sm:$0xff]
      %v6061 = vld [vmem:[#allocation2 + $0x178] sm:$0xff]
      %v6062 = vld [vmem:[#allocation2 + $0x180] sm:$0xff]
      %v6063 = vld [vmem:[#allocation2 + $0x188] sm:$0xff]
      %v6064 = vld [vmem:[#allocation2 + $0x190] sm:$0xff]
      %v6065 = vld [vmem:[#allocation2 + $0x198] sm:$0xff]
      %v6066 = vpack.c.bf16 %v6019, %v6018
      %v6067 = vpack.c.bf16 %v6021, %v6020
      %v6068 = vpack.c.bf16 %v6023, %v6022
      %v6069 = vpack.c.bf16 %v6025, %v6024
      %v6070 = vpack.c.bf16 %v6027, %v6026
      %v6071 = vpack.c.bf16 %v6029, %v6028
      %v6072 = vpack.c.bf16 %v6031, %v6030
      %v6073 = vpack.c.bf16 %v6033, %v6032
      %v6074 = vpack.c.bf16 %v6035, %v6034
      %v6075 = vpack.c.bf16 %v6037, %v6036
      %v6076 = vpack.c.bf16 %v6039, %v6038
      %v6077 = vpack.c.bf16 %v6041, %v6040
      %v6078 = vpack.c.bf16 %v6043, %v6042
      %v6079 = vpack.c.bf16 %v6045, %v6044
      %v6080 = vpack.c.bf16 %v6047, %v6046
      %v6081 = vpack.c.bf16 %v6049, %v6048
      %v6082 = vpack.c.bf16 %v6051, %v6050
      %v6083 = vpack.c.bf16 %v6053, %v6052
      %v6084 = vpack.c.bf16 %v6055, %v6054
      %v6085 = vpack.c.bf16 %v6057, %v6056
      %v6086 = vpack.c.bf16 %v6059, %v6058
      %v6087 = vpack.c.bf16 %v6061, %v6060
      %v6088 = vpack.c.bf16 %v6063, %v6062
      %v6089 = vpack.c.bf16 %v6065, %v6064
      %s6090 = scalar_lea.vmem %s4, 256
      %v6091 = vld [vmem:[%s6090] sm:$0xf]
      %v6092 = vld [vmem:[%s6090 + $0x4] sm:$0xf]
      %v6093 = vld [vmem:[%s6090 + $0x8] sm:$0xf]
      %v6094 = vld [vmem:[%s6090 + $0xc] sm:$0xf]
      %v6095 = vld [vmem:[%s6090 + $0x10] sm:$0xf]
      %v6096 = vld [vmem:[%s6090 + $0x14] sm:$0xf]
      %v6097 = vld [vmem:[%s6090 + $0x18] sm:$0xf]
      %v6098 = vld [vmem:[%s6090 + $0x1c] sm:$0xf]
      %v6099 = vld [vmem:[%s6090 + $0x20] sm:$0xf]
      %v6100 = vld [vmem:[%s6090 + $0x24] sm:$0xf]
      %v6101 = vld [vmem:[%s6090 + $0x28] sm:$0xf]
      %v6102 = vld [vmem:[%s6090 + $0x2c] sm:$0xf]
      %v6103 = vld [vmem:[%s6090 + $0x30] sm:$0xf]
      %v6104 = vld [vmem:[%s6090 + $0x34] sm:$0xf]
      %v6105 = vld [vmem:[%s6090 + $0x38] sm:$0xf]
      %v6106 = vld [vmem:[%s6090 + $0x3c] sm:$0xf]
      %v6123 = vunpack.c.l.b16 %v6091
      %v6124 = vunpack.c.l.b16 %v6092
      %v6125 = vunpack.c.l.b16 %v6093
      %v6126 = vunpack.c.l.b16 %v6094
      %v6127 = vunpack.c.l.b16 %v6095
      %v6128 = vunpack.c.l.b16 %v6096
      %v6129 = vunpack.c.l.b16 %v6097
      %v6130 = vunpack.c.l.b16 %v6098
      %v6131 = vunpack.c.l.b16 %v6099
      %v6132 = vunpack.c.l.b16 %v6100
      %v6133 = vunpack.c.l.b16 %v6101
      %v6134 = vunpack.c.l.b16 %v6102
      %v6135 = vunpack.c.l.b16 %v6103
      %v6136 = vunpack.c.l.b16 %v6104
      %v6137 = vunpack.c.l.b16 %v6105
      %v6138 = vunpack.c.l.b16 %v6106
      %v6139 = vpack.c.b16 %v6124, %v6123
      %v6140 = vpack.c.b16 %v6126, %v6125
      %v6141 = vpack.c.b16 %v6128, %v6127
      %v6142 = vpack.c.b16 %v6130, %v6129
      %v6143 = vpack.c.b16 %v6132, %v6131
      %v6144 = vpack.c.b16 %v6134, %v6133
      %v6145 = vpack.c.b16 %v6136, %v6135
      %v6146 = vpack.c.b16 %v6138, %v6137
      %6155 = vmatprep.subr.bf16.mxu0 0
      %6156 = vmatpush1.bf16.msra.mxu0 %v6146
      %6157 = vmatprep.subr.bf16.mxu0 0
      %6158 = vmatpush1.bf16.msra.mxu0 %v6145
      %6159 = vmatprep.subr.bf16.mxu0 0
      %6160 = vmatpush1.bf16.msra.mxu0 %v6144
      %6161 = vmatprep.subr.bf16.mxu0 0
      %6162 = vmatpush1.bf16.msra.mxu0 %v6143
      %6163 = vmatprep.subr.bf16.mxu0 0
      %6164 = vmatpush1.bf16.msra.mxu0 %v6142
      %6165 = vmatprep.subr.bf16.mxu0 0
      %6166 = vmatpush1.bf16.msra.mxu0 %v6141
      %6167 = vmatprep.subr.bf16.mxu0 0
      %6168 = vmatpush1.bf16.msra.mxu0 %v6140
      %6169 = vmatprep.subr.bf16.mxu0 0
      %6170 = vmatpush1.bf16.msra.mxu0 %v6139
      %6171 = vmatprep.subr.bf16.mxu0 0
      %6172 = vmatpush2.bf16.msra.mxu0 0
      %6173 = vmatprep.subr.bf16.mxu0 0
      %6174 = vmatpush2.bf16.msra.mxu0 0
      %6175 = vmatprep.subr.bf16.mxu0 0
      %6176 = vmatpush2.bf16.msra.mxu0 0
      %6177 = vmatprep.subr.bf16.mxu0 0
      %6178 = vmatpush2.bf16.msra.mxu0 0
      %6179 = vmatprep.subr.bf16.mxu0 0
      %6180 = vmatpush2.bf16.msra.mxu0 0
      %6181 = vmatprep.subr.bf16.mxu0 0
      %6182 = vmatpush2.bf16.msra.mxu0 0
      %6183 = vmatprep.subr.bf16.mxu0 0
      %6184 = vmatpush2.bf16.msra.mxu0 0
      %6185 = vmatprep.subr.bf16.mxu0 0
      %6186 = vmatpush2.bf16.msra.mxu0 0
      %6187 = vmatprep.mubr.bf16.mxu0 0
      %6188 = vmatmul.mubr.bf16.gmra.mxu0 %v6066
      %v6189 = vpop.f32.mrf.mxu0
      %v6190 = vadd.f32 0.0, %v6189
      %v6191 = vpop.f32.mrf.mxu0
      %v6192 = vpop.f32.mrf.mxu0
      %v6193 = vadd.f32 0.0, %v6192
      %v6194 = vpop.f32.mrf.mxu0
      %6195 = vmatprep.mubr.bf16.mxu0 0
      %6196 = vmatmul.mubr.bf16.gmra.mxu0 %v6067
      %v6197 = vpop.f32.mrf.mxu0
      %v6198 = vadd.f32 0.0, %v6197
      %v6199 = vpop.f32.mrf.mxu0
      %v6200 = vpop.f32.mrf.mxu0
      %v6201 = vadd.f32 0.0, %v6200
      %v6202 = vpop.f32.mrf.mxu0
      %6203 = vmatprep.mubr.bf16.mxu0 0
      %6204 = vmatmul.mubr.bf16.gmra.mxu0 %v6068
      %v6205 = vpop.f32.mrf.mxu0
      %v6206 = vadd.f32 0.0, %v6205
      %v6207 = vpop.f32.mrf.mxu0
      %v6208 = vpop.f32.mrf.mxu0
      %v6209 = vadd.f32 0.0, %v6208
      %v6210 = vpop.f32.mrf.mxu0
      %6211 = vmatprep.mubr.bf16.mxu0 0
      %6212 = vmatmul.mubr.bf16.gmra.mxu0 %v6069
      %v6213 = vpop.f32.mrf.mxu0
      %v6214 = vadd.f32 0.0, %v6213
      %v6215 = vpop.f32.mrf.mxu0
      %v6216 = vpop.f32.mrf.mxu0
      %v6217 = vadd.f32 0.0, %v6216
      %v6218 = vpop.f32.mrf.mxu0
      %6219 = vmatprep.mubr.bf16.mxu0 0
      %6220 = vmatmul.mubr.bf16.gmra.mxu0 %v6070
      %v6221 = vpop.f32.mrf.mxu0
      %v6222 = vadd.f32 0.0, %v6221
      %v6223 = vpop.f32.mrf.mxu0
      %v6224 = vpop.f32.mrf.mxu0
      %v6225 = vadd.f32 0.0, %v6224
      %v6226 = vpop.f32.mrf.mxu0
      %6227 = vmatprep.mubr.bf16.mxu0 0
      %6228 = vmatmul.mubr.bf16.gmra.mxu0 %v6071
      %v6229 = vpop.f32.mrf.mxu0
      %v6230 = vadd.f32 0.0, %v6229
      %v6231 = vpop.f32.mrf.mxu0
      %v6232 = vpop.f32.mrf.mxu0
      %v6233 = vadd.f32 0.0, %v6232
      %v6234 = vpop.f32.mrf.mxu0
      %6235 = vmatprep.mubr.bf16.mxu0 0
      %6236 = vmatmul.mubr.bf16.gmra.mxu0 %v6072
      %v6237 = vpop.f32.mrf.mxu0
      %v6238 = vadd.f32 0.0, %v6237
      %v6239 = vpop.f32.mrf.mxu0
      %v6240 = vpop.f32.mrf.mxu0
      %v6241 = vadd.f32 0.0, %v6240
      %v6242 = vpop.f32.mrf.mxu0
      %6243 = vmatprep.mubr.bf16.mxu0 0
      %6244 = vmatmul.mubr.bf16.gmra.mxu0 %v6073
      %v6245 = vpop.f32.mrf.mxu0
      %v6246 = vadd.f32 0.0, %v6245
      %v6247 = vpop.f32.mrf.mxu0
      %v6248 = vpop.f32.mrf.mxu0
      %v6249 = vadd.f32 0.0, %v6248
      %v6250 = vpop.f32.mrf.mxu0
      %6251 = vmatprep.mubr.bf16.mxu0 0
      %6252 = vmatmul.mubr.bf16.gmra.mxu0 %v6074
      %v6253 = vpop.f32.mrf.mxu0
      %v6254 = vadd.f32 0.0, %v6253
      %v6255 = vpop.f32.mrf.mxu0
      %v6256 = vpop.f32.mrf.mxu0
      %v6257 = vadd.f32 0.0, %v6256
      %v6258 = vpop.f32.mrf.mxu0
      %6259 = vmatprep.mubr.bf16.mxu0 0
      %6260 = vmatmul.mubr.bf16.gmra.mxu0 %v6075
      %v6261 = vpop.f32.mrf.mxu0
      %v6262 = vadd.f32 0.0, %v6261
      %v6263 = vpop.f32.mrf.mxu0
      %v6264 = vpop.f32.mrf.mxu0
      %v6265 = vadd.f32 0.0, %v6264
      %v6266 = vpop.f32.mrf.mxu0
      %6267 = vmatprep.mubr.bf16.mxu0 0
      %6268 = vmatmul.mubr.bf16.gmra.mxu0 %v6076
      %v6269 = vpop.f32.mrf.mxu0
      %v6270 = vadd.f32 0.0, %v6269
      %v6271 = vpop.f32.mrf.mxu0
      %v6272 = vpop.f32.mrf.mxu0
      %v6273 = vadd.f32 0.0, %v6272
      %v6274 = vpop.f32.mrf.mxu0
      %6275 = vmatprep.mubr.bf16.mxu0 0
      %6276 = vmatmul.mubr.bf16.gmra.mxu0 %v6077
      %v6277 = vpop.f32.mrf.mxu0
      %v6278 = vadd.f32 0.0, %v6277
      %v6279 = vpop.f32.mrf.mxu0
      %v6280 = vpop.f32.mrf.mxu0
      %v6281 = vadd.f32 0.0, %v6280
      %v6282 = vpop.f32.mrf.mxu0
      %6283 = vmatprep.mubr.bf16.mxu0 0
      %6284 = vmatmul.mubr.bf16.gmra.mxu0 %v6078
      %v6285 = vpop.f32.mrf.mxu0
      %v6286 = vadd.f32 0.0, %v6285
      %v6287 = vpop.f32.mrf.mxu0
      %v6288 = vpop.f32.mrf.mxu0
      %v6289 = vadd.f32 0.0, %v6288
      %v6290 = vpop.f32.mrf.mxu0
      %6291 = vmatprep.mubr.bf16.mxu0 0
      %6292 = vmatmul.mubr.bf16.gmra.mxu0 %v6079
      %v6293 = vpop.f32.mrf.mxu0
      %v6294 = vadd.f32 0.0, %v6293
      %v6295 = vpop.f32.mrf.mxu0
      %v6296 = vpop.f32.mrf.mxu0
      %v6297 = vadd.f32 0.0, %v6296
      %v6298 = vpop.f32.mrf.mxu0
      %6299 = vmatprep.mubr.bf16.mxu0 0
      %6300 = vmatmul.mubr.bf16.gmra.mxu0 %v6080
      %v6301 = vpop.f32.mrf.mxu0
      %v6302 = vadd.f32 0.0, %v6301
      %v6303 = vpop.f32.mrf.mxu0
      %v6304 = vpop.f32.mrf.mxu0
      %v6305 = vadd.f32 0.0, %v6304
      %v6306 = vpop.f32.mrf.mxu0
      %6307 = vmatprep.mubr.bf16.mxu0 0
      %6308 = vmatmul.mubr.bf16.gmra.mxu0 %v6081
      %v6309 = vpop.f32.mrf.mxu0
      %v6310 = vadd.f32 0.0, %v6309
      %v6311 = vpop.f32.mrf.mxu0
      %v6312 = vpop.f32.mrf.mxu0
      %v6313 = vadd.f32 0.0, %v6312
      %v6314 = vpop.f32.mrf.mxu0
      %6315 = vmatprep.mubr.bf16.mxu0 0
      %6316 = vmatmul.mubr.bf16.gmra.mxu0 %v6082
      %v6317 = vpop.f32.mrf.mxu0
      %v6318 = vadd.f32 0.0, %v6317
      %v6319 = vpop.f32.mrf.mxu0
      %v6320 = vpop.f32.mrf.mxu0
      %v6321 = vadd.f32 0.0, %v6320
      %v6322 = vpop.f32.mrf.mxu0
      %6323 = vmatprep.mubr.bf16.mxu0 0
      %6324 = vmatmul.mubr.bf16.gmra.mxu0 %v6083
      %v6325 = vpop.f32.mrf.mxu0
      %v6326 = vadd.f32 0.0, %v6325
      %v6327 = vpop.f32.mrf.mxu0
      %v6328 = vpop.f32.mrf.mxu0
      %v6329 = vadd.f32 0.0, %v6328
      %v6330 = vpop.f32.mrf.mxu0
      %6331 = vmatprep.mubr.bf16.mxu0 0
      %6332 = vmatmul.mubr.bf16.gmra.mxu0 %v6084
      %v6333 = vpop.f32.mrf.mxu0
      %v6334 = vadd.f32 0.0, %v6333
      %v6335 = vpop.f32.mrf.mxu0
      %v6336 = vpop.f32.mrf.mxu0
      %v6337 = vadd.f32 0.0, %v6336
      %v6338 = vpop.f32.mrf.mxu0
      %6339 = vmatprep.mubr.bf16.mxu0 0
      %6340 = vmatmul.mubr.bf16.gmra.mxu0 %v6085
      %v6341 = vpop.f32.mrf.mxu0
      %v6342 = vadd.f32 0.0, %v6341
      %v6343 = vpop.f32.mrf.mxu0
      %v6344 = vpop.f32.mrf.mxu0
      %v6345 = vadd.f32 0.0, %v6344
      %v6346 = vpop.f32.mrf.mxu0
      %6347 = vmatprep.mubr.bf16.mxu0 0
      %6348 = vmatmul.mubr.bf16.gmra.mxu0 %v6086
      %v6349 = vpop.f32.mrf.mxu0
      %v6350 = vadd.f32 0.0, %v6349
      %v6351 = vpop.f32.mrf.mxu0
      %v6352 = vpop.f32.mrf.mxu0
      %v6353 = vadd.f32 0.0, %v6352
      %v6354 = vpop.f32.mrf.mxu0
      %6355 = vmatprep.mubr.bf16.mxu0 0
      %6356 = vmatmul.mubr.bf16.gmra.mxu0 %v6087
      %v6357 = vpop.f32.mrf.mxu0
      %v6358 = vadd.f32 0.0, %v6357
      %v6359 = vpop.f32.mrf.mxu0
      %v6360 = vpop.f32.mrf.mxu0
      %v6361 = vadd.f32 0.0, %v6360
      %v6362 = vpop.f32.mrf.mxu0
      %6363 = vmatprep.mubr.bf16.mxu0 0
      %6364 = vmatmul.mubr.bf16.gmra.mxu0 %v6088
      %v6365 = vpop.f32.mrf.mxu0
      %v6366 = vadd.f32 0.0, %v6365
      %v6367 = vpop.f32.mrf.mxu0
      %v6368 = vpop.f32.mrf.mxu0
      %v6369 = vadd.f32 0.0, %v6368
      %v6370 = vpop.f32.mrf.mxu0
      %6371 = vmatprep.mubr.bf16.mxu0 0
      %6372 = vmatmul.mubr.bf16.gmra.mxu0 %v6089
      %v6373 = vpop.f32.mrf.mxu0
      %v6374 = vadd.f32 0.0, %v6373
      %v6375 = vpop.f32.mrf.mxu0
      %v6376 = vpop.f32.mrf.mxu0
      %v6377 = vadd.f32 0.0, %v6376
      %v6378 = vpop.f32.mrf.mxu0
      %6379 = vdwg.mxu0
      %v6396 = vunpack.c.l.b16 %v6002
      %v6397 = vunpack.c.l.b16 %v6003
      %v6398 = vunpack.c.l.b16 %v6004
      %v6399 = vunpack.c.l.b16 %v6005
      %v6400 = vunpack.c.l.b16 %v6006
      %v6401 = vunpack.c.l.b16 %v6007
      %v6402 = vunpack.c.l.b16 %v6008
      %v6403 = vunpack.c.l.b16 %v6009
      %v6404 = vunpack.c.l.b16 %v6010
      %v6405 = vunpack.c.l.b16 %v6011
      %v6406 = vunpack.c.l.b16 %v6012
      %v6407 = vunpack.c.l.b16 %v6013
      %v6408 = vunpack.c.l.b16 %v6014
      %v6409 = vunpack.c.l.b16 %v6015
      %v6410 = vunpack.c.l.b16 %v6016
      %v6411 = vunpack.c.l.b16 %v6017
      %v6412 = vpack.c.b16 %v6397, %v6396
      %v6413 = vpack.c.b16 %v6399, %v6398
      %v6414 = vpack.c.b16 %v6401, %v6400
      %v6415 = vpack.c.b16 %v6403, %v6402
      %v6416 = vpack.c.b16 %v6405, %v6404
      %v6417 = vpack.c.b16 %v6407, %v6406
      %v6418 = vpack.c.b16 %v6409, %v6408
      %v6419 = vpack.c.b16 %v6411, %v6410
      %6428 = vmatprep.subr.bf16.mxu0 0
      %6429 = vmatpush1.bf16.msra.mxu0 %v6419
      %6430 = vmatprep.subr.bf16.mxu0 0
      %6431 = vmatpush1.bf16.msra.mxu0 %v6418
      %6432 = vmatprep.subr.bf16.mxu0 0
      %6433 = vmatpush1.bf16.msra.mxu0 %v6417
      %6434 = vmatprep.subr.bf16.mxu0 0
      %6435 = vmatpush1.bf16.msra.mxu0 %v6416
      %6436 = vmatprep.subr.bf16.mxu0 0
      %6437 = vmatpush1.bf16.msra.mxu0 %v6415
      %6438 = vmatprep.subr.bf16.mxu0 0
      %6439 = vmatpush1.bf16.msra.mxu0 %v6414
      %6440 = vmatprep.subr.bf16.mxu0 0
      %6441 = vmatpush1.bf16.msra.mxu0 %v6413
      %6442 = vmatprep.subr.bf16.mxu0 0
      %6443 = vmatpush1.bf16.msra.mxu0 %v6412
      %6444 = vmatprep.subr.bf16.mxu0 0
      %6445 = vmatpush2.bf16.msra.mxu0 0
      %6446 = vmatprep.subr.bf16.mxu0 0
      %6447 = vmatpush2.bf16.msra.mxu0 0
      %6448 = vmatprep.subr.bf16.mxu0 0
      %6449 = vmatpush2.bf16.msra.mxu0 0
      %6450 = vmatprep.subr.bf16.mxu0 0
      %6451 = vmatpush2.bf16.msra.mxu0 0
      %6452 = vmatprep.subr.bf16.mxu0 0
      %6453 = vmatpush2.bf16.msra.mxu0 0
      %6454 = vmatprep.subr.bf16.mxu0 0
      %6455 = vmatpush2.bf16.msra.mxu0 0
      %6456 = vmatprep.subr.bf16.mxu0 0
      %6457 = vmatpush2.bf16.msra.mxu0 0
      %6458 = vmatprep.subr.bf16.mxu0 0
      %6459 = vmatpush2.bf16.msra.mxu0 0
      %6460 = vmatprep.mubr.bf16.mxu0 0
      %6461 = vmatmul.mubr.bf16.gmra.mxu0 %v5977
      %v6462 = vpop.f32.mrf.mxu0
      %v6463 = vadd.f32 %v6190, %v6462
      %v6464 = vpop.f32.mrf.mxu0
      %v6465 = vpop.f32.mrf.mxu0
      %v6466 = vadd.f32 %v6193, %v6465
      %v6467 = vpop.f32.mrf.mxu0
      %6468 = vmatprep.mubr.bf16.mxu0 0
      %6469 = vmatmul.mubr.bf16.gmra.mxu0 %v5978
      %v6470 = vpop.f32.mrf.mxu0
      %v6471 = vadd.f32 %v6198, %v6470
      %v6472 = vpop.f32.mrf.mxu0
      %v6473 = vpop.f32.mrf.mxu0
      %v6474 = vadd.f32 %v6201, %v6473
      %v6475 = vpop.f32.mrf.mxu0
      %6476 = vmatprep.mubr.bf16.mxu0 0
      %6477 = vmatmul.mubr.bf16.gmra.mxu0 %v5979
      %v6478 = vpop.f32.mrf.mxu0
      %v6479 = vadd.f32 %v6206, %v6478
      %v6480 = vpop.f32.mrf.mxu0
      %v6481 = vpop.f32.mrf.mxu0
      %v6482 = vadd.f32 %v6209, %v6481
      %v6483 = vpop.f32.mrf.mxu0
      %6484 = vmatprep.mubr.bf16.mxu0 0
      %6485 = vmatmul.mubr.bf16.gmra.mxu0 %v5980
      %v6486 = vpop.f32.mrf.mxu0
      %v6487 = vadd.f32 %v6214, %v6486
      %v6488 = vpop.f32.mrf.mxu0
      %v6489 = vpop.f32.mrf.mxu0
      %v6490 = vadd.f32 %v6217, %v6489
      %v6491 = vpop.f32.mrf.mxu0
      %6492 = vmatprep.mubr.bf16.mxu0 0
      %6493 = vmatmul.mubr.bf16.gmra.mxu0 %v5981
      %v6494 = vpop.f32.mrf.mxu0
      %v6495 = vadd.f32 %v6222, %v6494
      %v6496 = vpop.f32.mrf.mxu0
      %v6497 = vpop.f32.mrf.mxu0
      %v6498 = vadd.f32 %v6225, %v6497
      %v6499 = vpop.f32.mrf.mxu0
      %6500 = vmatprep.mubr.bf16.mxu0 0
      %6501 = vmatmul.mubr.bf16.gmra.mxu0 %v5982
      %v6502 = vpop.f32.mrf.mxu0
      %v6503 = vadd.f32 %v6230, %v6502
      %v6504 = vpop.f32.mrf.mxu0
      %v6505 = vpop.f32.mrf.mxu0
      %v6506 = vadd.f32 %v6233, %v6505
      %v6507 = vpop.f32.mrf.mxu0
      %6508 = vmatprep.mubr.bf16.mxu0 0
      %6509 = vmatmul.mubr.bf16.gmra.mxu0 %v5983
      %v6510 = vpop.f32.mrf.mxu0
      %v6511 = vadd.f32 %v6238, %v6510
      %v6512 = vpop.f32.mrf.mxu0
      %v6513 = vpop.f32.mrf.mxu0
      %v6514 = vadd.f32 %v6241, %v6513
      %v6515 = vpop.f32.mrf.mxu0
      %6516 = vmatprep.mubr.bf16.mxu0 0
      %6517 = vmatmul.mubr.bf16.gmra.mxu0 %v5984
      %v6518 = vpop.f32.mrf.mxu0
      %v6519 = vadd.f32 %v6246, %v6518
      %v6520 = vpop.f32.mrf.mxu0
      %v6521 = vpop.f32.mrf.mxu0
      %v6522 = vadd.f32 %v6249, %v6521
      %v6523 = vpop.f32.mrf.mxu0
      %6524 = vmatprep.mubr.bf16.mxu0 0
      %6525 = vmatmul.mubr.bf16.gmra.mxu0 %v5985
      %v6526 = vpop.f32.mrf.mxu0
      %v6527 = vadd.f32 %v6254, %v6526
      %v6528 = vpop.f32.mrf.mxu0
      %v6529 = vpop.f32.mrf.mxu0
      %v6530 = vadd.f32 %v6257, %v6529
      %v6531 = vpop.f32.mrf.mxu0
      %6532 = vmatprep.mubr.bf16.mxu0 0
      %6533 = vmatmul.mubr.bf16.gmra.mxu0 %v5986
      %v6534 = vpop.f32.mrf.mxu0
      %v6535 = vadd.f32 %v6262, %v6534
      %v6536 = vpop.f32.mrf.mxu0
      %v6537 = vpop.f32.mrf.mxu0
      %v6538 = vadd.f32 %v6265, %v6537
      %v6539 = vpop.f32.mrf.mxu0
      %6540 = vmatprep.mubr.bf16.mxu0 0
      %6541 = vmatmul.mubr.bf16.gmra.mxu0 %v5987
      %v6542 = vpop.f32.mrf.mxu0
      %v6543 = vadd.f32 %v6270, %v6542
      %v6544 = vpop.f32.mrf.mxu0
      %v6545 = vpop.f32.mrf.mxu0
      %v6546 = vadd.f32 %v6273, %v6545
      %v6547 = vpop.f32.mrf.mxu0
      %6548 = vmatprep.mubr.bf16.mxu0 0
      %6549 = vmatmul.mubr.bf16.gmra.mxu0 %v5988
      %v6550 = vpop.f32.mrf.mxu0
      %v6551 = vadd.f32 %v6278, %v6550
      %v6552 = vpop.f32.mrf.mxu0
      %v6553 = vpop.f32.mrf.mxu0
      %v6554 = vadd.f32 %v6281, %v6553
      %v6555 = vpop.f32.mrf.mxu0
      %6556 = vmatprep.mubr.bf16.mxu0 0
      %6557 = vmatmul.mubr.bf16.gmra.mxu0 %v5989
      %v6558 = vpop.f32.mrf.mxu0
      %v6559 = vadd.f32 %v6286, %v6558
      %v6560 = vpop.f32.mrf.mxu0
      %v6561 = vpop.f32.mrf.mxu0
      %v6562 = vadd.f32 %v6289, %v6561
      %v6563 = vpop.f32.mrf.mxu0
      %6564 = vmatprep.mubr.bf16.mxu0 0
      %6565 = vmatmul.mubr.bf16.gmra.mxu0 %v5990
      %v6566 = vpop.f32.mrf.mxu0
      %v6567 = vadd.f32 %v6294, %v6566
      %v6568 = vpop.f32.mrf.mxu0
      %v6569 = vpop.f32.mrf.mxu0
      %v6570 = vadd.f32 %v6297, %v6569
      %v6571 = vpop.f32.mrf.mxu0
      %6572 = vmatprep.mubr.bf16.mxu0 0
      %6573 = vmatmul.mubr.bf16.gmra.mxu0 %v5991
      %v6574 = vpop.f32.mrf.mxu0
      %v6575 = vadd.f32 %v6302, %v6574
      %v6576 = vpop.f32.mrf.mxu0
      %v6577 = vpop.f32.mrf.mxu0
      %v6578 = vadd.f32 %v6305, %v6577
      %v6579 = vpop.f32.mrf.mxu0
      %6580 = vmatprep.mubr.bf16.mxu0 0
      %6581 = vmatmul.mubr.bf16.gmra.mxu0 %v5992
      %v6582 = vpop.f32.mrf.mxu0
      %v6583 = vadd.f32 %v6310, %v6582
      %v6584 = vpop.f32.mrf.mxu0
      %v6585 = vpop.f32.mrf.mxu0
      %v6586 = vadd.f32 %v6313, %v6585
      %v6587 = vpop.f32.mrf.mxu0
      %6588 = vmatprep.mubr.bf16.mxu0 0
      %6589 = vmatmul.mubr.bf16.gmra.mxu0 %v5993
      %v6590 = vpop.f32.mrf.mxu0
      %v6591 = vadd.f32 %v6318, %v6590
      %v6592 = vpop.f32.mrf.mxu0
      %v6593 = vpop.f32.mrf.mxu0
      %v6594 = vadd.f32 %v6321, %v6593
      %v6595 = vpop.f32.mrf.mxu0
      %6596 = vmatprep.mubr.bf16.mxu0 0
      %6597 = vmatmul.mubr.bf16.gmra.mxu0 %v5994
      %v6598 = vpop.f32.mrf.mxu0
      %v6599 = vadd.f32 %v6326, %v6598
      %v6600 = vpop.f32.mrf.mxu0
      %v6601 = vpop.f32.mrf.mxu0
      %v6602 = vadd.f32 %v6329, %v6601
      %v6603 = vpop.f32.mrf.mxu0
      %6604 = vmatprep.mubr.bf16.mxu0 0
      %6605 = vmatmul.mubr.bf16.gmra.mxu0 %v5995
      %v6606 = vpop.f32.mrf.mxu0
      %v6607 = vadd.f32 %v6334, %v6606
      %v6608 = vpop.f32.mrf.mxu0
      %v6609 = vpop.f32.mrf.mxu0
      %v6610 = vadd.f32 %v6337, %v6609
      %v6611 = vpop.f32.mrf.mxu0
      %6612 = vmatprep.mubr.bf16.mxu0 0
      %6613 = vmatmul.mubr.bf16.gmra.mxu0 %v5996
      %v6614 = vpop.f32.mrf.mxu0
      %v6615 = vadd.f32 %v6342, %v6614
      %v6616 = vpop.f32.mrf.mxu0
      %v6617 = vpop.f32.mrf.mxu0
      %v6618 = vadd.f32 %v6345, %v6617
      %v6619 = vpop.f32.mrf.mxu0
      %6620 = vmatprep.mubr.bf16.mxu0 0
      %6621 = vmatmul.mubr.bf16.gmra.mxu0 %v5997
      %v6622 = vpop.f32.mrf.mxu0
      %v6623 = vadd.f32 %v6350, %v6622
      %v6624 = vpop.f32.mrf.mxu0
      %v6625 = vpop.f32.mrf.mxu0
      %v6626 = vadd.f32 %v6353, %v6625
      %v6627 = vpop.f32.mrf.mxu0
      %6628 = vmatprep.mubr.bf16.mxu0 0
      %6629 = vmatmul.mubr.bf16.gmra.mxu0 %v5998
      %v6630 = vpop.f32.mrf.mxu0
      %v6631 = vadd.f32 %v6358, %v6630
      %v6632 = vpop.f32.mrf.mxu0
      %v6633 = vpop.f32.mrf.mxu0
      %v6634 = vadd.f32 %v6361, %v6633
      %v6635 = vpop.f32.mrf.mxu0
      %6636 = vmatprep.mubr.bf16.mxu0 0
      %6637 = vmatmul.mubr.bf16.gmra.mxu0 %v5999
      %v6638 = vpop.f32.mrf.mxu0
      %v6639 = vadd.f32 %v6366, %v6638
      %v6640 = vpop.f32.mrf.mxu0
      %v6641 = vpop.f32.mrf.mxu0
      %v6642 = vadd.f32 %v6369, %v6641
      %v6643 = vpop.f32.mrf.mxu0
      %6644 = vmatprep.mubr.bf16.mxu0 0
      %6645 = vmatmul.mubr.bf16.gmra.mxu0 %v6000
      %v6646 = vpop.f32.mrf.mxu0
      %v6647 = vadd.f32 %v6374, %v6646
      %v6648 = vpop.f32.mrf.mxu0
      %v6649 = vpop.f32.mrf.mxu0
      %v6650 = vadd.f32 %v6377, %v6649
      %v6651 = vpop.f32.mrf.mxu0
      %6652 = vdwg.mxu0
      %v6653 = vld [vmem:[#allocation2 + $0x21] sm:$0xff]
      %v6654 = vld [vmem:[#allocation2 + $0x29] sm:$0xff]
      %v6655 = vld [vmem:[#allocation2 + $0x31] sm:$0xff]
      %v6656 = vld [vmem:[#allocation2 + $0x39] sm:$0xff]
      %v6657 = vld [vmem:[#allocation2 + $0x41] sm:$0xff]
      %v6658 = vld [vmem:[#allocation2 + $0x49] sm:$0xff]
      %v6659 = vld [vmem:[#allocation2 + $0x51] sm:$0xff]
      %v6660 = vld [vmem:[#allocation2 + $0x59] sm:$0xff]
      %v6661 = vld [vmem:[#allocation2 + $0x61] sm:$0xff]
      %v6662 = vld [vmem:[#allocation2 + $0x69] sm:$0xff]
      %v6663 = vld [vmem:[#allocation2 + $0x71] sm:$0xff]
      %v6664 = vld [vmem:[#allocation2 + $0x79] sm:$0xff]
      %v6665 = vld [vmem:[#allocation2 + $0x81] sm:$0xff]
      %v6666 = vld [vmem:[#allocation2 + $0x89] sm:$0xff]
      %v6667 = vld [vmem:[#allocation2 + $0x91] sm:$0xff]
      %v6668 = vld [vmem:[#allocation2 + $0x99] sm:$0xff]
      %v6669 = vld [vmem:[#allocation2 + $0xa1] sm:$0xff]
      %v6670 = vld [vmem:[#allocation2 + $0xa9] sm:$0xff]
      %v6671 = vld [vmem:[#allocation2 + $0xb1] sm:$0xff]
      %v6672 = vld [vmem:[#allocation2 + $0xb9] sm:$0xff]
      %v6673 = vld [vmem:[#allocation2 + $0xc1] sm:$0xff]
      %v6674 = vld [vmem:[#allocation2 + $0xc9] sm:$0xff]
      %v6675 = vld [vmem:[#allocation2 + $0xd1] sm:$0xff]
      %v6676 = vld [vmem:[#allocation2 + $0xd9] sm:$0xff]
      %v6677 = vld [vmem:[#allocation2 + $0xe1] sm:$0xff]
      %v6678 = vld [vmem:[#allocation2 + $0xe9] sm:$0xff]
      %v6679 = vld [vmem:[#allocation2 + $0xf1] sm:$0xff]
      %v6680 = vld [vmem:[#allocation2 + $0xf9] sm:$0xff]
      %v6681 = vld [vmem:[#allocation2 + $0x101] sm:$0xff]
      %v6682 = vld [vmem:[#allocation2 + $0x109] sm:$0xff]
      %v6683 = vld [vmem:[#allocation2 + $0x111] sm:$0xff]
      %v6684 = vld [vmem:[#allocation2 + $0x119] sm:$0xff]
      %v6685 = vld [vmem:[#allocation2 + $0x121] sm:$0xff]
      %v6686 = vld [vmem:[#allocation2 + $0x129] sm:$0xff]
      %v6687 = vld [vmem:[#allocation2 + $0x131] sm:$0xff]
      %v6688 = vld [vmem:[#allocation2 + $0x139] sm:$0xff]
      %v6689 = vld [vmem:[#allocation2 + $0x141] sm:$0xff]
      %v6690 = vld [vmem:[#allocation2 + $0x149] sm:$0xff]
      %v6691 = vld [vmem:[#allocation2 + $0x151] sm:$0xff]
      %v6692 = vld [vmem:[#allocation2 + $0x159] sm:$0xff]
      %v6693 = vld [vmem:[#allocation2 + $0x161] sm:$0xff]
      %v6694 = vld [vmem:[#allocation2 + $0x169] sm:$0xff]
      %v6695 = vld [vmem:[#allocation2 + $0x171] sm:$0xff]
      %v6696 = vld [vmem:[#allocation2 + $0x179] sm:$0xff]
      %v6697 = vld [vmem:[#allocation2 + $0x181] sm:$0xff]
      %v6698 = vld [vmem:[#allocation2 + $0x189] sm:$0xff]
      %v6699 = vld [vmem:[#allocation2 + $0x191] sm:$0xff]
      %v6700 = vld [vmem:[#allocation2 + $0x199] sm:$0xff]
      %v6701 = vpack.c.bf16 %v6654, %v6653
      %v6702 = vpack.c.bf16 %v6656, %v6655
      %v6703 = vpack.c.bf16 %v6658, %v6657
      %v6704 = vpack.c.bf16 %v6660, %v6659
      %v6705 = vpack.c.bf16 %v6662, %v6661
      %v6706 = vpack.c.bf16 %v6664, %v6663
      %v6707 = vpack.c.bf16 %v6666, %v6665
      %v6708 = vpack.c.bf16 %v6668, %v6667
      %v6709 = vpack.c.bf16 %v6670, %v6669
      %v6710 = vpack.c.bf16 %v6672, %v6671
      %v6711 = vpack.c.bf16 %v6674, %v6673
      %v6712 = vpack.c.bf16 %v6676, %v6675
      %v6713 = vpack.c.bf16 %v6678, %v6677
      %v6714 = vpack.c.bf16 %v6680, %v6679
      %v6715 = vpack.c.bf16 %v6682, %v6681
      %v6716 = vpack.c.bf16 %v6684, %v6683
      %v6717 = vpack.c.bf16 %v6686, %v6685
      %v6718 = vpack.c.bf16 %v6688, %v6687
      %v6719 = vpack.c.bf16 %v6690, %v6689
      %v6720 = vpack.c.bf16 %v6692, %v6691
      %v6721 = vpack.c.bf16 %v6694, %v6693
      %v6722 = vpack.c.bf16 %v6696, %v6695
      %v6723 = vpack.c.bf16 %v6698, %v6697
      %v6724 = vpack.c.bf16 %v6700, %v6699
      %s6725 = scalar_lea.vmem %s4, 320
      %v6726 = vld [vmem:[%s6725] sm:$0xf]
      %v6727 = vld [vmem:[%s6725 + $0x4] sm:$0xf]
      %v6728 = vld [vmem:[%s6725 + $0x8] sm:$0xf]
      %v6729 = vld [vmem:[%s6725 + $0xc] sm:$0xf]
      %v6730 = vld [vmem:[%s6725 + $0x10] sm:$0xf]
      %v6731 = vld [vmem:[%s6725 + $0x14] sm:$0xf]
      %v6732 = vld [vmem:[%s6725 + $0x18] sm:$0xf]
      %v6733 = vld [vmem:[%s6725 + $0x1c] sm:$0xf]
      %v6734 = vld [vmem:[%s6725 + $0x20] sm:$0xf]
      %v6735 = vld [vmem:[%s6725 + $0x24] sm:$0xf]
      %v6736 = vld [vmem:[%s6725 + $0x28] sm:$0xf]
      %v6737 = vld [vmem:[%s6725 + $0x2c] sm:$0xf]
      %v6738 = vld [vmem:[%s6725 + $0x30] sm:$0xf]
      %v6739 = vld [vmem:[%s6725 + $0x34] sm:$0xf]
      %v6740 = vld [vmem:[%s6725 + $0x38] sm:$0xf]
      %v6741 = vld [vmem:[%s6725 + $0x3c] sm:$0xf]
      %v6758 = vunpack.c.l.b16 %v6726
      %v6759 = vunpack.c.l.b16 %v6727
      %v6760 = vunpack.c.l.b16 %v6728
      %v6761 = vunpack.c.l.b16 %v6729
      %v6762 = vunpack.c.l.b16 %v6730
      %v6763 = vunpack.c.l.b16 %v6731
      %v6764 = vunpack.c.l.b16 %v6732
      %v6765 = vunpack.c.l.b16 %v6733
      %v6766 = vunpack.c.l.b16 %v6734
      %v6767 = vunpack.c.l.b16 %v6735
      %v6768 = vunpack.c.l.b16 %v6736
      %v6769 = vunpack.c.l.b16 %v6737
      %v6770 = vunpack.c.l.b16 %v6738
      %v6771 = vunpack.c.l.b16 %v6739
      %v6772 = vunpack.c.l.b16 %v6740
      %v6773 = vunpack.c.l.b16 %v6741
      %v6774 = vpack.c.b16 %v6759, %v6758
      %v6775 = vpack.c.b16 %v6761, %v6760
      %v6776 = vpack.c.b16 %v6763, %v6762
      %v6777 = vpack.c.b16 %v6765, %v6764
      %v6778 = vpack.c.b16 %v6767, %v6766
      %v6779 = vpack.c.b16 %v6769, %v6768
      %v6780 = vpack.c.b16 %v6771, %v6770
      %v6781 = vpack.c.b16 %v6773, %v6772
      %6790 = vmatprep.subr.bf16.mxu0 0
      %6791 = vmatpush1.bf16.msra.mxu0 %v6781
      %6792 = vmatprep.subr.bf16.mxu0 0
      %6793 = vmatpush1.bf16.msra.mxu0 %v6780
      %6794 = vmatprep.subr.bf16.mxu0 0
      %6795 = vmatpush1.bf16.msra.mxu0 %v6779
      %6796 = vmatprep.subr.bf16.mxu0 0
      %6797 = vmatpush1.bf16.msra.mxu0 %v6778
      %6798 = vmatprep.subr.bf16.mxu0 0
      %6799 = vmatpush1.bf16.msra.mxu0 %v6777
      %6800 = vmatprep.subr.bf16.mxu0 0
      %6801 = vmatpush1.bf16.msra.mxu0 %v6776
      %6802 = vmatprep.subr.bf16.mxu0 0
      %6803 = vmatpush1.bf16.msra.mxu0 %v6775
      %6804 = vmatprep.subr.bf16.mxu0 0
      %6805 = vmatpush1.bf16.msra.mxu0 %v6774
      %6806 = vmatprep.subr.bf16.mxu0 0
      %6807 = vmatpush2.bf16.msra.mxu0 0
      %6808 = vmatprep.subr.bf16.mxu0 0
      %6809 = vmatpush2.bf16.msra.mxu0 0
      %6810 = vmatprep.subr.bf16.mxu0 0
      %6811 = vmatpush2.bf16.msra.mxu0 0
      %6812 = vmatprep.subr.bf16.mxu0 0
      %6813 = vmatpush2.bf16.msra.mxu0 0
      %6814 = vmatprep.subr.bf16.mxu0 0
      %6815 = vmatpush2.bf16.msra.mxu0 0
      %6816 = vmatprep.subr.bf16.mxu0 0
      %6817 = vmatpush2.bf16.msra.mxu0 0
      %6818 = vmatprep.subr.bf16.mxu0 0
      %6819 = vmatpush2.bf16.msra.mxu0 0
      %6820 = vmatprep.subr.bf16.mxu0 0
      %6821 = vmatpush2.bf16.msra.mxu0 0
      %6822 = vmatprep.mubr.bf16.mxu0 0
      %6823 = vmatmul.mubr.bf16.gmra.mxu0 %v6701
      %v6824 = vpop.f32.mrf.mxu0
      %v6825 = vadd.f32 0.0, %v6824
      %v6826 = vpop.f32.mrf.mxu0
      %v6827 = vpop.f32.mrf.mxu0
      %v6828 = vadd.f32 0.0, %v6827
      %v6829 = vpop.f32.mrf.mxu0
      %6830 = vmatprep.mubr.bf16.mxu0 0
      %6831 = vmatmul.mubr.bf16.gmra.mxu0 %v6702
      %v6832 = vpop.f32.mrf.mxu0
      %v6833 = vadd.f32 0.0, %v6832
      %v6834 = vpop.f32.mrf.mxu0
      %v6835 = vpop.f32.mrf.mxu0
      %v6836 = vadd.f32 0.0, %v6835
      %v6837 = vpop.f32.mrf.mxu0
      %6838 = vmatprep.mubr.bf16.mxu0 0
      %6839 = vmatmul.mubr.bf16.gmra.mxu0 %v6703
      %v6840 = vpop.f32.mrf.mxu0
      %v6841 = vadd.f32 0.0, %v6840
      %v6842 = vpop.f32.mrf.mxu0
      %v6843 = vpop.f32.mrf.mxu0
      %v6844 = vadd.f32 0.0, %v6843
      %v6845 = vpop.f32.mrf.mxu0
      %6846 = vmatprep.mubr.bf16.mxu0 0
      %6847 = vmatmul.mubr.bf16.gmra.mxu0 %v6704
      %v6848 = vpop.f32.mrf.mxu0
      %v6849 = vadd.f32 0.0, %v6848
      %v6850 = vpop.f32.mrf.mxu0
      %v6851 = vpop.f32.mrf.mxu0
      %v6852 = vadd.f32 0.0, %v6851
      %v6853 = vpop.f32.mrf.mxu0
      %6854 = vmatprep.mubr.bf16.mxu0 0
      %6855 = vmatmul.mubr.bf16.gmra.mxu0 %v6705
      %v6856 = vpop.f32.mrf.mxu0
      %v6857 = vadd.f32 0.0, %v6856
      %v6858 = vpop.f32.mrf.mxu0
      %v6859 = vpop.f32.mrf.mxu0
      %v6860 = vadd.f32 0.0, %v6859
      %v6861 = vpop.f32.mrf.mxu0
      %6862 = vmatprep.mubr.bf16.mxu0 0
      %6863 = vmatmul.mubr.bf16.gmra.mxu0 %v6706
      %v6864 = vpop.f32.mrf.mxu0
      %v6865 = vadd.f32 0.0, %v6864
      %v6866 = vpop.f32.mrf.mxu0
      %v6867 = vpop.f32.mrf.mxu0
      %v6868 = vadd.f32 0.0, %v6867
      %v6869 = vpop.f32.mrf.mxu0
      %6870 = vmatprep.mubr.bf16.mxu0 0
      %6871 = vmatmul.mubr.bf16.gmra.mxu0 %v6707
      %v6872 = vpop.f32.mrf.mxu0
      %v6873 = vadd.f32 0.0, %v6872
      %v6874 = vpop.f32.mrf.mxu0
      %v6875 = vpop.f32.mrf.mxu0
      %v6876 = vadd.f32 0.0, %v6875
      %v6877 = vpop.f32.mrf.mxu0
      %6878 = vmatprep.mubr.bf16.mxu0 0
      %6879 = vmatmul.mubr.bf16.gmra.mxu0 %v6708
      %v6880 = vpop.f32.mrf.mxu0
      %v6881 = vadd.f32 0.0, %v6880
      %v6882 = vpop.f32.mrf.mxu0
      %v6883 = vpop.f32.mrf.mxu0
      %v6884 = vadd.f32 0.0, %v6883
      %v6885 = vpop.f32.mrf.mxu0
      %6886 = vmatprep.mubr.bf16.mxu0 0
      %6887 = vmatmul.mubr.bf16.gmra.mxu0 %v6709
      %v6888 = vpop.f32.mrf.mxu0
      %v6889 = vadd.f32 0.0, %v6888
      %v6890 = vpop.f32.mrf.mxu0
      %v6891 = vpop.f32.mrf.mxu0
      %v6892 = vadd.f32 0.0, %v6891
      %v6893 = vpop.f32.mrf.mxu0
      %6894 = vmatprep.mubr.bf16.mxu0 0
      %6895 = vmatmul.mubr.bf16.gmra.mxu0 %v6710
      %v6896 = vpop.f32.mrf.mxu0
      %v6897 = vadd.f32 0.0, %v6896
      %v6898 = vpop.f32.mrf.mxu0
      %v6899 = vpop.f32.mrf.mxu0
      %v6900 = vadd.f32 0.0, %v6899
      %v6901 = vpop.f32.mrf.mxu0
      %6902 = vmatprep.mubr.bf16.mxu0 0
      %6903 = vmatmul.mubr.bf16.gmra.mxu0 %v6711
      %v6904 = vpop.f32.mrf.mxu0
      %v6905 = vadd.f32 0.0, %v6904
      %v6906 = vpop.f32.mrf.mxu0
      %v6907 = vpop.f32.mrf.mxu0
      %v6908 = vadd.f32 0.0, %v6907
      %v6909 = vpop.f32.mrf.mxu0
      %6910 = vmatprep.mubr.bf16.mxu0 0
      %6911 = vmatmul.mubr.bf16.gmra.mxu0 %v6712
      %v6912 = vpop.f32.mrf.mxu0
      %v6913 = vadd.f32 0.0, %v6912
      %v6914 = vpop.f32.mrf.mxu0
      %v6915 = vpop.f32.mrf.mxu0
      %v6916 = vadd.f32 0.0, %v6915
      %v6917 = vpop.f32.mrf.mxu0
      %6918 = vmatprep.mubr.bf16.mxu0 0
      %6919 = vmatmul.mubr.bf16.gmra.mxu0 %v6713
      %v6920 = vpop.f32.mrf.mxu0
      %v6921 = vadd.f32 0.0, %v6920
      %v6922 = vpop.f32.mrf.mxu0
      %v6923 = vpop.f32.mrf.mxu0
      %v6924 = vadd.f32 0.0, %v6923
      %v6925 = vpop.f32.mrf.mxu0
      %6926 = vmatprep.mubr.bf16.mxu0 0
      %6927 = vmatmul.mubr.bf16.gmra.mxu0 %v6714
      %v6928 = vpop.f32.mrf.mxu0
      %v6929 = vadd.f32 0.0, %v6928
      %v6930 = vpop.f32.mrf.mxu0
      %v6931 = vpop.f32.mrf.mxu0
      %v6932 = vadd.f32 0.0, %v6931
      %v6933 = vpop.f32.mrf.mxu0
      %6934 = vmatprep.mubr.bf16.mxu0 0
      %6935 = vmatmul.mubr.bf16.gmra.mxu0 %v6715
      %v6936 = vpop.f32.mrf.mxu0
      %v6937 = vadd.f32 0.0, %v6936
      %v6938 = vpop.f32.mrf.mxu0
      %v6939 = vpop.f32.mrf.mxu0
      %v6940 = vadd.f32 0.0, %v6939
      %v6941 = vpop.f32.mrf.mxu0
      %6942 = vmatprep.mubr.bf16.mxu0 0
      %6943 = vmatmul.mubr.bf16.gmra.mxu0 %v6716
      %v6944 = vpop.f32.mrf.mxu0
      %v6945 = vadd.f32 0.0, %v6944
      %v6946 = vpop.f32.mrf.mxu0
      %v6947 = vpop.f32.mrf.mxu0
      %v6948 = vadd.f32 0.0, %v6947
      %v6949 = vpop.f32.mrf.mxu0
      %6950 = vmatprep.mubr.bf16.mxu0 0
      %6951 = vmatmul.mubr.bf16.gmra.mxu0 %v6717
      %v6952 = vpop.f32.mrf.mxu0
      %v6953 = vadd.f32 0.0, %v6952
      %v6954 = vpop.f32.mrf.mxu0
      %v6955 = vpop.f32.mrf.mxu0
      %v6956 = vadd.f32 0.0, %v6955
      %v6957 = vpop.f32.mrf.mxu0
      %6958 = vmatprep.mubr.bf16.mxu0 0
      %6959 = vmatmul.mubr.bf16.gmra.mxu0 %v6718
      %v6960 = vpop.f32.mrf.mxu0
      %v6961 = vadd.f32 0.0, %v6960
      %v6962 = vpop.f32.mrf.mxu0
      %v6963 = vpop.f32.mrf.mxu0
      %v6964 = vadd.f32 0.0, %v6963
      %v6965 = vpop.f32.mrf.mxu0
      %6966 = vmatprep.mubr.bf16.mxu0 0
      %6967 = vmatmul.mubr.bf16.gmra.mxu0 %v6719
      %v6968 = vpop.f32.mrf.mxu0
      %v6969 = vadd.f32 0.0, %v6968
      %v6970 = vpop.f32.mrf.mxu0
      %v6971 = vpop.f32.mrf.mxu0
      %v6972 = vadd.f32 0.0, %v6971
      %v6973 = vpop.f32.mrf.mxu0
      %6974 = vmatprep.mubr.bf16.mxu0 0
      %6975 = vmatmul.mubr.bf16.gmra.mxu0 %v6720
      %v6976 = vpop.f32.mrf.mxu0
      %v6977 = vadd.f32 0.0, %v6976
      %v6978 = vpop.f32.mrf.mxu0
      %v6979 = vpop.f32.mrf.mxu0
      %v6980 = vadd.f32 0.0, %v6979
      %v6981 = vpop.f32.mrf.mxu0
      %6982 = vmatprep.mubr.bf16.mxu0 0
      %6983 = vmatmul.mubr.bf16.gmra.mxu0 %v6721
      %v6984 = vpop.f32.mrf.mxu0
      %v6985 = vadd.f32 0.0, %v6984
      %v6986 = vpop.f32.mrf.mxu0
      %v6987 = vpop.f32.mrf.mxu0
      %v6988 = vadd.f32 0.0, %v6987
      %v6989 = vpop.f32.mrf.mxu0
      %6990 = vmatprep.mubr.bf16.mxu0 0
      %6991 = vmatmul.mubr.bf16.gmra.mxu0 %v6722
      %v6992 = vpop.f32.mrf.mxu0
      %v6993 = vadd.f32 0.0, %v6992
      %v6994 = vpop.f32.mrf.mxu0
      %v6995 = vpop.f32.mrf.mxu0
      %v6996 = vadd.f32 0.0, %v6995
      %v6997 = vpop.f32.mrf.mxu0
      %6998 = vmatprep.mubr.bf16.mxu0 0
      %6999 = vmatmul.mubr.bf16.gmra.mxu0 %v6723
      %v7000 = vpop.f32.mrf.mxu0
      %v7001 = vadd.f32 0.0, %v7000
      %v7002 = vpop.f32.mrf.mxu0
      %v7003 = vpop.f32.mrf.mxu0
      %v7004 = vadd.f32 0.0, %v7003
      %v7005 = vpop.f32.mrf.mxu0
      %7006 = vmatprep.mubr.bf16.mxu0 0
      %7007 = vmatmul.mubr.bf16.gmra.mxu0 %v6724
      %v7008 = vpop.f32.mrf.mxu0
      %v7009 = vadd.f32 0.0, %v7008
      %v7010 = vpop.f32.mrf.mxu0
      %v7011 = vpop.f32.mrf.mxu0
      %v7012 = vadd.f32 0.0, %v7011
      %v7013 = vpop.f32.mrf.mxu0
      %7014 = vdwg.mxu0
      %v7015 = vadd.f32 %v6463, %v6825
      %v7016 = vadd.f32 %v6466, %v6828
      %v7017 = vadd.f32 %v6471, %v6833
      %v7018 = vadd.f32 %v6474, %v6836
      %v7019 = vadd.f32 %v6479, %v6841
      %v7020 = vadd.f32 %v6482, %v6844
      %v7021 = vadd.f32 %v6487, %v6849
      %v7022 = vadd.f32 %v6490, %v6852
      %v7023 = vadd.f32 %v6495, %v6857
      %v7024 = vadd.f32 %v6498, %v6860
      %v7025 = vadd.f32 %v6503, %v6865
      %v7026 = vadd.f32 %v6506, %v6868
      %v7027 = vadd.f32 %v6511, %v6873
      %v7028 = vadd.f32 %v6514, %v6876
      %v7029 = vadd.f32 %v6519, %v6881
      %v7030 = vadd.f32 %v6522, %v6884
      %v7031 = vadd.f32 %v6527, %v6889
      %v7032 = vadd.f32 %v6530, %v6892
      %v7033 = vadd.f32 %v6535, %v6897
      %v7034 = vadd.f32 %v6538, %v6900
      %v7035 = vadd.f32 %v6543, %v6905
      %v7036 = vadd.f32 %v6546, %v6908
      %v7037 = vadd.f32 %v6551, %v6913
      %v7038 = vadd.f32 %v6554, %v6916
      %v7039 = vadd.f32 %v6559, %v6921
      %v7040 = vadd.f32 %v6562, %v6924
      %v7041 = vadd.f32 %v6567, %v6929
      %v7042 = vadd.f32 %v6570, %v6932
      %v7043 = vadd.f32 %v6575, %v6937
      %v7044 = vadd.f32 %v6578, %v6940
      %v7045 = vadd.f32 %v6583, %v6945
      %v7046 = vadd.f32 %v6586, %v6948
      %v7047 = vadd.f32 %v6591, %v6953
      %v7048 = vadd.f32 %v6594, %v6956
      %v7049 = vadd.f32 %v6599, %v6961
      %v7050 = vadd.f32 %v6602, %v6964
      %v7051 = vadd.f32 %v6607, %v6969
      %v7052 = vadd.f32 %v6610, %v6972
      %v7053 = vadd.f32 %v6615, %v6977
      %v7054 = vadd.f32 %v6618, %v6980
      %v7055 = vadd.f32 %v6623, %v6985
      %v7056 = vadd.f32 %v6626, %v6988
      %v7057 = vadd.f32 %v6631, %v6993
      %v7058 = vadd.f32 %v6634, %v6996
      %v7059 = vadd.f32 %v6639, %v7001
      %v7060 = vadd.f32 %v6642, %v7004
      %v7061 = vadd.f32 %v6647, %v7009
      %v7062 = vadd.f32 %v6650, %v7012
      %v7063 = vadd.f32 %v5881, %v7015
      %v7064 = vadd.f32 %v5882, %v7016
      %v7065 = vadd.f32 %v5883, %v7017
      %v7066 = vadd.f32 %v5884, %v7018
      %v7067 = vadd.f32 %v5885, %v7019
      %v7068 = vadd.f32 %v5886, %v7020
      %v7069 = vadd.f32 %v5887, %v7021
      %v7070 = vadd.f32 %v5888, %v7022
      %v7071 = vadd.f32 %v5889, %v7023
      %v7072 = vadd.f32 %v5890, %v7024
      %v7073 = vadd.f32 %v5891, %v7025
      %v7074 = vadd.f32 %v5892, %v7026
      %v7075 = vadd.f32 %v5893, %v7027
      %v7076 = vadd.f32 %v5894, %v7028
      %v7077 = vadd.f32 %v5895, %v7029
      %v7078 = vadd.f32 %v5896, %v7030
      %v7079 = vadd.f32 %v5897, %v7031
      %v7080 = vadd.f32 %v5898, %v7032
      %v7081 = vadd.f32 %v5899, %v7033
      %v7082 = vadd.f32 %v5900, %v7034
      %v7083 = vadd.f32 %v5901, %v7035
      %v7084 = vadd.f32 %v5902, %v7036
      %v7085 = vadd.f32 %v5903, %v7037
      %v7086 = vadd.f32 %v5904, %v7038
      %v7087 = vadd.f32 %v5905, %v7039
      %v7088 = vadd.f32 %v5906, %v7040
      %v7089 = vadd.f32 %v5907, %v7041
      %v7090 = vadd.f32 %v5908, %v7042
      %v7091 = vadd.f32 %v5909, %v7043
      %v7092 = vadd.f32 %v5910, %v7044
      %v7093 = vadd.f32 %v5911, %v7045
      %v7094 = vadd.f32 %v5912, %v7046
      %v7095 = vadd.f32 %v5913, %v7047
      %v7096 = vadd.f32 %v5914, %v7048
      %v7097 = vadd.f32 %v5915, %v7049
      %v7098 = vadd.f32 %v5916, %v7050
      %v7099 = vadd.f32 %v5917, %v7051
      %v7100 = vadd.f32 %v5918, %v7052
      %v7101 = vadd.f32 %v5919, %v7053
      %v7102 = vadd.f32 %v5920, %v7054
      %v7103 = vadd.f32 %v5921, %v7055
      %v7104 = vadd.f32 %v5922, %v7056
      %v7105 = vadd.f32 %v5923, %v7057
      %v7106 = vadd.f32 %v5924, %v7058
      %v7107 = vadd.f32 %v5925, %v7059
      %v7108 = vadd.f32 %v5926, %v7060
      %v7109 = vadd.f32 %v5927, %v7061
      %v7110 = vadd.f32 %v5928, %v7062
      %v7111 = vld [vmem:[#allocation2 + $0x37] sm:$0xff]
      %v7112 = vld [vmem:[#allocation2 + $0x3f] sm:$0xff]
      %v7113 = vld [vmem:[#allocation2 + $0x47] sm:$0xff]
      %v7114 = vld [vmem:[#allocation2 + $0x4f] sm:$0xff]
      %v7115 = vld [vmem:[#allocation2 + $0x57] sm:$0xff]
      %v7116 = vld [vmem:[#allocation2 + $0x5f] sm:$0xff]
      %v7117 = vld [vmem:[#allocation2 + $0x67] sm:$0xff]
      %v7118 = vld [vmem:[#allocation2 + $0x6f] sm:$0xff]
      %v7119 = vld [vmem:[#allocation2 + $0x77] sm:$0xff]
      %v7120 = vld [vmem:[#allocation2 + $0x7f] sm:$0xff]
      %v7121 = vld [vmem:[#allocation2 + $0x87] sm:$0xff]
      %v7122 = vld [vmem:[#allocation2 + $0x8f] sm:$0xff]
      %v7123 = vld [vmem:[#allocation2 + $0x97] sm:$0xff]
      %v7124 = vld [vmem:[#allocation2 + $0x9f] sm:$0xff]
      %v7125 = vld [vmem:[#allocation2 + $0xa7] sm:$0xff]
      %v7126 = vld [vmem:[#allocation2 + $0xaf] sm:$0xff]
      %v7127 = vld [vmem:[#allocation2 + $0xb7] sm:$0xff]
      %v7128 = vld [vmem:[#allocation2 + $0xbf] sm:$0xff]
      %v7129 = vld [vmem:[#allocation2 + $0xc7] sm:$0xff]
      %v7130 = vld [vmem:[#allocation2 + $0xcf] sm:$0xff]
      %v7131 = vld [vmem:[#allocation2 + $0xd7] sm:$0xff]
      %v7132 = vld [vmem:[#allocation2 + $0xdf] sm:$0xff]
      %v7133 = vld [vmem:[#allocation2 + $0xe7] sm:$0xff]
      %v7134 = vld [vmem:[#allocation2 + $0xef] sm:$0xff]
      %v7135 = vld [vmem:[#allocation2 + $0xf7] sm:$0xff]
      %v7136 = vld [vmem:[#allocation2 + $0xff] sm:$0xff]
      %v7137 = vld [vmem:[#allocation2 + $0x107] sm:$0xff]
      %v7138 = vld [vmem:[#allocation2 + $0x10f] sm:$0xff]
      %v7139 = vld [vmem:[#allocation2 + $0x117] sm:$0xff]
      %v7140 = vld [vmem:[#allocation2 + $0x11f] sm:$0xff]
      %v7141 = vld [vmem:[#allocation2 + $0x127] sm:$0xff]
      %v7142 = vld [vmem:[#allocation2 + $0x12f] sm:$0xff]
      %v7143 = vld [vmem:[#allocation2 + $0x137] sm:$0xff]
      %v7144 = vld [vmem:[#allocation2 + $0x13f] sm:$0xff]
      %v7145 = vld [vmem:[#allocation2 + $0x147] sm:$0xff]
      %v7146 = vld [vmem:[#allocation2 + $0x14f] sm:$0xff]
      %v7147 = vld [vmem:[#allocation2 + $0x157] sm:$0xff]
      %v7148 = vld [vmem:[#allocation2 + $0x15f] sm:$0xff]
      %v7149 = vld [vmem:[#allocation2 + $0x167] sm:$0xff]
      %v7150 = vld [vmem:[#allocation2 + $0x16f] sm:$0xff]
      %v7151 = vld [vmem:[#allocation2 + $0x177] sm:$0xff]
      %v7152 = vld [vmem:[#allocation2 + $0x17f] sm:$0xff]
      %v7153 = vld [vmem:[#allocation2 + $0x187] sm:$0xff]
      %v7154 = vld [vmem:[#allocation2 + $0x18f] sm:$0xff]
      %v7155 = vld [vmem:[#allocation2 + $0x197] sm:$0xff]
      %v7156 = vld [vmem:[#allocation2 + $0x19f] sm:$0xff]
      %v7157 = vld [vmem:[#allocation2 + $0x1a7] sm:$0xff]
      %v7158 = vld [vmem:[#allocation2 + $0x1af] sm:$0xff]
      %v7159 = vpack.c.bf16 %v7112, %v7111
      %v7160 = vpack.c.bf16 %v7114, %v7113
      %v7161 = vpack.c.bf16 %v7116, %v7115
      %v7162 = vpack.c.bf16 %v7118, %v7117
      %v7163 = vpack.c.bf16 %v7120, %v7119
      %v7164 = vpack.c.bf16 %v7122, %v7121
      %v7165 = vpack.c.bf16 %v7124, %v7123
      %v7166 = vpack.c.bf16 %v7126, %v7125
      %v7167 = vpack.c.bf16 %v7128, %v7127
      %v7168 = vpack.c.bf16 %v7130, %v7129
      %v7169 = vpack.c.bf16 %v7132, %v7131
      %v7170 = vpack.c.bf16 %v7134, %v7133
      %v7171 = vpack.c.bf16 %v7136, %v7135
      %v7172 = vpack.c.bf16 %v7138, %v7137
      %v7173 = vpack.c.bf16 %v7140, %v7139
      %v7174 = vpack.c.bf16 %v7142, %v7141
      %v7175 = vpack.c.bf16 %v7144, %v7143
      %v7176 = vpack.c.bf16 %v7146, %v7145
      %v7177 = vpack.c.bf16 %v7148, %v7147
      %v7178 = vpack.c.bf16 %v7150, %v7149
      %v7179 = vpack.c.bf16 %v7152, %v7151
      %v7180 = vpack.c.bf16 %v7154, %v7153
      %v7181 = vpack.c.bf16 %v7156, %v7155
      %v7182 = vpack.c.bf16 %v7158, %v7157
      %s7183 = scalar_lea.vmem %s4, 384
      %v7184 = vld [vmem:[%s7183] sm:$0xf]
      %v7185 = vld [vmem:[%s7183 + $0x4] sm:$0xf]
      %v7186 = vld [vmem:[%s7183 + $0x8] sm:$0xf]
      %v7187 = vld [vmem:[%s7183 + $0xc] sm:$0xf]
      %v7188 = vld [vmem:[%s7183 + $0x10] sm:$0xf]
      %v7189 = vld [vmem:[%s7183 + $0x14] sm:$0xf]
      %v7190 = vld [vmem:[%s7183 + $0x18] sm:$0xf]
      %v7191 = vld [vmem:[%s7183 + $0x1c] sm:$0xf]
      %v7192 = vld [vmem:[%s7183 + $0x20] sm:$0xf]
      %v7193 = vld [vmem:[%s7183 + $0x24] sm:$0xf]
      %v7194 = vld [vmem:[%s7183 + $0x28] sm:$0xf]
      %v7195 = vld [vmem:[%s7183 + $0x2c] sm:$0xf]
      %v7196 = vld [vmem:[%s7183 + $0x30] sm:$0xf]
      %v7197 = vld [vmem:[%s7183 + $0x34] sm:$0xf]
      %v7198 = vld [vmem:[%s7183 + $0x38] sm:$0xf]
      %v7199 = vld [vmem:[%s7183 + $0x3c] sm:$0xf]
      %v7200 = vld [vmem:[#allocation2 + $0x38] sm:$0xff]
      %v7201 = vld [vmem:[#allocation2 + $0x40] sm:$0xff]
      %v7202 = vld [vmem:[#allocation2 + $0x48] sm:$0xff]
      %v7203 = vld [vmem:[#allocation2 + $0x50] sm:$0xff]
      %v7204 = vld [vmem:[#allocation2 + $0x58] sm:$0xff]
      %v7205 = vld [vmem:[#allocation2 + $0x60] sm:$0xff]
      %v7206 = vld [vmem:[#allocation2 + $0x68] sm:$0xff]
      %v7207 = vld [vmem:[#allocation2 + $0x70] sm:$0xff]
      %v7208 = vld [vmem:[#allocation2 + $0x78] sm:$0xff]
      %v7209 = vld [vmem:[#allocation2 + $0x80] sm:$0xff]
      %v7210 = vld [vmem:[#allocation2 + $0x88] sm:$0xff]
      %v7211 = vld [vmem:[#allocation2 + $0x90] sm:$0xff]
      %v7212 = vld [vmem:[#allocation2 + $0x98] sm:$0xff]
      %v7213 = vld [vmem:[#allocation2 + $0xa0] sm:$0xff]
      %v7214 = vld [vmem:[#allocation2 + $0xa8] sm:$0xff]
      %v7215 = vld [vmem:[#allocation2 + $0xb0] sm:$0xff]
      %v7216 = vld [vmem:[#allocation2 + $0xb8] sm:$0xff]
      %v7217 = vld [vmem:[#allocation2 + $0xc0] sm:$0xff]
      %v7218 = vld [vmem:[#allocation2 + $0xc8] sm:$0xff]
      %v7219 = vld [vmem:[#allocation2 + $0xd0] sm:$0xff]
      %v7220 = vld [vmem:[#allocation2 + $0xd8] sm:$0xff]
      %v7221 = vld [vmem:[#allocation2 + $0xe0] sm:$0xff]
      %v7222 = vld [vmem:[#allocation2 + $0xe8] sm:$0xff]
      %v7223 = vld [vmem:[#allocation2 + $0xf0] sm:$0xff]
      %v7224 = vld [vmem:[#allocation2 + $0xf8] sm:$0xff]
      %v7225 = vld [vmem:[#allocation2 + $0x100] sm:$0xff]
      %v7226 = vld [vmem:[#allocation2 + $0x108] sm:$0xff]
      %v7227 = vld [vmem:[#allocation2 + $0x110] sm:$0xff]
      %v7228 = vld [vmem:[#allocation2 + $0x118] sm:$0xff]
      %v7229 = vld [vmem:[#allocation2 + $0x120] sm:$0xff]
      %v7230 = vld [vmem:[#allocation2 + $0x128] sm:$0xff]
      %v7231 = vld [vmem:[#allocation2 + $0x130] sm:$0xff]
      %v7232 = vld [vmem:[#allocation2 + $0x138] sm:$0xff]
      %v7233 = vld [vmem:[#allocation2 + $0x140] sm:$0xff]
      %v7234 = vld [vmem:[#allocation2 + $0x148] sm:$0xff]
      %v7235 = vld [vmem:[#allocation2 + $0x150] sm:$0xff]
      %v7236 = vld [vmem:[#allocation2 + $0x158] sm:$0xff]
      %v7237 = vld [vmem:[#allocation2 + $0x160] sm:$0xff]
      %v7238 = vld [vmem:[#allocation2 + $0x168] sm:$0xff]
      %v7239 = vld [vmem:[#allocation2 + $0x170] sm:$0xff]
      %v7240 = vld [vmem:[#allocation2 + $0x178] sm:$0xff]
      %v7241 = vld [vmem:[#allocation2 + $0x180] sm:$0xff]
      %v7242 = vld [vmem:[#allocation2 + $0x188] sm:$0xff]
      %v7243 = vld [vmem:[#allocation2 + $0x190] sm:$0xff]
      %v7244 = vld [vmem:[#allocation2 + $0x198] sm:$0xff]
      %v7245 = vld [vmem:[#allocation2 + $0x1a0] sm:$0xff]
      %v7246 = vld [vmem:[#allocation2 + $0x1a8] sm:$0xff]
      %v7247 = vld [vmem:[#allocation2 + $0x1b0] sm:$0xff]
      %v7248 = vpack.c.bf16 %v7201, %v7200
      %v7249 = vpack.c.bf16 %v7203, %v7202
      %v7250 = vpack.c.bf16 %v7205, %v7204
      %v7251 = vpack.c.bf16 %v7207, %v7206
      %v7252 = vpack.c.bf16 %v7209, %v7208
      %v7253 = vpack.c.bf16 %v7211, %v7210
      %v7254 = vpack.c.bf16 %v7213, %v7212
      %v7255 = vpack.c.bf16 %v7215, %v7214
      %v7256 = vpack.c.bf16 %v7217, %v7216
      %v7257 = vpack.c.bf16 %v7219, %v7218
      %v7258 = vpack.c.bf16 %v7221, %v7220
      %v7259 = vpack.c.bf16 %v7223, %v7222
      %v7260 = vpack.c.bf16 %v7225, %v7224
      %v7261 = vpack.c.bf16 %v7227, %v7226
      %v7262 = vpack.c.bf16 %v7229, %v7228
      %v7263 = vpack.c.bf16 %v7231, %v7230
      %v7264 = vpack.c.bf16 %v7233, %v7232
      %v7265 = vpack.c.bf16 %v7235, %v7234
      %v7266 = vpack.c.bf16 %v7237, %v7236
      %v7267 = vpack.c.bf16 %v7239, %v7238
      %v7268 = vpack.c.bf16 %v7241, %v7240
      %v7269 = vpack.c.bf16 %v7243, %v7242
      %v7270 = vpack.c.bf16 %v7245, %v7244
      %v7271 = vpack.c.bf16 %v7247, %v7246
      %s7272 = scalar_lea.vmem %s4, 448
      %v7273 = vld [vmem:[%s7272] sm:$0xf]
      %v7274 = vld [vmem:[%s7272 + $0x4] sm:$0xf]
      %v7275 = vld [vmem:[%s7272 + $0x8] sm:$0xf]
      %v7276 = vld [vmem:[%s7272 + $0xc] sm:$0xf]
      %v7277 = vld [vmem:[%s7272 + $0x10] sm:$0xf]
      %v7278 = vld [vmem:[%s7272 + $0x14] sm:$0xf]
      %v7279 = vld [vmem:[%s7272 + $0x18] sm:$0xf]
      %v7280 = vld [vmem:[%s7272 + $0x1c] sm:$0xf]
      %v7281 = vld [vmem:[%s7272 + $0x20] sm:$0xf]
      %v7282 = vld [vmem:[%s7272 + $0x24] sm:$0xf]
      %v7283 = vld [vmem:[%s7272 + $0x28] sm:$0xf]
      %v7284 = vld [vmem:[%s7272 + $0x2c] sm:$0xf]
      %v7285 = vld [vmem:[%s7272 + $0x30] sm:$0xf]
      %v7286 = vld [vmem:[%s7272 + $0x34] sm:$0xf]
      %v7287 = vld [vmem:[%s7272 + $0x38] sm:$0xf]
      %v7288 = vld [vmem:[%s7272 + $0x3c] sm:$0xf]
      %v7305 = vunpack.c.l.b16 %v7273
      %v7306 = vunpack.c.l.b16 %v7274
      %v7307 = vunpack.c.l.b16 %v7275
      %v7308 = vunpack.c.l.b16 %v7276
      %v7309 = vunpack.c.l.b16 %v7277
      %v7310 = vunpack.c.l.b16 %v7278
      %v7311 = vunpack.c.l.b16 %v7279
      %v7312 = vunpack.c.l.b16 %v7280
      %v7313 = vunpack.c.l.b16 %v7281
      %v7314 = vunpack.c.l.b16 %v7282
      %v7315 = vunpack.c.l.b16 %v7283
      %v7316 = vunpack.c.l.b16 %v7284
      %v7317 = vunpack.c.l.b16 %v7285
      %v7318 = vunpack.c.l.b16 %v7286
      %v7319 = vunpack.c.l.b16 %v7287
      %v7320 = vunpack.c.l.b16 %v7288
      %v7321 = vpack.c.b16 %v7306, %v7305
      %v7322 = vpack.c.b16 %v7308, %v7307
      %v7323 = vpack.c.b16 %v7310, %v7309
      %v7324 = vpack.c.b16 %v7312, %v7311
      %v7325 = vpack.c.b16 %v7314, %v7313
      %v7326 = vpack.c.b16 %v7316, %v7315
      %v7327 = vpack.c.b16 %v7318, %v7317
      %v7328 = vpack.c.b16 %v7320, %v7319
      %7337 = vmatprep.subr.bf16.mxu0 0
      %7338 = vmatpush1.bf16.msra.mxu0 %v7328
      %7339 = vmatprep.subr.bf16.mxu0 0
      %7340 = vmatpush1.bf16.msra.mxu0 %v7327
      %7341 = vmatprep.subr.bf16.mxu0 0
      %7342 = vmatpush1.bf16.msra.mxu0 %v7326
      %7343 = vmatprep.subr.bf16.mxu0 0
      %7344 = vmatpush1.bf16.msra.mxu0 %v7325
      %7345 = vmatprep.subr.bf16.mxu0 0
      %7346 = vmatpush1.bf16.msra.mxu0 %v7324
      %7347 = vmatprep.subr.bf16.mxu0 0
      %7348 = vmatpush1.bf16.msra.mxu0 %v7323
      %7349 = vmatprep.subr.bf16.mxu0 0
      %7350 = vmatpush1.bf16.msra.mxu0 %v7322
      %7351 = vmatprep.subr.bf16.mxu0 0
      %7352 = vmatpush1.bf16.msra.mxu0 %v7321
      %7353 = vmatprep.subr.bf16.mxu0 0
      %7354 = vmatpush2.bf16.msra.mxu0 0
      %7355 = vmatprep.subr.bf16.mxu0 0
      %7356 = vmatpush2.bf16.msra.mxu0 0
      %7357 = vmatprep.subr.bf16.mxu0 0
      %7358 = vmatpush2.bf16.msra.mxu0 0
      %7359 = vmatprep.subr.bf16.mxu0 0
      %7360 = vmatpush2.bf16.msra.mxu0 0
      %7361 = vmatprep.subr.bf16.mxu0 0
      %7362 = vmatpush2.bf16.msra.mxu0 0
      %7363 = vmatprep.subr.bf16.mxu0 0
      %7364 = vmatpush2.bf16.msra.mxu0 0
      %7365 = vmatprep.subr.bf16.mxu0 0
      %7366 = vmatpush2.bf16.msra.mxu0 0
      %7367 = vmatprep.subr.bf16.mxu0 0
      %7368 = vmatpush2.bf16.msra.mxu0 0
      %7369 = vmatprep.mubr.bf16.mxu0 0
      %7370 = vmatmul.mubr.bf16.gmra.mxu0 %v7248
      %v7371 = vpop.f32.mrf.mxu0
      %v7372 = vadd.f32 0.0, %v7371
      %v7373 = vpop.f32.mrf.mxu0
      %v7374 = vpop.f32.mrf.mxu0
      %v7375 = vadd.f32 0.0, %v7374
      %v7376 = vpop.f32.mrf.mxu0
      %7377 = vmatprep.mubr.bf16.mxu0 0
      %7378 = vmatmul.mubr.bf16.gmra.mxu0 %v7249
      %v7379 = vpop.f32.mrf.mxu0
      %v7380 = vadd.f32 0.0, %v7379
      %v7381 = vpop.f32.mrf.mxu0
      %v7382 = vpop.f32.mrf.mxu0
      %v7383 = vadd.f32 0.0, %v7382
      %v7384 = vpop.f32.mrf.mxu0
      %7385 = vmatprep.mubr.bf16.mxu0 0
      %7386 = vmatmul.mubr.bf16.gmra.mxu0 %v7250
      %v7387 = vpop.f32.mrf.mxu0
      %v7388 = vadd.f32 0.0, %v7387
      %v7389 = vpop.f32.mrf.mxu0
      %v7390 = vpop.f32.mrf.mxu0
      %v7391 = vadd.f32 0.0, %v7390
      %v7392 = vpop.f32.mrf.mxu0
      %7393 = vmatprep.mubr.bf16.mxu0 0
      %7394 = vmatmul.mubr.bf16.gmra.mxu0 %v7251
      %v7395 = vpop.f32.mrf.mxu0
      %v7396 = vadd.f32 0.0, %v7395
      %v7397 = vpop.f32.mrf.mxu0
      %v7398 = vpop.f32.mrf.mxu0
      %v7399 = vadd.f32 0.0, %v7398
      %v7400 = vpop.f32.mrf.mxu0
      %7401 = vmatprep.mubr.bf16.mxu0 0
      %7402 = vmatmul.mubr.bf16.gmra.mxu0 %v7252
      %v7403 = vpop.f32.mrf.mxu0
      %v7404 = vadd.f32 0.0, %v7403
      %v7405 = vpop.f32.mrf.mxu0
      %v7406 = vpop.f32.mrf.mxu0
      %v7407 = vadd.f32 0.0, %v7406
      %v7408 = vpop.f32.mrf.mxu0
      %7409 = vmatprep.mubr.bf16.mxu0 0
      %7410 = vmatmul.mubr.bf16.gmra.mxu0 %v7253
      %v7411 = vpop.f32.mrf.mxu0
      %v7412 = vadd.f32 0.0, %v7411
      %v7413 = vpop.f32.mrf.mxu0
      %v7414 = vpop.f32.mrf.mxu0
      %v7415 = vadd.f32 0.0, %v7414
      %v7416 = vpop.f32.mrf.mxu0
      %7417 = vmatprep.mubr.bf16.mxu0 0
      %7418 = vmatmul.mubr.bf16.gmra.mxu0 %v7254
      %v7419 = vpop.f32.mrf.mxu0
      %v7420 = vadd.f32 0.0, %v7419
      %v7421 = vpop.f32.mrf.mxu0
      %v7422 = vpop.f32.mrf.mxu0
      %v7423 = vadd.f32 0.0, %v7422
      %v7424 = vpop.f32.mrf.mxu0
      %7425 = vmatprep.mubr.bf16.mxu0 0
      %7426 = vmatmul.mubr.bf16.gmra.mxu0 %v7255
      %v7427 = vpop.f32.mrf.mxu0
      %v7428 = vadd.f32 0.0, %v7427
      %v7429 = vpop.f32.mrf.mxu0
      %v7430 = vpop.f32.mrf.mxu0
      %v7431 = vadd.f32 0.0, %v7430
      %v7432 = vpop.f32.mrf.mxu0
      %7433 = vmatprep.mubr.bf16.mxu0 0
      %7434 = vmatmul.mubr.bf16.gmra.mxu0 %v7256
      %v7435 = vpop.f32.mrf.mxu0
      %v7436 = vadd.f32 0.0, %v7435
      %v7437 = vpop.f32.mrf.mxu0
      %v7438 = vpop.f32.mrf.mxu0
      %v7439 = vadd.f32 0.0, %v7438
      %v7440 = vpop.f32.mrf.mxu0
      %7441 = vmatprep.mubr.bf16.mxu0 0
      %7442 = vmatmul.mubr.bf16.gmra.mxu0 %v7257
      %v7443 = vpop.f32.mrf.mxu0
      %v7444 = vadd.f32 0.0, %v7443
      %v7445 = vpop.f32.mrf.mxu0
      %v7446 = vpop.f32.mrf.mxu0
      %v7447 = vadd.f32 0.0, %v7446
      %v7448 = vpop.f32.mrf.mxu0
      %7449 = vmatprep.mubr.bf16.mxu0 0
      %7450 = vmatmul.mubr.bf16.gmra.mxu0 %v7258
      %v7451 = vpop.f32.mrf.mxu0
      %v7452 = vadd.f32 0.0, %v7451
      %v7453 = vpop.f32.mrf.mxu0
      %v7454 = vpop.f32.mrf.mxu0
      %v7455 = vadd.f32 0.0, %v7454
      %v7456 = vpop.f32.mrf.mxu0
      %7457 = vmatprep.mubr.bf16.mxu0 0
      %7458 = vmatmul.mubr.bf16.gmra.mxu0 %v7259
      %v7459 = vpop.f32.mrf.mxu0
      %v7460 = vadd.f32 0.0, %v7459
      %v7461 = vpop.f32.mrf.mxu0
      %v7462 = vpop.f32.mrf.mxu0
      %v7463 = vadd.f32 0.0, %v7462
      %v7464 = vpop.f32.mrf.mxu0
      %7465 = vmatprep.mubr.bf16.mxu0 0
      %7466 = vmatmul.mubr.bf16.gmra.mxu0 %v7260
      %v7467 = vpop.f32.mrf.mxu0
      %v7468 = vadd.f32 0.0, %v7467
      %v7469 = vpop.f32.mrf.mxu0
      %v7470 = vpop.f32.mrf.mxu0
      %v7471 = vadd.f32 0.0, %v7470
      %v7472 = vpop.f32.mrf.mxu0
      %7473 = vmatprep.mubr.bf16.mxu0 0
      %7474 = vmatmul.mubr.bf16.gmra.mxu0 %v7261
      %v7475 = vpop.f32.mrf.mxu0
      %v7476 = vadd.f32 0.0, %v7475
      %v7477 = vpop.f32.mrf.mxu0
      %v7478 = vpop.f32.mrf.mxu0
      %v7479 = vadd.f32 0.0, %v7478
      %v7480 = vpop.f32.mrf.mxu0
      %7481 = vmatprep.mubr.bf16.mxu0 0
      %7482 = vmatmul.mubr.bf16.gmra.mxu0 %v7262
      %v7483 = vpop.f32.mrf.mxu0
      %v7484 = vadd.f32 0.0, %v7483
      %v7485 = vpop.f32.mrf.mxu0
      %v7486 = vpop.f32.mrf.mxu0
      %v7487 = vadd.f32 0.0, %v7486
      %v7488 = vpop.f32.mrf.mxu0
      %7489 = vmatprep.mubr.bf16.mxu0 0
      %7490 = vmatmul.mubr.bf16.gmra.mxu0 %v7263
      %v7491 = vpop.f32.mrf.mxu0
      %v7492 = vadd.f32 0.0, %v7491
      %v7493 = vpop.f32.mrf.mxu0
      %v7494 = vpop.f32.mrf.mxu0
      %v7495 = vadd.f32 0.0, %v7494
      %v7496 = vpop.f32.mrf.mxu0
      %7497 = vmatprep.mubr.bf16.mxu0 0
      %7498 = vmatmul.mubr.bf16.gmra.mxu0 %v7264
      %v7499 = vpop.f32.mrf.mxu0
      %v7500 = vadd.f32 0.0, %v7499
      %v7501 = vpop.f32.mrf.mxu0
      %v7502 = vpop.f32.mrf.mxu0
      %v7503 = vadd.f32 0.0, %v7502
      %v7504 = vpop.f32.mrf.mxu0
      %7505 = vmatprep.mubr.bf16.mxu0 0
      %7506 = vmatmul.mubr.bf16.gmra.mxu0 %v7265
      %v7507 = vpop.f32.mrf.mxu0
      %v7508 = vadd.f32 0.0, %v7507
      %v7509 = vpop.f32.mrf.mxu0
      %v7510 = vpop.f32.mrf.mxu0
      %v7511 = vadd.f32 0.0, %v7510
      %v7512 = vpop.f32.mrf.mxu0
      %7513 = vmatprep.mubr.bf16.mxu0 0
      %7514 = vmatmul.mubr.bf16.gmra.mxu0 %v7266
      %v7515 = vpop.f32.mrf.mxu0
      %v7516 = vadd.f32 0.0, %v7515
      %v7517 = vpop.f32.mrf.mxu0
      %v7518 = vpop.f32.mrf.mxu0
      %v7519 = vadd.f32 0.0, %v7518
      %v7520 = vpop.f32.mrf.mxu0
      %7521 = vmatprep.mubr.bf16.mxu0 0
      %7522 = vmatmul.mubr.bf16.gmra.mxu0 %v7267
      %v7523 = vpop.f32.mrf.mxu0
      %v7524 = vadd.f32 0.0, %v7523
      %v7525 = vpop.f32.mrf.mxu0
      %v7526 = vpop.f32.mrf.mxu0
      %v7527 = vadd.f32 0.0, %v7526
      %v7528 = vpop.f32.mrf.mxu0
      %7529 = vmatprep.mubr.bf16.mxu0 0
      %7530 = vmatmul.mubr.bf16.gmra.mxu0 %v7268
      %v7531 = vpop.f32.mrf.mxu0
      %v7532 = vadd.f32 0.0, %v7531
      %v7533 = vpop.f32.mrf.mxu0
      %v7534 = vpop.f32.mrf.mxu0
      %v7535 = vadd.f32 0.0, %v7534
      %v7536 = vpop.f32.mrf.mxu0
      %7537 = vmatprep.mubr.bf16.mxu0 0
      %7538 = vmatmul.mubr.bf16.gmra.mxu0 %v7269
      %v7539 = vpop.f32.mrf.mxu0
      %v7540 = vadd.f32 0.0, %v7539
      %v7541 = vpop.f32.mrf.mxu0
      %v7542 = vpop.f32.mrf.mxu0
      %v7543 = vadd.f32 0.0, %v7542
      %v7544 = vpop.f32.mrf.mxu0
      %7545 = vmatprep.mubr.bf16.mxu0 0
      %7546 = vmatmul.mubr.bf16.gmra.mxu0 %v7270
      %v7547 = vpop.f32.mrf.mxu0
      %v7548 = vadd.f32 0.0, %v7547
      %v7549 = vpop.f32.mrf.mxu0
      %v7550 = vpop.f32.mrf.mxu0
      %v7551 = vadd.f32 0.0, %v7550
      %v7552 = vpop.f32.mrf.mxu0
      %7553 = vmatprep.mubr.bf16.mxu0 0
      %7554 = vmatmul.mubr.bf16.gmra.mxu0 %v7271
      %v7555 = vpop.f32.mrf.mxu0
      %v7556 = vadd.f32 0.0, %v7555
      %v7557 = vpop.f32.mrf.mxu0
      %v7558 = vpop.f32.mrf.mxu0
      %v7559 = vadd.f32 0.0, %v7558
      %v7560 = vpop.f32.mrf.mxu0
      %7561 = vdwg.mxu0
      %v7578 = vunpack.c.l.b16 %v7184
      %v7579 = vunpack.c.l.b16 %v7185
      %v7580 = vunpack.c.l.b16 %v7186
      %v7581 = vunpack.c.l.b16 %v7187
      %v7582 = vunpack.c.l.b16 %v7188
      %v7583 = vunpack.c.l.b16 %v7189
      %v7584 = vunpack.c.l.b16 %v7190
      %v7585 = vunpack.c.l.b16 %v7191
      %v7586 = vunpack.c.l.b16 %v7192
      %v7587 = vunpack.c.l.b16 %v7193
      %v7588 = vunpack.c.l.b16 %v7194
      %v7589 = vunpack.c.l.b16 %v7195
      %v7590 = vunpack.c.l.b16 %v7196
      %v7591 = vunpack.c.l.b16 %v7197
      %v7592 = vunpack.c.l.b16 %v7198
      %v7593 = vunpack.c.l.b16 %v7199
      %v7594 = vpack.c.b16 %v7579, %v7578
      %v7595 = vpack.c.b16 %v7581, %v7580
      %v7596 = vpack.c.b16 %v7583, %v7582
      %v7597 = vpack.c.b16 %v7585, %v7584
      %v7598 = vpack.c.b16 %v7587, %v7586
      %v7599 = vpack.c.b16 %v7589, %v7588
      %v7600 = vpack.c.b16 %v7591, %v7590
      %v7601 = vpack.c.b16 %v7593, %v7592
      %7610 = vmatprep.subr.bf16.mxu0 0
      %7611 = vmatpush1.bf16.msra.mxu0 %v7601
      %7612 = vmatprep.subr.bf16.mxu0 0
      %7613 = vmatpush1.bf16.msra.mxu0 %v7600
      %7614 = vmatprep.subr.bf16.mxu0 0
      %7615 = vmatpush1.bf16.msra.mxu0 %v7599
      %7616 = vmatprep.subr.bf16.mxu0 0
      %7617 = vmatpush1.bf16.msra.mxu0 %v7598
      %7618 = vmatprep.subr.bf16.mxu0 0
      %7619 = vmatpush1.bf16.msra.mxu0 %v7597
      %7620 = vmatprep.subr.bf16.mxu0 0
      %7621 = vmatpush1.bf16.msra.mxu0 %v7596
      %7622 = vmatprep.subr.bf16.mxu0 0
      %7623 = vmatpush1.bf16.msra.mxu0 %v7595
      %7624 = vmatprep.subr.bf16.mxu0 0
      %7625 = vmatpush1.bf16.msra.mxu0 %v7594
      %7626 = vmatprep.subr.bf16.mxu0 0
      %7627 = vmatpush2.bf16.msra.mxu0 0
      %7628 = vmatprep.subr.bf16.mxu0 0
      %7629 = vmatpush2.bf16.msra.mxu0 0
      %7630 = vmatprep.subr.bf16.mxu0 0
      %7631 = vmatpush2.bf16.msra.mxu0 0
      %7632 = vmatprep.subr.bf16.mxu0 0
      %7633 = vmatpush2.bf16.msra.mxu0 0
      %7634 = vmatprep.subr.bf16.mxu0 0
      %7635 = vmatpush2.bf16.msra.mxu0 0
      %7636 = vmatprep.subr.bf16.mxu0 0
      %7637 = vmatpush2.bf16.msra.mxu0 0
      %7638 = vmatprep.subr.bf16.mxu0 0
      %7639 = vmatpush2.bf16.msra.mxu0 0
      %7640 = vmatprep.subr.bf16.mxu0 0
      %7641 = vmatpush2.bf16.msra.mxu0 0
      %7642 = vmatprep.mubr.bf16.mxu0 0
      %7643 = vmatmul.mubr.bf16.gmra.mxu0 %v7159
      %v7644 = vpop.f32.mrf.mxu0
      %v7645 = vadd.f32 %v7372, %v7644
      %v7646 = vpop.f32.mrf.mxu0
      %v7647 = vpop.f32.mrf.mxu0
      %v7648 = vadd.f32 %v7375, %v7647
      %v7649 = vpop.f32.mrf.mxu0
      %7650 = vmatprep.mubr.bf16.mxu0 0
      %7651 = vmatmul.mubr.bf16.gmra.mxu0 %v7160
      %v7652 = vpop.f32.mrf.mxu0
      %v7653 = vadd.f32 %v7380, %v7652
      %v7654 = vpop.f32.mrf.mxu0
      %v7655 = vpop.f32.mrf.mxu0
      %v7656 = vadd.f32 %v7383, %v7655
      %v7657 = vpop.f32.mrf.mxu0
      %7658 = vmatprep.mubr.bf16.mxu0 0
      %7659 = vmatmul.mubr.bf16.gmra.mxu0 %v7161
      %v7660 = vpop.f32.mrf.mxu0
      %v7661 = vadd.f32 %v7388, %v7660
      %v7662 = vpop.f32.mrf.mxu0
      %v7663 = vpop.f32.mrf.mxu0
      %v7664 = vadd.f32 %v7391, %v7663
      %v7665 = vpop.f32.mrf.mxu0
      %7666 = vmatprep.mubr.bf16.mxu0 0
      %7667 = vmatmul.mubr.bf16.gmra.mxu0 %v7162
      %v7668 = vpop.f32.mrf.mxu0
      %v7669 = vadd.f32 %v7396, %v7668
      %v7670 = vpop.f32.mrf.mxu0
      %v7671 = vpop.f32.mrf.mxu0
      %v7672 = vadd.f32 %v7399, %v7671
      %v7673 = vpop.f32.mrf.mxu0
      %7674 = vmatprep.mubr.bf16.mxu0 0
      %7675 = vmatmul.mubr.bf16.gmra.mxu0 %v7163
      %v7676 = vpop.f32.mrf.mxu0
      %v7677 = vadd.f32 %v7404, %v7676
      %v7678 = vpop.f32.mrf.mxu0
      %v7679 = vpop.f32.mrf.mxu0
      %v7680 = vadd.f32 %v7407, %v7679
      %v7681 = vpop.f32.mrf.mxu0
      %7682 = vmatprep.mubr.bf16.mxu0 0
      %7683 = vmatmul.mubr.bf16.gmra.mxu0 %v7164
      %v7684 = vpop.f32.mrf.mxu0
      %v7685 = vadd.f32 %v7412, %v7684
      %v7686 = vpop.f32.mrf.mxu0
      %v7687 = vpop.f32.mrf.mxu0
      %v7688 = vadd.f32 %v7415, %v7687
      %v7689 = vpop.f32.mrf.mxu0
      %7690 = vmatprep.mubr.bf16.mxu0 0
      %7691 = vmatmul.mubr.bf16.gmra.mxu0 %v7165
      %v7692 = vpop.f32.mrf.mxu0
      %v7693 = vadd.f32 %v7420, %v7692
      %v7694 = vpop.f32.mrf.mxu0
      %v7695 = vpop.f32.mrf.mxu0
      %v7696 = vadd.f32 %v7423, %v7695
      %v7697 = vpop.f32.mrf.mxu0
      %7698 = vmatprep.mubr.bf16.mxu0 0
      %7699 = vmatmul.mubr.bf16.gmra.mxu0 %v7166
      %v7700 = vpop.f32.mrf.mxu0
      %v7701 = vadd.f32 %v7428, %v7700
      %v7702 = vpop.f32.mrf.mxu0
      %v7703 = vpop.f32.mrf.mxu0
      %v7704 = vadd.f32 %v7431, %v7703
      %v7705 = vpop.f32.mrf.mxu0
      %7706 = vmatprep.mubr.bf16.mxu0 0
      %7707 = vmatmul.mubr.bf16.gmra.mxu0 %v7167
      %v7708 = vpop.f32.mrf.mxu0
      %v7709 = vadd.f32 %v7436, %v7708
      %v7710 = vpop.f32.mrf.mxu0
      %v7711 = vpop.f32.mrf.mxu0
      %v7712 = vadd.f32 %v7439, %v7711
      %v7713 = vpop.f32.mrf.mxu0
      %7714 = vmatprep.mubr.bf16.mxu0 0
      %7715 = vmatmul.mubr.bf16.gmra.mxu0 %v7168
      %v7716 = vpop.f32.mrf.mxu0
      %v7717 = vadd.f32 %v7444, %v7716
      %v7718 = vpop.f32.mrf.mxu0
      %v7719 = vpop.f32.mrf.mxu0
      %v7720 = vadd.f32 %v7447, %v7719
      %v7721 = vpop.f32.mrf.mxu0
      %7722 = vmatprep.mubr.bf16.mxu0 0
      %7723 = vmatmul.mubr.bf16.gmra.mxu0 %v7169
      %v7724 = vpop.f32.mrf.mxu0
      %v7725 = vadd.f32 %v7452, %v7724
      %v7726 = vpop.f32.mrf.mxu0
      %v7727 = vpop.f32.mrf.mxu0
      %v7728 = vadd.f32 %v7455, %v7727
      %v7729 = vpop.f32.mrf.mxu0
      %7730 = vmatprep.mubr.bf16.mxu0 0
      %7731 = vmatmul.mubr.bf16.gmra.mxu0 %v7170
      %v7732 = vpop.f32.mrf.mxu0
      %v7733 = vadd.f32 %v7460, %v7732
      %v7734 = vpop.f32.mrf.mxu0
      %v7735 = vpop.f32.mrf.mxu0
      %v7736 = vadd.f32 %v7463, %v7735
      %v7737 = vpop.f32.mrf.mxu0
      %7738 = vmatprep.mubr.bf16.mxu0 0
      %7739 = vmatmul.mubr.bf16.gmra.mxu0 %v7171
      %v7740 = vpop.f32.mrf.mxu0
      %v7741 = vadd.f32 %v7468, %v7740
      %v7742 = vpop.f32.mrf.mxu0
      %v7743 = vpop.f32.mrf.mxu0
      %v7744 = vadd.f32 %v7471, %v7743
      %v7745 = vpop.f32.mrf.mxu0
      %7746 = vmatprep.mubr.bf16.mxu0 0
      %7747 = vmatmul.mubr.bf16.gmra.mxu0 %v7172
      %v7748 = vpop.f32.mrf.mxu0
      %v7749 = vadd.f32 %v7476, %v7748
      %v7750 = vpop.f32.mrf.mxu0
      %v7751 = vpop.f32.mrf.mxu0
      %v7752 = vadd.f32 %v7479, %v7751
      %v7753 = vpop.f32.mrf.mxu0
      %7754 = vmatprep.mubr.bf16.mxu0 0
      %7755 = vmatmul.mubr.bf16.gmra.mxu0 %v7173
      %v7756 = vpop.f32.mrf.mxu0
      %v7757 = vadd.f32 %v7484, %v7756
      %v7758 = vpop.f32.mrf.mxu0
      %v7759 = vpop.f32.mrf.mxu0
      %v7760 = vadd.f32 %v7487, %v7759
      %v7761 = vpop.f32.mrf.mxu0
      %7762 = vmatprep.mubr.bf16.mxu0 0
      %7763 = vmatmul.mubr.bf16.gmra.mxu0 %v7174
      %v7764 = vpop.f32.mrf.mxu0
      %v7765 = vadd.f32 %v7492, %v7764
      %v7766 = vpop.f32.mrf.mxu0
      %v7767 = vpop.f32.mrf.mxu0
      %v7768 = vadd.f32 %v7495, %v7767
      %v7769 = vpop.f32.mrf.mxu0
      %7770 = vmatprep.mubr.bf16.mxu0 0
      %7771 = vmatmul.mubr.bf16.gmra.mxu0 %v7175
      %v7772 = vpop.f32.mrf.mxu0
      %v7773 = vadd.f32 %v7500, %v7772
      %v7774 = vpop.f32.mrf.mxu0
      %v7775 = vpop.f32.mrf.mxu0
      %v7776 = vadd.f32 %v7503, %v7775
      %v7777 = vpop.f32.mrf.mxu0
      %7778 = vmatprep.mubr.bf16.mxu0 0
      %7779 = vmatmul.mubr.bf16.gmra.mxu0 %v7176
      %v7780 = vpop.f32.mrf.mxu0
      %v7781 = vadd.f32 %v7508, %v7780
      %v7782 = vpop.f32.mrf.mxu0
      %v7783 = vpop.f32.mrf.mxu0
      %v7784 = vadd.f32 %v7511, %v7783
      %v7785 = vpop.f32.mrf.mxu0
      %7786 = vmatprep.mubr.bf16.mxu0 0
      %7787 = vmatmul.mubr.bf16.gmra.mxu0 %v7177
      %v7788 = vpop.f32.mrf.mxu0
      %v7789 = vadd.f32 %v7516, %v7788
      %v7790 = vpop.f32.mrf.mxu0
      %v7791 = vpop.f32.mrf.mxu0
      %v7792 = vadd.f32 %v7519, %v7791
      %v7793 = vpop.f32.mrf.mxu0
      %7794 = vmatprep.mubr.bf16.mxu0 0
      %7795 = vmatmul.mubr.bf16.gmra.mxu0 %v7178
      %v7796 = vpop.f32.mrf.mxu0
      %v7797 = vadd.f32 %v7524, %v7796
      %v7798 = vpop.f32.mrf.mxu0
      %v7799 = vpop.f32.mrf.mxu0
      %v7800 = vadd.f32 %v7527, %v7799
      %v7801 = vpop.f32.mrf.mxu0
      %7802 = vmatprep.mubr.bf16.mxu0 0
      %7803 = vmatmul.mubr.bf16.gmra.mxu0 %v7179
      %v7804 = vpop.f32.mrf.mxu0
      %v7805 = vadd.f32 %v7532, %v7804
      %v7806 = vpop.f32.mrf.mxu0
      %v7807 = vpop.f32.mrf.mxu0
      %v7808 = vadd.f32 %v7535, %v7807
      %v7809 = vpop.f32.mrf.mxu0
      %7810 = vmatprep.mubr.bf16.mxu0 0
      %7811 = vmatmul.mubr.bf16.gmra.mxu0 %v7180
      %v7812 = vpop.f32.mrf.mxu0
      %v7813 = vadd.f32 %v7540, %v7812
      %v7814 = vpop.f32.mrf.mxu0
      %v7815 = vpop.f32.mrf.mxu0
      %v7816 = vadd.f32 %v7543, %v7815
      %v7817 = vpop.f32.mrf.mxu0
      %7818 = vmatprep.mubr.bf16.mxu0 0
      %7819 = vmatmul.mubr.bf16.gmra.mxu0 %v7181
      %v7820 = vpop.f32.mrf.mxu0
      %v7821 = vadd.f32 %v7548, %v7820
      %v7822 = vpop.f32.mrf.mxu0
      %v7823 = vpop.f32.mrf.mxu0
      %v7824 = vadd.f32 %v7551, %v7823
      %v7825 = vpop.f32.mrf.mxu0
      %7826 = vmatprep.mubr.bf16.mxu0 0
      %7827 = vmatmul.mubr.bf16.gmra.mxu0 %v7182
      %v7828 = vpop.f32.mrf.mxu0
      %v7829 = vadd.f32 %v7556, %v7828
      %v7830 = vpop.f32.mrf.mxu0
      %v7831 = vpop.f32.mrf.mxu0
      %v7832 = vadd.f32 %v7559, %v7831
      %v7833 = vpop.f32.mrf.mxu0
      %7834 = vdwg.mxu0
      %v7835 = vld [vmem:[#allocation2 + $0x39] sm:$0xff]
      %v7836 = vld [vmem:[#allocation2 + $0x41] sm:$0xff]
      %v7837 = vld [vmem:[#allocation2 + $0x49] sm:$0xff]
      %v7838 = vld [vmem:[#allocation2 + $0x51] sm:$0xff]
      %v7839 = vld [vmem:[#allocation2 + $0x59] sm:$0xff]
      %v7840 = vld [vmem:[#allocation2 + $0x61] sm:$0xff]
      %v7841 = vld [vmem:[#allocation2 + $0x69] sm:$0xff]
      %v7842 = vld [vmem:[#allocation2 + $0x71] sm:$0xff]
      %v7843 = vld [vmem:[#allocation2 + $0x79] sm:$0xff]
      %v7844 = vld [vmem:[#allocation2 + $0x81] sm:$0xff]
      %v7845 = vld [vmem:[#allocation2 + $0x89] sm:$0xff]
      %v7846 = vld [vmem:[#allocation2 + $0x91] sm:$0xff]
      %v7847 = vld [vmem:[#allocation2 + $0x99] sm:$0xff]
      %v7848 = vld [vmem:[#allocation2 + $0xa1] sm:$0xff]
      %v7849 = vld [vmem:[#allocation2 + $0xa9] sm:$0xff]
      %v7850 = vld [vmem:[#allocation2 + $0xb1] sm:$0xff]
      %v7851 = vld [vmem:[#allocation2 + $0xb9] sm:$0xff]
      %v7852 = vld [vmem:[#allocation2 + $0xc1] sm:$0xff]
      %v7853 = vld [vmem:[#allocation2 + $0xc9] sm:$0xff]
      %v7854 = vld [vmem:[#allocation2 + $0xd1] sm:$0xff]
      %v7855 = vld [vmem:[#allocation2 + $0xd9] sm:$0xff]
      %v7856 = vld [vmem:[#allocation2 + $0xe1] sm:$0xff]
      %v7857 = vld [vmem:[#allocation2 + $0xe9] sm:$0xff]
      %v7858 = vld [vmem:[#allocation2 + $0xf1] sm:$0xff]
      %v7859 = vld [vmem:[#allocation2 + $0xf9] sm:$0xff]
      %v7860 = vld [vmem:[#allocation2 + $0x101] sm:$0xff]
      %v7861 = vld [vmem:[#allocation2 + $0x109] sm:$0xff]
      %v7862 = vld [vmem:[#allocation2 + $0x111] sm:$0xff]
      %v7863 = vld [vmem:[#allocation2 + $0x119] sm:$0xff]
      %v7864 = vld [vmem:[#allocation2 + $0x121] sm:$0xff]
      %v7865 = vld [vmem:[#allocation2 + $0x129] sm:$0xff]
      %v7866 = vld [vmem:[#allocation2 + $0x131] sm:$0xff]
      %v7867 = vld [vmem:[#allocation2 + $0x139] sm:$0xff]
      %v7868 = vld [vmem:[#allocation2 + $0x141] sm:$0xff]
      %v7869 = vld [vmem:[#allocation2 + $0x149] sm:$0xff]
      %v7870 = vld [vmem:[#allocation2 + $0x151] sm:$0xff]
      %v7871 = vld [vmem:[#allocation2 + $0x159] sm:$0xff]
      %v7872 = vld [vmem:[#allocation2 + $0x161] sm:$0xff]
      %v7873 = vld [vmem:[#allocation2 + $0x169] sm:$0xff]
      %v7874 = vld [vmem:[#allocation2 + $0x171] sm:$0xff]
      %v7875 = vld [vmem:[#allocation2 + $0x179] sm:$0xff]
      %v7876 = vld [vmem:[#allocation2 + $0x181] sm:$0xff]
      %v7877 = vld [vmem:[#allocation2 + $0x189] sm:$0xff]
      %v7878 = vld [vmem:[#allocation2 + $0x191] sm:$0xff]
      %v7879 = vld [vmem:[#allocation2 + $0x199] sm:$0xff]
      %v7880 = vld [vmem:[#allocation2 + $0x1a1] sm:$0xff]
      %v7881 = vld [vmem:[#allocation2 + $0x1a9] sm:$0xff]
      %v7882 = vld [vmem:[#allocation2 + $0x1b1] sm:$0xff]
      %v7883 = vpack.c.bf16 %v7836, %v7835
      %v7884 = vpack.c.bf16 %v7838, %v7837
      %v7885 = vpack.c.bf16 %v7840, %v7839
      %v7886 = vpack.c.bf16 %v7842, %v7841
      %v7887 = vpack.c.bf16 %v7844, %v7843
      %v7888 = vpack.c.bf16 %v7846, %v7845
      %v7889 = vpack.c.bf16 %v7848, %v7847
      %v7890 = vpack.c.bf16 %v7850, %v7849
      %v7891 = vpack.c.bf16 %v7852, %v7851
      %v7892 = vpack.c.bf16 %v7854, %v7853
      %v7893 = vpack.c.bf16 %v7856, %v7855
      %v7894 = vpack.c.bf16 %v7858, %v7857
      %v7895 = vpack.c.bf16 %v7860, %v7859
      %v7896 = vpack.c.bf16 %v7862, %v7861
      %v7897 = vpack.c.bf16 %v7864, %v7863
      %v7898 = vpack.c.bf16 %v7866, %v7865
      %v7899 = vpack.c.bf16 %v7868, %v7867
      %v7900 = vpack.c.bf16 %v7870, %v7869
      %v7901 = vpack.c.bf16 %v7872, %v7871
      %v7902 = vpack.c.bf16 %v7874, %v7873
      %v7903 = vpack.c.bf16 %v7876, %v7875
      %v7904 = vpack.c.bf16 %v7878, %v7877
      %v7905 = vpack.c.bf16 %v7880, %v7879
      %v7906 = vpack.c.bf16 %v7882, %v7881
      %s7907 = scalar_lea.vmem %s4, 512
      %v7908 = vld [vmem:[%s7907] sm:$0xf]
      %v7909 = vld [vmem:[%s7907 + $0x4] sm:$0xf]
      %v7910 = vld [vmem:[%s7907 + $0x8] sm:$0xf]
      %v7911 = vld [vmem:[%s7907 + $0xc] sm:$0xf]
      %v7912 = vld [vmem:[%s7907 + $0x10] sm:$0xf]
      %v7913 = vld [vmem:[%s7907 + $0x14] sm:$0xf]
      %v7914 = vld [vmem:[%s7907 + $0x18] sm:$0xf]
      %v7915 = vld [vmem:[%s7907 + $0x1c] sm:$0xf]
      %v7916 = vld [vmem:[%s7907 + $0x20] sm:$0xf]
      %v7917 = vld [vmem:[%s7907 + $0x24] sm:$0xf]
      %v7918 = vld [vmem:[%s7907 + $0x28] sm:$0xf]
      %v7919 = vld [vmem:[%s7907 + $0x2c] sm:$0xf]
      %v7920 = vld [vmem:[%s7907 + $0x30] sm:$0xf]
      %v7921 = vld [vmem:[%s7907 + $0x34] sm:$0xf]
      %v7922 = vld [vmem:[%s7907 + $0x38] sm:$0xf]
      %v7923 = vld [vmem:[%s7907 + $0x3c] sm:$0xf]
      %v7940 = vunpack.c.l.b16 %v7908
      %v7941 = vunpack.c.l.b16 %v7909
      %v7942 = vunpack.c.l.b16 %v7910
      %v7943 = vunpack.c.l.b16 %v7911
      %v7944 = vunpack.c.l.b16 %v7912
      %v7945 = vunpack.c.l.b16 %v7913
      %v7946 = vunpack.c.l.b16 %v7914
      %v7947 = vunpack.c.l.b16 %v7915
      %v7948 = vunpack.c.l.b16 %v7916
      %v7949 = vunpack.c.l.b16 %v7917
      %v7950 = vunpack.c.l.b16 %v7918
      %v7951 = vunpack.c.l.b16 %v7919
      %v7952 = vunpack.c.l.b16 %v7920
      %v7953 = vunpack.c.l.b16 %v7921
      %v7954 = vunpack.c.l.b16 %v7922
      %v7955 = vunpack.c.l.b16 %v7923
      %v7956 = vpack.c.b16 %v7941, %v7940
      %v7957 = vpack.c.b16 %v7943, %v7942
      %v7958 = vpack.c.b16 %v7945, %v7944
      %v7959 = vpack.c.b16 %v7947, %v7946
      %v7960 = vpack.c.b16 %v7949, %v7948
      %v7961 = vpack.c.b16 %v7951, %v7950
      %v7962 = vpack.c.b16 %v7953, %v7952
      %v7963 = vpack.c.b16 %v7955, %v7954
      %7972 = vmatprep.subr.bf16.mxu0 0
      %7973 = vmatpush1.bf16.msra.mxu0 %v7963
      %7974 = vmatprep.subr.bf16.mxu0 0
      %7975 = vmatpush1.bf16.msra.mxu0 %v7962
      %7976 = vmatprep.subr.bf16.mxu0 0
      %7977 = vmatpush1.bf16.msra.mxu0 %v7961
      %7978 = vmatprep.subr.bf16.mxu0 0
      %7979 = vmatpush1.bf16.msra.mxu0 %v7960
      %7980 = vmatprep.subr.bf16.mxu0 0
      %7981 = vmatpush1.bf16.msra.mxu0 %v7959
      %7982 = vmatprep.subr.bf16.mxu0 0
      %7983 = vmatpush1.bf16.msra.mxu0 %v7958
      %7984 = vmatprep.subr.bf16.mxu0 0
      %7985 = vmatpush1.bf16.msra.mxu0 %v7957
      %7986 = vmatprep.subr.bf16.mxu0 0
      %7987 = vmatpush1.bf16.msra.mxu0 %v7956
      %7988 = vmatprep.subr.bf16.mxu0 0
      %7989 = vmatpush2.bf16.msra.mxu0 0
      %7990 = vmatprep.subr.bf16.mxu0 0
      %7991 = vmatpush2.bf16.msra.mxu0 0
      %7992 = vmatprep.subr.bf16.mxu0 0
      %7993 = vmatpush2.bf16.msra.mxu0 0
      %7994 = vmatprep.subr.bf16.mxu0 0
      %7995 = vmatpush2.bf16.msra.mxu0 0
      %7996 = vmatprep.subr.bf16.mxu0 0
      %7997 = vmatpush2.bf16.msra.mxu0 0
      %7998 = vmatprep.subr.bf16.mxu0 0
      %7999 = vmatpush2.bf16.msra.mxu0 0
      %8000 = vmatprep.subr.bf16.mxu0 0
      %8001 = vmatpush2.bf16.msra.mxu0 0
      %8002 = vmatprep.subr.bf16.mxu0 0
      %8003 = vmatpush2.bf16.msra.mxu0 0
      %8004 = vmatprep.mubr.bf16.mxu0 0
      %8005 = vmatmul.mubr.bf16.gmra.mxu0 %v7883
      %v8006 = vpop.f32.mrf.mxu0
      %v8007 = vadd.f32 0.0, %v8006
      %v8008 = vpop.f32.mrf.mxu0
      %v8009 = vpop.f32.mrf.mxu0
      %v8010 = vadd.f32 0.0, %v8009
      %v8011 = vpop.f32.mrf.mxu0
      %8012 = vmatprep.mubr.bf16.mxu0 0
      %8013 = vmatmul.mubr.bf16.gmra.mxu0 %v7884
      %v8014 = vpop.f32.mrf.mxu0
      %v8015 = vadd.f32 0.0, %v8014
      %v8016 = vpop.f32.mrf.mxu0
      %v8017 = vpop.f32.mrf.mxu0
      %v8018 = vadd.f32 0.0, %v8017
      %v8019 = vpop.f32.mrf.mxu0
      %8020 = vmatprep.mubr.bf16.mxu0 0
      %8021 = vmatmul.mubr.bf16.gmra.mxu0 %v7885
      %v8022 = vpop.f32.mrf.mxu0
      %v8023 = vadd.f32 0.0, %v8022
      %v8024 = vpop.f32.mrf.mxu0
      %v8025 = vpop.f32.mrf.mxu0
      %v8026 = vadd.f32 0.0, %v8025
      %v8027 = vpop.f32.mrf.mxu0
      %8028 = vmatprep.mubr.bf16.mxu0 0
      %8029 = vmatmul.mubr.bf16.gmra.mxu0 %v7886
      %v8030 = vpop.f32.mrf.mxu0
      %v8031 = vadd.f32 0.0, %v8030
      %v8032 = vpop.f32.mrf.mxu0
      %v8033 = vpop.f32.mrf.mxu0
      %v8034 = vadd.f32 0.0, %v8033
      %v8035 = vpop.f32.mrf.mxu0
      %8036 = vmatprep.mubr.bf16.mxu0 0
      %8037 = vmatmul.mubr.bf16.gmra.mxu0 %v7887
      %v8038 = vpop.f32.mrf.mxu0
      %v8039 = vadd.f32 0.0, %v8038
      %v8040 = vpop.f32.mrf.mxu0
      %v8041 = vpop.f32.mrf.mxu0
      %v8042 = vadd.f32 0.0, %v8041
      %v8043 = vpop.f32.mrf.mxu0
      %8044 = vmatprep.mubr.bf16.mxu0 0
      %8045 = vmatmul.mubr.bf16.gmra.mxu0 %v7888
      %v8046 = vpop.f32.mrf.mxu0
      %v8047 = vadd.f32 0.0, %v8046
      %v8048 = vpop.f32.mrf.mxu0
      %v8049 = vpop.f32.mrf.mxu0
      %v8050 = vadd.f32 0.0, %v8049
      %v8051 = vpop.f32.mrf.mxu0
      %8052 = vmatprep.mubr.bf16.mxu0 0
      %8053 = vmatmul.mubr.bf16.gmra.mxu0 %v7889
      %v8054 = vpop.f32.mrf.mxu0
      %v8055 = vadd.f32 0.0, %v8054
      %v8056 = vpop.f32.mrf.mxu0
      %v8057 = vpop.f32.mrf.mxu0
      %v8058 = vadd.f32 0.0, %v8057
      %v8059 = vpop.f32.mrf.mxu0
      %8060 = vmatprep.mubr.bf16.mxu0 0
      %8061 = vmatmul.mubr.bf16.gmra.mxu0 %v7890
      %v8062 = vpop.f32.mrf.mxu0
      %v8063 = vadd.f32 0.0, %v8062
      %v8064 = vpop.f32.mrf.mxu0
      %v8065 = vpop.f32.mrf.mxu0
      %v8066 = vadd.f32 0.0, %v8065
      %v8067 = vpop.f32.mrf.mxu0
      %8068 = vmatprep.mubr.bf16.mxu0 0
      %8069 = vmatmul.mubr.bf16.gmra.mxu0 %v7891
      %v8070 = vpop.f32.mrf.mxu0
      %v8071 = vadd.f32 0.0, %v8070
      %v8072 = vpop.f32.mrf.mxu0
      %v8073 = vpop.f32.mrf.mxu0
      %v8074 = vadd.f32 0.0, %v8073
      %v8075 = vpop.f32.mrf.mxu0
      %8076 = vmatprep.mubr.bf16.mxu0 0
      %8077 = vmatmul.mubr.bf16.gmra.mxu0 %v7892
      %v8078 = vpop.f32.mrf.mxu0
      %v8079 = vadd.f32 0.0, %v8078
      %v8080 = vpop.f32.mrf.mxu0
      %v8081 = vpop.f32.mrf.mxu0
      %v8082 = vadd.f32 0.0, %v8081
      %v8083 = vpop.f32.mrf.mxu0
      %8084 = vmatprep.mubr.bf16.mxu0 0
      %8085 = vmatmul.mubr.bf16.gmra.mxu0 %v7893
      %v8086 = vpop.f32.mrf.mxu0
      %v8087 = vadd.f32 0.0, %v8086
      %v8088 = vpop.f32.mrf.mxu0
      %v8089 = vpop.f32.mrf.mxu0
      %v8090 = vadd.f32 0.0, %v8089
      %v8091 = vpop.f32.mrf.mxu0
      %8092 = vmatprep.mubr.bf16.mxu0 0
      %8093 = vmatmul.mubr.bf16.gmra.mxu0 %v7894
      %v8094 = vpop.f32.mrf.mxu0
      %v8095 = vadd.f32 0.0, %v8094
      %v8096 = vpop.f32.mrf.mxu0
      %v8097 = vpop.f32.mrf.mxu0
      %v8098 = vadd.f32 0.0, %v8097
      %v8099 = vpop.f32.mrf.mxu0
      %8100 = vmatprep.mubr.bf16.mxu0 0
      %8101 = vmatmul.mubr.bf16.gmra.mxu0 %v7895
      %v8102 = vpop.f32.mrf.mxu0
      %v8103 = vadd.f32 0.0, %v8102
      %v8104 = vpop.f32.mrf.mxu0
      %v8105 = vpop.f32.mrf.mxu0
      %v8106 = vadd.f32 0.0, %v8105
      %v8107 = vpop.f32.mrf.mxu0
      %8108 = vmatprep.mubr.bf16.mxu0 0
      %8109 = vmatmul.mubr.bf16.gmra.mxu0 %v7896
      %v8110 = vpop.f32.mrf.mxu0
      %v8111 = vadd.f32 0.0, %v8110
      %v8112 = vpop.f32.mrf.mxu0
      %v8113 = vpop.f32.mrf.mxu0
      %v8114 = vadd.f32 0.0, %v8113
      %v8115 = vpop.f32.mrf.mxu0
      %8116 = vmatprep.mubr.bf16.mxu0 0
      %8117 = vmatmul.mubr.bf16.gmra.mxu0 %v7897
      %v8118 = vpop.f32.mrf.mxu0
      %v8119 = vadd.f32 0.0, %v8118
      %v8120 = vpop.f32.mrf.mxu0
      %v8121 = vpop.f32.mrf.mxu0
      %v8122 = vadd.f32 0.0, %v8121
      %v8123 = vpop.f32.mrf.mxu0
      %8124 = vmatprep.mubr.bf16.mxu0 0
      %8125 = vmatmul.mubr.bf16.gmra.mxu0 %v7898
      %v8126 = vpop.f32.mrf.mxu0
      %v8127 = vadd.f32 0.0, %v8126
      %v8128 = vpop.f32.mrf.mxu0
      %v8129 = vpop.f32.mrf.mxu0
      %v8130 = vadd.f32 0.0, %v8129
      %v8131 = vpop.f32.mrf.mxu0
      %8132 = vmatprep.mubr.bf16.mxu0 0
      %8133 = vmatmul.mubr.bf16.gmra.mxu0 %v7899
      %v8134 = vpop.f32.mrf.mxu0
      %v8135 = vadd.f32 0.0, %v8134
      %v8136 = vpop.f32.mrf.mxu0
      %v8137 = vpop.f32.mrf.mxu0
      %v8138 = vadd.f32 0.0, %v8137
      %v8139 = vpop.f32.mrf.mxu0
      %8140 = vmatprep.mubr.bf16.mxu0 0
      %8141 = vmatmul.mubr.bf16.gmra.mxu0 %v7900
      %v8142 = vpop.f32.mrf.mxu0
      %v8143 = vadd.f32 0.0, %v8142
      %v8144 = vpop.f32.mrf.mxu0
      %v8145 = vpop.f32.mrf.mxu0
      %v8146 = vadd.f32 0.0, %v8145
      %v8147 = vpop.f32.mrf.mxu0
      %8148 = vmatprep.mubr.bf16.mxu0 0
      %8149 = vmatmul.mubr.bf16.gmra.mxu0 %v7901
      %v8150 = vpop.f32.mrf.mxu0
      %v8151 = vadd.f32 0.0, %v8150
      %v8152 = vpop.f32.mrf.mxu0
      %v8153 = vpop.f32.mrf.mxu0
      %v8154 = vadd.f32 0.0, %v8153
      %v8155 = vpop.f32.mrf.mxu0
      %8156 = vmatprep.mubr.bf16.mxu0 0
      %8157 = vmatmul.mubr.bf16.gmra.mxu0 %v7902
      %v8158 = vpop.f32.mrf.mxu0
      %v8159 = vadd.f32 0.0, %v8158
      %v8160 = vpop.f32.mrf.mxu0
      %v8161 = vpop.f32.mrf.mxu0
      %v8162 = vadd.f32 0.0, %v8161
      %v8163 = vpop.f32.mrf.mxu0
      %8164 = vmatprep.mubr.bf16.mxu0 0
      %8165 = vmatmul.mubr.bf16.gmra.mxu0 %v7903
      %v8166 = vpop.f32.mrf.mxu0
      %v8167 = vadd.f32 0.0, %v8166
      %v8168 = vpop.f32.mrf.mxu0
      %v8169 = vpop.f32.mrf.mxu0
      %v8170 = vadd.f32 0.0, %v8169
      %v8171 = vpop.f32.mrf.mxu0
      %8172 = vmatprep.mubr.bf16.mxu0 0
      %8173 = vmatmul.mubr.bf16.gmra.mxu0 %v7904
      %v8174 = vpop.f32.mrf.mxu0
      %v8175 = vadd.f32 0.0, %v8174
      %v8176 = vpop.f32.mrf.mxu0
      %v8177 = vpop.f32.mrf.mxu0
      %v8178 = vadd.f32 0.0, %v8177
      %v8179 = vpop.f32.mrf.mxu0
      %8180 = vmatprep.mubr.bf16.mxu0 0
      %8181 = vmatmul.mubr.bf16.gmra.mxu0 %v7905
      %v8182 = vpop.f32.mrf.mxu0
      %v8183 = vadd.f32 0.0, %v8182
      %v8184 = vpop.f32.mrf.mxu0
      %v8185 = vpop.f32.mrf.mxu0
      %v8186 = vadd.f32 0.0, %v8185
      %v8187 = vpop.f32.mrf.mxu0
      %8188 = vmatprep.mubr.bf16.mxu0 0
      %8189 = vmatmul.mubr.bf16.gmra.mxu0 %v7906
      %v8190 = vpop.f32.mrf.mxu0
      %v8191 = vadd.f32 0.0, %v8190
      %v8192 = vpop.f32.mrf.mxu0
      %v8193 = vpop.f32.mrf.mxu0
      %v8194 = vadd.f32 0.0, %v8193
      %v8195 = vpop.f32.mrf.mxu0
      %8196 = vdwg.mxu0
      %v8197 = vadd.f32 %v7645, %v8007
      %v8198 = vadd.f32 %v7648, %v8010
      %v8199 = vadd.f32 %v7653, %v8015
      %v8200 = vadd.f32 %v7656, %v8018
      %v8201 = vadd.f32 %v7661, %v8023
      %v8202 = vadd.f32 %v7664, %v8026
      %v8203 = vadd.f32 %v7669, %v8031
      %v8204 = vadd.f32 %v7672, %v8034
      %v8205 = vadd.f32 %v7677, %v8039
      %v8206 = vadd.f32 %v7680, %v8042
      %v8207 = vadd.f32 %v7685, %v8047
      %v8208 = vadd.f32 %v7688, %v8050
      %v8209 = vadd.f32 %v7693, %v8055
      %v8210 = vadd.f32 %v7696, %v8058
      %v8211 = vadd.f32 %v7701, %v8063
      %v8212 = vadd.f32 %v7704, %v8066
      %v8213 = vadd.f32 %v7709, %v8071
      %v8214 = vadd.f32 %v7712, %v8074
      %v8215 = vadd.f32 %v7717, %v8079
      %v8216 = vadd.f32 %v7720, %v8082
      %v8217 = vadd.f32 %v7725, %v8087
      %v8218 = vadd.f32 %v7728, %v8090
      %v8219 = vadd.f32 %v7733, %v8095
      %v8220 = vadd.f32 %v7736, %v8098
      %v8221 = vadd.f32 %v7741, %v8103
      %v8222 = vadd.f32 %v7744, %v8106
      %v8223 = vadd.f32 %v7749, %v8111
      %v8224 = vadd.f32 %v7752, %v8114
      %v8225 = vadd.f32 %v7757, %v8119
      %v8226 = vadd.f32 %v7760, %v8122
      %v8227 = vadd.f32 %v7765, %v8127
      %v8228 = vadd.f32 %v7768, %v8130
      %v8229 = vadd.f32 %v7773, %v8135
      %v8230 = vadd.f32 %v7776, %v8138
      %v8231 = vadd.f32 %v7781, %v8143
      %v8232 = vadd.f32 %v7784, %v8146
      %v8233 = vadd.f32 %v7789, %v8151
      %v8234 = vadd.f32 %v7792, %v8154
      %v8235 = vadd.f32 %v7797, %v8159
      %v8236 = vadd.f32 %v7800, %v8162
      %v8237 = vadd.f32 %v7805, %v8167
      %v8238 = vadd.f32 %v7808, %v8170
      %v8239 = vadd.f32 %v7813, %v8175
      %v8240 = vadd.f32 %v7816, %v8178
      %v8241 = vadd.f32 %v7821, %v8183
      %v8242 = vadd.f32 %v7824, %v8186
      %v8243 = vadd.f32 %v7829, %v8191
      %v8244 = vadd.f32 %v7832, %v8194
      %v8245 = vadd.f32 %v7063, %v8197
      %v8246 = vadd.f32 %v7064, %v8198
      %v8247 = vadd.f32 %v7065, %v8199
      %v8248 = vadd.f32 %v7066, %v8200
      %v8249 = vadd.f32 %v7067, %v8201
      %v8250 = vadd.f32 %v7068, %v8202
      %v8251 = vadd.f32 %v7069, %v8203
      %v8252 = vadd.f32 %v7070, %v8204
      %v8253 = vadd.f32 %v7071, %v8205
      %v8254 = vadd.f32 %v7072, %v8206
      %v8255 = vadd.f32 %v7073, %v8207
      %v8256 = vadd.f32 %v7074, %v8208
      %v8257 = vadd.f32 %v7075, %v8209
      %v8258 = vadd.f32 %v7076, %v8210
      %v8259 = vadd.f32 %v7077, %v8211
      %v8260 = vadd.f32 %v7078, %v8212
      %v8261 = vadd.f32 %v7079, %v8213
      %v8262 = vadd.f32 %v7080, %v8214
      %v8263 = vadd.f32 %v7081, %v8215
      %v8264 = vadd.f32 %v7082, %v8216
      %v8265 = vadd.f32 %v7083, %v8217
      %v8266 = vadd.f32 %v7084, %v8218
      %v8267 = vadd.f32 %v7085, %v8219
      %v8268 = vadd.f32 %v7086, %v8220
      %v8269 = vadd.f32 %v7087, %v8221
      %v8270 = vadd.f32 %v7088, %v8222
      %v8271 = vadd.f32 %v7089, %v8223
      %v8272 = vadd.f32 %v7090, %v8224
      %v8273 = vadd.f32 %v7091, %v8225
      %v8274 = vadd.f32 %v7092, %v8226
      %v8275 = vadd.f32 %v7093, %v8227
      %v8276 = vadd.f32 %v7094, %v8228
      %v8277 = vadd.f32 %v7095, %v8229
      %v8278 = vadd.f32 %v7096, %v8230
      %v8279 = vadd.f32 %v7097, %v8231
      %v8280 = vadd.f32 %v7098, %v8232
      %v8281 = vadd.f32 %v7099, %v8233
      %v8282 = vadd.f32 %v7100, %v8234
      %v8283 = vadd.f32 %v7101, %v8235
      %v8284 = vadd.f32 %v7102, %v8236
      %v8285 = vadd.f32 %v7103, %v8237
      %v8286 = vadd.f32 %v7104, %v8238
      %v8287 = vadd.f32 %v7105, %v8239
      %v8288 = vadd.f32 %v7106, %v8240
      %v8289 = vadd.f32 %v7107, %v8241
      %v8290 = vadd.f32 %v7108, %v8242
      %v8291 = vadd.f32 %v7109, %v8243
      %v8292 = vadd.f32 %v7110, %v8244
      %8293 = vst [vmem:[#allocation3] sm:$0xff] %v8245
      %8294 = vst [vmem:[#allocation3 + $0x8] sm:$0xff] %v8246
      %8295 = vst [vmem:[#allocation3 + $0x10] sm:$0xff] %v8247
      %8296 = vst [vmem:[#allocation3 + $0x18] sm:$0xff] %v8248
      %8297 = vst [vmem:[#allocation3 + $0x20] sm:$0xff] %v8249
      %8298 = vst [vmem:[#allocation3 + $0x28] sm:$0xff] %v8250
      %8299 = vst [vmem:[#allocation3 + $0x30] sm:$0xff] %v8251
      %8300 = vst [vmem:[#allocation3 + $0x38] sm:$0xff] %v8252
      %8301 = vst [vmem:[#allocation3 + $0x40] sm:$0xff] %v8253
      %8302 = vst [vmem:[#allocation3 + $0x48] sm:$0xff] %v8254
      %8303 = vst [vmem:[#allocation3 + $0x50] sm:$0xff] %v8255
      %8304 = vst [vmem:[#allocation3 + $0x58] sm:$0xff] %v8256
      %8305 = vst [vmem:[#allocation3 + $0x60] sm:$0xff] %v8257
      %8306 = vst [vmem:[#allocation3 + $0x68] sm:$0xff] %v8258
      %8307 = vst [vmem:[#allocation3 + $0x70] sm:$0xff] %v8259
      %8308 = vst [vmem:[#allocation3 + $0x78] sm:$0xff] %v8260
      %8309 = vst [vmem:[#allocation3 + $0x80] sm:$0xff] %v8261
      %8310 = vst [vmem:[#allocation3 + $0x88] sm:$0xff] %v8262
      %8311 = vst [vmem:[#allocation3 + $0x90] sm:$0xff] %v8263
      %8312 = vst [vmem:[#allocation3 + $0x98] sm:$0xff] %v8264
      %8313 = vst [vmem:[#allocation3 + $0xa0] sm:$0xff] %v8265
      %8314 = vst [vmem:[#allocation3 + $0xa8] sm:$0xff] %v8266
      %8315 = vst [vmem:[#allocation3 + $0xb0] sm:$0xff] %v8267
      %8316 = vst [vmem:[#allocation3 + $0xb8] sm:$0xff] %v8268
      %8317 = vst [vmem:[#allocation3 + $0xc0] sm:$0xff] %v8269
      %8318 = vst [vmem:[#allocation3 + $0xc8] sm:$0xff] %v8270
      %8319 = vst [vmem:[#allocation3 + $0xd0] sm:$0xff] %v8271
      %8320 = vst [vmem:[#allocation3 + $0xd8] sm:$0xff] %v8272
      %8321 = vst [vmem:[#allocation3 + $0xe0] sm:$0xff] %v8273
      %8322 = vst [vmem:[#allocation3 + $0xe8] sm:$0xff] %v8274
      %8323 = vst [vmem:[#allocation3 + $0xf0] sm:$0xff] %v8275
      %8324 = vst [vmem:[#allocation3 + $0xf8] sm:$0xff] %v8276
      %8325 = vst [vmem:[#allocation3 + $0x100] sm:$0xff] %v8277
      %8326 = vst [vmem:[#allocation3 + $0x108] sm:$0xff] %v8278
      %8327 = vst [vmem:[#allocation3 + $0x110] sm:$0xff] %v8279
      %8328 = vst [vmem:[#allocation3 + $0x118] sm:$0xff] %v8280
      %8329 = vst [vmem:[#allocation3 + $0x120] sm:$0xff] %v8281
      %8330 = vst [vmem:[#allocation3 + $0x128] sm:$0xff] %v8282
      %8331 = vst [vmem:[#allocation3 + $0x130] sm:$0xff] %v8283
      %8332 = vst [vmem:[#allocation3 + $0x138] sm:$0xff] %v8284
      %8333 = vst [vmem:[#allocation3 + $0x140] sm:$0xff] %v8285
      %8334 = vst [vmem:[#allocation3 + $0x148] sm:$0xff] %v8286
      %8335 = vst [vmem:[#allocation3 + $0x150] sm:$0xff] %v8287
      %8336 = vst [vmem:[#allocation3 + $0x158] sm:$0xff] %v8288
      %8337 = vst [vmem:[#allocation3 + $0x160] sm:$0xff] %v8289
      %8338 = vst [vmem:[#allocation3 + $0x168] sm:$0xff] %v8290
      %8339 = vst [vmem:[#allocation3 + $0x170] sm:$0xff] %v8291
      %8340 = vst [vmem:[#allocation3 + $0x178] sm:$0xff] %v8292
      %v8341 = vld [vmem:[#allocation3] sm:$0xff]
      %v8342 = vld [vmem:[#allocation3 + $0x8] sm:$0xff]
      %v8343 = vld [vmem:[#allocation3 + $0x10] sm:$0xff]
      %v8344 = vld [vmem:[#allocation3 + $0x18] sm:$0xff]
      %v8345 = vld [vmem:[#allocation3 + $0x20] sm:$0xff]
      %v8346 = vld [vmem:[#allocation3 + $0x28] sm:$0xff]
      %v8347 = vld [vmem:[#allocation3 + $0x30] sm:$0xff]
      %v8348 = vld [vmem:[#allocation3 + $0x38] sm:$0xff]
      %v8349 = vld [vmem:[#allocation3 + $0x40] sm:$0xff]
      %v8350 = vld [vmem:[#allocation3 + $0x48] sm:$0xff]
      %v8351 = vld [vmem:[#allocation3 + $0x50] sm:$0xff]
      %v8352 = vld [vmem:[#allocation3 + $0x58] sm:$0xff]
      %v8353 = vld [vmem:[#allocation3 + $0x60] sm:$0xff]
      %v8354 = vld [vmem:[#allocation3 + $0x68] sm:$0xff]
      %v8355 = vld [vmem:[#allocation3 + $0x70] sm:$0xff]
      %v8356 = vld [vmem:[#allocation3 + $0x78] sm:$0xff]
      %v8357 = vld [vmem:[#allocation3 + $0x80] sm:$0xff]
      %v8358 = vld [vmem:[#allocation3 + $0x88] sm:$0xff]
      %v8359 = vld [vmem:[#allocation3 + $0x90] sm:$0xff]
      %v8360 = vld [vmem:[#allocation3 + $0x98] sm:$0xff]
      %v8361 = vld [vmem:[#allocation3 + $0xa0] sm:$0xff]
      %v8362 = vld [vmem:[#allocation3 + $0xa8] sm:$0xff]
      %v8363 = vld [vmem:[#allocation3 + $0xb0] sm:$0xff]
      %v8364 = vld [vmem:[#allocation3 + $0xb8] sm:$0xff]
      %v8365 = vld [vmem:[#allocation3 + $0xc0] sm:$0xff]
      %v8366 = vld [vmem:[#allocation3 + $0xc8] sm:$0xff]
      %v8367 = vld [vmem:[#allocation3 + $0xd0] sm:$0xff]
      %v8368 = vld [vmem:[#allocation3 + $0xd8] sm:$0xff]
      %v8369 = vld [vmem:[#allocation3 + $0xe0] sm:$0xff]
      %v8370 = vld [vmem:[#allocation3 + $0xe8] sm:$0xff]
      %v8371 = vld [vmem:[#allocation3 + $0xf0] sm:$0xff]
      %v8372 = vld [vmem:[#allocation3 + $0xf8] sm:$0xff]
      %v8373 = vld [vmem:[#allocation3 + $0x100] sm:$0xff]
      %v8374 = vld [vmem:[#allocation3 + $0x108] sm:$0xff]
      %v8375 = vld [vmem:[#allocation3 + $0x110] sm:$0xff]
      %v8376 = vld [vmem:[#allocation3 + $0x118] sm:$0xff]
      %v8377 = vld [vmem:[#allocation3 + $0x120] sm:$0xff]
      %v8378 = vld [vmem:[#allocation3 + $0x128] sm:$0xff]
      %v8379 = vld [vmem:[#allocation3 + $0x130] sm:$0xff]
      %v8380 = vld [vmem:[#allocation3 + $0x138] sm:$0xff]
      %v8381 = vld [vmem:[#allocation3 + $0x140] sm:$0xff]
      %v8382 = vld [vmem:[#allocation3 + $0x148] sm:$0xff]
      %v8383 = vld [vmem:[#allocation3 + $0x150] sm:$0xff]
      %v8384 = vld [vmem:[#allocation3 + $0x158] sm:$0xff]
      %v8385 = vld [vmem:[#allocation3 + $0x160] sm:$0xff]
      %v8386 = vld [vmem:[#allocation3 + $0x168] sm:$0xff]
      %v8387 = vld [vmem:[#allocation3 + $0x170] sm:$0xff]
      %v8388 = vld [vmem:[#allocation3 + $0x178] sm:$0xff]
      %v8389 = vmul.f32 %v8341, %v666
      %v8390 = vmul.f32 %v8342, %v667
      %v8391 = vmul.f32 %v8343, %v668
      %v8392 = vmul.f32 %v8344, %v669
      %v8393 = vmul.f32 %v8345, %v670
      %v8394 = vmul.f32 %v8346, %v671
      %v8395 = vmul.f32 %v8347, %v672
      %v8396 = vmul.f32 %v8348, %v673
      %v8397 = vmul.f32 %v8349, %v674
      %v8398 = vmul.f32 %v8350, %v675
      %v8399 = vmul.f32 %v8351, %v676
      %v8400 = vmul.f32 %v8352, %v677
      %v8401 = vmul.f32 %v8353, %v678
      %v8402 = vmul.f32 %v8354, %v679
      %v8403 = vmul.f32 %v8355, %v680
      %v8404 = vmul.f32 %v8356, %v681
      %v8405 = vmul.f32 %v8357, %v682
      %v8406 = vmul.f32 %v8358, %v683
      %v8407 = vmul.f32 %v8359, %v684
      %v8408 = vmul.f32 %v8360, %v685
      %v8409 = vmul.f32 %v8361, %v686
      %v8410 = vmul.f32 %v8362, %v687
      %v8411 = vmul.f32 %v8363, %v688
      %v8412 = vmul.f32 %v8364, %v689
      %v8413 = vmul.f32 %v8365, %v690
      %v8414 = vmul.f32 %v8366, %v691
      %v8415 = vmul.f32 %v8367, %v692
      %v8416 = vmul.f32 %v8368, %v693
      %v8417 = vmul.f32 %v8369, %v694
      %v8418 = vmul.f32 %v8370, %v695
      %v8419 = vmul.f32 %v8371, %v696
      %v8420 = vmul.f32 %v8372, %v697
      %v8421 = vmul.f32 %v8373, %v698
      %v8422 = vmul.f32 %v8374, %v699
      %v8423 = vmul.f32 %v8375, %v700
      %v8424 = vmul.f32 %v8376, %v701
      %v8425 = vmul.f32 %v8377, %v702
      %v8426 = vmul.f32 %v8378, %v703
      %v8427 = vmul.f32 %v8379, %v704
      %v8428 = vmul.f32 %v8380, %v705
      %v8429 = vmul.f32 %v8381, %v706
      %v8430 = vmul.f32 %v8382, %v707
      %v8431 = vmul.f32 %v8383, %v708
      %v8432 = vmul.f32 %v8384, %v709
      %v8433 = vmul.f32 %v8385, %v710
      %v8434 = vmul.f32 %v8386, %v711
      %v8435 = vmul.f32 %v8387, %v712
      %v8436 = vmul.f32 %v8388, %v713
      %v8437 = vadd.f32 %v8389, %v8390
      %v8438 = vadd.f32 %v8437, %v8391
      %v8439 = vadd.f32 %v8438, %v8392
      %v8440 = vadd.f32 %v8439, %v8393
      %v8441 = vadd.f32 %v8440, %v8394
      %v8442 = vadd.f32 %v8441, %v8395
      %v8443 = vadd.f32 %v8442, %v8396
      %v8444 = vadd.f32 %v8443, %v8397
      %v8445 = vadd.f32 %v8444, %v8398
      %v8446 = vadd.f32 %v8445, %v8399
      %v8447 = vadd.f32 %v8446, %v8400
      %v8448 = vadd.f32 %v8447, %v8401
      %v8449 = vadd.f32 %v8448, %v8402
      %v8450 = vadd.f32 %v8449, %v8403
      %v8451 = vadd.f32 %v8450, %v8404
      %v8452 = vadd.f32 %v8451, %v8405
      %v8453 = vadd.f32 %v8452, %v8406
      %v8454 = vadd.f32 %v8453, %v8407
      %v8455 = vadd.f32 %v8454, %v8408
      %v8456 = vadd.f32 %v8455, %v8409
      %v8457 = vadd.f32 %v8456, %v8410
      %v8458 = vadd.f32 %v8457, %v8411
      %v8459 = vadd.f32 %v8458, %v8412
      %v8460 = vadd.f32 %v8459, %v8413
      %v8461 = vadd.f32 %v8460, %v8414
      %v8462 = vadd.f32 %v8461, %v8415
      %v8463 = vadd.f32 %v8462, %v8416
      %v8464 = vadd.f32 %v8463, %v8417
      %v8465 = vadd.f32 %v8464, %v8418
      %v8466 = vadd.f32 %v8465, %v8419
      %v8467 = vadd.f32 %v8466, %v8420
      %v8468 = vadd.f32 %v8467, %v8421
      %v8469 = vadd.f32 %v8468, %v8422
      %v8470 = vadd.f32 %v8469, %v8423
      %v8471 = vadd.f32 %v8470, %v8424
      %v8472 = vadd.f32 %v8471, %v8425
      %v8473 = vadd.f32 %v8472, %v8426
      %v8474 = vadd.f32 %v8473, %v8427
      %v8475 = vadd.f32 %v8474, %v8428
      %v8476 = vadd.f32 %v8475, %v8429
      %v8477 = vadd.f32 %v8476, %v8430
      %v8478 = vadd.f32 %v8477, %v8431
      %v8479 = vadd.f32 %v8478, %v8432
      %v8480 = vadd.f32 %v8479, %v8433
      %v8481 = vadd.f32 %v8480, %v8434
      %v8482 = vadd.f32 %v8481, %v8435
      %v8483 = vadd.f32 %v8482, %v8436
      %v8484 = vrot.slane %v8483, 4
      %v8485 = vadd.f32 %v8483, %v8484
      %v8486 = vrot.slane %v8485, 2
      %v8487 = vadd.f32 %v8485, %v8486
      %v8488 = vrot.slane %v8487, 1
      %v8489 = vadd.f32 %v8487, %v8488
      %v8490 = vmul.f32 %v8389, %v8389
      %v8491 = vmul.f32 %v8390, %v8390
      %v8492 = vmul.f32 %v8391, %v8391
      %v8493 = vmul.f32 %v8392, %v8392
      %v8494 = vmul.f32 %v8393, %v8393
      %v8495 = vmul.f32 %v8394, %v8394
      %v8496 = vmul.f32 %v8395, %v8395
      %v8497 = vmul.f32 %v8396, %v8396
      %v8498 = vmul.f32 %v8397, %v8397
      %v8499 = vmul.f32 %v8398, %v8398
      %v8500 = vmul.f32 %v8399, %v8399
      %v8501 = vmul.f32 %v8400, %v8400
      %v8502 = vmul.f32 %v8401, %v8401
      %v8503 = vmul.f32 %v8402, %v8402
      %v8504 = vmul.f32 %v8403, %v8403
      %v8505 = vmul.f32 %v8404, %v8404
      %v8506 = vmul.f32 %v8405, %v8405
      %v8507 = vmul.f32 %v8406, %v8406
      %v8508 = vmul.f32 %v8407, %v8407
      %v8509 = vmul.f32 %v8408, %v8408
      %v8510 = vmul.f32 %v8409, %v8409
      %v8511 = vmul.f32 %v8410, %v8410
      %v8512 = vmul.f32 %v8411, %v8411
      %v8513 = vmul.f32 %v8412, %v8412
      %v8514 = vmul.f32 %v8413, %v8413
      %v8515 = vmul.f32 %v8414, %v8414
      %v8516 = vmul.f32 %v8415, %v8415
      %v8517 = vmul.f32 %v8416, %v8416
      %v8518 = vmul.f32 %v8417, %v8417
      %v8519 = vmul.f32 %v8418, %v8418
      %v8520 = vmul.f32 %v8419, %v8419
      %v8521 = vmul.f32 %v8420, %v8420
      %v8522 = vmul.f32 %v8421, %v8421
      %v8523 = vmul.f32 %v8422, %v8422
      %v8524 = vmul.f32 %v8423, %v8423
      %v8525 = vmul.f32 %v8424, %v8424
      %v8526 = vmul.f32 %v8425, %v8425
      %v8527 = vmul.f32 %v8426, %v8426
      %v8528 = vmul.f32 %v8427, %v8427
      %v8529 = vmul.f32 %v8428, %v8428
      %v8530 = vmul.f32 %v8429, %v8429
      %v8531 = vmul.f32 %v8430, %v8430
      %v8532 = vmul.f32 %v8431, %v8431
      %v8533 = vmul.f32 %v8432, %v8432
      %v8534 = vmul.f32 %v8433, %v8433
      %v8535 = vmul.f32 %v8434, %v8434
      %v8536 = vmul.f32 %v8435, %v8435
      %v8537 = vmul.f32 %v8436, %v8436
      %v8538 = vadd.f32 %v8490, %v8491
      %v8539 = vadd.f32 %v8538, %v8492
      %v8540 = vadd.f32 %v8539, %v8493
      %v8541 = vadd.f32 %v8540, %v8494
      %v8542 = vadd.f32 %v8541, %v8495
      %v8543 = vadd.f32 %v8542, %v8496
      %v8544 = vadd.f32 %v8543, %v8497
      %v8545 = vadd.f32 %v8544, %v8498
      %v8546 = vadd.f32 %v8545, %v8499
      %v8547 = vadd.f32 %v8546, %v8500
      %v8548 = vadd.f32 %v8547, %v8501
      %v8549 = vadd.f32 %v8548, %v8502
      %v8550 = vadd.f32 %v8549, %v8503
      %v8551 = vadd.f32 %v8550, %v8504
      %v8552 = vadd.f32 %v8551, %v8505
      %v8553 = vadd.f32 %v8552, %v8506
      %v8554 = vadd.f32 %v8553, %v8507
      %v8555 = vadd.f32 %v8554, %v8508
      %v8556 = vadd.f32 %v8555, %v8509
      %v8557 = vadd.f32 %v8556, %v8510
      %v8558 = vadd.f32 %v8557, %v8511
      %v8559 = vadd.f32 %v8558, %v8512
      %v8560 = vadd.f32 %v8559, %v8513
      %v8561 = vadd.f32 %v8560, %v8514
      %v8562 = vadd.f32 %v8561, %v8515
      %v8563 = vadd.f32 %v8562, %v8516
      %v8564 = vadd.f32 %v8563, %v8517
      %v8565 = vadd.f32 %v8564, %v8518
      %v8566 = vadd.f32 %v8565, %v8519
      %v8567 = vadd.f32 %v8566, %v8520
      %v8568 = vadd.f32 %v8567, %v8521
      %v8569 = vadd.f32 %v8568, %v8522
      %v8570 = vadd.f32 %v8569, %v8523
      %v8571 = vadd.f32 %v8570, %v8524
      %v8572 = vadd.f32 %v8571, %v8525
      %v8573 = vadd.f32 %v8572, %v8526
      %v8574 = vadd.f32 %v8573, %v8527
      %v8575 = vadd.f32 %v8574, %v8528
      %v8576 = vadd.f32 %v8575, %v8529
      %v8577 = vadd.f32 %v8576, %v8530
      %v8578 = vadd.f32 %v8577, %v8531
      %v8579 = vadd.f32 %v8578, %v8532
      %v8580 = vadd.f32 %v8579, %v8533
      %v8581 = vadd.f32 %v8580, %v8534
      %v8582 = vadd.f32 %v8581, %v8535
      %v8583 = vadd.f32 %v8582, %v8536
      %v8584 = vadd.f32 %v8583, %v8537
      %v8585 = vrot.slane %v8584, 4
      %v8586 = vadd.f32 %v8584, %v8585
      %v8587 = vrot.slane %v8586, 2
      %v8588 = vadd.f32 %v8586, %v8587
      %v8589 = vrot.slane %v8588, 1
      %v8590 = vadd.f32 %v8588, %v8589
      %v8591 = vmul.f32 %v8489, 0.00390625
      %v8592 = vmul.f32 %v8590, 0.00390625
      %v8593 = vmul.f32 %v8591, %v8591
      %v8594 = vsub.f32 %v8592, %v8593
      %v8595 = vadd.f32 %v8594, 1e-05
      %v8596 = vrsqrt.pop %v8595
      %v8597 = vld [vmem:[%s5] sm:$0x1]
      %v8598 = vmul.f32 %v8596, %v8597
      %v8599 = vld [vmem:[%s6] sm:$0x1]
      %v8600 = vmul.f32 %v8591, %v8598
      %v8601 = vsub.f32 %v8599, %v8600
      loop: start=0, step=1, limit=16
      $region56: #{_residual_block_nhwc_jit.1} parent=47 // loop_pre_header
        _
      $region57: #{_residual_block_nhwc_jit.1} parent=47 // loop_header
        %s8603 = sphi 0, %s8607
        %p8604 = scmp.ge.s32.totalorder %s8603, 16
      $region58: #{_residual_block_nhwc_jit.1} parent=47 // loop_header_branch
        %8606 = sbr.rel (%p8604) target = $region62
      $region59: #{_residual_block_nhwc_jit.1} parent=47 // loop_body
        %s8608 = smul.u32 %s8603, 24
        %s8609 = scalar_lea.vmem [#allocation3], %s8608
        %v8610 = vld [vmem:[%s8609] sm:$0xff]
        %v8611 = vld [vmem:[%s8609 + $0x8] sm:$0xff]
        %v8612 = vlaneseq
        %v8613 = vshrl.u32 %v8612, 7
        %v8614 = vsub.s32 0, %v8613
        %v8615 = vrot.slane %v8598, %v8614
        %v8616 = vmul.f32 %v8610, %v8615
        %v8617 = vmul.f32 %v8611, %v8615
        %v8619 = vlaneseq
        %v8620 = vshrl.u32 %v8619, 7
        %v8621 = vsub.s32 0, %v8620
        %v8622 = vrot.slane %v8601, %v8621
        %v8624 = vadd.f32 %v8616, %v8622
        %v8625 = vadd.f32 %v8617, %v8622
        %s8626 = smul.u32 %s8603, 16
        %s8627 = scalar_lea.vmem %s273, %s8626
        %v8628 = vld [vmem:[%s8627] sm:$0xff]
        %v8629 = vld [vmem:[%s8627 + $0x8] sm:$0xff]
        %v8630 = vadd.f32 %v8628, %v8624
        %v8631 = vadd.f32 %v8629, %v8625
        %s8632 = scalar_lea.vmem %s278, %s8626
        %8633 = vst [vmem:[%s8632] sm:$0xff] %v8630
        %8634 = vst [vmem:[%s8632 + $0x8] sm:$0xff] %v8631
      $region60: #{_residual_block_nhwc_jit.1} parent=47 // loop_footer
        %s8607 = sadd.s32 1, %s8603
      $region61: #{_residual_block_nhwc_jit.1} parent=47 // loop_footer_branch
        %8602 = sbr.rel target = $region57
      $region62: #{_residual_block_nhwc_jit.1} parent=47 // loop_exit
        _
      %p8635 = scmp.lt.s32.totalorder %s18, 1
      %s8636 = scalar_select %p8635, %s18, 1
      %s8637 = smul.addr %s8636, 32
      %s8638 = smul.addr %s8637, 8
      %s8639 = scalar_lea.vmem %s7, %s8638
      // Predicated region
      $region63: #{_residual_block_nhwc_jit.1} parent=47 // pred_check
        %p8640 = pneg %p188
      $region64: #{_residual_block_nhwc_jit.1} parent=47 // pred_check_branch
        %8642 = sbr.rel (%p8640) target = $region66
      $region65: #{_residual_block_nhwc_jit.1} parent=47 // pred_region
        _
      $region66: #{_residual_block_nhwc_jit.1} parent=47 // pred_fallthru
        _
    $region48: #{_residual_block_nhwc_jit.1} parent=5 // pred_fallthru
      _
    %p8643 = scmp.le.s32.totalorder 2, %s13
    // Predicated region
    $region67: #{_residual_block_nhwc_jit.1} parent=5 // pred_check
      %p8644 = pneg %p8643
    $region68: #{_residual_block_nhwc_jit.1} parent=5 // pred_check_branch
      %8646 = sbr.rel (%p8644) target = $region70
    $region69: #{_residual_block_nhwc_jit.1} parent=5 // pred_region
      %s8647 = ssub.s32 %s13, 2
      // Predicated region
      $region71: #{_residual_block_nhwc_jit.1} parent=69 // pred_check
        %p8648 = pneg %p194
      $region72: #{_residual_block_nhwc_jit.1} parent=69 // pred_check_branch
        %8650 = sbr.rel (%p8648) target = $region74
      $region73: #{_residual_block_nhwc_jit.1} parent=69 // pred_region
        %p8651 = scmp.lt.s32.totalorder %s19, 1
        %s8652 = scalar_select %p8651, %s19, 1
        %s8653 = smul.addr %s8652, 32
        %s8654 = smul.addr %s8653, 8
        %s8655 = scalar_lea.vmem %s7, %s8654
      $region74: #{_residual_block_nhwc_jit.1} parent=69 // pred_fallthru
        _
    $region70: #{_residual_block_nhwc_jit.1} parent=5 // pred_fallthru
      _
  $region6: #{_residual_block_nhwc_jit.1} parent=0 // loop_footer
    %s17 = sadd.s32 1, %s13
  $region7: #{_residual_block_nhwc_jit.1} parent=0 // loop_footer_branch
    %12 = sbr.rel target = $region3
  $region8: #{_residual_block_nhwc_jit.1} parent=0 // loop_exit
    _

</llo_original>
